<compile_context>
chip_gen: v6e
topology: v6e:2x2x1
jax: 0.10.0
libtpu: 0.0.40
codegen_flags: <defaults>
</compile_context>

<pallas_src>
import functools
import numpy as np

import jax
import jax.numpy as jnp
from jax.experimental import pallas as pl
from jax.experimental.pallas import tpu as pltpu

# ----------------------------- small config -----------------------------------
IMG = 32          # image_size
PATCH = 4         # patch_size
IN_CH = 3         # in_channels
EMBED = 64        # embed_dim (divisible by HEADS and by GN_GROUPS)
DEPTH = 2         # ViT depth (12 in the full model)
HEADS = 4         # num_heads
MLP_RATIO = 4
MODEL_CH = 8      # model_channels
CH_MULT = (1, 2, 4, 4)
PYR = (8, 4, 2, 1)  # pyramid_sizes (scaled to the 8x8 token grid)
GN_GROUPS = 32
LN_EPS = 1e-6     # partial(nn.LayerNorm, eps=1e-6) in the reference ViT
GN_EPS = 1e-6     # diffusers ResnetBlock2D GroupNorm default eps

_PAR1 = pltpu.CompilerParams(dimension_semantics=("parallel",))


# ----------------------------- BlockSpec helpers -------------------------------
def _const_spec(shape):
    nd = len(shape)
    return pl.BlockSpec(tuple(shape), lambda i, _nd=nd: (0,) * _nd)


def _batch_spec(shape):
    nd = len(shape)
    return pl.BlockSpec((1,) + tuple(shape), lambda i, _nd=nd: (i,) + (0,) * _nd)


# ----------------------------- Pallas kernels ----------------------------------
def _vit_pyramid_kernel(xp_ref, pw_ref, posb_ref,
                        ln1g_ref, ln1b_ref, qkvw_ref, qkvb_ref,
                        projw_ref, projb_ref, ln2g_ref, ln2b_ref,
                        fc1w_ref, fc1b_ref, fc2w_ref, fc2b_ref,
                        ng_ref, nb_ref, pool_ref, wf_ref, bf_ref,
                        hout_ref, pyr_ref, *, depth, heads):
    """Per-batch: patch-embed + `depth` ViT blocks + final LN + pyramid/zero-conv matmul."""

    def ln(v, g, b):
        mu = jnp.mean(v, axis=-1, keepdims=True)
        vc = v - mu
        var = jnp.mean(vc * vc, axis=-1, keepdims=True)
        return vc * jax.lax.rsqrt(var + LN_EPS) * g + b

    # patch embed; conv bias + sinusoid pos-embed pre-summed into posb (prep step)
    x = jnp.dot(xp_ref[0].astype(jnp.bfloat16), pw_ref[...],
                preferred_element_type=jnp.float32) + posb_ref[...]     # (N, D) f32

    D = x.shape[-1]
    hd = D // heads
    for d in range(depth):                      # depth=2, unrolled (VMEM-resident residual)
        # ---- attention (scale already folded into q weights/bias) ----
        y = ln(x, ln1g_ref[d], ln1b_ref[d])
        qkv = jnp.dot(y.astype(jnp.bfloat16), qkvw_ref[d],
                      preferred_element_type=jnp.float32) + qkvb_ref[d]  # (N, 3D)
        head_outs = []
        for hh in range(heads):
            q = qkv[:, hh * hd:(hh + 1) * hd]
            k = qkv[:, D + hh * hd:D + (hh + 1) * hd]
            v = qkv[:, 2 * D + hh * hd:2 * D + (hh + 1) * hd]
            s = jax.lax.dot_general(q.astype(jnp.bfloat16), k.astype(jnp.bfloat16),
                                    (((1,), (1,)), ((), ())),
                                    preferred_element_type=jnp.float32)  # (N, N)
            m = jnp.max(s, axis=-1, keepdims=True)
            p = jnp.exp(s - m)
            p = p * pl.reciprocal(jnp.sum(p, axis=-1, keepdims=True), approx=True)
            head_outs.append(jnp.dot(p.astype(jnp.bfloat16), v.astype(jnp.bfloat16),
                                     preferred_element_type=jnp.float32))  # (N, hd)
        o_cat = jnp.concatenate(head_outs, axis=1)                       # (N, D)
        attn = jnp.dot(o_cat.astype(jnp.bfloat16), projw_ref[d],
                       preferred_element_type=jnp.float32) + projb_ref[d]
        x = x + attn
        # ---- MLP ----
        y2 = ln(x, ln2g_ref[d], ln2b_ref[d])
        h1 = jnp.dot(y2.astype(jnp.bfloat16), fc1w_ref[d],
                     preferred_element_type=jnp.float32) + fc1b_ref[d]
        h1 = 0.5 * h1 * (1.0 + jax.lax.erf(h1 * 0.7071067811865476))      # exact erf GELU
        x = x + jnp.dot(h1.astype(jnp.bfloat16), fc2w_ref[d],
                        preferred_element_type=jnp.float32) + fc2b_ref[d]

    # ---- final ViT LayerNorm; tokens feed the middle branch ----
    xn = ln(x, ng_ref[...], nb_ref[...])
    hout_ref[0] = xn
    # ---- all pyramid poolings (zero-padded to 88 rows) + fused stage/zero-conv matmul ----
    pooled = jnp.dot(pool_ref[...], xn.astype(jnp.bfloat16),
                     preferred_element_type=jnp.float32)                 # (88, D)
    pyr_ref[0] = jnp.dot(pooled.astype(jnp.bfloat16), wf_ref[...],
                         preferred_element_type=jnp.float32) + bf_ref[...]  # (88, 256)


def _middle_kernel(x_ref, gmat_ref, pool1_ref, shift1_ref, pool2_ref, shift2_ref,
                   g1a_ref, b1a_ref, w1a_ref, c1a_ref, g2a_ref, b2a_ref, w2a_ref, c2a_ref,
                   g1b_ref, b1b_ref, w1b_ref, c1b_ref, g2b_ref, b2b_ref, w2b_ref, c2b_ref,
                   midw_ref, midb_ref, o_ref, *, groups, eps):
    """Per-batch: two fused ResnetBlock2D(down=True) blocks + middle_block_out zero-conv."""
    C = x_ref.shape[-1]
    gs = C // groups
    gmat = gmat_ref[...]                                  # (C, C) same-group 0/1 matrix

    def gn_silu(v, g_ref, b_ref):
        # GroupNorm (biased two-pass variance, f32 statistics) + fused SiLU.
        inv_n = 1.0 / (gs * v.shape[0])
        csum = jnp.sum(v, axis=0, keepdims=True) * inv_n               # (1, C)
        mean_c = jnp.dot(csum, gmat, preferred_element_type=jnp.float32)
        vc = v - mean_c
        vsum = jnp.sum(vc * vc, axis=0, keepdims=True) * inv_n
        var_c = jnp.dot(vsum, gmat, preferred_element_type=jnp.float32)
        y = vc * jax.lax.rsqrt(var_c + eps) * g_ref[...] + b_ref[...]
        return y * jax.nn.sigmoid(y)

    def conv3x3(h, shift_ref, w_ref, b_ref):
        # one stacked shift matmul -> 9 shifted/zero-padded copies, then one wide im2col matmul
        ohw = h.shape[0]
        stacked = jnp.dot(shift_ref[...], h.astype(jnp.bfloat16),
                          preferred_element_type=jnp.float32)          # (9*ohw, C)
        im2col = jnp.concatenate(
            [stacked[t * ohw:(t + 1) * ohw, :] for t in range(9)], axis=1
        ).astype(jnp.bfloat16)                                          # (ohw, 9C)
        return (jnp.dot(im2col, w_ref[...], preferred_element_type=jnp.float32)
                + b_ref[...])

    def resnet_block(x, pool_ref, shift_ref, g1, b1, w1, c1, g2, b2, w2, c2):
        h = gn_silu(x, g1, b1)
        P = pool_ref[...]                                               # (OHW, HW) bf16
        x_down = jnp.dot(P, x.astype(jnp.bfloat16), preferred_element_type=jnp.float32)
        hp = jnp.dot(P, h.astype(jnp.bfloat16), preferred_element_type=jnp.float32)
        h1 = conv3x3(hp, shift_ref, w1, c1)
        h1 = gn_silu(h1, g2, b2)
        h2 = conv3x3(h1, shift_ref, w2, c2)
        return x_down + h2

    x = x_ref[0]                                                        # (64, C) = 8x8 tokens
    y1 = resnet_block(x, pool1_ref, shift1_ref,
                      g1a_ref, b1a_ref, w1a_ref, c1a_ref,
                      g2a_ref, b2a_ref, w2a_ref, c2a_ref)               # (16, C) = 4x4
    y2 = resnet_block(y1, pool2_ref, shift2_ref,
                      g1b_ref, b1b_ref, w1b_ref, c1b_ref,
                      g2b_ref, b2b_ref, w2b_ref, c2b_ref)               # (4, C) = 2x2
    o_ref[0] = (jnp.dot(y2.astype(jnp.bfloat16), midw_ref[...],
                        preferred_element_type=jnp.float32) + midb_ref[...])


# ----------------------------- pallas_call wrappers -----------------------------
def vit_pyramid_pallas(prep, xp):
    B, N, K = xp.shape
    D = EMBED
    hid = D * MLP_RATIO
    Rp = prep["pool_all"].shape[0]
    COp = prep["wf"].shape[1]
    kern = functools.partial(_vit_pyramid_kernel, depth=DEPTH, heads=HEADS)
    return pl.pallas_call(
        kern,
        out_shape=(jax.ShapeDtypeStruct((B, N, D), jnp.float32),
                   jax.ShapeDtypeStruct((B, Rp, COp), jnp.float32)),
        grid=(B,),
        in_specs=[
            _batch_spec((N, K)),
            _const_spec((K, D)), _const_spec((N, D)),
            _const_spec((DEPTH, 1, D)), _const_spec((DEPTH, 1, D)),        # ln1
            _const_spec((DEPTH, D, 3 * D)), _const_spec((DEPTH, 1, 3 * D)),  # qkv
            _const_spec((DEPTH, D, D)), _const_spec((DEPTH, 1, D)),        # proj
            _const_spec((DEPTH, 1, D)), _const_spec((DEPTH, 1, D)),        # ln2
            _const_spec((DEPTH, D, hid)), _const_spec((DEPTH, 1, hid)),    # fc1
            _const_spec((DEPTH, hid, D)), _const_spec((DEPTH, 1, D)),      # fc2
            _const_spec((1, D)), _const_spec((1, D)),                      # final LN
            _const_spec((Rp, N)), _const_spec((D, COp)), _const_spec((1, COp)),
        ],
        out_specs=(_batch_spec((N, D)), _batch_spec((Rp, COp))),
        compiler_params=_PAR1,
    )(xp, prep["patch_wT"], prep["posb"],
      prep["ln1_g"], prep["ln1_b"], prep["qkv_wT"], prep["qkv_b"],
      prep["proj_wT"], prep["proj_b"], prep["ln2_g"], prep["ln2_b"],
      prep["fc1_wT"], prep["fc1_b"], prep["fc2_wT"], prep["fc2_b"],
      prep["norm_g"], prep["norm_b"],
      prep["pool_all"], prep["wf"], prep["bias_f"])


def middle_pallas(prep, h):
    B, HW, C = h.shape
    OHW1 = prep["pool1"].shape[0]
    OHW2 = prep["pool2"].shape[0]
    COm = prep["mid_wT"].shape[1]
    kern = functools.partial(_middle_kernel, groups=GN_GROUPS, eps=GN_EPS)
    in_specs = [
        _batch_spec((HW, C)),
        _const_spec((C, C)),
        _const_spec((OHW1, HW)), _const_spec((9 * OHW1, OHW1)),
        _const_spec((OHW2, OHW1)), _const_spec((9 * OHW2, OHW2)),
    ]
    args = [h, prep["gmat"], prep["pool1"], prep["shift1"],
            prep["pool2"], prep["shift2"]]
    for r in prep["resnet"]:
        in_specs += [
            _const_spec((1, C)), _const_spec((1, C)),
            _const_spec((9 * C, C)), _const_spec((1, C)),
            _const_spec((1, C)), _const_spec((1, C)),
            _const_spec((9 * C, C)), _const_spec((1, C)),
        ]
        args += [r["gn1_g"], r["gn1_b"], r["conv1_w"], r["conv1_b"],
                 r["gn2_g"], r["gn2_b"], r["conv2_w"], r["conv2_b"]]
    in_specs += [_const_spec((C, COm)), _const_spec((1, COm))]
    args += [prep["mid_wT"], prep["mid_b"]]
    return pl.pallas_call(
        kern,
        out_shape=jax.ShapeDtypeStruct((B, OHW2, COm), jnp.float32),
        grid=(B,),
        in_specs=in_specs,
        out_specs=_batch_spec((OHW2, COm)),
        compiler_params=_PAR1,
    )(*args)


# ----------------------------- host-side constant builders ----------------------
def _np_pool_matrix(in_hw, out_hw):
    """(out_hw^2, in_hw^2) block-average matrix, row-major spatial (AdaptiveAvgPool2d)."""
    k = in_hw // out_hw
    m = np.zeros((out_hw * out_hw, in_hw * in_hw), np.float32)
    for oi in range(out_hw):
        for oj in range(out_hw):
            for di in range(k):
                for dj in range(k):
                    m[oi * out_hw + oj,
                      (oi * k + di) * in_hw + (oj * k + dj)] = 1.0 / (k * k)
    return m


def _np_shift_stack(hw):
    """Stacked (9*hw^2, hw^2) shift matrices (zero padding folded in) for a 3x3 conv."""
    ohw = hw * hw
    s = np.zeros((9 * ohw, ohw), np.float32)
    for di in range(3):
        for dj in range(3):
            t = di * 3 + dj
            for i in range(hw):
                for j in range(hw):
                    ii, jj = i + di - 1, j + dj - 1
                    if 0 <= ii < hw and 0 <= jj < hw:
                        s[t * ohw + i * hw + j, ii * hw + jj] = 1.0
    return s


def get_sinusoid_encoding_table(n_position, d_hid):
    def angle_vec(pos):
        return [pos / np.power(10000, 2 * (j // 2) / d_hid) for j in range(d_hid)]
    table = np.array([angle_vec(p) for p in range(n_position)], dtype=np.float64)
    table[:, 0::2] = np.sin(table[:, 0::2])
    table[:, 1::2] = np.cos(table[:, 1::2])
    return jnp.asarray(table[None], dtype=jnp.float32)    # (1, N, D)


# ----------------------------- one-time parameter prep ---------------------------
def prepare(params):
    """Hoisted host/XLA-side prep: weight stacking, bf16 casts, scale folding, padding,
    stage-conv ⊗ zero-conv fusion, pool/shift/group constant matrices."""
    D = EMBED
    nh = IMG // PATCH
    N = nh * nh
    hid = D * MLP_RATIO
    hd = D // HEADS
    scale = hd ** -0.5

    prep = {}
    prep["patch_wT"] = params["patch_wT"].astype(jnp.bfloat16)
    prep["posb"] = (params["pos_embed"].reshape(N, D)
                    + params["patch_b"].reshape(1, D))

    # fold attention scale into the q columns of qkv weight/bias
    qscale = jnp.concatenate([jnp.full((D,), scale, jnp.float32),
                              jnp.ones((2 * D,), jnp.float32)])
    blocks = params["blocks"]
    prep["ln1_g"] = jnp.stack([b["ln1_g"].reshape(1, D) for b in blocks])
    prep["ln1_b"] = jnp.stack([b["ln1_b"].reshape(1, D) for b in blocks])
    prep["qkv_wT"] = jnp.stack([b["qkv_wT"] * qscale[None, :] for b in blocks]
                               ).astype(jnp.bfloat16)
    prep["qkv_b"] = jnp.stack([(b["qkv_b"] * qscale).reshape(1, 3 * D) for b in blocks])
    prep["proj_wT"] = jnp.stack([b["proj_wT"] for b in blocks]).astype(jnp.bfloat16)
    prep["proj_b"] = jnp.stack([b["proj_b"].reshape(1, D) for b in blocks])
    prep["ln2_g"] = jnp.stack([b["ln2_g"].reshape(1, D) for b in blocks])
    prep["ln2_b"] = jnp.stack([b["ln2_b"].reshape(1, D) for b in blocks])
    prep["fc1_wT"] = jnp.stack([b["fc1_wT"] for b in blocks]).astype(jnp.bfloat16)
    prep["fc1_b"] = jnp.stack([b["fc1_b"].reshape(1, hid) for b in blocks])
    prep["fc2_wT"] = jnp.stack([b["fc2_wT"] for b in blocks]).astype(jnp.bfloat16)
    prep["fc2_b"] = jnp.stack([b["fc2_b"].reshape(1, D) for b in blocks])

    prep["norm_g"] = params["norm_g"].reshape(1, D)
    prep["norm_b"] = params["norm_b"].reshape(1, D)

    # pyramid: stacked pool matrix (85 rows -> pad to multiple of 8 sublanes)
    pool_np = np.concatenate([_np_pool_matrix(nh, s) for s in PYR], axis=0)
    R = pool_np.shape[0]
    R_pad = -(-R // 8) * 8
    pool_pad = np.zeros((R_pad, N), np.float32)
    pool_pad[:R] = pool_np                        # entries are powers of 2 -> exact in bf16
    prep["pool_all"] = jnp.asarray(pool_pad).astype(jnp.bfloat16)

    # fuse each stage's 1x1 conv (no bias) with its 3 zero convs; pad cols 240 -> 256 lanes
    wf_cols, b_cols = [], []
    for i in range(len(PYR)):
        zw = jnp.concatenate([params["zc_wT"][j] for j in range(3 * i, 3 * i + 3)], axis=1)
        wf_cols.append(params["stage_wT"][i] @ zw)
        b_cols.append(jnp.concatenate([params["zc_b"][j] for j in range(3 * i, 3 * i + 3)]))
    wf = jnp.concatenate(wf_cols, axis=1)
    bf = jnp.concatenate(b_cols)
    CO = wf.shape[1]
    CO_pad = -(-CO // 128) * 128
    prep["wf"] = jnp.pad(wf, ((0, 0), (0, CO_pad - CO))).astype(jnp.bfloat16)
    prep["bias_f"] = jnp.pad(bf, (0, CO_pad - CO)).reshape(1, CO_pad)

    # middle branch constants
    gs = D // GN_GROUPS
    gvec = np.arange(D) // gs
    prep["gmat"] = jnp.asarray((gvec[:, None] == gvec[None, :]).astype(np.float32))
    prep["pool1"] = jnp.asarray(_np_pool_matrix(nh, nh // 2)).astype(jnp.bfloat16)
    prep["pool2"] = jnp.asarray(_np_pool_matrix(nh // 2, nh // 4)).astype(jnp.bfloat16)
    prep["shift1"] = jnp.asarray(_np_shift_stack(nh // 2)).astype(jnp.bfloat16)
    prep["shift2"] = jnp.asarray(_np_shift_stack(nh // 4)).astype(jnp.bfloat16)

    prep["resnet"] = []
    for r in params["resnet"]:
        prep["resnet"].append(dict(
            gn1_g=r["gn1_g"].reshape(1, D), gn1_b=r["gn1_b"].reshape(1, D),
            conv1_w=r["conv1_w"].reshape(9 * D, D).astype(jnp.bfloat16),
            conv1_b=r["conv1_b"].reshape(1, D),
            gn2_g=r["gn2_g"].reshape(1, D), gn2_b=r["gn2_b"].reshape(1, D),
            conv2_w=r["conv2_w"].reshape(9 * D, D).astype(jnp.bfloat16),
            conv2_b=r["conv2_b"].reshape(1, D)))

    cm = MODEL_CH * CH_MULT[-1]
    cm_pad = 128                                  # lane-dense middle output
    prep["mid_wT"] = jnp.pad(params["mid_wT"], ((0, 0), (0, cm_pad - cm))).astype(jnp.bfloat16)
    prep["mid_b"] = jnp.pad(params["mid_b"], (0, cm_pad - cm)).reshape(1, cm_pad)
    return prep


# ----------------------------- forward pass -------------------------------------
def style_pyramid_forward(prep, hint):
    B, Cin, H, W = hint.shape
    nh, nw = H // PATCH, W // PATCH
    N, D = nh * nw, EMBED
    assert nh == nw and all(nh % s == 0 for s in PYR)

    # patch extraction (layout glue, once)
    xp = hint.reshape(B, Cin, nh, PATCH, nw, PATCH).transpose(0, 2, 4, 1, 3, 5)
    xp = xp.reshape(B, N, Cin * PATCH * PATCH)

    # Call A: patch-embed + full ViT + final LN + pyramid stages/zero-convs
    h_ln, pyr = vit_pyramid_pallas(prep, xp)

    # split the fused pyramid output into the 12 zero-conv outputs (zero data at init)
    zc_mult = [CH_MULT[0]] * 4 + [CH_MULT[1]] * 3 + [CH_MULT[2]] * 3 + [CH_MULT[3]] * 2
    outs = []
    ro, co = 0, 0
    for i, s in enumerate(PYR):
        rows = s * s
        for j in range(3 * i, 3 * i + 3):
            cj = MODEL_CH * zc_mult[j]
            blk = pyr[:, ro:ro + rows, co:co + cj]
            outs.append(blk.reshape(B, s, s, cj).transpose(0, 3, 1, 2))
            co += cj
        ro += rows

    # Call B: two ResnetBlock2D(down=True) + middle_block_out zero-conv (fused)
    mid = middle_pallas(prep, h_ln)
    s_mid = nh // 4
    cm = MODEL_CH * CH_MULT[-1]
    outs.append(mid[:, :, :cm].reshape(B, s_mid, s_mid, cm).transpose(0, 3, 1, 2))
    return outs


# ----------------------------- parameter init -----------------------------------
def init_params(key):
    keys = iter(jax.random.split(key, 64))

    def w(shape, scale=0.02):
        return (scale * jax.random.normal(next(keys), shape)).astype(jnp.float32)

    D = EMBED
    N = (IMG // PATCH) ** 2
    hid = int(D * MLP_RATIO)
    p = {
        "patch_wT": w((IN_CH * PATCH * PATCH, D)),
        "patch_b": jnp.zeros((D,), jnp.float32),
        "pos_embed": get_sinusoid_encoding_table(N, D),
        "norm_g": jnp.ones((D,), jnp.float32),
        "norm_b": jnp.zeros((D,), jnp.float32),
    }
    p["blocks"] = [
        dict(
            ln1_g=jnp.ones((D,), jnp.float32), ln1_b=jnp.zeros((D,), jnp.float32),
            # qkv_bias=True: q_bias/v_bias init to zero, k bias forced zero -> all-zero bias
            qkv_wT=w((D, 3 * D)), qkv_b=jnp.zeros((3 * D,), jnp.float32),
            proj_wT=w((D, D)), proj_b=jnp.zeros((D,), jnp.float32),
            ln2_g=jnp.ones((D,), jnp.float32), ln2_b=jnp.zeros((D,), jnp.float32),
            fc1_wT=w((D, hid)), fc1_b=jnp.zeros((hid,), jnp.float32),
            fc2_wT=w((hid, D)), fc2_b=jnp.zeros((D,), jnp.float32),
        )
        for _ in range(DEPTH)
    ]
    p["stage_wT"] = [w((D, D)) for _ in PYR]            # 1x1 stage convs, bias=False
    # channel multiplier per zero-conv index, exactly as in the PyTorch constructor
    zc_mult = [CH_MULT[0]] * 4 + [CH_MULT[1]] * 3 + [CH_MULT[2]] * 3 + [CH_MULT[3]] * 2
    p["zc_wT"] = [jnp.zeros((D, MODEL_CH * m), jnp.float32) for m in zc_mult]  # zero_module
    p["zc_b"] = [jnp.zeros((MODEL_CH * m,), jnp.float32) for m in zc_mult]
    # conv weights stored per-tap: (9, Cin, Cout), tap t = di*3+dj == torch weight[:,:,di,dj].T
    p["resnet"] = [
        dict(
            gn1_g=jnp.ones((D,), jnp.float32), gn1_b=jnp.zeros((D,), jnp.float32),
            conv1_w=w((9, D, D)), conv1_b=jnp.zeros((D,), jnp.float32),
            gn2_g=jnp.ones((D,), jnp.float32), gn2_b=jnp.zeros((D,), jnp.float32),
            conv2_w=w((9, D, D)), conv2_b=jnp.zeros((D,), jnp.float32),
        )
        for _ in range(2)
    ]
    last = MODEL_CH * CH_MULT[-1]
    p["mid_wT"] = jnp.zeros((D, last), jnp.float32)     # zero_module
    p["mid_b"] = jnp.zeros((last,), jnp.float32)
    return p


# ----------------------------- main ----------------------------------------------
if __name__ == "__main__":
    key = jax.random.PRNGKey(0)
    pkey, xkey = jax.random.split(key)
    params = init_params(pkey)
    prep = prepare(params)                               # one-time parameter/constant prep
    hint = jax.random.normal(xkey, (2, IN_CH, IMG, IMG), jnp.float32)

    fwd = jax.jit(style_pyramid_forward)
    outs = fwd(prep, hint)
    outs = [jax.block_until_ready(o) for o in outs]

    # sanity: 12 zero-conv outputs + middle_block_out
    assert len(outs) == 13
    zc_mult = [CH_MULT[0]] * 4 + [CH_MULT[1]] * 3 + [CH_MULT[2]] * 3 + [CH_MULT[3]] * 2
    k = 0
    for i, s in enumerate(PYR):
        for j in range(3 * i, 3 * i + 3):
            assert outs[k].shape == (2, MODEL_CH * zc_mult[j], s, s), outs[k].shape
            k += 1
    assert outs[-1].shape == (2, MODEL_CH * CH_MULT[-1], 2, 2), outs[-1].shape
    assert all(bool(jnp.all(jnp.isfinite(o))) for o in outs)
    # zero_module init => every output must be exactly zero (matches PyTorch reference)
    assert all(float(jnp.max(jnp.abs(o))) == 0.0 for o in outs)

    print("KERNEL_OK")
</pallas_src>

<mosaic_0001>
module attributes {stable_mosaic.version = 11 : i64} {
  func.func @_vit_pyramid_kernel(%arg0: i32, %arg1: memref<1x64x48xf32, #tpu.memory_space<vmem>>, %arg2: memref<48x64xbf16, #tpu.memory_space<vmem>>, %arg3: memref<64x64xf32, #tpu.memory_space<vmem>>, %arg4: memref<2x1x64xf32, #tpu.memory_space<vmem>>, %arg5: memref<2x1x64xf32, #tpu.memory_space<vmem>>, %arg6: memref<2x64x192xbf16, #tpu.memory_space<vmem>>, %arg7: memref<2x1x192xf32, #tpu.memory_space<vmem>>, %arg8: memref<2x64x64xbf16, #tpu.memory_space<vmem>>, %arg9: memref<2x1x64xf32, #tpu.memory_space<vmem>>, %arg10: memref<2x1x64xf32, #tpu.memory_space<vmem>>, %arg11: memref<2x1x64xf32, #tpu.memory_space<vmem>>, %arg12: memref<2x64x256xbf16, #tpu.memory_space<vmem>>, %arg13: memref<2x1x256xf32, #tpu.memory_space<vmem>>, %arg14: memref<2x256x64xbf16, #tpu.memory_space<vmem>>, %arg15: memref<2x1x64xf32, #tpu.memory_space<vmem>>, %arg16: memref<1x64xf32, #tpu.memory_space<vmem>>, %arg17: memref<1x64xf32, #tpu.memory_space<vmem>>, %arg18: memref<88x64xbf16, #tpu.memory_space<vmem>>, %arg19: memref<64x256xbf16, #tpu.memory_space<vmem>>, %arg20: memref<1x256xf32, #tpu.memory_space<vmem>>, %arg21: memref<1x64x64xf32, #tpu.memory_space<vmem>>, %arg22: memref<1x88x256xf32, #tpu.memory_space<vmem>>) attributes {dimension_semantics = [#tpu.dimension_semantics<parallel>], iteration_bounds = array<i64: 2>, scalar_prefetch = 0 : i64, scratch_operands = 0 : i64, tpu.core_type = #tpu.core_type<tc>, window_params = [{transform_indices = @transform_0, window_bounds = array<i64: 1, 64, 48>}, {pipeline_mode = #tpu.pipeline_mode<synchronous>, transform_indices = @transform_1, window_bounds = array<i64: 48, 64>}, {pipeline_mode = #tpu.pipeline_mode<synchronous>, transform_indices = @transform_2, window_bounds = array<i64: 64, 64>}, {pipeline_mode = #tpu.pipeline_mode<synchronous>, transform_indices = @transform_3, window_bounds = array<i64: 2, 1, 64>}, {pipeline_mode = #tpu.pipeline_mode<synchronous>, transform_indices = @transform_4, window_bounds = array<i64: 2, 1, 64>}, {pipeline_mode = #tpu.pipeline_mode<synchronous>, transform_indices = @transform_5, window_bounds = array<i64: 2, 64, 192>}, {pipeline_mode = #tpu.pipeline_mode<synchronous>, transform_indices = @transform_6, window_bounds = array<i64: 2, 1, 192>}, {pipeline_mode = #tpu.pipeline_mode<synchronous>, transform_indices = @transform_7, window_bounds = array<i64: 2, 64, 64>}, {pipeline_mode = #tpu.pipeline_mode<synchronous>, transform_indices = @transform_8, window_bounds = array<i64: 2, 1, 64>}, {pipeline_mode = #tpu.pipeline_mode<synchronous>, transform_indices = @transform_9, window_bounds = array<i64: 2, 1, 64>}, {pipeline_mode = #tpu.pipeline_mode<synchronous>, transform_indices = @transform_10, window_bounds = array<i64: 2, 1, 64>}, {pipeline_mode = #tpu.pipeline_mode<synchronous>, transform_indices = @transform_11, window_bounds = array<i64: 2, 64, 256>}, {pipeline_mode = #tpu.pipeline_mode<synchronous>, transform_indices = @transform_12, window_bounds = array<i64: 2, 1, 256>}, {pipeline_mode = #tpu.pipeline_mode<synchronous>, transform_indices = @transform_13, window_bounds = array<i64: 2, 256, 64>}, {pipeline_mode = #tpu.pipeline_mode<synchronous>, transform_indices = @transform_14, window_bounds = array<i64: 2, 1, 64>}, {pipeline_mode = #tpu.pipeline_mode<synchronous>, transform_indices = @transform_15, window_bounds = array<i64: 1, 64>}, {pipeline_mode = #tpu.pipeline_mode<synchronous>, transform_indices = @transform_16, window_bounds = array<i64: 1, 64>}, {pipeline_mode = #tpu.pipeline_mode<synchronous>, transform_indices = @transform_17, window_bounds = array<i64: 88, 64>}, {pipeline_mode = #tpu.pipeline_mode<synchronous>, transform_indices = @transform_18, window_bounds = array<i64: 64, 256>}, {pipeline_mode = #tpu.pipeline_mode<synchronous>, transform_indices = @transform_19, window_bounds = array<i64: 1, 256>}, {transform_indices = @transform_20, window_bounds = array<i64: 1, 64, 64>}, {transform_indices = @transform_21, window_bounds = array<i64: 1, 88, 256>}]} {
    %c0 = arith.constant 0 : index
    %c0_0 = arith.constant 0 : index
    %c0_1 = arith.constant 0 : index
    %0 = vector.load %arg1[%c0, %c0_0, %c0_1] : memref<1x64x48xf32, #tpu.memory_space<vmem>>, vector<1x64x48xf32>
    %1 = vector.shape_cast %0 : vector<1x64x48xf32> to vector<64x48xf32>
    %2 = arith.truncf %1 : vector<64x48xf32> to vector<64x48xbf16>
    %c0_2 = arith.constant 0 : index
    %c0_3 = arith.constant 0 : index
    %3 = vector.load %arg2[%c0_2, %c0_3] : memref<48x64xbf16, #tpu.memory_space<vmem>>, vector<48x64xbf16>
    %cst = arith.constant dense<0.000000e+00> : vector<64x64xf32>
    %4 = tpu.matmul %2, %3, %cst {dimension_numbers = #tpu.dot_dimension_numbers<[1], [0], [0], [1], [0, 0, 1, 1], [], []>} : vector<64x48xbf16>, vector<48x64xbf16>, vector<64x64xf32> -> vector<64x64xf32>
    %c0_4 = arith.constant 0 : index
    %c0_5 = arith.constant 0 : index
    %5 = vector.load %arg3[%c0_4, %c0_5] : memref<64x64xf32, #tpu.memory_space<vmem>>, vector<64x64xf32>
    %6 = arith.addf %4, %5 : vector<64x64xf32>
    %c0_6 = arith.constant 0 : index
    %c0_7 = arith.constant 0 : index
    %c0_8 = arith.constant 0 : index
    %7 = vector.load %arg4[%c0_6, %c0_7, %c0_8] : memref<2x1x64xf32, #tpu.memory_space<vmem>>, vector<1x1x64xf32>
    %8 = vector.shape_cast %7 : vector<1x1x64xf32> to vector<1x64xf32>
    %c0_9 = arith.constant 0 : index
    %c0_10 = arith.constant 0 : index
    %c0_11 = arith.constant 0 : index
    %9 = vector.load %arg5[%c0_9, %c0_10, %c0_11] : memref<2x1x64xf32, #tpu.memory_space<vmem>>, vector<1x1x64xf32>
    %10 = vector.shape_cast %9 : vector<1x1x64xf32> to vector<1x64xf32>
    %cst_12 = arith.constant dense<0.000000e+00> : vector<64xf32>
    %11 = vector.multi_reduction <add>, %6, %cst_12 [1] : vector<64x64xf32> to vector<64xf32>
    %12 = vector.shape_cast %11 : vector<64xf32> to vector<64x1xf32>
    %cst_13 = arith.constant 6.400000e+01 : f32
    %13 = vector.broadcast %cst_13 : f32 to vector<64x1xf32>
    %14 = arith.divf %12, %13 : vector<64x1xf32>
    %15 = vector.broadcast %14 : vector<64x1xf32> to vector<64x64xf32>
    %16 = arith.subf %6, %15 : vector<64x64xf32>
    %17 = arith.mulf %16, %16 : vector<64x64xf32>
    %cst_14 = arith.constant dense<0.000000e+00> : vector<64xf32>
    %18 = vector.multi_reduction <add>, %17, %cst_14 [1] : vector<64x64xf32> to vector<64xf32>
    %19 = vector.shape_cast %18 : vector<64xf32> to vector<64x1xf32>
    %cst_15 = arith.constant 6.400000e+01 : f32
    %20 = vector.broadcast %cst_15 : f32 to vector<64x1xf32>
    %21 = arith.divf %19, %20 : vector<64x1xf32>
    %cst_16 = arith.constant 9.99999997E-7 : f32
    %22 = vector.broadcast %cst_16 : f32 to vector<64x1xf32>
    %23 = arith.addf %21, %22 : vector<64x1xf32>
    %24 = math.rsqrt %23 : vector<64x1xf32>
    %25 = vector.broadcast %24 : vector<64x1xf32> to vector<64x64xf32>
    %26 = arith.mulf %16, %25 : vector<64x64xf32>
    %27 = vector.broadcast %8 : vector<1x64xf32> to vector<64x64xf32>
    %28 = arith.mulf %26, %27 : vector<64x64xf32>
    %29 = vector.broadcast %10 : vector<1x64xf32> to vector<64x64xf32>
    %30 = arith.addf %28, %29 : vector<64x64xf32>
    %31 = arith.truncf %30 : vector<64x64xf32> to vector<64x64xbf16>
    %c0_17 = arith.constant 0 : index
    %c0_18 = arith.constant 0 : index
    %c0_19 = arith.constant 0 : index
    %32 = vector.load %arg6[%c0_17, %c0_18, %c0_19] : memref<2x64x192xbf16, #tpu.memory_space<vmem>>, vector<1x64x192xbf16>
    %33 = vector.shape_cast %32 : vector<1x64x192xbf16> to vector<64x192xbf16>
    %cst_20 = arith.constant dense<0.000000e+00> : vector<64x192xf32>
    %34 = tpu.matmul %31, %33, %cst_20 {dimension_numbers = #tpu.dot_dimension_numbers<[1], [0], [0], [1], [0, 0, 1, 1], [], []>} : vector<64x64xbf16>, vector<64x192xbf16>, vector<64x192xf32> -> vector<64x192xf32>
    %c0_21 = arith.constant 0 : index
    %c0_22 = arith.constant 0 : index
    %c0_23 = arith.constant 0 : index
    %35 = vector.load %arg7[%c0_21, %c0_22, %c0_23] : memref<2x1x192xf32, #tpu.memory_space<vmem>>, vector<1x1x192xf32>
    %36 = vector.shape_cast %35 : vector<1x1x192xf32> to vector<1x192xf32>
    %37 = vector.broadcast %36 : vector<1x192xf32> to vector<64x192xf32>
    %38 = arith.addf %34, %37 : vector<64x192xf32>
    %39 = vector.extract_strided_slice %38 {offsets = [0, 0], sizes = [64, 16], strides = [1, 1]} : vector<64x192xf32> to vector<64x16xf32>
    %40 = vector.extract_strided_slice %38 {offsets = [0, 64], sizes = [64, 16], strides = [1, 1]} : vector<64x192xf32> to vector<64x16xf32>
    %41 = vector.extract_strided_slice %38 {offsets = [0, 128], sizes = [64, 16], strides = [1, 1]} : vector<64x192xf32> to vector<64x16xf32>
    %42 = arith.truncf %39 : vector<64x16xf32> to vector<64x16xbf16>
    %43 = arith.truncf %40 : vector<64x16xf32> to vector<64x16xbf16>
    %cst_24 = arith.constant dense<0.000000e+00> : vector<64x64xf32>
    %44 = tpu.matmul %42, %43, %cst_24 {dimension_numbers = #tpu.dot_dimension_numbers<[1], [1], [0], [0], [0, 0, 1, 0], [], []>} : vector<64x16xbf16>, vector<64x16xbf16>, vector<64x64xf32> -> vector<64x64xf32>
    %cst_25 = arith.constant dense<0xFF800000> : vector<64xf32>
    %45 = vector.multi_reduction <maximumf>, %44, %cst_25 [1] : vector<64x64xf32> to vector<64xf32>
    %46 = vector.shape_cast %45 : vector<64xf32> to vector<64x1xf32>
    %47 = vector.broadcast %46 : vector<64x1xf32> to vector<64x64xf32>
    %48 = arith.subf %44, %47 : vector<64x64xf32>
    %49 = math.exp %48 : vector<64x64xf32>
    %cst_26 = arith.constant dense<0.000000e+00> : vector<64xf32>
    %50 = vector.multi_reduction <add>, %49, %cst_26 [1] : vector<64x64xf32> to vector<64xf32>
    %51 = vector.shape_cast %50 : vector<64xf32> to vector<64x1xf32>
    %52 = tpu.reciprocal %51 {approx = true} : vector<64x1xf32> -> vector<64x1xf32>
    %53 = vector.broadcast %52 : vector<64x1xf32> to vector<64x64xf32>
    %54 = arith.mulf %49, %53 : vector<64x64xf32>
    %55 = arith.truncf %54 : vector<64x64xf32> to vector<64x64xbf16>
    %56 = arith.truncf %41 : vector<64x16xf32> to vector<64x16xbf16>
    %cst_27 = arith.constant dense<0.000000e+00> : vector<64x16xf32>
    %57 = tpu.matmul %55, %56, %cst_27 {dimension_numbers = #tpu.dot_dimension_numbers<[1], [0], [0], [1], [0, 0, 1, 1], [], []>} : vector<64x64xbf16>, vector<64x16xbf16>, vector<64x16xf32> -> vector<64x16xf32>
    %58 = vector.extract_strided_slice %38 {offsets = [0, 16], sizes = [64, 16], strides = [1, 1]} : vector<64x192xf32> to vector<64x16xf32>
    %59 = vector.extract_strided_slice %38 {offsets = [0, 80], sizes = [64, 16], strides = [1, 1]} : vector<64x192xf32> to vector<64x16xf32>
    %60 = vector.extract_strided_slice %38 {offsets = [0, 144], sizes = [64, 16], strides = [1, 1]} : vector<64x192xf32> to vector<64x16xf32>
    %61 = arith.truncf %58 : vector<64x16xf32> to vector<64x16xbf16>
    %62 = arith.truncf %59 : vector<64x16xf32> to vector<64x16xbf16>
    %cst_28 = arith.constant dense<0.000000e+00> : vector<64x64xf32>
    %63 = tpu.matmul %61, %62, %cst_28 {dimension_numbers = #tpu.dot_dimension_numbers<[1], [1], [0], [0], [0, 0, 1, 0], [], []>} : vector<64x16xbf16>, vector<64x16xbf16>, vector<64x64xf32> -> vector<64x64xf32>
    %cst_29 = arith.constant dense<0xFF800000> : vector<64xf32>
    %64 = vector.multi_reduction <maximumf>, %63, %cst_29 [1] : vector<64x64xf32> to vector<64xf32>
    %65 = vector.shape_cast %64 : vector<64xf32> to vector<64x1xf32>
    %66 = vector.broadcast %65 : vector<64x1xf32> to vector<64x64xf32>
    %67 = arith.subf %63, %66 : vector<64x64xf32>
    %68 = math.exp %67 : vector<64x64xf32>
    %cst_30 = arith.constant dense<0.000000e+00> : vector<64xf32>
    %69 = vector.multi_reduction <add>, %68, %cst_30 [1] : vector<64x64xf32> to vector<64xf32>
    %70 = vector.shape_cast %69 : vector<64xf32> to vector<64x1xf32>
    %71 = tpu.reciprocal %70 {approx = true} : vector<64x1xf32> -> vector<64x1xf32>
    %72 = vector.broadcast %71 : vector<64x1xf32> to vector<64x64xf32>
    %73 = arith.mulf %68, %72 : vector<64x64xf32>
    %74 = arith.truncf %73 : vector<64x64xf32> to vector<64x64xbf16>
    %75 = arith.truncf %60 : vector<64x16xf32> to vector<64x16xbf16>
    %cst_31 = arith.constant dense<0.000000e+00> : vector<64x16xf32>
    %76 = tpu.matmul %74, %75, %cst_31 {dimension_numbers = #tpu.dot_dimension_numbers<[1], [0], [0], [1], [0, 0, 1, 1], [], []>} : vector<64x64xbf16>, vector<64x16xbf16>, vector<64x16xf32> -> vector<64x16xf32>
    %77 = vector.extract_strided_slice %38 {offsets = [0, 32], sizes = [64, 16], strides = [1, 1]} : vector<64x192xf32> to vector<64x16xf32>
    %78 = vector.extract_strided_slice %38 {offsets = [0, 96], sizes = [64, 16], strides = [1, 1]} : vector<64x192xf32> to vector<64x16xf32>
    %79 = vector.extract_strided_slice %38 {offsets = [0, 160], sizes = [64, 16], strides = [1, 1]} : vector<64x192xf32> to vector<64x16xf32>
    %80 = arith.truncf %77 : vector<64x16xf32> to vector<64x16xbf16>
    %81 = arith.truncf %78 : vector<64x16xf32> to vector<64x16xbf16>
    %cst_32 = arith.constant dense<0.000000e+00> : vector<64x64xf32>
    %82 = tpu.matmul %80, %81, %cst_32 {dimension_numbers = #tpu.dot_dimension_numbers<[1], [1], [0], [0], [0, 0, 1, 0], [], []>} : vector<64x16xbf16>, vector<64x16xbf16>, vector<64x64xf32> -> vector<64x64xf32>
    %cst_33 = arith.constant dense<0xFF800000> : vector<64xf32>
    %83 = vector.multi_reduction <maximumf>, %82, %cst_33 [1] : vector<64x64xf32> to vector<64xf32>
    %84 = vector.shape_cast %83 : vector<64xf32> to vector<64x1xf32>
    %85 = vector.broadcast %84 : vector<64x1xf32> to vector<64x64xf32>
    %86 = arith.subf %82, %85 : vector<64x64xf32>
    %87 = math.exp %86 : vector<64x64xf32>
    %cst_34 = arith.constant dense<0.000000e+00> : vector<64xf32>
    %88 = vector.multi_reduction <add>, %87, %cst_34 [1] : vector<64x64xf32> to vector<64xf32>
    %89 = vector.shape_cast %88 : vector<64xf32> to vector<64x1xf32>
    %90 = tpu.reciprocal %89 {approx = true} : vector<64x1xf32> -> vector<64x1xf32>
    %91 = vector.broadcast %90 : vector<64x1xf32> to vector<64x64xf32>
    %92 = arith.mulf %87, %91 : vector<64x64xf32>
    %93 = arith.truncf %92 : vector<64x64xf32> to vector<64x64xbf16>
    %94 = arith.truncf %79 : vector<64x16xf32> to vector<64x16xbf16>
    %cst_35 = arith.constant dense<0.000000e+00> : vector<64x16xf32>
    %95 = tpu.matmul %93, %94, %cst_35 {dimension_numbers = #tpu.dot_dimension_numbers<[1], [0], [0], [1], [0, 0, 1, 1], [], []>} : vector<64x64xbf16>, vector<64x16xbf16>, vector<64x16xf32> -> vector<64x16xf32>
    %96 = vector.extract_strided_slice %38 {offsets = [0, 48], sizes = [64, 16], strides = [1, 1]} : vector<64x192xf32> to vector<64x16xf32>
    %97 = vector.extract_strided_slice %38 {offsets = [0, 112], sizes = [64, 16], strides = [1, 1]} : vector<64x192xf32> to vector<64x16xf32>
    %98 = vector.extract_strided_slice %38 {offsets = [0, 176], sizes = [64, 16], strides = [1, 1]} : vector<64x192xf32> to vector<64x16xf32>
    %99 = arith.truncf %96 : vector<64x16xf32> to vector<64x16xbf16>
    %100 = arith.truncf %97 : vector<64x16xf32> to vector<64x16xbf16>
    %cst_36 = arith.constant dense<0.000000e+00> : vector<64x64xf32>
    %101 = tpu.matmul %99, %100, %cst_36 {dimension_numbers = #tpu.dot_dimension_numbers<[1], [1], [0], [0], [0, 0, 1, 0], [], []>} : vector<64x16xbf16>, vector<64x16xbf16>, vector<64x64xf32> -> vector<64x64xf32>
    %cst_37 = arith.constant dense<0xFF800000> : vector<64xf32>
    %102 = vector.multi_reduction <maximumf>, %101, %cst_37 [1] : vector<64x64xf32> to vector<64xf32>
    %103 = vector.shape_cast %102 : vector<64xf32> to vector<64x1xf32>
    %104 = vector.broadcast %103 : vector<64x1xf32> to vector<64x64xf32>
    %105 = arith.subf %101, %104 : vector<64x64xf32>
    %106 = math.exp %105 : vector<64x64xf32>
    %cst_38 = arith.constant dense<0.000000e+00> : vector<64xf32>
    %107 = vector.multi_reduction <add>, %106, %cst_38 [1] : vector<64x64xf32> to vector<64xf32>
    %108 = vector.shape_cast %107 : vector<64xf32> to vector<64x1xf32>
    %109 = tpu.reciprocal %108 {approx = true} : vector<64x1xf32> -> vector<64x1xf32>
    %110 = vector.broadcast %109 : vector<64x1xf32> to vector<64x64xf32>
    %111 = arith.mulf %106, %110 : vector<64x64xf32>
    %112 = arith.truncf %111 : vector<64x64xf32> to vector<64x64xbf16>
    %113 = arith.truncf %98 : vector<64x16xf32> to vector<64x16xbf16>
    %cst_39 = arith.constant dense<0.000000e+00> : vector<64x16xf32>
    %114 = tpu.matmul %112, %113, %cst_39 {dimension_numbers = #tpu.dot_dimension_numbers<[1], [0], [0], [1], [0, 0, 1, 1], [], []>} : vector<64x64xbf16>, vector<64x16xbf16>, vector<64x16xf32> -> vector<64x16xf32>
    %115 = tpu.concatenate %57, %76, %95, %114 in 1 : vector<64x16xf32>, vector<64x16xf32>, vector<64x16xf32>, vector<64x16xf32> -> vector<64x64xf32>
    %116 = arith.truncf %115 : vector<64x64xf32> to vector<64x64xbf16>
    %c0_40 = arith.constant 0 : index
    %c0_41 = arith.constant 0 : index
    %c0_42 = arith.constant 0 : index
    %117 = vector.load %arg8[%c0_40, %c0_41, %c0_42] : memref<2x64x64xbf16, #tpu.memory_space<vmem>>, vector<1x64x64xbf16>
    %118 = vector.shape_cast %117 : vector<1x64x64xbf16> to vector<64x64xbf16>
    %cst_43 = arith.constant dense<0.000000e+00> : vector<64x64xf32>
    %119 = tpu.matmul %116, %118, %cst_43 {dimension_numbers = #tpu.dot_dimension_numbers<[1], [0], [0], [1], [0, 0, 1, 1], [], []>} : vector<64x64xbf16>, vector<64x64xbf16>, vector<64x64xf32> -> vector<64x64xf32>
    %c0_44 = arith.constant 0 : index
    %c0_45 = arith.constant 0 : index
    %c0_46 = arith.constant 0 : index
    %120 = vector.load %arg9[%c0_44, %c0_45, %c0_46] : memref<2x1x64xf32, #tpu.memory_space<vmem>>, vector<1x1x64xf32>
    %121 = vector.shape_cast %120 : vector<1x1x64xf32> to vector<1x64xf32>
    %122 = vector.broadcast %121 : vector<1x64xf32> to vector<64x64xf32>
    %123 = arith.addf %119, %122 : vector<64x64xf32>
    %124 = arith.addf %6, %123 : vector<64x64xf32>
    %c0_47 = arith.constant 0 : index
    %c0_48 = arith.constant 0 : index
    %c0_49 = arith.constant 0 : index
    %125 = vector.load %arg10[%c0_47, %c0_48, %c0_49] : memref<2x1x64xf32, #tpu.memory_space<vmem>>, vector<1x1x64xf32>
    %126 = vector.shape_cast %125 : vector<1x1x64xf32> to vector<1x64xf32>
    %c0_50 = arith.constant 0 : index
    %c0_51 = arith.constant 0 : index
    %c0_52 = arith.constant 0 : index
    %127 = vector.load %arg11[%c0_50, %c0_51, %c0_52] : memref<2x1x64xf32, #tpu.memory_space<vmem>>, vector<1x1x64xf32>
    %128 = vector.shape_cast %127 : vector<1x1x64xf32> to vector<1x64xf32>
    %cst_53 = arith.constant dense<0.000000e+00> : vector<64xf32>
    %129 = vector.multi_reduction <add>, %124, %cst_53 [1] : vector<64x64xf32> to vector<64xf32>
    %130 = vector.shape_cast %129 : vector<64xf32> to vector<64x1xf32>
    %cst_54 = arith.constant 6.400000e+01 : f32
    %131 = vector.broadcast %cst_54 : f32 to vector<64x1xf32>
    %132 = arith.divf %130, %131 : vector<64x1xf32>
    %133 = vector.broadcast %132 : vector<64x1xf32> to vector<64x64xf32>
    %134 = arith.subf %124, %133 : vector<64x64xf32>
    %135 = arith.mulf %134, %134 : vector<64x64xf32>
    %cst_55 = arith.constant dense<0.000000e+00> : vector<64xf32>
    %136 = vector.multi_reduction <add>, %135, %cst_55 [1] : vector<64x64xf32> to vector<64xf32>
    %137 = vector.shape_cast %136 : vector<64xf32> to vector<64x1xf32>
    %cst_56 = arith.constant 6.400000e+01 : f32
    %138 = vector.broadcast %cst_56 : f32 to vector<64x1xf32>
    %139 = arith.divf %137, %138 : vector<64x1xf32>
    %cst_57 = arith.constant 9.99999997E-7 : f32
    %140 = vector.broadcast %cst_57 : f32 to vector<64x1xf32>
    %141 = arith.addf %139, %140 : vector<64x1xf32>
    %142 = math.rsqrt %141 : vector<64x1xf32>
    %143 = vector.broadcast %142 : vector<64x1xf32> to vector<64x64xf32>
    %144 = arith.mulf %134, %143 : vector<64x64xf32>
    %145 = vector.broadcast %126 : vector<1x64xf32> to vector<64x64xf32>
    %146 = arith.mulf %144, %145 : vector<64x64xf32>
    %147 = vector.broadcast %128 : vector<1x64xf32> to vector<64x64xf32>
    %148 = arith.addf %146, %147 : vector<64x64xf32>
    %149 = arith.truncf %148 : vector<64x64xf32> to vector<64x64xbf16>
    %c0_58 = arith.constant 0 : index
    %c0_59 = arith.constant 0 : index
    %c0_60 = arith.constant 0 : index
    %150 = vector.load %arg12[%c0_58, %c0_59, %c0_60] : memref<2x64x256xbf16, #tpu.memory_space<vmem>>, vector<1x64x256xbf16>
    %151 = vector.shape_cast %150 : vector<1x64x256xbf16> to vector<64x256xbf16>
    %cst_61 = arith.constant dense<0.000000e+00> : vector<64x256xf32>
    %152 = tpu.matmul %149, %151, %cst_61 {dimension_numbers = #tpu.dot_dimension_numbers<[1], [0], [0], [1], [0, 0, 1, 1], [], []>} : vector<64x64xbf16>, vector<64x256xbf16>, vector<64x256xf32> -> vector<64x256xf32>
    %c0_62 = arith.constant 0 : index
    %c0_63 = arith.constant 0 : index
    %c0_64 = arith.constant 0 : index
    %153 = vector.load %arg13[%c0_62, %c0_63, %c0_64] : memref<2x1x256xf32, #tpu.memory_space<vmem>>, vector<1x1x256xf32>
    %154 = vector.shape_cast %153 : vector<1x1x256xf32> to vector<1x256xf32>
    %155 = vector.broadcast %154 : vector<1x256xf32> to vector<64x256xf32>
    %156 = arith.addf %152, %155 : vector<64x256xf32>
    %cst_65 = arith.constant 5.000000e-01 : f32
    %157 = vector.broadcast %cst_65 : f32 to vector<64x256xf32>
    %158 = arith.mulf %157, %156 : vector<64x256xf32>
    %cst_66 = arith.constant 0.707106769 : f32
    %159 = vector.broadcast %cst_66 : f32 to vector<64x256xf32>
    %160 = arith.mulf %156, %159 : vector<64x256xf32>
    %161 = math.erf %160 : vector<64x256xf32>
    %cst_67 = arith.constant 1.000000e+00 : f32
    %162 = vector.broadcast %cst_67 : f32 to vector<64x256xf32>
    %163 = arith.addf %162, %161 : vector<64x256xf32>
    %164 = arith.mulf %158, %163 : vector<64x256xf32>
    %165 = arith.truncf %164 : vector<64x256xf32> to vector<64x256xbf16>
    %c0_68 = arith.constant 0 : index
    %c0_69 = arith.constant 0 : index
    %c0_70 = arith.constant 0 : index
    %166 = vector.load %arg14[%c0_68, %c0_69, %c0_70] : memref<2x256x64xbf16, #tpu.memory_space<vmem>>, vector<1x256x64xbf16>
    %167 = vector.shape_cast %166 : vector<1x256x64xbf16> to vector<256x64xbf16>
    %cst_71 = arith.constant dense<0.000000e+00> : vector<64x64xf32>
    %168 = tpu.matmul %165, %167, %cst_71 {dimension_numbers = #tpu.dot_dimension_numbers<[1], [0], [0], [1], [0, 0, 1, 1], [], []>} : vector<64x256xbf16>, vector<256x64xbf16>, vector<64x64xf32> -> vector<64x64xf32>
    %169 = arith.addf %124, %168 : vector<64x64xf32>
    %c0_72 = arith.constant 0 : index
    %c0_73 = arith.constant 0 : index
    %c0_74 = arith.constant 0 : index
    %170 = vector.load %arg15[%c0_72, %c0_73, %c0_74] : memref<2x1x64xf32, #tpu.memory_space<vmem>>, vector<1x1x64xf32>
    %171 = vector.shape_cast %170 : vector<1x1x64xf32> to vector<1x64xf32>
    %172 = vector.broadcast %171 : vector<1x64xf32> to vector<64x64xf32>
    %173 = arith.addf %169, %172 : vector<64x64xf32>
    %c1 = arith.constant 1 : index
    %c0_75 = arith.constant 0 : index
    %c0_76 = arith.constant 0 : index
    %174 = vector.load %arg4[%c1, %c0_75, %c0_76] : memref<2x1x64xf32, #tpu.memory_space<vmem>>, vector<1x1x64xf32>
    %175 = vector.shape_cast %174 : vector<1x1x64xf32> to vector<1x64xf32>
    %c1_77 = arith.constant 1 : index
    %c0_78 = arith.constant 0 : index
    %c0_79 = arith.constant 0 : index
    %176 = vector.load %arg5[%c1_77, %c0_78, %c0_79] : memref<2x1x64xf32, #tpu.memory_space<vmem>>, vector<1x1x64xf32>
    %177 = vector.shape_cast %176 : vector<1x1x64xf32> to vector<1x64xf32>
    %cst_80 = arith.constant dense<0.000000e+00> : vector<64xf32>
    %178 = vector.multi_reduction <add>, %173, %cst_80 [1] : vector<64x64xf32> to vector<64xf32>
    %179 = vector.shape_cast %178 : vector<64xf32> to vector<64x1xf32>
    %cst_81 = arith.constant 6.400000e+01 : f32
    %180 = vector.broadcast %cst_81 : f32 to vector<64x1xf32>
    %181 = arith.divf %179, %180 : vector<64x1xf32>
    %182 = vector.broadcast %181 : vector<64x1xf32> to vector<64x64xf32>
    %183 = arith.subf %173, %182 : vector<64x64xf32>
    %184 = arith.mulf %183, %183 : vector<64x64xf32>
    %cst_82 = arith.constant dense<0.000000e+00> : vector<64xf32>
    %185 = vector.multi_reduction <add>, %184, %cst_82 [1] : vector<64x64xf32> to vector<64xf32>
    %186 = vector.shape_cast %185 : vector<64xf32> to vector<64x1xf32>
    %cst_83 = arith.constant 6.400000e+01 : f32
    %187 = vector.broadcast %cst_83 : f32 to vector<64x1xf32>
    %188 = arith.divf %186, %187 : vector<64x1xf32>
    %cst_84 = arith.constant 9.99999997E-7 : f32
    %189 = vector.broadcast %cst_84 : f32 to vector<64x1xf32>
    %190 = arith.addf %188, %189 : vector<64x1xf32>
    %191 = math.rsqrt %190 : vector<64x1xf32>
    %192 = vector.broadcast %191 : vector<64x1xf32> to vector<64x64xf32>
    %193 = arith.mulf %183, %192 : vector<64x64xf32>
    %194 = vector.broadcast %175 : vector<1x64xf32> to vector<64x64xf32>
    %195 = arith.mulf %193, %194 : vector<64x64xf32>
    %196 = vector.broadcast %177 : vector<1x64xf32> to vector<64x64xf32>
    %197 = arith.addf %195, %196 : vector<64x64xf32>
    %198 = arith.truncf %197 : vector<64x64xf32> to vector<64x64xbf16>
    %c1_85 = arith.constant 1 : index
    %c0_86 = arith.constant 0 : index
    %c0_87 = arith.constant 0 : index
    %199 = vector.load %arg6[%c1_85, %c0_86, %c0_87] : memref<2x64x192xbf16, #tpu.memory_space<vmem>>, vector<1x64x192xbf16>
    %200 = vector.shape_cast %199 : vector<1x64x192xbf16> to vector<64x192xbf16>
    %cst_88 = arith.constant dense<0.000000e+00> : vector<64x192xf32>
    %201 = tpu.matmul %198, %200, %cst_88 {dimension_numbers = #tpu.dot_dimension_numbers<[1], [0], [0], [1], [0, 0, 1, 1], [], []>} : vector<64x64xbf16>, vector<64x192xbf16>, vector<64x192xf32> -> vector<64x192xf32>
    %c1_89 = arith.constant 1 : index
    %c0_90 = arith.constant 0 : index
    %c0_91 = arith.constant 0 : index
    %202 = vector.load %arg7[%c1_89, %c0_90, %c0_91] : memref<2x1x192xf32, #tpu.memory_space<vmem>>, vector<1x1x192xf32>
    %203 = vector.shape_cast %202 : vector<1x1x192xf32> to vector<1x192xf32>
    %204 = vector.broadcast %203 : vector<1x192xf32> to vector<64x192xf32>
    %205 = arith.addf %201, %204 : vector<64x192xf32>
    %206 = vector.extract_strided_slice %205 {offsets = [0, 0], sizes = [64, 16], strides = [1, 1]} : vector<64x192xf32> to vector<64x16xf32>
    %207 = vector.extract_strided_slice %205 {offsets = [0, 64], sizes = [64, 16], strides = [1, 1]} : vector<64x192xf32> to vector<64x16xf32>
    %208 = vector.extract_strided_slice %205 {offsets = [0, 128], sizes = [64, 16], strides = [1, 1]} : vector<64x192xf32> to vector<64x16xf32>
    %209 = arith.truncf %206 : vector<64x16xf32> to vector<64x16xbf16>
    %210 = arith.truncf %207 : vector<64x16xf32> to vector<64x16xbf16>
    %cst_92 = arith.constant dense<0.000000e+00> : vector<64x64xf32>
    %211 = tpu.matmul %209, %210, %cst_92 {dimension_numbers = #tpu.dot_dimension_numbers<[1], [1], [0], [0], [0, 0, 1, 0], [], []>} : vector<64x16xbf16>, vector<64x16xbf16>, vector<64x64xf32> -> vector<64x64xf32>
    %cst_93 = arith.constant dense<0xFF800000> : vector<64xf32>
    %212 = vector.multi_reduction <maximumf>, %211, %cst_93 [1] : vector<64x64xf32> to vector<64xf32>
    %213 = vector.shape_cast %212 : vector<64xf32> to vector<64x1xf32>
    %214 = vector.broadcast %213 : vector<64x1xf32> to vector<64x64xf32>
    %215 = arith.subf %211, %214 : vector<64x64xf32>
    %216 = math.exp %215 : vector<64x64xf32>
    %cst_94 = arith.constant dense<0.000000e+00> : vector<64xf32>
    %217 = vector.multi_reduction <add>, %216, %cst_94 [1] : vector<64x64xf32> to vector<64xf32>
    %218 = vector.shape_cast %217 : vector<64xf32> to vector<64x1xf32>
    %219 = tpu.reciprocal %218 {approx = true} : vector<64x1xf32> -> vector<64x1xf32>
    %220 = vector.broadcast %219 : vector<64x1xf32> to vector<64x64xf32>
    %221 = arith.mulf %216, %220 : vector<64x64xf32>
    %222 = arith.truncf %221 : vector<64x64xf32> to vector<64x64xbf16>
    %223 = arith.truncf %208 : vector<64x16xf32> to vector<64x16xbf16>
    %cst_95 = arith.constant dense<0.000000e+00> : vector<64x16xf32>
    %224 = tpu.matmul %222, %223, %cst_95 {dimension_numbers = #tpu.dot_dimension_numbers<[1], [0], [0], [1], [0, 0, 1, 1], [], []>} : vector<64x64xbf16>, vector<64x16xbf16>, vector<64x16xf32> -> vector<64x16xf32>
    %225 = vector.extract_strided_slice %205 {offsets = [0, 16], sizes = [64, 16], strides = [1, 1]} : vector<64x192xf32> to vector<64x16xf32>
    %226 = vector.extract_strided_slice %205 {offsets = [0, 80], sizes = [64, 16], strides = [1, 1]} : vector<64x192xf32> to vector<64x16xf32>
    %227 = vector.extract_strided_slice %205 {offsets = [0, 144], sizes = [64, 16], strides = [1, 1]} : vector<64x192xf32> to vector<64x16xf32>
    %228 = arith.truncf %225 : vector<64x16xf32> to vector<64x16xbf16>
    %229 = arith.truncf %226 : vector<64x16xf32> to vector<64x16xbf16>
    %cst_96 = arith.constant dense<0.000000e+00> : vector<64x64xf32>
    %230 = tpu.matmul %228, %229, %cst_96 {dimension_numbers = #tpu.dot_dimension_numbers<[1], [1], [0], [0], [0, 0, 1, 0], [], []>} : vector<64x16xbf16>, vector<64x16xbf16>, vector<64x64xf32> -> vector<64x64xf32>
    %cst_97 = arith.constant dense<0xFF800000> : vector<64xf32>
    %231 = vector.multi_reduction <maximumf>, %230, %cst_97 [1] : vector<64x64xf32> to vector<64xf32>
    %232 = vector.shape_cast %231 : vector<64xf32> to vector<64x1xf32>
    %233 = vector.broadcast %232 : vector<64x1xf32> to vector<64x64xf32>
    %234 = arith.subf %230, %233 : vector<64x64xf32>
    %235 = math.exp %234 : vector<64x64xf32>
    %cst_98 = arith.constant dense<0.000000e+00> : vector<64xf32>
    %236 = vector.multi_reduction <add>, %235, %cst_98 [1] : vector<64x64xf32> to vector<64xf32>
    %237 = vector.shape_cast %236 : vector<64xf32> to vector<64x1xf32>
    %238 = tpu.reciprocal %237 {approx = true} : vector<64x1xf32> -> vector<64x1xf32>
    %239 = vector.broadcast %238 : vector<64x1xf32> to vector<64x64xf32>
    %240 = arith.mulf %235, %239 : vector<64x64xf32>
    %241 = arith.truncf %240 : vector<64x64xf32> to vector<64x64xbf16>
    %242 = arith.truncf %227 : vector<64x16xf32> to vector<64x16xbf16>
    %cst_99 = arith.constant dense<0.000000e+00> : vector<64x16xf32>
    %243 = tpu.matmul %241, %242, %cst_99 {dimension_numbers = #tpu.dot_dimension_numbers<[1], [0], [0], [1], [0, 0, 1, 1], [], []>} : vector<64x64xbf16>, vector<64x16xbf16>, vector<64x16xf32> -> vector<64x16xf32>
    %244 = vector.extract_strided_slice %205 {offsets = [0, 32], sizes = [64, 16], strides = [1, 1]} : vector<64x192xf32> to vector<64x16xf32>
    %245 = vector.extract_strided_slice %205 {offsets = [0, 96], sizes = [64, 16], strides = [1, 1]} : vector<64x192xf32> to vector<64x16xf32>
    %246 = vector.extract_strided_slice %205 {offsets = [0, 160], sizes = [64, 16], strides = [1, 1]} : vector<64x192xf32> to vector<64x16xf32>
    %247 = arith.truncf %244 : vector<64x16xf32> to vector<64x16xbf16>
    %248 = arith.truncf %245 : vector<64x16xf32> to vector<64x16xbf16>
    %cst_100 = arith.constant dense<0.000000e+00> : vector<64x64xf32>
    %249 = tpu.matmul %247, %248, %cst_100 {dimension_numbers = #tpu.dot_dimension_numbers<[1], [1], [0], [0], [0, 0, 1, 0], [], []>} : vector<64x16xbf16>, vector<64x16xbf16>, vector<64x64xf32> -> vector<64x64xf32>
    %cst_101 = arith.constant dense<0xFF800000> : vector<64xf32>
    %250 = vector.multi_reduction <maximumf>, %249, %cst_101 [1] : vector<64x64xf32> to vector<64xf32>
    %251 = vector.shape_cast %250 : vector<64xf32> to vector<64x1xf32>
    %252 = vector.broadcast %251 : vector<64x1xf32> to vector<64x64xf32>
    %253 = arith.subf %249, %252 : vector<64x64xf32>
    %254 = math.exp %253 : vector<64x64xf32>
    %cst_102 = arith.constant dense<0.000000e+00> : vector<64xf32>
    %255 = vector.multi_reduction <add>, %254, %cst_102 [1] : vector<64x64xf32> to vector<64xf32>
    %256 = vector.shape_cast %255 : vector<64xf32> to vector<64x1xf32>
    %257 = tpu.reciprocal %256 {approx = true} : vector<64x1xf32> -> vector<64x1xf32>
    %258 = vector.broadcast %257 : vector<64x1xf32> to vector<64x64xf32>
    %259 = arith.mulf %254, %258 : vector<64x64xf32>
    %260 = arith.truncf %259 : vector<64x64xf32> to vector<64x64xbf16>
    %261 = arith.truncf %246 : vector<64x16xf32> to vector<64x16xbf16>
    %cst_103 = arith.constant dense<0.000000e+00> : vector<64x16xf32>
    %262 = tpu.matmul %260, %261, %cst_103 {dimension_numbers = #tpu.dot_dimension_numbers<[1], [0], [0], [1], [0, 0, 1, 1], [], []>} : vector<64x64xbf16>, vector<64x16xbf16>, vector<64x16xf32> -> vector<64x16xf32>
    %263 = vector.extract_strided_slice %205 {offsets = [0, 48], sizes = [64, 16], strides = [1, 1]} : vector<64x192xf32> to vector<64x16xf32>
    %264 = vector.extract_strided_slice %205 {offsets = [0, 112], sizes = [64, 16], strides = [1, 1]} : vector<64x192xf32> to vector<64x16xf32>
    %265 = vector.extract_strided_slice %205 {offsets = [0, 176], sizes = [64, 16], strides = [1, 1]} : vector<64x192xf32> to vector<64x16xf32>
    %266 = arith.truncf %263 : vector<64x16xf32> to vector<64x16xbf16>
    %267 = arith.truncf %264 : vector<64x16xf32> to vector<64x16xbf16>
    %cst_104 = arith.constant dense<0.000000e+00> : vector<64x64xf32>
    %268 = tpu.matmul %266, %267, %cst_104 {dimension_numbers = #tpu.dot_dimension_numbers<[1], [1], [0], [0], [0, 0, 1, 0], [], []>} : vector<64x16xbf16>, vector<64x16xbf16>, vector<64x64xf32> -> vector<64x64xf32>
    %cst_105 = arith.constant dense<0xFF800000> : vector<64xf32>
    %269 = vector.multi_reduction <maximumf>, %268, %cst_105 [1] : vector<64x64xf32> to vector<64xf32>
    %270 = vector.shape_cast %269 : vector<64xf32> to vector<64x1xf32>
    %271 = vector.broadcast %270 : vector<64x1xf32> to vector<64x64xf32>
    %272 = arith.subf %268, %271 : vector<64x64xf32>
    %273 = math.exp %272 : vector<64x64xf32>
    %cst_106 = arith.constant dense<0.000000e+00> : vector<64xf32>
    %274 = vector.multi_reduction <add>, %273, %cst_106 [1] : vector<64x64xf32> to vector<64xf32>
    %275 = vector.shape_cast %274 : vector<64xf32> to vector<64x1xf32>
    %276 = tpu.reciprocal %275 {approx = true} : vector<64x1xf32> -> vector<64x1xf32>
    %277 = vector.broadcast %276 : vector<64x1xf32> to vector<64x64xf32>
    %278 = arith.mulf %273, %277 : vector<64x64xf32>
    %279 = arith.truncf %278 : vector<64x64xf32> to vector<64x64xbf16>
    %280 = arith.truncf %265 : vector<64x16xf32> to vector<64x16xbf16>
    %cst_107 = arith.constant dense<0.000000e+00> : vector<64x16xf32>
    %281 = tpu.matmul %279, %280, %cst_107 {dimension_numbers = #tpu.dot_dimension_numbers<[1], [0], [0], [1], [0, 0, 1, 1], [], []>} : vector<64x64xbf16>, vector<64x16xbf16>, vector<64x16xf32> -> vector<64x16xf32>
    %282 = tpu.concatenate %224, %243, %262, %281 in 1 : vector<64x16xf32>, vector<64x16xf32>, vector<64x16xf32>, vector<64x16xf32> -> vector<64x64xf32>
    %283 = arith.truncf %282 : vector<64x64xf32> to vector<64x64xbf16>
    %c1_108 = arith.constant 1 : index
    %c0_109 = arith.constant 0 : index
    %c0_110 = arith.constant 0 : index
    %284 = vector.load %arg8[%c1_108, %c0_109, %c0_110] : memref<2x64x64xbf16, #tpu.memory_space<vmem>>, vector<1x64x64xbf16>
    %285 = vector.shape_cast %284 : vector<1x64x64xbf16> to vector<64x64xbf16>
    %cst_111 = arith.constant dense<0.000000e+00> : vector<64x64xf32>
    %286 = tpu.matmul %283, %285, %cst_111 {dimension_numbers = #tpu.dot_dimension_numbers<[1], [0], [0], [1], [0, 0, 1, 1], [], []>} : vector<64x64xbf16>, vector<64x64xbf16>, vector<64x64xf32> -> vector<64x64xf32>
    %c1_112 = arith.constant 1 : index
    %c0_113 = arith.constant 0 : index
    %c0_114 = arith.constant 0 : index
    %287 = vector.load %arg9[%c1_112, %c0_113, %c0_114] : memref<2x1x64xf32, #tpu.memory_space<vmem>>, vector<1x1x64xf32>
    %288 = vector.shape_cast %287 : vector<1x1x64xf32> to vector<1x64xf32>
    %289 = vector.broadcast %288 : vector<1x64xf32> to vector<64x64xf32>
    %290 = arith.addf %286, %289 : vector<64x64xf32>
    %291 = arith.addf %173, %290 : vector<64x64xf32>
    %c1_115 = arith.constant 1 : index
    %c0_116 = arith.constant 0 : index
    %c0_117 = arith.constant 0 : index
    %292 = vector.load %arg10[%c1_115, %c0_116, %c0_117] : memref<2x1x64xf32, #tpu.memory_space<vmem>>, vector<1x1x64xf32>
    %293 = vector.shape_cast %292 : vector<1x1x64xf32> to vector<1x64xf32>
    %c1_118 = arith.constant 1 : index
    %c0_119 = arith.constant 0 : index
    %c0_120 = arith.constant 0 : index
    %294 = vector.load %arg11[%c1_118, %c0_119, %c0_120] : memref<2x1x64xf32, #tpu.memory_space<vmem>>, vector<1x1x64xf32>
    %295 = vector.shape_cast %294 : vector<1x1x64xf32> to vector<1x64xf32>
    %cst_121 = arith.constant dense<0.000000e+00> : vector<64xf32>
    %296 = vector.multi_reduction <add>, %291, %cst_121 [1] : vector<64x64xf32> to vector<64xf32>
    %297 = vector.shape_cast %296 : vector<64xf32> to vector<64x1xf32>
    %cst_122 = arith.constant 6.400000e+01 : f32
    %298 = vector.broadcast %cst_122 : f32 to vector<64x1xf32>
    %299 = arith.divf %297, %298 : vector<64x1xf32>
    %300 = vector.broadcast %299 : vector<64x1xf32> to vector<64x64xf32>
    %301 = arith.subf %291, %300 : vector<64x64xf32>
    %302 = arith.mulf %301, %301 : vector<64x64xf32>
    %cst_123 = arith.constant dense<0.000000e+00> : vector<64xf32>
    %303 = vector.multi_reduction <add>, %302, %cst_123 [1] : vector<64x64xf32> to vector<64xf32>
    %304 = vector.shape_cast %303 : vector<64xf32> to vector<64x1xf32>
    %cst_124 = arith.constant 6.400000e+01 : f32
    %305 = vector.broadcast %cst_124 : f32 to vector<64x1xf32>
    %306 = arith.divf %304, %305 : vector<64x1xf32>
    %cst_125 = arith.constant 9.99999997E-7 : f32
    %307 = vector.broadcast %cst_125 : f32 to vector<64x1xf32>
    %308 = arith.addf %306, %307 : vector<64x1xf32>
    %309 = math.rsqrt %308 : vector<64x1xf32>
    %310 = vector.broadcast %309 : vector<64x1xf32> to vector<64x64xf32>
    %311 = arith.mulf %301, %310 : vector<64x64xf32>
    %312 = vector.broadcast %293 : vector<1x64xf32> to vector<64x64xf32>
    %313 = arith.mulf %311, %312 : vector<64x64xf32>
    %314 = vector.broadcast %295 : vector<1x64xf32> to vector<64x64xf32>
    %315 = arith.addf %313, %314 : vector<64x64xf32>
    %316 = arith.truncf %315 : vector<64x64xf32> to vector<64x64xbf16>
    %c1_126 = arith.constant 1 : index
    %c0_127 = arith.constant 0 : index
    %c0_128 = arith.constant 0 : index
    %317 = vector.load %arg12[%c1_126, %c0_127, %c0_128] : memref<2x64x256xbf16, #tpu.memory_space<vmem>>, vector<1x64x256xbf16>
    %318 = vector.shape_cast %317 : vector<1x64x256xbf16> to vector<64x256xbf16>
    %cst_129 = arith.constant dense<0.000000e+00> : vector<64x256xf32>
    %319 = tpu.matmul %316, %318, %cst_129 {dimension_numbers = #tpu.dot_dimension_numbers<[1], [0], [0], [1], [0, 0, 1, 1], [], []>} : vector<64x64xbf16>, vector<64x256xbf16>, vector<64x256xf32> -> vector<64x256xf32>
    %c1_130 = arith.constant 1 : index
    %c0_131 = arith.constant 0 : index
    %c0_132 = arith.constant 0 : index
    %320 = vector.load %arg13[%c1_130, %c0_131, %c0_132] : memref<2x1x256xf32, #tpu.memory_space<vmem>>, vector<1x1x256xf32>
    %321 = vector.shape_cast %320 : vector<1x1x256xf32> to vector<1x256xf32>
    %322 = vector.broadcast %321 : vector<1x256xf32> to vector<64x256xf32>
    %323 = arith.addf %319, %322 : vector<64x256xf32>
    %cst_133 = arith.constant 5.000000e-01 : f32
    %324 = vector.broadcast %cst_133 : f32 to vector<64x256xf32>
    %325 = arith.mulf %324, %323 : vector<64x256xf32>
    %cst_134 = arith.constant 0.707106769 : f32
    %326 = vector.broadcast %cst_134 : f32 to vector<64x256xf32>
    %327 = arith.mulf %323, %326 : vector<64x256xf32>
    %328 = math.erf %327 : vector<64x256xf32>
    %cst_135 = arith.constant 1.000000e+00 : f32
    %329 = vector.broadcast %cst_135 : f32 to vector<64x256xf32>
    %330 = arith.addf %329, %328 : vector<64x256xf32>
    %331 = arith.mulf %325, %330 : vector<64x256xf32>
    %332 = arith.truncf %331 : vector<64x256xf32> to vector<64x256xbf16>
    %c1_136 = arith.constant 1 : index
    %c0_137 = arith.constant 0 : index
    %c0_138 = arith.constant 0 : index
    %333 = vector.load %arg14[%c1_136, %c0_137, %c0_138] : memref<2x256x64xbf16, #tpu.memory_space<vmem>>, vector<1x256x64xbf16>
    %334 = vector.shape_cast %333 : vector<1x256x64xbf16> to vector<256x64xbf16>
    %cst_139 = arith.constant dense<0.000000e+00> : vector<64x64xf32>
    %335 = tpu.matmul %332, %334, %cst_139 {dimension_numbers = #tpu.dot_dimension_numbers<[1], [0], [0], [1], [0, 0, 1, 1], [], []>} : vector<64x256xbf16>, vector<256x64xbf16>, vector<64x64xf32> -> vector<64x64xf32>
    %336 = arith.addf %291, %335 : vector<64x64xf32>
    %c1_140 = arith.constant 1 : index
    %c0_141 = arith.constant 0 : index
    %c0_142 = arith.constant 0 : index
    %337 = vector.load %arg15[%c1_140, %c0_141, %c0_142] : memref<2x1x64xf32, #tpu.memory_space<vmem>>, vector<1x1x64xf32>
    %338 = vector.shape_cast %337 : vector<1x1x64xf32> to vector<1x64xf32>
    %339 = vector.broadcast %338 : vector<1x64xf32> to vector<64x64xf32>
    %340 = arith.addf %336, %339 : vector<64x64xf32>
    %c0_143 = arith.constant 0 : index
    %c0_144 = arith.constant 0 : index
    %341 = vector.load %arg16[%c0_143, %c0_144] : memref<1x64xf32, #tpu.memory_space<vmem>>, vector<1x64xf32>
    %c0_145 = arith.constant 0 : index
    %c0_146 = arith.constant 0 : index
    %342 = vector.load %arg17[%c0_145, %c0_146] : memref<1x64xf32, #tpu.memory_space<vmem>>, vector<1x64xf32>
    %cst_147 = arith.constant dense<0.000000e+00> : vector<64xf32>
    %343 = vector.multi_reduction <add>, %340, %cst_147 [1] : vector<64x64xf32> to vector<64xf32>
    %344 = vector.shape_cast %343 : vector<64xf32> to vector<64x1xf32>
    %cst_148 = arith.constant 6.400000e+01 : f32
    %345 = vector.broadcast %cst_148 : f32 to vector<64x1xf32>
    %346 = arith.divf %344, %345 : vector<64x1xf32>
    %347 = vector.broadcast %346 : vector<64x1xf32> to vector<64x64xf32>
    %348 = arith.subf %340, %347 : vector<64x64xf32>
    %349 = arith.mulf %348, %348 : vector<64x64xf32>
    %cst_149 = arith.constant dense<0.000000e+00> : vector<64xf32>
    %350 = vector.multi_reduction <add>, %349, %cst_149 [1] : vector<64x64xf32> to vector<64xf32>
    %351 = vector.shape_cast %350 : vector<64xf32> to vector<64x1xf32>
    %cst_150 = arith.constant 6.400000e+01 : f32
    %352 = vector.broadcast %cst_150 : f32 to vector<64x1xf32>
    %353 = arith.divf %351, %352 : vector<64x1xf32>
    %cst_151 = arith.constant 9.99999997E-7 : f32
    %354 = vector.broadcast %cst_151 : f32 to vector<64x1xf32>
    %355 = arith.addf %353, %354 : vector<64x1xf32>
    %356 = math.rsqrt %355 : vector<64x1xf32>
    %357 = vector.broadcast %356 : vector<64x1xf32> to vector<64x64xf32>
    %358 = arith.mulf %348, %357 : vector<64x64xf32>
    %359 = vector.broadcast %341 : vector<1x64xf32> to vector<64x64xf32>
    %360 = arith.mulf %358, %359 : vector<64x64xf32>
    %361 = vector.broadcast %342 : vector<1x64xf32> to vector<64x64xf32>
    %362 = arith.addf %360, %361 : vector<64x64xf32>
    %c0_152 = arith.constant 0 : index
    %c0_153 = arith.constant 0 : index
    %c0_154 = arith.constant 0 : index
    %363 = vector.load %arg21[%c0_152, %c0_153, %c0_154] : memref<1x64x64xf32, #tpu.memory_space<vmem>>, vector<1x64x64xf32>
    %364 = vector.shape_cast %363 : vector<1x64x64xf32> to vector<64x64xf32>
    %365 = vector.shape_cast %362 : vector<64x64xf32> to vector<1x64x64xf32>
    tpu.vector_store %arg21[%c0_152, %c0_153, %c0_154], %365 {strides = array<i32>} : memref<1x64x64xf32, #tpu.memory_space<vmem>>, vector<1x64x64xf32>,
    %c0_155 = arith.constant 0 : index
    %c0_156 = arith.constant 0 : index
    %366 = vector.load %arg18[%c0_155, %c0_156] : memref<88x64xbf16, #tpu.memory_space<vmem>>, vector<88x64xbf16>
    %367 = arith.truncf %362 : vector<64x64xf32> to vector<64x64xbf16>
    %cst_157 = arith.constant dense<0.000000e+00> : vector<88x64xf32>
    %368 = tpu.matmul %366, %367, %cst_157 {dimension_numbers = #tpu.dot_dimension_numbers<[1], [0], [0], [1], [0, 0, 1, 1], [], []>} : vector<88x64xbf16>, vector<64x64xbf16>, vector<88x64xf32> -> vector<88x64xf32>
    %369 = arith.truncf %368 : vector<88x64xf32> to vector<88x64xbf16>
    %c0_158 = arith.constant 0 : index
    %c0_159 = arith.constant 0 : index
    %370 = vector.load %arg19[%c0_158, %c0_159] : memref<64x256xbf16, #tpu.memory_space<vmem>>, vector<64x256xbf16>
    %cst_160 = arith.constant dense<0.000000e+00> : vector<88x256xf32>
    %371 = tpu.matmul %369, %370, %cst_160 {dimension_numbers = #tpu.dot_dimension_numbers<[1], [0], [0], [1], [0, 0, 1, 1], [], []>} : vector<88x64xbf16>, vector<64x256xbf16>, vector<88x256xf32> -> vector<88x256xf32>
    %c0_161 = arith.constant 0 : index
    %c0_162 = arith.constant 0 : index
    %372 = vector.load %arg20[%c0_161, %c0_162] : memref<1x256xf32, #tpu.memory_space<vmem>>, vector<1x256xf32>
    %373 = vector.broadcast %372 : vector<1x256xf32> to vector<88x256xf32>
    %374 = arith.addf %371, %373 : vector<88x256xf32>
    %c0_163 = arith.constant 0 : index
    %c0_164 = arith.constant 0 : index
    %c0_165 = arith.constant 0 : index
    %375 = vector.load %arg22[%c0_163, %c0_164, %c0_165] : memref<1x88x256xf32, #tpu.memory_space<vmem>>, vector<1x88x256xf32>
    %376 = vector.shape_cast %375 : vector<1x88x256xf32> to vector<88x256xf32>
    %377 = vector.shape_cast %374 : vector<88x256xf32> to vector<1x88x256xf32>
    tpu.vector_store %arg22[%c0_163, %c0_164, %c0_165], %377 {strides = array<i32>} : memref<1x88x256xf32, #tpu.memory_space<vmem>>, vector<1x88x256xf32>,
    return
  }
  func.func @transform_0(%arg0: i32) -> (i32, i32, i32) {
    %c0_i32 = arith.constant 0 : i32
    %c0_i32_0 = arith.constant 0 : i32
    %c0_i32_1 = arith.constant 0 : i32
    return %arg0, %c0_i32, %c0_i32_0 : i32, i32, i32
  }
  func.func @transform_1(%arg0: i32) -> (i32, i32) {
    %c0_i32 = arith.constant 0 : i32
    %c0_i32_0 = arith.constant 0 : i32
    %c0_i32_1 = arith.constant 0 : i32
    return %c0_i32, %c0_i32_0 : i32, i32
  }
  func.func @transform_2(%arg0: i32) -> (i32, i32) {
    %c0_i32 = arith.constant 0 : i32
    %c0_i32_0 = arith.constant 0 : i32
    %c0_i32_1 = arith.constant 0 : i32
    return %c0_i32, %c0_i32_0 : i32, i32
  }
  func.func @transform_3(%arg0: i32) -> (i32, i32, i32) {
    %c0_i32 = arith.constant 0 : i32
    %c0_i32_0 = arith.constant 0 : i32
    %c0_i32_1 = arith.constant 0 : i32
    %c0_i32_2 = arith.constant 0 : i32
    return %c0_i32, %c0_i32_0, %c0_i32_1 : i32, i32, i32
  }
  func.func @transform_4(%arg0: i32) -> (i32, i32, i32) {
    %c0_i32 = arith.constant 0 : i32
    %c0_i32_0 = arith.constant 0 : i32
    %c0_i32_1 = arith.constant 0 : i32
    %c0_i32_2 = arith.constant 0 : i32
    return %c0_i32, %c0_i32_0, %c0_i32_1 : i32, i32, i32
  }
  func.func @transform_5(%arg0: i32) -> (i32, i32, i32) {
    %c0_i32 = arith.constant 0 : i32
    %c0_i32_0 = arith.constant 0 : i32
    %c0_i32_1 = arith.constant 0 : i32
    %c0_i32_2 = arith.constant 0 : i32
    return %c0_i32, %c0_i32_0, %c0_i32_1 : i32, i32, i32
  }
  func.func @transform_6(%arg0: i32) -> (i32, i32, i32) {
    %c0_i32 = arith.constant 0 : i32
    %c0_i32_0 = arith.constant 0 : i32
    %c0_i32_1 = arith.constant 0 : i32
    %c0_i32_2 = arith.constant 0 : i32
    return %c0_i32, %c0_i32_0, %c0_i32_1 : i32, i32, i32
  }
  func.func @transform_7(%arg0: i32) -> (i32, i32, i32) {
    %c0_i32 = arith.constant 0 : i32
    %c0_i32_0 = arith.constant 0 : i32
    %c0_i32_1 = arith.constant 0 : i32
    %c0_i32_2 = arith.constant 0 : i32
    return %c0_i32, %c0_i32_0, %c0_i32_1 : i32, i32, i32
  }
  func.func @transform_8(%arg0: i32) -> (i32, i32, i32) {
    %c0_i32 = arith.constant 0 : i32
    %c0_i32_0 = arith.constant 0 : i32
    %c0_i32_1 = arith.constant 0 : i32
    %c0_i32_2 = arith.constant 0 : i32
    return %c0_i32, %c0_i32_0, %c0_i32_1 : i32, i32, i32
  }
  func.func @transform_9(%arg0: i32) -> (i32, i32, i32) {
    %c0_i32 = arith.constant 0 : i32
    %c0_i32_0 = arith.constant 0 : i32
    %c0_i32_1 = arith.constant 0 : i32
    %c0_i32_2 = arith.constant 0 : i32
    return %c0_i32, %c0_i32_0, %c0_i32_1 : i32, i32, i32
  }
  func.func @transform_10(%arg0: i32) -> (i32, i32, i32) {
    %c0_i32 = arith.constant 0 : i32
    %c0_i32_0 = arith.constant 0 : i32
    %c0_i32_1 = arith.constant 0 : i32
    %c0_i32_2 = arith.constant 0 : i32
    return %c0_i32, %c0_i32_0, %c0_i32_1 : i32, i32, i32
  }
  func.func @transform_11(%arg0: i32) -> (i32, i32, i32) {
    %c0_i32 = arith.constant 0 : i32
    %c0_i32_0 = arith.constant 0 : i32
    %c0_i32_1 = arith.constant 0 : i32
    %c0_i32_2 = arith.constant 0 : i32
    return %c0_i32, %c0_i32_0, %c0_i32_1 : i32, i32, i32
  }
  func.func @transform_12(%arg0: i32) -> (i32, i32, i32) {
    %c0_i32 = arith.constant 0 : i32
    %c0_i32_0 = arith.constant 0 : i32
    %c0_i32_1 = arith.constant 0 : i32
    %c0_i32_2 = arith.constant 0 : i32
    return %c0_i32, %c0_i32_0, %c0_i32_1 : i32, i32, i32
  }
  func.func @transform_13(%arg0: i32) -> (i32, i32, i32) {
    %c0_i32 = arith.constant 0 : i32
    %c0_i32_0 = arith.constant 0 : i32
    %c0_i32_1 = arith.constant 0 : i32
    %c0_i32_2 = arith.constant 0 : i32
    return %c0_i32, %c0_i32_0, %c0_i32_1 : i32, i32, i32
  }
  func.func @transform_14(%arg0: i32) -> (i32, i32, i32) {
    %c0_i32 = arith.constant 0 : i32
    %c0_i32_0 = arith.constant 0 : i32
    %c0_i32_1 = arith.constant 0 : i32
    %c0_i32_2 = arith.constant 0 : i32
    return %c0_i32, %c0_i32_0, %c0_i32_1 : i32, i32, i32
  }
  func.func @transform_15(%arg0: i32) -> (i32, i32) {
    %c0_i32 = arith.constant 0 : i32
    %c0_i32_0 = arith.constant 0 : i32
    %c0_i32_1 = arith.constant 0 : i32
    return %c0_i32, %c0_i32_0 : i32, i32
  }
  func.func @transform_16(%arg0: i32) -> (i32, i32) {
    %c0_i32 = arith.constant 0 : i32
    %c0_i32_0 = arith.constant 0 : i32
    %c0_i32_1 = arith.constant 0 : i32
    return %c0_i32, %c0_i32_0 : i32, i32
  }
  func.func @transform_17(%arg0: i32) -> (i32, i32) {
    %c0_i32 = arith.constant 0 : i32
    %c0_i32_0 = arith.constant 0 : i32
    %c0_i32_1 = arith.constant 0 : i32
    return %c0_i32, %c0_i32_0 : i32, i32
  }
  func.func @transform_18(%arg0: i32) -> (i32, i32) {
    %c0_i32 = arith.constant 0 : i32
    %c0_i32_0 = arith.constant 0 : i32
    %c0_i32_1 = arith.constant 0 : i32
    return %c0_i32, %c0_i32_0 : i32, i32
  }
  func.func @transform_19(%arg0: i32) -> (i32, i32) {
    %c0_i32 = arith.constant 0 : i32
    %c0_i32_0 = arith.constant 0 : i32
    %c0_i32_1 = arith.constant 0 : i32
    return %c0_i32, %c0_i32_0 : i32, i32
  }
  func.func @transform_20(%arg0: i32) -> (i32, i32, i32) {
    %c0_i32 = arith.constant 0 : i32
    %c0_i32_0 = arith.constant 0 : i32
    %c0_i32_1 = arith.constant 0 : i32
    return %arg0, %c0_i32, %c0_i32_0 : i32, i32, i32
  }
  func.func @transform_21(%arg0: i32) -> (i32, i32, i32) {
    %c0_i32 = arith.constant 0 : i32
    %c0_i32_0 = arith.constant 0 : i32
    %c0_i32_1 = arith.constant 0 : i32
    return %arg0, %c0_i32, %c0_i32_0 : i32, i32, i32
  }
}

module attributes {stable_mosaic.version = 11 : i64} {
  func.func @_middle_kernel(%arg0: i32, %arg1: memref<1x64x64xf32, #tpu.memory_space<vmem>>, %arg2: memref<64x64xf32, #tpu.memory_space<vmem>>, %arg3: memref<16x64xbf16, #tpu.memory_space<vmem>>, %arg4: memref<144x16xbf16, #tpu.memory_space<vmem>>, %arg5: memref<4x16xbf16, #tpu.memory_space<vmem>>, %arg6: memref<36x4xbf16, #tpu.memory_space<vmem>>, %arg7: memref<1x64xf32, #tpu.memory_space<vmem>>, %arg8: memref<1x64xf32, #tpu.memory_space<vmem>>, %arg9: memref<576x64xbf16, #tpu.memory_space<vmem>>, %arg10: memref<1x64xf32, #tpu.memory_space<vmem>>, %arg11: memref<1x64xf32, #tpu.memory_space<vmem>>, %arg12: memref<1x64xf32, #tpu.memory_space<vmem>>, %arg13: memref<576x64xbf16, #tpu.memory_space<vmem>>, %arg14: memref<1x64xf32, #tpu.memory_space<vmem>>, %arg15: memref<1x64xf32, #tpu.memory_space<vmem>>, %arg16: memref<1x64xf32, #tpu.memory_space<vmem>>, %arg17: memref<576x64xbf16, #tpu.memory_space<vmem>>, %arg18: memref<1x64xf32, #tpu.memory_space<vmem>>, %arg19: memref<1x64xf32, #tpu.memory_space<vmem>>, %arg20: memref<1x64xf32, #tpu.memory_space<vmem>>, %arg21: memref<576x64xbf16, #tpu.memory_space<vmem>>, %arg22: memref<1x64xf32, #tpu.memory_space<vmem>>, %arg23: memref<64x128xbf16, #tpu.memory_space<vmem>>, %arg24: memref<1x128xf32, #tpu.memory_space<vmem>>, %arg25: memref<1x4x128xf32, #tpu.memory_space<vmem>>) attributes {dimension_semantics = [#tpu.dimension_semantics<parallel>], iteration_bounds = array<i64: 2>, scalar_prefetch = 0 : i64, scratch_operands = 0 : i64, tpu.core_type = #tpu.core_type<tc>, window_params = [{transform_indices = @transform_0, window_bounds = array<i64: 1, 64, 64>}, {pipeline_mode = #tpu.pipeline_mode<synchronous>, transform_indices = @transform_1, window_bounds = array<i64: 64, 64>}, {pipeline_mode = #tpu.pipeline_mode<synchronous>, transform_indices = @transform_2, window_bounds = array<i64: 16, 64>}, {pipeline_mode = #tpu.pipeline_mode<synchronous>, transform_indices = @transform_3, window_bounds = array<i64: 144, 16>}, {pipeline_mode = #tpu.pipeline_mode<synchronous>, transform_indices = @transform_4, window_bounds = array<i64: 4, 16>}, {pipeline_mode = #tpu.pipeline_mode<synchronous>, transform_indices = @transform_5, window_bounds = array<i64: 36, 4>}, {pipeline_mode = #tpu.pipeline_mode<synchronous>, transform_indices = @transform_6, window_bounds = array<i64: 1, 64>}, {pipeline_mode = #tpu.pipeline_mode<synchronous>, transform_indices = @transform_7, window_bounds = array<i64: 1, 64>}, {pipeline_mode = #tpu.pipeline_mode<synchronous>, transform_indices = @transform_8, window_bounds = array<i64: 576, 64>}, {pipeline_mode = #tpu.pipeline_mode<synchronous>, transform_indices = @transform_9, window_bounds = array<i64: 1, 64>}, {pipeline_mode = #tpu.pipeline_mode<synchronous>, transform_indices = @transform_10, window_bounds = array<i64: 1, 64>}, {pipeline_mode = #tpu.pipeline_mode<synchronous>, transform_indices = @transform_11, window_bounds = array<i64: 1, 64>}, {pipeline_mode = #tpu.pipeline_mode<synchronous>, transform_indices = @transform_12, window_bounds = array<i64: 576, 64>}, {pipeline_mode = #tpu.pipeline_mode<synchronous>, transform_indices = @transform_13, window_bounds = array<i64: 1, 64>}, {pipeline_mode = #tpu.pipeline_mode<synchronous>, transform_indices = @transform_14, window_bounds = array<i64: 1, 64>}, {pipeline_mode = #tpu.pipeline_mode<synchronous>, transform_indices = @transform_15, window_bounds = array<i64: 1, 64>}, {pipeline_mode = #tpu.pipeline_mode<synchronous>, transform_indices = @transform_16, window_bounds = array<i64: 576, 64>}, {pipeline_mode = #tpu.pipeline_mode<synchronous>, transform_indices = @transform_17, window_bounds = array<i64: 1, 64>}, {pipeline_mode = #tpu.pipeline_mode<synchronous>, transform_indices = @transform_18, window_bounds = array<i64: 1, 64>}, {pipeline_mode = #tpu.pipeline_mode<synchronous>, transform_indices = @transform_19, window_bounds = array<i64: 1, 64>}, {pipeline_mode = #tpu.pipeline_mode<synchronous>, transform_indices = @transform_20, window_bounds = array<i64: 576, 64>}, {pipeline_mode = #tpu.pipeline_mode<synchronous>, transform_indices = @transform_21, window_bounds = array<i64: 1, 64>}, {pipeline_mode = #tpu.pipeline_mode<synchronous>, transform_indices = @transform_22, window_bounds = array<i64: 64, 128>}, {pipeline_mode = #tpu.pipeline_mode<synchronous>, transform_indices = @transform_23, window_bounds = array<i64: 1, 128>}, {transform_indices = @transform_24, window_bounds = array<i64: 1, 4, 128>}]} {
    %c0 = arith.constant 0 : index
    %c0_0 = arith.constant 0 : index
    %0 = vector.load %arg2[%c0, %c0_0] : memref<64x64xf32, #tpu.memory_space<vmem>>, vector<64x64xf32>
    %c0_1 = arith.constant 0 : index
    %c0_2 = arith.constant 0 : index
    %c0_3 = arith.constant 0 : index
    %1 = vector.load %arg1[%c0_1, %c0_2, %c0_3] : memref<1x64x64xf32, #tpu.memory_space<vmem>>, vector<1x64x64xf32>
    %2 = vector.shape_cast %1 : vector<1x64x64xf32> to vector<64x64xf32>
    %cst = arith.constant dense<0.000000e+00> : vector<64xf32>
    %3 = vector.multi_reduction <add>, %2, %cst [0] : vector<64x64xf32> to vector<64xf32>
    %4 = vector.shape_cast %3 : vector<64xf32> to vector<1x64xf32>
    %cst_4 = arith.constant 7.812500e-03 : f32
    %5 = vector.broadcast %cst_4 : f32 to vector<1x64xf32>
    %6 = arith.mulf %4, %5 : vector<1x64xf32>
    %cst_5 = arith.constant dense<0.000000e+00> : vector<1x64xf32>
    %7 = tpu.matmul %6, %0, %cst_5 {dimension_numbers = #tpu.dot_dimension_numbers<[1], [0], [0], [1], [0, 0, 1, 1], [], []>} : vector<1x64xf32>, vector<64x64xf32>, vector<1x64xf32> -> vector<1x64xf32>
    %8 = vector.broadcast %7 : vector<1x64xf32> to vector<64x64xf32>
    %9 = arith.subf %2, %8 : vector<64x64xf32>
    %10 = arith.mulf %9, %9 : vector<64x64xf32>
    %cst_6 = arith.constant dense<0.000000e+00> : vector<64xf32>
    %11 = vector.multi_reduction <add>, %10, %cst_6 [0] : vector<64x64xf32> to vector<64xf32>
    %12 = vector.shape_cast %11 : vector<64xf32> to vector<1x64xf32>
    %cst_7 = arith.constant 7.812500e-03 : f32
    %13 = vector.broadcast %cst_7 : f32 to vector<1x64xf32>
    %14 = arith.mulf %12, %13 : vector<1x64xf32>
    %cst_8 = arith.constant dense<0.000000e+00> : vector<1x64xf32>
    %15 = tpu.matmul %14, %0, %cst_8 {dimension_numbers = #tpu.dot_dimension_numbers<[1], [0], [0], [1], [0, 0, 1, 1], [], []>} : vector<1x64xf32>, vector<64x64xf32>, vector<1x64xf32> -> vector<1x64xf32>
    %cst_9 = arith.constant 9.99999997E-7 : f32
    %16 = vector.broadcast %cst_9 : f32 to vector<1x64xf32>
    %17 = arith.addf %15, %16 : vector<1x64xf32>
    %18 = math.rsqrt %17 : vector<1x64xf32>
    %19 = vector.broadcast %18 : vector<1x64xf32> to vector<64x64xf32>
    %20 = arith.mulf %9, %19 : vector<64x64xf32>
    %c0_10 = arith.constant 0 : index
    %c0_11 = arith.constant 0 : index
    %21 = vector.load %arg7[%c0_10, %c0_11] : memref<1x64xf32, #tpu.memory_space<vmem>>, vector<1x64xf32>
    %22 = vector.broadcast %21 : vector<1x64xf32> to vector<64x64xf32>
    %23 = arith.mulf %20, %22 : vector<64x64xf32>
    %c0_12 = arith.constant 0 : index
    %c0_13 = arith.constant 0 : index
    %24 = vector.load %arg8[%c0_12, %c0_13] : memref<1x64xf32, #tpu.memory_space<vmem>>, vector<1x64xf32>
    %25 = vector.broadcast %24 : vector<1x64xf32> to vector<64x64xf32>
    %26 = arith.addf %23, %25 : vector<64x64xf32>
    %27 = arith.negf %26 : vector<64x64xf32>
    %28 = math.exp %27 : vector<64x64xf32>
    %cst_14 = arith.constant 1.000000e+00 : f32
    %29 = vector.broadcast %cst_14 : f32 to vector<64x64xf32>
    %30 = arith.addf %29, %28 : vector<64x64xf32>
    %31 = arith.divf %29, %30 : vector<64x64xf32>
    %32 = arith.mulf %26, %31 : vector<64x64xf32>
    %c0_15 = arith.constant 0 : index
    %c0_16 = arith.constant 0 : index
    %33 = vector.load %arg3[%c0_15, %c0_16] : memref<16x64xbf16, #tpu.memory_space<vmem>>, vector<16x64xbf16>
    %34 = arith.truncf %2 : vector<64x64xf32> to vector<64x64xbf16>
    %cst_17 = arith.constant dense<0.000000e+00> : vector<16x64xf32>
    %35 = tpu.matmul %33, %34, %cst_17 {dimension_numbers = #tpu.dot_dimension_numbers<[1], [0], [0], [1], [0, 0, 1, 1], [], []>} : vector<16x64xbf16>, vector<64x64xbf16>, vector<16x64xf32> -> vector<16x64xf32>
    %36 = arith.truncf %32 : vector<64x64xf32> to vector<64x64xbf16>
    %cst_18 = arith.constant dense<0.000000e+00> : vector<16x64xf32>
    %37 = tpu.matmul %33, %36, %cst_18 {dimension_numbers = #tpu.dot_dimension_numbers<[1], [0], [0], [1], [0, 0, 1, 1], [], []>} : vector<16x64xbf16>, vector<64x64xbf16>, vector<16x64xf32> -> vector<16x64xf32>
    %c0_19 = arith.constant 0 : index
    %c0_20 = arith.constant 0 : index
    %38 = vector.load %arg4[%c0_19, %c0_20] : memref<144x16xbf16, #tpu.memory_space<vmem>>, vector<144x16xbf16>
    %39 = arith.truncf %37 : vector<16x64xf32> to vector<16x64xbf16>
    %cst_21 = arith.constant dense<0.000000e+00> : vector<144x64xf32>
    %40 = tpu.matmul %38, %39, %cst_21 {dimension_numbers = #tpu.dot_dimension_numbers<[1], [0], [0], [1], [0, 0, 1, 1], [], []>} : vector<144x16xbf16>, vector<16x64xbf16>, vector<144x64xf32> -> vector<144x64xf32>
    %41 = vector.extract_strided_slice %40 {offsets = [0, 0], sizes = [16, 64], strides = [1, 1]} : vector<144x64xf32> to vector<16x64xf32>
    %42 = vector.extract_strided_slice %40 {offsets = [16, 0], sizes = [16, 64], strides = [1, 1]} : vector<144x64xf32> to vector<16x64xf32>
    %43 = vector.extract_strided_slice %40 {offsets = [32, 0], sizes = [16, 64], strides = [1, 1]} : vector<144x64xf32> to vector<16x64xf32>
    %44 = vector.extract_strided_slice %40 {offsets = [48, 0], sizes = [16, 64], strides = [1, 1]} : vector<144x64xf32> to vector<16x64xf32>
    %45 = vector.extract_strided_slice %40 {offsets = [64, 0], sizes = [16, 64], strides = [1, 1]} : vector<144x64xf32> to vector<16x64xf32>
    %46 = vector.extract_strided_slice %40 {offsets = [80, 0], sizes = [16, 64], strides = [1, 1]} : vector<144x64xf32> to vector<16x64xf32>
    %47 = vector.extract_strided_slice %40 {offsets = [96, 0], sizes = [16, 64], strides = [1, 1]} : vector<144x64xf32> to vector<16x64xf32>
    %48 = vector.extract_strided_slice %40 {offsets = [112, 0], sizes = [16, 64], strides = [1, 1]} : vector<144x64xf32> to vector<16x64xf32>
    %49 = vector.extract_strided_slice %40 {offsets = [128, 0], sizes = [16, 64], strides = [1, 1]} : vector<144x64xf32> to vector<16x64xf32>
    %50 = tpu.concatenate %41, %42, %43, %44, %45, %46, %47, %48, %49 in 1 : vector<16x64xf32>, vector<16x64xf32>, vector<16x64xf32>, vector<16x64xf32>, vector<16x64xf32>, vector<16x64xf32>, vector<16x64xf32>, vector<16x64xf32>, vector<16x64xf32> -> vector<16x576xf32>
    %51 = arith.truncf %50 : vector<16x576xf32> to vector<16x576xbf16>
    %c0_22 = arith.constant 0 : index
    %c0_23 = arith.constant 0 : index
    %52 = vector.load %arg9[%c0_22, %c0_23] : memref<576x64xbf16, #tpu.memory_space<vmem>>, vector<576x64xbf16>
    %cst_24 = arith.constant dense<0.000000e+00> : vector<16x64xf32>
    %53 = tpu.matmul %51, %52, %cst_24 {dimension_numbers = #tpu.dot_dimension_numbers<[1], [0], [0], [1], [0, 0, 1, 1], [], []>} : vector<16x576xbf16>, vector<576x64xbf16>, vector<16x64xf32> -> vector<16x64xf32>
    %c0_25 = arith.constant 0 : index
    %c0_26 = arith.constant 0 : index
    %54 = vector.load %arg10[%c0_25, %c0_26] : memref<1x64xf32, #tpu.memory_space<vmem>>, vector<1x64xf32>
    %55 = vector.broadcast %54 : vector<1x64xf32> to vector<16x64xf32>
    %56 = arith.addf %53, %55 : vector<16x64xf32>
    %cst_27 = arith.constant dense<0.000000e+00> : vector<64xf32>
    %57 = vector.multi_reduction <add>, %56, %cst_27 [0] : vector<16x64xf32> to vector<64xf32>
    %58 = vector.shape_cast %57 : vector<64xf32> to vector<1x64xf32>
    %cst_28 = arith.constant 3.125000e-02 : f32
    %59 = vector.broadcast %cst_28 : f32 to vector<1x64xf32>
    %60 = arith.mulf %58, %59 : vector<1x64xf32>
    %cst_29 = arith.constant dense<0.000000e+00> : vector<1x64xf32>
    %61 = tpu.matmul %60, %0, %cst_29 {dimension_numbers = #tpu.dot_dimension_numbers<[1], [0], [0], [1], [0, 0, 1, 1], [], []>} : vector<1x64xf32>, vector<64x64xf32>, vector<1x64xf32> -> vector<1x64xf32>
    %62 = vector.broadcast %61 : vector<1x64xf32> to vector<16x64xf32>
    %63 = arith.subf %56, %62 : vector<16x64xf32>
    %64 = arith.mulf %63, %63 : vector<16x64xf32>
    %cst_30 = arith.constant dense<0.000000e+00> : vector<64xf32>
    %65 = vector.multi_reduction <add>, %64, %cst_30 [0] : vector<16x64xf32> to vector<64xf32>
    %66 = vector.shape_cast %65 : vector<64xf32> to vector<1x64xf32>
    %cst_31 = arith.constant 3.125000e-02 : f32
    %67 = vector.broadcast %cst_31 : f32 to vector<1x64xf32>
    %68 = arith.mulf %66, %67 : vector<1x64xf32>
    %cst_32 = arith.constant dense<0.000000e+00> : vector<1x64xf32>
    %69 = tpu.matmul %68, %0, %cst_32 {dimension_numbers = #tpu.dot_dimension_numbers<[1], [0], [0], [1], [0, 0, 1, 1], [], []>} : vector<1x64xf32>, vector<64x64xf32>, vector<1x64xf32> -> vector<1x64xf32>
    %cst_33 = arith.constant 9.99999997E-7 : f32
    %70 = vector.broadcast %cst_33 : f32 to vector<1x64xf32>
    %71 = arith.addf %69, %70 : vector<1x64xf32>
    %72 = math.rsqrt %71 : vector<1x64xf32>
    %73 = vector.broadcast %72 : vector<1x64xf32> to vector<16x64xf32>
    %74 = arith.mulf %63, %73 : vector<16x64xf32>
    %c0_34 = arith.constant 0 : index
    %c0_35 = arith.constant 0 : index
    %75 = vector.load %arg11[%c0_34, %c0_35] : memref<1x64xf32, #tpu.memory_space<vmem>>, vector<1x64xf32>
    %76 = vector.broadcast %75 : vector<1x64xf32> to vector<16x64xf32>
    %77 = arith.mulf %74, %76 : vector<16x64xf32>
    %c0_36 = arith.constant 0 : index
    %c0_37 = arith.constant 0 : index
    %78 = vector.load %arg12[%c0_36, %c0_37] : memref<1x64xf32, #tpu.memory_space<vmem>>, vector<1x64xf32>
    %79 = vector.broadcast %78 : vector<1x64xf32> to vector<16x64xf32>
    %80 = arith.addf %77, %79 : vector<16x64xf32>
    %81 = arith.negf %80 : vector<16x64xf32>
    %82 = math.exp %81 : vector<16x64xf32>
    %cst_38 = arith.constant 1.000000e+00 : f32
    %83 = vector.broadcast %cst_38 : f32 to vector<16x64xf32>
    %84 = arith.addf %83, %82 : vector<16x64xf32>
    %85 = arith.divf %83, %84 : vector<16x64xf32>
    %86 = arith.mulf %80, %85 : vector<16x64xf32>
    %c0_39 = arith.constant 0 : index
    %c0_40 = arith.constant 0 : index
    %87 = vector.load %arg4[%c0_39, %c0_40] : memref<144x16xbf16, #tpu.memory_space<vmem>>, vector<144x16xbf16>
    %88 = arith.truncf %86 : vector<16x64xf32> to vector<16x64xbf16>
    %cst_41 = arith.constant dense<0.000000e+00> : vector<144x64xf32>
    %89 = tpu.matmul %87, %88, %cst_41 {dimension_numbers = #tpu.dot_dimension_numbers<[1], [0], [0], [1], [0, 0, 1, 1], [], []>} : vector<144x16xbf16>, vector<16x64xbf16>, vector<144x64xf32> -> vector<144x64xf32>
    %90 = vector.extract_strided_slice %89 {offsets = [0, 0], sizes = [16, 64], strides = [1, 1]} : vector<144x64xf32> to vector<16x64xf32>
    %91 = vector.extract_strided_slice %89 {offsets = [16, 0], sizes = [16, 64], strides = [1, 1]} : vector<144x64xf32> to vector<16x64xf32>
    %92 = vector.extract_strided_slice %89 {offsets = [32, 0], sizes = [16, 64], strides = [1, 1]} : vector<144x64xf32> to vector<16x64xf32>
    %93 = vector.extract_strided_slice %89 {offsets = [48, 0], sizes = [16, 64], strides = [1, 1]} : vector<144x64xf32> to vector<16x64xf32>
    %94 = vector.extract_strided_slice %89 {offsets = [64, 0], sizes = [16, 64], strides = [1, 1]} : vector<144x64xf32> to vector<16x64xf32>
    %95 = vector.extract_strided_slice %89 {offsets = [80, 0], sizes = [16, 64], strides = [1, 1]} : vector<144x64xf32> to vector<16x64xf32>
    %96 = vector.extract_strided_slice %89 {offsets = [96, 0], sizes = [16, 64], strides = [1, 1]} : vector<144x64xf32> to vector<16x64xf32>
    %97 = vector.extract_strided_slice %89 {offsets = [112, 0], sizes = [16, 64], strides = [1, 1]} : vector<144x64xf32> to vector<16x64xf32>
    %98 = vector.extract_strided_slice %89 {offsets = [128, 0], sizes = [16, 64], strides = [1, 1]} : vector<144x64xf32> to vector<16x64xf32>
    %99 = tpu.concatenate %90, %91, %92, %93, %94, %95, %96, %97, %98 in 1 : vector<16x64xf32>, vector<16x64xf32>, vector<16x64xf32>, vector<16x64xf32>, vector<16x64xf32>, vector<16x64xf32>, vector<16x64xf32>, vector<16x64xf32>, vector<16x64xf32> -> vector<16x576xf32>
    %100 = arith.truncf %99 : vector<16x576xf32> to vector<16x576xbf16>
    %c0_42 = arith.constant 0 : index
    %c0_43 = arith.constant 0 : index
    %101 = vector.load %arg13[%c0_42, %c0_43] : memref<576x64xbf16, #tpu.memory_space<vmem>>, vector<576x64xbf16>
    %cst_44 = arith.constant dense<0.000000e+00> : vector<16x64xf32>
    %102 = tpu.matmul %100, %101, %cst_44 {dimension_numbers = #tpu.dot_dimension_numbers<[1], [0], [0], [1], [0, 0, 1, 1], [], []>} : vector<16x576xbf16>, vector<576x64xbf16>, vector<16x64xf32> -> vector<16x64xf32>
    %c0_45 = arith.constant 0 : index
    %c0_46 = arith.constant 0 : index
    %103 = vector.load %arg14[%c0_45, %c0_46] : memref<1x64xf32, #tpu.memory_space<vmem>>, vector<1x64xf32>
    %104 = vector.broadcast %103 : vector<1x64xf32> to vector<16x64xf32>
    %105 = arith.addf %102, %104 : vector<16x64xf32>
    %106 = arith.addf %35, %105 : vector<16x64xf32>
    %cst_47 = arith.constant dense<0.000000e+00> : vector<64xf32>
    %107 = vector.multi_reduction <add>, %106, %cst_47 [0] : vector<16x64xf32> to vector<64xf32>
    %108 = vector.shape_cast %107 : vector<64xf32> to vector<1x64xf32>
    %cst_48 = arith.constant 3.125000e-02 : f32
    %109 = vector.broadcast %cst_48 : f32 to vector<1x64xf32>
    %110 = arith.mulf %108, %109 : vector<1x64xf32>
    %cst_49 = arith.constant dense<0.000000e+00> : vector<1x64xf32>
    %111 = tpu.matmul %110, %0, %cst_49 {dimension_numbers = #tpu.dot_dimension_numbers<[1], [0], [0], [1], [0, 0, 1, 1], [], []>} : vector<1x64xf32>, vector<64x64xf32>, vector<1x64xf32> -> vector<1x64xf32>
    %112 = vector.broadcast %111 : vector<1x64xf32> to vector<16x64xf32>
    %113 = arith.subf %106, %112 : vector<16x64xf32>
    %114 = arith.mulf %113, %113 : vector<16x64xf32>
    %cst_50 = arith.constant dense<0.000000e+00> : vector<64xf32>
    %115 = vector.multi_reduction <add>, %114, %cst_50 [0] : vector<16x64xf32> to vector<64xf32>
    %116 = vector.shape_cast %115 : vector<64xf32> to vector<1x64xf32>
    %cst_51 = arith.constant 3.125000e-02 : f32
    %117 = vector.broadcast %cst_51 : f32 to vector<1x64xf32>
    %118 = arith.mulf %116, %117 : vector<1x64xf32>
    %cst_52 = arith.constant dense<0.000000e+00> : vector<1x64xf32>
    %119 = tpu.matmul %118, %0, %cst_52 {dimension_numbers = #tpu.dot_dimension_numbers<[1], [0], [0], [1], [0, 0, 1, 1], [], []>} : vector<1x64xf32>, vector<64x64xf32>, vector<1x64xf32> -> vector<1x64xf32>
    %cst_53 = arith.constant 9.99999997E-7 : f32
    %120 = vector.broadcast %cst_53 : f32 to vector<1x64xf32>
    %121 = arith.addf %119, %120 : vector<1x64xf32>
    %122 = math.rsqrt %121 : vector<1x64xf32>
    %123 = vector.broadcast %122 : vector<1x64xf32> to vector<16x64xf32>
    %124 = arith.mulf %113, %123 : vector<16x64xf32>
    %c0_54 = arith.constant 0 : index
    %c0_55 = arith.constant 0 : index
    %125 = vector.load %arg15[%c0_54, %c0_55] : memref<1x64xf32, #tpu.memory_space<vmem>>, vector<1x64xf32>
    %126 = vector.broadcast %125 : vector<1x64xf32> to vector<16x64xf32>
    %127 = arith.mulf %124, %126 : vector<16x64xf32>
    %c0_56 = arith.constant 0 : index
    %c0_57 = arith.constant 0 : index
    %128 = vector.load %arg16[%c0_56, %c0_57] : memref<1x64xf32, #tpu.memory_space<vmem>>, vector<1x64xf32>
    %129 = vector.broadcast %128 : vector<1x64xf32> to vector<16x64xf32>
    %130 = arith.addf %127, %129 : vector<16x64xf32>
    %131 = arith.negf %130 : vector<16x64xf32>
    %132 = math.exp %131 : vector<16x64xf32>
    %cst_58 = arith.constant 1.000000e+00 : f32
    %133 = vector.broadcast %cst_58 : f32 to vector<16x64xf32>
    %134 = arith.addf %133, %132 : vector<16x64xf32>
    %135 = arith.divf %133, %134 : vector<16x64xf32>
    %136 = arith.mulf %130, %135 : vector<16x64xf32>
    %c0_59 = arith.constant 0 : index
    %c0_60 = arith.constant 0 : index
    %137 = vector.load %arg5[%c0_59, %c0_60] : memref<4x16xbf16, #tpu.memory_space<vmem>>, vector<4x16xbf16>
    %138 = arith.truncf %106 : vector<16x64xf32> to vector<16x64xbf16>
    %cst_61 = arith.constant dense<0.000000e+00> : vector<4x64xf32>
    %139 = tpu.matmul %137, %138, %cst_61 {dimension_numbers = #tpu.dot_dimension_numbers<[1], [0], [0], [1], [0, 0, 1, 1], [], []>} : vector<4x16xbf16>, vector<16x64xbf16>, vector<4x64xf32> -> vector<4x64xf32>
    %140 = arith.truncf %136 : vector<16x64xf32> to vector<16x64xbf16>
    %cst_62 = arith.constant dense<0.000000e+00> : vector<4x64xf32>
    %141 = tpu.matmul %137, %140, %cst_62 {dimension_numbers = #tpu.dot_dimension_numbers<[1], [0], [0], [1], [0, 0, 1, 1], [], []>} : vector<4x16xbf16>, vector<16x64xbf16>, vector<4x64xf32> -> vector<4x64xf32>
    %c0_63 = arith.constant 0 : index
    %c0_64 = arith.constant 0 : index
    %142 = vector.load %arg6[%c0_63, %c0_64] : memref<36x4xbf16, #tpu.memory_space<vmem>>, vector<36x4xbf16>
    %143 = arith.truncf %141 : vector<4x64xf32> to vector<4x64xbf16>
    %cst_65 = arith.constant dense<0.000000e+00> : vector<36x64xf32>
    %144 = tpu.matmul %142, %143, %cst_65 {dimension_numbers = #tpu.dot_dimension_numbers<[1], [0], [0], [1], [0, 0, 1, 1], [], []>} : vector<36x4xbf16>, vector<4x64xbf16>, vector<36x64xf32> -> vector<36x64xf32>
    %145 = vector.extract_strided_slice %144 {offsets = [0, 0], sizes = [4, 64], strides = [1, 1]} : vector<36x64xf32> to vector<4x64xf32>
    %146 = vector.extract_strided_slice %144 {offsets = [4, 0], sizes = [4, 64], strides = [1, 1]} : vector<36x64xf32> to vector<4x64xf32>
    %147 = vector.extract_strided_slice %144 {offsets = [8, 0], sizes = [4, 64], strides = [1, 1]} : vector<36x64xf32> to vector<4x64xf32>
    %148 = vector.extract_strided_slice %144 {offsets = [12, 0], sizes = [4, 64], strides = [1, 1]} : vector<36x64xf32> to vector<4x64xf32>
    %149 = vector.extract_strided_slice %144 {offsets = [16, 0], sizes = [4, 64], strides = [1, 1]} : vector<36x64xf32> to vector<4x64xf32>
    %150 = vector.extract_strided_slice %144 {offsets = [20, 0], sizes = [4, 64], strides = [1, 1]} : vector<36x64xf32> to vector<4x64xf32>
    %151 = vector.extract_strided_slice %144 {offsets = [24, 0], sizes = [4, 64], strides = [1, 1]} : vector<36x64xf32> to vector<4x64xf32>
    %152 = vector.extract_strided_slice %144 {offsets = [28, 0], sizes = [4, 64], strides = [1, 1]} : vector<36x64xf32> to vector<4x64xf32>
    %153 = vector.extract_strided_slice %144 {offsets = [32, 0], sizes = [4, 64], strides = [1, 1]} : vector<36x64xf32> to vector<4x64xf32>
    %154 = tpu.concatenate %145, %146, %147, %148, %149, %150, %151, %152, %153 in 1 : vector<4x64xf32>, vector<4x64xf32>, vector<4x64xf32>, vector<4x64xf32>, vector<4x64xf32>, vector<4x64xf32>, vector<4x64xf32>, vector<4x64xf32>, vector<4x64xf32> -> vector<4x576xf32>
    %155 = arith.truncf %154 : vector<4x576xf32> to vector<4x576xbf16>
    %c0_66 = arith.constant 0 : index
    %c0_67 = arith.constant 0 : index
    %156 = vector.load %arg17[%c0_66, %c0_67] : memref<576x64xbf16, #tpu.memory_space<vmem>>, vector<576x64xbf16>
    %cst_68 = arith.constant dense<0.000000e+00> : vector<4x64xf32>
    %157 = tpu.matmul %155, %156, %cst_68 {dimension_numbers = #tpu.dot_dimension_numbers<[1], [0], [0], [1], [0, 0, 1, 1], [], []>} : vector<4x576xbf16>, vector<576x64xbf16>, vector<4x64xf32> -> vector<4x64xf32>
    %c0_69 = arith.constant 0 : index
    %c0_70 = arith.constant 0 : index
    %158 = vector.load %arg18[%c0_69, %c0_70] : memref<1x64xf32, #tpu.memory_space<vmem>>, vector<1x64xf32>
    %159 = vector.broadcast %158 : vector<1x64xf32> to vector<4x64xf32>
    %160 = arith.addf %157, %159 : vector<4x64xf32>
    %cst_71 = arith.constant dense<0.000000e+00> : vector<64xf32>
    %161 = vector.multi_reduction <add>, %160, %cst_71 [0] : vector<4x64xf32> to vector<64xf32>
    %162 = vector.shape_cast %161 : vector<64xf32> to vector<1x64xf32>
    %cst_72 = arith.constant 1.250000e-01 : f32
    %163 = vector.broadcast %cst_72 : f32 to vector<1x64xf32>
    %164 = arith.mulf %162, %163 : vector<1x64xf32>
    %cst_73 = arith.constant dense<0.000000e+00> : vector<1x64xf32>
    %165 = tpu.matmul %164, %0, %cst_73 {dimension_numbers = #tpu.dot_dimension_numbers<[1], [0], [0], [1], [0, 0, 1, 1], [], []>} : vector<1x64xf32>, vector<64x64xf32>, vector<1x64xf32> -> vector<1x64xf32>
    %166 = vector.broadcast %165 : vector<1x64xf32> to vector<4x64xf32>
    %167 = arith.subf %160, %166 : vector<4x64xf32>
    %168 = arith.mulf %167, %167 : vector<4x64xf32>
    %cst_74 = arith.constant dense<0.000000e+00> : vector<64xf32>
    %169 = vector.multi_reduction <add>, %168, %cst_74 [0] : vector<4x64xf32> to vector<64xf32>
    %170 = vector.shape_cast %169 : vector<64xf32> to vector<1x64xf32>
    %cst_75 = arith.constant 1.250000e-01 : f32
    %171 = vector.broadcast %cst_75 : f32 to vector<1x64xf32>
    %172 = arith.mulf %170, %171 : vector<1x64xf32>
    %cst_76 = arith.constant dense<0.000000e+00> : vector<1x64xf32>
    %173 = tpu.matmul %172, %0, %cst_76 {dimension_numbers = #tpu.dot_dimension_numbers<[1], [0], [0], [1], [0, 0, 1, 1], [], []>} : vector<1x64xf32>, vector<64x64xf32>, vector<1x64xf32> -> vector<1x64xf32>
    %cst_77 = arith.constant 9.99999997E-7 : f32
    %174 = vector.broadcast %cst_77 : f32 to vector<1x64xf32>
    %175 = arith.addf %173, %174 : vector<1x64xf32>
    %176 = math.rsqrt %175 : vector<1x64xf32>
    %177 = vector.broadcast %176 : vector<1x64xf32> to vector<4x64xf32>
    %178 = arith.mulf %167, %177 : vector<4x64xf32>
    %c0_78 = arith.constant 0 : index
    %c0_79 = arith.constant 0 : index
    %179 = vector.load %arg19[%c0_78, %c0_79] : memref<1x64xf32, #tpu.memory_space<vmem>>, vector<1x64xf32>
    %180 = vector.broadcast %179 : vector<1x64xf32> to vector<4x64xf32>
    %181 = arith.mulf %178, %180 : vector<4x64xf32>
    %c0_80 = arith.constant 0 : index
    %c0_81 = arith.constant 0 : index
    %182 = vector.load %arg20[%c0_80, %c0_81] : memref<1x64xf32, #tpu.memory_space<vmem>>, vector<1x64xf32>
    %183 = vector.broadcast %182 : vector<1x64xf32> to vector<4x64xf32>
    %184 = arith.addf %181, %183 : vector<4x64xf32>
    %185 = arith.negf %184 : vector<4x64xf32>
    %186 = math.exp %185 : vector<4x64xf32>
    %cst_82 = arith.constant 1.000000e+00 : f32
    %187 = vector.broadcast %cst_82 : f32 to vector<4x64xf32>
    %188 = arith.addf %187, %186 : vector<4x64xf32>
    %189 = arith.divf %187, %188 : vector<4x64xf32>
    %190 = arith.mulf %184, %189 : vector<4x64xf32>
    %c0_83 = arith.constant 0 : index
    %c0_84 = arith.constant 0 : index
    %191 = vector.load %arg6[%c0_83, %c0_84] : memref<36x4xbf16, #tpu.memory_space<vmem>>, vector<36x4xbf16>
    %192 = arith.truncf %190 : vector<4x64xf32> to vector<4x64xbf16>
    %cst_85 = arith.constant dense<0.000000e+00> : vector<36x64xf32>
    %193 = tpu.matmul %191, %192, %cst_85 {dimension_numbers = #tpu.dot_dimension_numbers<[1], [0], [0], [1], [0, 0, 1, 1], [], []>} : vector<36x4xbf16>, vector<4x64xbf16>, vector<36x64xf32> -> vector<36x64xf32>
    %194 = vector.extract_strided_slice %193 {offsets = [0, 0], sizes = [4, 64], strides = [1, 1]} : vector<36x64xf32> to vector<4x64xf32>
    %195 = vector.extract_strided_slice %193 {offsets = [4, 0], sizes = [4, 64], strides = [1, 1]} : vector<36x64xf32> to vector<4x64xf32>
    %196 = vector.extract_strided_slice %193 {offsets = [8, 0], sizes = [4, 64], strides = [1, 1]} : vector<36x64xf32> to vector<4x64xf32>
    %197 = vector.extract_strided_slice %193 {offsets = [12, 0], sizes = [4, 64], strides = [1, 1]} : vector<36x64xf32> to vector<4x64xf32>
    %198 = vector.extract_strided_slice %193 {offsets = [16, 0], sizes = [4, 64], strides = [1, 1]} : vector<36x64xf32> to vector<4x64xf32>
    %199 = vector.extract_strided_slice %193 {offsets = [20, 0], sizes = [4, 64], strides = [1, 1]} : vector<36x64xf32> to vector<4x64xf32>
    %200 = vector.extract_strided_slice %193 {offsets = [24, 0], sizes = [4, 64], strides = [1, 1]} : vector<36x64xf32> to vector<4x64xf32>
    %201 = vector.extract_strided_slice %193 {offsets = [28, 0], sizes = [4, 64], strides = [1, 1]} : vector<36x64xf32> to vector<4x64xf32>
    %202 = vector.extract_strided_slice %193 {offsets = [32, 0], sizes = [4, 64], strides = [1, 1]} : vector<36x64xf32> to vector<4x64xf32>
    %203 = tpu.concatenate %194, %195, %196, %197, %198, %199, %200, %201, %202 in 1 : vector<4x64xf32>, vector<4x64xf32>, vector<4x64xf32>, vector<4x64xf32>, vector<4x64xf32>, vector<4x64xf32>, vector<4x64xf32>, vector<4x64xf32>, vector<4x64xf32> -> vector<4x576xf32>
    %204 = arith.truncf %203 : vector<4x576xf32> to vector<4x576xbf16>
    %c0_86 = arith.constant 0 : index
    %c0_87 = arith.constant 0 : index
    %205 = vector.load %arg21[%c0_86, %c0_87] : memref<576x64xbf16, #tpu.memory_space<vmem>>, vector<576x64xbf16>
    %cst_88 = arith.constant dense<0.000000e+00> : vector<4x64xf32>
    %206 = tpu.matmul %204, %205, %cst_88 {dimension_numbers = #tpu.dot_dimension_numbers<[1], [0], [0], [1], [0, 0, 1, 1], [], []>} : vector<4x576xbf16>, vector<576x64xbf16>, vector<4x64xf32> -> vector<4x64xf32>
    %c0_89 = arith.constant 0 : index
    %c0_90 = arith.constant 0 : index
    %207 = vector.load %arg22[%c0_89, %c0_90] : memref<1x64xf32, #tpu.memory_space<vmem>>, vector<1x64xf32>
    %208 = vector.broadcast %207 : vector<1x64xf32> to vector<4x64xf32>
    %209 = arith.addf %206, %208 : vector<4x64xf32>
    %210 = arith.addf %139, %209 : vector<4x64xf32>
    %211 = arith.truncf %210 : vector<4x64xf32> to vector<4x64xbf16>
    %c0_91 = arith.constant 0 : index
    %c0_92 = arith.constant 0 : index
    %212 = vector.load %arg23[%c0_91, %c0_92] : memref<64x128xbf16, #tpu.memory_space<vmem>>, vector<64x128xbf16>
    %cst_93 = arith.constant dense<0.000000e+00> : vector<4x128xf32>
    %213 = tpu.matmul %211, %212, %cst_93 {dimension_numbers = #tpu.dot_dimension_numbers<[1], [0], [0], [1], [0, 0, 1, 1], [], []>} : vector<4x64xbf16>, vector<64x128xbf16>, vector<4x128xf32> -> vector<4x128xf32>
    %c0_94 = arith.constant 0 : index
    %c0_95 = arith.constant 0 : index
    %214 = vector.load %arg24[%c0_94, %c0_95] : memref<1x128xf32, #tpu.memory_space<vmem>>, vector<1x128xf32>
    %215 = vector.broadcast %214 : vector<1x128xf32> to vector<4x128xf32>
    %216 = arith.addf %213, %215 : vector<4x128xf32>
    %c0_96 = arith.constant 0 : index
    %c0_97 = arith.constant 0 : index
    %c0_98 = arith.constant 0 : index
    %217 = vector.load %arg25[%c0_96, %c0_97, %c0_98] : memref<1x4x128xf32, #tpu.memory_space<vmem>>, vector<1x4x128xf32>
    %218 = vector.shape_cast %217 : vector<1x4x128xf32> to vector<4x128xf32>
    %219 = vector.shape_cast %216 : vector<4x128xf32> to vector<1x4x128xf32>
    tpu.vector_store %arg25[%c0_96, %c0_97, %c0_98], %219 {strides = array<i32>} : memref<1x4x128xf32, #tpu.memory_space<vmem>>, vector<1x4x128xf32>,
    return
  }
  func.func @transform_0(%arg0: i32) -> (i32, i32, i32) {
    %c0_i32 = arith.constant 0 : i32
    %c0_i32_0 = arith.constant 0 : i32
    %c0_i32_1 = arith.constant 0 : i32
    return %arg0, %c0_i32, %c0_i32_0 : i32, i32, i32
  }
  func.func @transform_1(%arg0: i32) -> (i32, i32) {
    %c0_i32 = arith.constant 0 : i32
    %c0_i32_0 = arith.constant 0 : i32
    %c0_i32_1 = arith.constant 0 : i32
    return %c0_i32, %c0_i32_0 : i32, i32
  }
  func.func @transform_2(%arg0: i32) -> (i32, i32) {
    %c0_i32 = arith.constant 0 : i32
    %c0_i32_0 = arith.constant 0 : i32
    %c0_i32_1 = arith.constant 0 : i32
    return %c0_i32, %c0_i32_0 : i32, i32
  }
  func.func @transform_3(%arg0: i32) -> (i32, i32) {
    %c0_i32 = arith.constant 0 : i32
    %c0_i32_0 = arith.constant 0 : i32
    %c0_i32_1 = arith.constant 0 : i32
    return %c0_i32, %c0_i32_0 : i32, i32
  }
  func.func @transform_4(%arg0: i32) -> (i32, i32) {
    %c0_i32 = arith.constant 0 : i32
    %c0_i32_0 = arith.constant 0 : i32
    %c0_i32_1 = arith.constant 0 : i32
    return %c0_i32, %c0_i32_0 : i32, i32
  }
  func.func @transform_5(%arg0: i32) -> (i32, i32) {
    %c0_i32 = arith.constant 0 : i32
    %c0_i32_0 = arith.constant 0 : i32
    %c0_i32_1 = arith.constant 0 : i32
    return %c0_i32, %c0_i32_0 : i32, i32
  }
  func.func @transform_6(%arg0: i32) -> (i32, i32) {
    %c0_i32 = arith.constant 0 : i32
    %c0_i32_0 = arith.constant 0 : i32
    %c0_i32_1 = arith.constant 0 : i32
    return %c0_i32, %c0_i32_0 : i32, i32
  }
  func.func @transform_7(%arg0: i32) -> (i32, i32) {
    %c0_i32 = arith.constant 0 : i32
    %c0_i32_0 = arith.constant 0 : i32
    %c0_i32_1 = arith.constant 0 : i32
    return %c0_i32, %c0_i32_0 : i32, i32
  }
  func.func @transform_8(%arg0: i32) -> (i32, i32) {
    %c0_i32 = arith.constant 0 : i32
    %c0_i32_0 = arith.constant 0 : i32
    %c0_i32_1 = arith.constant 0 : i32
    return %c0_i32, %c0_i32_0 : i32, i32
  }
  func.func @transform_9(%arg0: i32) -> (i32, i32) {
    %c0_i32 = arith.constant 0 : i32
    %c0_i32_0 = arith.constant 0 : i32
    %c0_i32_1 = arith.constant 0 : i32
    return %c0_i32, %c0_i32_0 : i32, i32
  }
  func.func @transform_10(%arg0: i32) -> (i32, i32) {
    %c0_i32 = arith.constant 0 : i32
    %c0_i32_0 = arith.constant 0 : i32
    %c0_i32_1 = arith.constant 0 : i32
    return %c0_i32, %c0_i32_0 : i32, i32
  }
  func.func @transform_11(%arg0: i32) -> (i32, i32) {
    %c0_i32 = arith.constant 0 : i32
    %c0_i32_0 = arith.constant 0 : i32
    %c0_i32_1 = arith.constant 0 : i32
    return %c0_i32, %c0_i32_0 : i32, i32
  }
  func.func @transform_12(%arg0: i32) -> (i32, i32) {
    %c0_i32 = arith.constant 0 : i32
    %c0_i32_0 = arith.constant 0 : i32
    %c0_i32_1 = arith.constant 0 : i32
    return %c0_i32, %c0_i32_0 : i32, i32
  }
  func.func @transform_13(%arg0: i32) -> (i32, i32) {
    %c0_i32 = arith.constant 0 : i32
    %c0_i32_0 = arith.constant 0 : i32
    %c0_i32_1 = arith.constant 0 : i32
    return %c0_i32, %c0_i32_0 : i32, i32
  }
  func.func @transform_14(%arg0: i32) -> (i32, i32) {
    %c0_i32 = arith.constant 0 : i32
    %c0_i32_0 = arith.constant 0 : i32
    %c0_i32_1 = arith.constant 0 : i32
    return %c0_i32, %c0_i32_0 : i32, i32
  }
  func.func @transform_15(%arg0: i32) -> (i32, i32) {
    %c0_i32 = arith.constant 0 : i32
    %c0_i32_0 = arith.constant 0 : i32
    %c0_i32_1 = arith.constant 0 : i32
    return %c0_i32, %c0_i32_0 : i32, i32
  }
  func.func @transform_16(%arg0: i32) -> (i32, i32) {
    %c0_i32 = arith.constant 0 : i32
    %c0_i32_0 = arith.constant 0 : i32
    %c0_i32_1 = arith.constant 0 : i32
    return %c0_i32, %c0_i32_0 : i32, i32
  }
  func.func @transform_17(%arg0: i32) -> (i32, i32) {
    %c0_i32 = arith.constant 0 : i32
    %c0_i32_0 = arith.constant 0 : i32
    %c0_i32_1 = arith.constant 0 : i32
    return %c0_i32, %c0_i32_0 : i32, i32
  }
  func.func @transform_18(%arg0: i32) -> (i32, i32) {
    %c0_i32 = arith.constant 0 : i32
    %c0_i32_0 = arith.constant 0 : i32
    %c0_i32_1 = arith.constant 0 : i32
    return %c0_i32, %c0_i32_0 : i32, i32
  }
  func.func @transform_19(%arg0: i32) -> (i32, i32) {
    %c0_i32 = arith.constant 0 : i32
    %c0_i32_0 = arith.constant 0 : i32
    %c0_i32_1 = arith.constant 0 : i32
    return %c0_i32, %c0_i32_0 : i32, i32
  }
  func.func @transform_20(%arg0: i32) -> (i32, i32) {
    %c0_i32 = arith.constant 0 : i32
    %c0_i32_0 = arith.constant 0 : i32
    %c0_i32_1 = arith.constant 0 : i32
    return %c0_i32, %c0_i32_0 : i32, i32
  }
  func.func @transform_21(%arg0: i32) -> (i32, i32) {
    %c0_i32 = arith.constant 0 : i32
    %c0_i32_0 = arith.constant 0 : i32
    %c0_i32_1 = arith.constant 0 : i32
    return %c0_i32, %c0_i32_0 : i32, i32
  }
  func.func @transform_22(%arg0: i32) -> (i32, i32) {
    %c0_i32 = arith.constant 0 : i32
    %c0_i32_0 = arith.constant 0 : i32
    %c0_i32_1 = arith.constant 0 : i32
    return %c0_i32, %c0_i32_0 : i32, i32
  }
  func.func @transform_23(%arg0: i32) -> (i32, i32) {
    %c0_i32 = arith.constant 0 : i32
    %c0_i32_0 = arith.constant 0 : i32
    %c0_i32_1 = arith.constant 0 : i32
    return %c0_i32, %c0_i32_0 : i32, i32
  }
  func.func @transform_24(%arg0: i32) -> (i32, i32, i32) {
    %c0_i32 = arith.constant 0 : i32
    %c0_i32_0 = arith.constant 0 : i32
    %c0_i32_1 = arith.constant 0 : i32
    return %arg0, %c0_i32, %c0_i32_0 : i32, i32, i32
  }
}

</mosaic_0001>

<llo_original>
// kernel: style_pyramid_forward.3
$region0: #{style_pyramid_forward.3}
  #allocation0 [shape = 'u32[]', space=smem, size = 0x4, offset = 0x4, fixed_abs, tag = 'smem constant byte address 0x4 - core index']
  #allocation1 [shape = 'u32[144,128]{1,0:T(1,128)}', space=vmem, size = 0x12000, scoped, tag = 'internal scratch']
  %s0 = inlined_call_operand.vmem [shape: f32[2,64,64], index: 0, kind: input, shape index: {}]
  %s1 = inlined_call_operand.vmem [shape: f32[64,64], index: 1, kind: input, shape index: {}]
  %s2 = inlined_call_operand.vmem [shape: bf16[16,64], index: 2, kind: input, shape index: {}]
  %s3 = inlined_call_operand.vmem [shape: bf16[144,16], index: 3, kind: input, shape index: {}]
  %s4 = inlined_call_operand.vmem [shape: bf16[4,16], index: 4, kind: input, shape index: {}]
  %s5 = inlined_call_operand.vmem [shape: bf16[36,4], index: 5, kind: input, shape index: {}]
  %s6 = inlined_call_operand.vmem [shape: f32[1,64], index: 6, kind: input, shape index: {}]
  %s7 = inlined_call_operand.vmem [shape: f32[1,64], index: 7, kind: input, shape index: {}]
  %s8 = inlined_call_operand.vmem [shape: bf16[576,64], index: 8, kind: input, shape index: {}]
  %s9 = inlined_call_operand.vmem [shape: f32[1,64], index: 9, kind: input, shape index: {}]
  %s10 = inlined_call_operand.vmem [shape: f32[1,64], index: 10, kind: input, shape index: {}]
  %s11 = inlined_call_operand.vmem [shape: f32[1,64], index: 11, kind: input, shape index: {}]
  %s12 = inlined_call_operand.vmem [shape: bf16[576,64], index: 12, kind: input, shape index: {}]
  %s13 = inlined_call_operand.vmem [shape: f32[1,64], index: 13, kind: input, shape index: {}]
  %s14 = inlined_call_operand.vmem [shape: f32[1,64], index: 14, kind: input, shape index: {}]
  %s15 = inlined_call_operand.vmem [shape: f32[1,64], index: 15, kind: input, shape index: {}]
  %s16 = inlined_call_operand.vmem [shape: bf16[576,64], index: 16, kind: input, shape index: {}]
  %s17 = inlined_call_operand.vmem [shape: f32[1,64], index: 17, kind: input, shape index: {}]
  %s18 = inlined_call_operand.vmem [shape: f32[1,64], index: 18, kind: input, shape index: {}]
  %s19 = inlined_call_operand.vmem [shape: f32[1,64], index: 19, kind: input, shape index: {}]
  %s20 = inlined_call_operand.vmem [shape: bf16[576,64], index: 20, kind: input, shape index: {}]
  %s21 = inlined_call_operand.vmem [shape: f32[1,64], index: 21, kind: input, shape index: {}]
  %s22 = inlined_call_operand.vmem [shape: bf16[64,128], index: 22, kind: input, shape index: {}]
  %s23 = inlined_call_operand.vmem [shape: f32[1,128], index: 23, kind: input, shape index: {}]
  %s24 = inlined_call_operand.hbm [shape: f32[2,4,128], index: 24, kind: output, shape index: {}]
  %s25 = sld [smem:[#allocation0]]
  $region129: #{style_pyramid_forward.3} parent=0
    _
  %s27 = ssub.s32 1, %s25
  %s28 = scalar_select 0, %s27, %s25
  $region1: #{style_pyramid_forward.3} parent=0
    #allocation2 [shape = 'u8[4096]{0}', space=vmem, size = 0x1000, scoped, tag = 'output window, operand 0']
    #allocation3 [shape = 's32[2]{0}', space=sflag, size = 0x8, scoped, tag = 'scoped memory for style_pyramid_forward.3']
    %29 = vsyncpa [#allocation3], 0
    %s30 = scalar_lea.sflag [#allocation3], 1
    %31 = vsyncpa %s30, 0
    loop: start=0, step=1, limit=4
    $region2: #{style_pyramid_forward.3} parent=1 // loop_pre_header
      _
    $region3: #{style_pyramid_forward.3} parent=1 // loop_header
      %s33 = sphi 0, %s37
      %p34 = scmp.ge.s32.totalorder %s33, 4
      %s43 = sphi 0, %s45
      %s46 = sphi 0, %s43
      %s47 = sphi 0, %s46
      %s63 = sphi 0, %s47
      %s67 = sphi 0, %s67
      %s69 = sphi 0, %s67
      %s70 = sphi 0, %s69
      %s84 = sphi 0, %s70
      %s88 = sphi 0, %s88
      %s90 = sphi 0, %s88
      %s91 = sphi 0, %s90
      %s105 = sphi 0, %s91
      %s109 = sphi 0, %s109
      %s111 = sphi 0, %s109
      %s112 = sphi 0, %s111
      %s126 = sphi 0, %s112
      %s130 = sphi 0, %s130
      %s132 = sphi 0, %s130
      %s133 = sphi 0, %s132
      %s147 = sphi 0, %s133
      %s151 = sphi 0, %s151
      %s153 = sphi 0, %s151
      %s154 = sphi 0, %s153
      %s168 = sphi 0, %s154
      %s172 = sphi 0, %s172
      %s174 = sphi 0, %s172
      %s175 = sphi 0, %s174
      %s189 = sphi 0, %s175
      %s193 = sphi 0, %s193
      %s195 = sphi 0, %s193
      %s196 = sphi 0, %s195
      %s210 = sphi 0, %s196
      %s214 = sphi 0, %s214
      %s216 = sphi 0, %s214
      %s217 = sphi 0, %s216
      %s231 = sphi 0, %s217
      %s235 = sphi 0, %s235
      %s237 = sphi 0, %s235
      %s238 = sphi 0, %s237
      %s252 = sphi 0, %s238
      %s256 = sphi 0, %s256
      %s258 = sphi 0, %s256
      %s259 = sphi 0, %s258
      %s273 = sphi 0, %s259
      %s277 = sphi 0, %s277
      %s279 = sphi 0, %s277
      %s280 = sphi 0, %s279
      %s294 = sphi 0, %s280
      %s298 = sphi 0, %s298
      %s300 = sphi 0, %s298
      %s301 = sphi 0, %s300
      %s315 = sphi 0, %s301
      %s319 = sphi 0, %s319
      %s321 = sphi 0, %s319
      %s322 = sphi 0, %s321
      %s336 = sphi 0, %s322
      %s340 = sphi 0, %s340
      %s342 = sphi 0, %s340
      %s343 = sphi 0, %s342
      %s357 = sphi 0, %s343
      %s361 = sphi 0, %s361
      %s363 = sphi 0, %s361
      %s364 = sphi 0, %s363
      %s378 = sphi 0, %s364
      %s382 = sphi 0, %s382
      %s384 = sphi 0, %s382
      %s385 = sphi 0, %s384
      %s399 = sphi 0, %s385
      %s403 = sphi 0, %s403
      %s405 = sphi 0, %s403
      %s406 = sphi 0, %s405
      %s420 = sphi 0, %s406
      %s424 = sphi 0, %s424
      %s426 = sphi 0, %s424
      %s427 = sphi 0, %s426
      %s441 = sphi 0, %s427
      %s445 = sphi 0, %s445
      %s447 = sphi 0, %s445
      %s448 = sphi 0, %s447
      %s462 = sphi 0, %s448
      %s466 = sphi 0, %s466
      %s468 = sphi 0, %s466
      %s469 = sphi 0, %s468
      %s483 = sphi 0, %s469
      %s487 = sphi 0, %s487
      %s489 = sphi 0, %s487
      %s490 = sphi 0, %s489
      %s504 = sphi 0, %s490
      %s508 = sphi 0, %s508
      %s510 = sphi 0, %s508
      %s511 = sphi 0, %s510
      %s525 = sphi 0, %s511
      %s529 = sphi 0, %s529
      %s531 = sphi 0, %s529
      %s532 = sphi 0, %s531
      %s546 = sphi 0, %s532
      %s552 = sphi 0, %s554
      %s555 = sphi 0, %s552
      %s556 = sphi 0, %s555
      %s572 = sphi 0, %s556
    $region4: #{style_pyramid_forward.3} parent=1 // loop_header_branch
      %36 = sbr.rel (%p34) target = $region8
    $region5: #{style_pyramid_forward.3} parent=1 // loop_body
      %s38 = ssub.s32 %s33, 1
      %s39 = ssub.s32 %s33, 2
      %s40 = sadd.s32 %s33, 1
      %s41 = ssub.s32 %s33, %s40
      %p42 = scmp.eq.s32.totalorder %s41, 0
      %s44 = sadd.s32 %s43, 1
      %s45 = scalar_select %p42, %s43, %s44
      %p48 = pneg %p42
      %p49 = scmp.eq.s32.totalorder %s33, 1
      %p50 = por %p48, %p49
      %p51 = scmp.ne.s32.totalorder %s43, %s46
      %p52 = scmp.eq.s32.totalorder %s33, 0
      %p53 = por %p51, %p52
      %p54 = scmp.ne.s32.totalorder %s43, %s46
      %p55 = scmp.eq.s32.totalorder %s38, 1
      %p56 = por %p54, %p55
      %p57 = scmp.ne.s32.totalorder %s46, %s47
      %p58 = scmp.eq.s32.totalorder %s38, 0
      %p59 = por %p57, %p58
      %p60 = scmp.ne.s32.totalorder %s46, %s47
      %p61 = scmp.eq.s32.totalorder %s39, 1
      %p62 = por %p60, %p61
      %p64 = scmp.ne.s32.totalorder %s47, %s63
      %p65 = scmp.eq.s32.totalorder %s39, 0
      %p66 = por %p64, %p65
      %s68 = sadd.s32 %s67, 1
      %p71 = scmp.eq.s32.totalorder %s33, 1
      %p72 = scmp.ne.s32.totalorder %s67, %s69
      %p73 = scmp.eq.s32.totalorder %s33, 0
      %p74 = por %p72, %p73
      %p75 = scmp.ne.s32.totalorder %s67, %s69
      %p76 = scmp.eq.s32.totalorder %s38, 1
      %p77 = por %p75, %p76
      %p78 = scmp.ne.s32.totalorder %s69, %s70
      %p79 = scmp.eq.s32.totalorder %s38, 0
      %p80 = por %p78, %p79
      %p81 = scmp.ne.s32.totalorder %s69, %s70
      %p82 = scmp.eq.s32.totalorder %s39, 1
      %p83 = por %p81, %p82
      %p85 = scmp.ne.s32.totalorder %s70, %s84
      %p86 = scmp.eq.s32.totalorder %s39, 0
      %p87 = por %p85, %p86
      %s89 = sadd.s32 %s88, 1
      %p92 = scmp.eq.s32.totalorder %s33, 1
      %p93 = scmp.ne.s32.totalorder %s88, %s90
      %p94 = scmp.eq.s32.totalorder %s33, 0
      %p95 = por %p93, %p94
      %p96 = scmp.ne.s32.totalorder %s88, %s90
      %p97 = scmp.eq.s32.totalorder %s38, 1
      %p98 = por %p96, %p97
      %p99 = scmp.ne.s32.totalorder %s90, %s91
      %p100 = scmp.eq.s32.totalorder %s38, 0
      %p101 = por %p99, %p100
      %p102 = scmp.ne.s32.totalorder %s90, %s91
      %p103 = scmp.eq.s32.totalorder %s39, 1
      %p104 = por %p102, %p103
      %p106 = scmp.ne.s32.totalorder %s91, %s105
      %p107 = scmp.eq.s32.totalorder %s39, 0
      %p108 = por %p106, %p107
      %s110 = sadd.s32 %s109, 1
      %p113 = scmp.eq.s32.totalorder %s33, 1
      %p114 = scmp.ne.s32.totalorder %s109, %s111
      %p115 = scmp.eq.s32.totalorder %s33, 0
      %p116 = por %p114, %p115
      %p117 = scmp.ne.s32.totalorder %s109, %s111
      %p118 = scmp.eq.s32.totalorder %s38, 1
      %p119 = por %p117, %p118
      %p120 = scmp.ne.s32.totalorder %s111, %s112
      %p121 = scmp.eq.s32.totalorder %s38, 0
      %p122 = por %p120, %p121
      %p123 = scmp.ne.s32.totalorder %s111, %s112
      %p124 = scmp.eq.s32.totalorder %s39, 1
      %p125 = por %p123, %p124
      %p127 = scmp.ne.s32.totalorder %s112, %s126
      %p128 = scmp.eq.s32.totalorder %s39, 0
      %p129 = por %p127, %p128
      %s131 = sadd.s32 %s130, 1
      %p134 = scmp.eq.s32.totalorder %s33, 1
      %p135 = scmp.ne.s32.totalorder %s130, %s132
      %p136 = scmp.eq.s32.totalorder %s33, 0
      %p137 = por %p135, %p136
      %p138 = scmp.ne.s32.totalorder %s130, %s132
      %p139 = scmp.eq.s32.totalorder %s38, 1
      %p140 = por %p138, %p139
      %p141 = scmp.ne.s32.totalorder %s132, %s133
      %p142 = scmp.eq.s32.totalorder %s38, 0
      %p143 = por %p141, %p142
      %p144 = scmp.ne.s32.totalorder %s132, %s133
      %p145 = scmp.eq.s32.totalorder %s39, 1
      %p146 = por %p144, %p145
      %p148 = scmp.ne.s32.totalorder %s133, %s147
      %p149 = scmp.eq.s32.totalorder %s39, 0
      %p150 = por %p148, %p149
      %s152 = sadd.s32 %s151, 1
      %p155 = scmp.eq.s32.totalorder %s33, 1
      %p156 = scmp.ne.s32.totalorder %s151, %s153
      %p157 = scmp.eq.s32.totalorder %s33, 0
      %p158 = por %p156, %p157
      %p159 = scmp.ne.s32.totalorder %s151, %s153
      %p160 = scmp.eq.s32.totalorder %s38, 1
      %p161 = por %p159, %p160
      %p162 = scmp.ne.s32.totalorder %s153, %s154
      %p163 = scmp.eq.s32.totalorder %s38, 0
      %p164 = por %p162, %p163
      %p165 = scmp.ne.s32.totalorder %s153, %s154
      %p166 = scmp.eq.s32.totalorder %s39, 1
      %p167 = por %p165, %p166
      %p169 = scmp.ne.s32.totalorder %s154, %s168
      %p170 = scmp.eq.s32.totalorder %s39, 0
      %p171 = por %p169, %p170
      %s173 = sadd.s32 %s172, 1
      %p176 = scmp.eq.s32.totalorder %s33, 1
      %p177 = scmp.ne.s32.totalorder %s172, %s174
      %p178 = scmp.eq.s32.totalorder %s33, 0
      %p179 = por %p177, %p178
      %p180 = scmp.ne.s32.totalorder %s172, %s174
      %p181 = scmp.eq.s32.totalorder %s38, 1
      %p182 = por %p180, %p181
      %p183 = scmp.ne.s32.totalorder %s174, %s175
      %p184 = scmp.eq.s32.totalorder %s38, 0
      %p185 = por %p183, %p184
      %p186 = scmp.ne.s32.totalorder %s174, %s175
      %p187 = scmp.eq.s32.totalorder %s39, 1
      %p188 = por %p186, %p187
      %p190 = scmp.ne.s32.totalorder %s175, %s189
      %p191 = scmp.eq.s32.totalorder %s39, 0
      %p192 = por %p190, %p191
      %s194 = sadd.s32 %s193, 1
      %p197 = scmp.eq.s32.totalorder %s33, 1
      %p198 = scmp.ne.s32.totalorder %s193, %s195
      %p199 = scmp.eq.s32.totalorder %s33, 0
      %p200 = por %p198, %p199
      %p201 = scmp.ne.s32.totalorder %s193, %s195
      %p202 = scmp.eq.s32.totalorder %s38, 1
      %p203 = por %p201, %p202
      %p204 = scmp.ne.s32.totalorder %s195, %s196
      %p205 = scmp.eq.s32.totalorder %s38, 0
      %p206 = por %p204, %p205
      %p207 = scmp.ne.s32.totalorder %s195, %s196
      %p208 = scmp.eq.s32.totalorder %s39, 1
      %p209 = por %p207, %p208
      %p211 = scmp.ne.s32.totalorder %s196, %s210
      %p212 = scmp.eq.s32.totalorder %s39, 0
      %p213 = por %p211, %p212
      %s215 = sadd.s32 %s214, 1
      %p218 = scmp.eq.s32.totalorder %s33, 1
      %p219 = scmp.ne.s32.totalorder %s214, %s216
      %p220 = scmp.eq.s32.totalorder %s33, 0
      %p221 = por %p219, %p220
      %p222 = scmp.ne.s32.totalorder %s214, %s216
      %p223 = scmp.eq.s32.totalorder %s38, 1
      %p224 = por %p222, %p223
      %p225 = scmp.ne.s32.totalorder %s216, %s217
      %p226 = scmp.eq.s32.totalorder %s38, 0
      %p227 = por %p225, %p226
      %p228 = scmp.ne.s32.totalorder %s216, %s217
      %p229 = scmp.eq.s32.totalorder %s39, 1
      %p230 = por %p228, %p229
      %p232 = scmp.ne.s32.totalorder %s217, %s231
      %p233 = scmp.eq.s32.totalorder %s39, 0
      %p234 = por %p232, %p233
      %s236 = sadd.s32 %s235, 1
      %p239 = scmp.eq.s32.totalorder %s33, 1
      %p240 = scmp.ne.s32.totalorder %s235, %s237
      %p241 = scmp.eq.s32.totalorder %s33, 0
      %p242 = por %p240, %p241
      %p243 = scmp.ne.s32.totalorder %s235, %s237
      %p244 = scmp.eq.s32.totalorder %s38, 1
      %p245 = por %p243, %p244
      %p246 = scmp.ne.s32.totalorder %s237, %s238
      %p247 = scmp.eq.s32.totalorder %s38, 0
      %p248 = por %p246, %p247
      %p249 = scmp.ne.s32.totalorder %s237, %s238
      %p250 = scmp.eq.s32.totalorder %s39, 1
      %p251 = por %p249, %p250
      %p253 = scmp.ne.s32.totalorder %s238, %s252
      %p254 = scmp.eq.s32.totalorder %s39, 0
      %p255 = por %p253, %p254
      %s257 = sadd.s32 %s256, 1
      %p260 = scmp.eq.s32.totalorder %s33, 1
      %p261 = scmp.ne.s32.totalorder %s256, %s258
      %p262 = scmp.eq.s32.totalorder %s33, 0
      %p263 = por %p261, %p262
      %p264 = scmp.ne.s32.totalorder %s256, %s258
      %p265 = scmp.eq.s32.totalorder %s38, 1
      %p266 = por %p264, %p265
      %p267 = scmp.ne.s32.totalorder %s258, %s259
      %p268 = scmp.eq.s32.totalorder %s38, 0
      %p269 = por %p267, %p268
      %p270 = scmp.ne.s32.totalorder %s258, %s259
      %p271 = scmp.eq.s32.totalorder %s39, 1
      %p272 = por %p270, %p271
      %p274 = scmp.ne.s32.totalorder %s259, %s273
      %p275 = scmp.eq.s32.totalorder %s39, 0
      %p276 = por %p274, %p275
      %s278 = sadd.s32 %s277, 1
      %p281 = scmp.eq.s32.totalorder %s33, 1
      %p282 = scmp.ne.s32.totalorder %s277, %s279
      %p283 = scmp.eq.s32.totalorder %s33, 0
      %p284 = por %p282, %p283
      %p285 = scmp.ne.s32.totalorder %s277, %s279
      %p286 = scmp.eq.s32.totalorder %s38, 1
      %p287 = por %p285, %p286
      %p288 = scmp.ne.s32.totalorder %s279, %s280
      %p289 = scmp.eq.s32.totalorder %s38, 0
      %p290 = por %p288, %p289
      %p291 = scmp.ne.s32.totalorder %s279, %s280
      %p292 = scmp.eq.s32.totalorder %s39, 1
      %p293 = por %p291, %p292
      %p295 = scmp.ne.s32.totalorder %s280, %s294
      %p296 = scmp.eq.s32.totalorder %s39, 0
      %p297 = por %p295, %p296
      %s299 = sadd.s32 %s298, 1
      %p302 = scmp.eq.s32.totalorder %s33, 1
      %p303 = scmp.ne.s32.totalorder %s298, %s300
      %p304 = scmp.eq.s32.totalorder %s33, 0
      %p305 = por %p303, %p304
      %p306 = scmp.ne.s32.totalorder %s298, %s300
      %p307 = scmp.eq.s32.totalorder %s38, 1
      %p308 = por %p306, %p307
      %p309 = scmp.ne.s32.totalorder %s300, %s301
      %p310 = scmp.eq.s32.totalorder %s38, 0
      %p311 = por %p309, %p310
      %p312 = scmp.ne.s32.totalorder %s300, %s301
      %p313 = scmp.eq.s32.totalorder %s39, 1
      %p314 = por %p312, %p313
      %p316 = scmp.ne.s32.totalorder %s301, %s315
      %p317 = scmp.eq.s32.totalorder %s39, 0
      %p318 = por %p316, %p317
      %s320 = sadd.s32 %s319, 1
      %p323 = scmp.eq.s32.totalorder %s33, 1
      %p324 = scmp.ne.s32.totalorder %s319, %s321
      %p325 = scmp.eq.s32.totalorder %s33, 0
      %p326 = por %p324, %p325
      %p327 = scmp.ne.s32.totalorder %s319, %s321
      %p328 = scmp.eq.s32.totalorder %s38, 1
      %p329 = por %p327, %p328
      %p330 = scmp.ne.s32.totalorder %s321, %s322
      %p331 = scmp.eq.s32.totalorder %s38, 0
      %p332 = por %p330, %p331
      %p333 = scmp.ne.s32.totalorder %s321, %s322
      %p334 = scmp.eq.s32.totalorder %s39, 1
      %p335 = por %p333, %p334
      %p337 = scmp.ne.s32.totalorder %s322, %s336
      %p338 = scmp.eq.s32.totalorder %s39, 0
      %p339 = por %p337, %p338
      %s341 = sadd.s32 %s340, 1
      %p344 = scmp.eq.s32.totalorder %s33, 1
      %p345 = scmp.ne.s32.totalorder %s340, %s342
      %p346 = scmp.eq.s32.totalorder %s33, 0
      %p347 = por %p345, %p346
      %p348 = scmp.ne.s32.totalorder %s340, %s342
      %p349 = scmp.eq.s32.totalorder %s38, 1
      %p350 = por %p348, %p349
      %p351 = scmp.ne.s32.totalorder %s342, %s343
      %p352 = scmp.eq.s32.totalorder %s38, 0
      %p353 = por %p351, %p352
      %p354 = scmp.ne.s32.totalorder %s342, %s343
      %p355 = scmp.eq.s32.totalorder %s39, 1
      %p356 = por %p354, %p355
      %p358 = scmp.ne.s32.totalorder %s343, %s357
      %p359 = scmp.eq.s32.totalorder %s39, 0
      %p360 = por %p358, %p359
      %s362 = sadd.s32 %s361, 1
      %p365 = scmp.eq.s32.totalorder %s33, 1
      %p366 = scmp.ne.s32.totalorder %s361, %s363
      %p367 = scmp.eq.s32.totalorder %s33, 0
      %p368 = por %p366, %p367
      %p369 = scmp.ne.s32.totalorder %s361, %s363
      %p370 = scmp.eq.s32.totalorder %s38, 1
      %p371 = por %p369, %p370
      %p372 = scmp.ne.s32.totalorder %s363, %s364
      %p373 = scmp.eq.s32.totalorder %s38, 0
      %p374 = por %p372, %p373
      %p375 = scmp.ne.s32.totalorder %s363, %s364
      %p376 = scmp.eq.s32.totalorder %s39, 1
      %p377 = por %p375, %p376
      %p379 = scmp.ne.s32.totalorder %s364, %s378
      %p380 = scmp.eq.s32.totalorder %s39, 0
      %p381 = por %p379, %p380
      %s383 = sadd.s32 %s382, 1
      %p386 = scmp.eq.s32.totalorder %s33, 1
      %p387 = scmp.ne.s32.totalorder %s382, %s384
      %p388 = scmp.eq.s32.totalorder %s33, 0
      %p389 = por %p387, %p388
      %p390 = scmp.ne.s32.totalorder %s382, %s384
      %p391 = scmp.eq.s32.totalorder %s38, 1
      %p392 = por %p390, %p391
      %p393 = scmp.ne.s32.totalorder %s384, %s385
      %p394 = scmp.eq.s32.totalorder %s38, 0
      %p395 = por %p393, %p394
      %p396 = scmp.ne.s32.totalorder %s384, %s385
      %p397 = scmp.eq.s32.totalorder %s39, 1
      %p398 = por %p396, %p397
      %p400 = scmp.ne.s32.totalorder %s385, %s399
      %p401 = scmp.eq.s32.totalorder %s39, 0
      %p402 = por %p400, %p401
      %s404 = sadd.s32 %s403, 1
      %p407 = scmp.eq.s32.totalorder %s33, 1
      %p408 = scmp.ne.s32.totalorder %s403, %s405
      %p409 = scmp.eq.s32.totalorder %s33, 0
      %p410 = por %p408, %p409
      %p411 = scmp.ne.s32.totalorder %s403, %s405
      %p412 = scmp.eq.s32.totalorder %s38, 1
      %p413 = por %p411, %p412
      %p414 = scmp.ne.s32.totalorder %s405, %s406
      %p415 = scmp.eq.s32.totalorder %s38, 0
      %p416 = por %p414, %p415
      %p417 = scmp.ne.s32.totalorder %s405, %s406
      %p418 = scmp.eq.s32.totalorder %s39, 1
      %p419 = por %p417, %p418
      %p421 = scmp.ne.s32.totalorder %s406, %s420
      %p422 = scmp.eq.s32.totalorder %s39, 0
      %p423 = por %p421, %p422
      %s425 = sadd.s32 %s424, 1
      %p428 = scmp.eq.s32.totalorder %s33, 1
      %p429 = scmp.ne.s32.totalorder %s424, %s426
      %p430 = scmp.eq.s32.totalorder %s33, 0
      %p431 = por %p429, %p430
      %p432 = scmp.ne.s32.totalorder %s424, %s426
      %p433 = scmp.eq.s32.totalorder %s38, 1
      %p434 = por %p432, %p433
      %p435 = scmp.ne.s32.totalorder %s426, %s427
      %p436 = scmp.eq.s32.totalorder %s38, 0
      %p437 = por %p435, %p436
      %p438 = scmp.ne.s32.totalorder %s426, %s427
      %p439 = scmp.eq.s32.totalorder %s39, 1
      %p440 = por %p438, %p439
      %p442 = scmp.ne.s32.totalorder %s427, %s441
      %p443 = scmp.eq.s32.totalorder %s39, 0
      %p444 = por %p442, %p443
      %s446 = sadd.s32 %s445, 1
      %p449 = scmp.eq.s32.totalorder %s33, 1
      %p450 = scmp.ne.s32.totalorder %s445, %s447
      %p451 = scmp.eq.s32.totalorder %s33, 0
      %p452 = por %p450, %p451
      %p453 = scmp.ne.s32.totalorder %s445, %s447
      %p454 = scmp.eq.s32.totalorder %s38, 1
      %p455 = por %p453, %p454
      %p456 = scmp.ne.s32.totalorder %s447, %s448
      %p457 = scmp.eq.s32.totalorder %s38, 0
      %p458 = por %p456, %p457
      %p459 = scmp.ne.s32.totalorder %s447, %s448
      %p460 = scmp.eq.s32.totalorder %s39, 1
      %p461 = por %p459, %p460
      %p463 = scmp.ne.s32.totalorder %s448, %s462
      %p464 = scmp.eq.s32.totalorder %s39, 0
      %p465 = por %p463, %p464
      %s467 = sadd.s32 %s466, 1
      %p470 = scmp.eq.s32.totalorder %s33, 1
      %p471 = scmp.ne.s32.totalorder %s466, %s468
      %p472 = scmp.eq.s32.totalorder %s33, 0
      %p473 = por %p471, %p472
      %p474 = scmp.ne.s32.totalorder %s466, %s468
      %p475 = scmp.eq.s32.totalorder %s38, 1
      %p476 = por %p474, %p475
      %p477 = scmp.ne.s32.totalorder %s468, %s469
      %p478 = scmp.eq.s32.totalorder %s38, 0
      %p479 = por %p477, %p478
      %p480 = scmp.ne.s32.totalorder %s468, %s469
      %p481 = scmp.eq.s32.totalorder %s39, 1
      %p482 = por %p480, %p481
      %p484 = scmp.ne.s32.totalorder %s469, %s483
      %p485 = scmp.eq.s32.totalorder %s39, 0
      %p486 = por %p484, %p485
      %s488 = sadd.s32 %s487, 1
      %p491 = scmp.eq.s32.totalorder %s33, 1
      %p492 = scmp.ne.s32.totalorder %s487, %s489
      %p493 = scmp.eq.s32.totalorder %s33, 0
      %p494 = por %p492, %p493
      %p495 = scmp.ne.s32.totalorder %s487, %s489
      %p496 = scmp.eq.s32.totalorder %s38, 1
      %p497 = por %p495, %p496
      %p498 = scmp.ne.s32.totalorder %s489, %s490
      %p499 = scmp.eq.s32.totalorder %s38, 0
      %p500 = por %p498, %p499
      %p501 = scmp.ne.s32.totalorder %s489, %s490
      %p502 = scmp.eq.s32.totalorder %s39, 1
      %p503 = por %p501, %p502
      %p505 = scmp.ne.s32.totalorder %s490, %s504
      %p506 = scmp.eq.s32.totalorder %s39, 0
      %p507 = por %p505, %p506
      %s509 = sadd.s32 %s508, 1
      %p512 = scmp.eq.s32.totalorder %s33, 1
      %p513 = scmp.ne.s32.totalorder %s508, %s510
      %p514 = scmp.eq.s32.totalorder %s33, 0
      %p515 = por %p513, %p514
      %p516 = scmp.ne.s32.totalorder %s508, %s510
      %p517 = scmp.eq.s32.totalorder %s38, 1
      %p518 = por %p516, %p517
      %p519 = scmp.ne.s32.totalorder %s510, %s511
      %p520 = scmp.eq.s32.totalorder %s38, 0
      %p521 = por %p519, %p520
      %p522 = scmp.ne.s32.totalorder %s510, %s511
      %p523 = scmp.eq.s32.totalorder %s39, 1
      %p524 = por %p522, %p523
      %p526 = scmp.ne.s32.totalorder %s511, %s525
      %p527 = scmp.eq.s32.totalorder %s39, 0
      %p528 = por %p526, %p527
      %s530 = sadd.s32 %s529, 1
      %p533 = scmp.eq.s32.totalorder %s33, 1
      %p534 = scmp.ne.s32.totalorder %s529, %s531
      %p535 = scmp.eq.s32.totalorder %s33, 0
      %p536 = por %p534, %p535
      %p537 = scmp.ne.s32.totalorder %s529, %s531
      %p538 = scmp.eq.s32.totalorder %s38, 1
      %p539 = por %p537, %p538
      %p540 = scmp.ne.s32.totalorder %s531, %s532
      %p541 = scmp.eq.s32.totalorder %s38, 0
      %p542 = por %p540, %p541
      %p543 = scmp.ne.s32.totalorder %s531, %s532
      %p544 = scmp.eq.s32.totalorder %s39, 1
      %p545 = por %p543, %p544
      %p547 = scmp.ne.s32.totalorder %s532, %s546
      %p548 = scmp.eq.s32.totalorder %s39, 0
      %p549 = por %p547, %p548
      %s550 = ssub.s32 %s33, %s40
      %p551 = scmp.eq.s32.totalorder %s550, 0
      %s553 = sadd.s32 %s552, 1
      %s554 = scalar_select %p551, %s552, %s553
      %p557 = pneg %p551
      %p558 = scmp.eq.s32.totalorder %s33, 1
      %p559 = por %p557, %p558
      %p560 = scmp.ne.s32.totalorder %s552, %s555
      %p561 = scmp.eq.s32.totalorder %s33, 0
      %p562 = por %p560, %p561
      %p563 = scmp.ne.s32.totalorder %s552, %s555
      %p564 = scmp.eq.s32.totalorder %s38, 1
      %p565 = por %p563, %p564
      %p566 = scmp.ne.s32.totalorder %s555, %s556
      %p567 = scmp.eq.s32.totalorder %s38, 0
      %p568 = por %p566, %p567
      %p569 = scmp.ne.s32.totalorder %s555, %s556
      %p570 = scmp.eq.s32.totalorder %s39, 1
      %p571 = por %p569, %p570
      %p573 = scmp.ne.s32.totalorder %s556, %s572
      %p574 = scmp.eq.s32.totalorder %s39, 0
      %p575 = por %p573, %p574
      %p576 = scmp.le.s32.totalorder 1, %s33
      %p577 = scmp.lt.s32.totalorder %s33, 3
      %p578 = pnand %p576, %p577
      %p579 = pneg %p578
      // Predicated region
      $region9: #{style_pyramid_forward.3} parent=5 // pred_check
        _
      $region10: #{style_pyramid_forward.3} parent=5 // pred_check_branch
        %581 = sbr.rel (%p578) target = $region12
      $region11: #{style_pyramid_forward.3} parent=5 // pred_region
        %s582 = ssub.s32 %s33, 1
        // Predicated region
        $region13: #{style_pyramid_forward.3} parent=11 // pred_check
          %p583 = pneg %p80
        $region14: #{style_pyramid_forward.3} parent=11 // pred_check_branch
          %585 = sbr.rel (%p583) target = $region16
        $region15: #{style_pyramid_forward.3} parent=11 // pred_region
          _
        $region16: #{style_pyramid_forward.3} parent=11 // pred_fallthru
          _
        // Predicated region
        $region17: #{style_pyramid_forward.3} parent=11 // pred_check
          %p586 = pneg %p101
        $region18: #{style_pyramid_forward.3} parent=11 // pred_check_branch
          %588 = sbr.rel (%p586) target = $region20
        $region19: #{style_pyramid_forward.3} parent=11 // pred_region
          _
        $region20: #{style_pyramid_forward.3} parent=11 // pred_fallthru
          _
        // Predicated region
        $region21: #{style_pyramid_forward.3} parent=11 // pred_check
          %p589 = pneg %p122
        $region22: #{style_pyramid_forward.3} parent=11 // pred_check_branch
          %591 = sbr.rel (%p589) target = $region24
        $region23: #{style_pyramid_forward.3} parent=11 // pred_region
          _
        $region24: #{style_pyramid_forward.3} parent=11 // pred_fallthru
          _
        // Predicated region
        $region25: #{style_pyramid_forward.3} parent=11 // pred_check
          %p592 = pneg %p143
        $region26: #{style_pyramid_forward.3} parent=11 // pred_check_branch
          %594 = sbr.rel (%p592) target = $region28
        $region27: #{style_pyramid_forward.3} parent=11 // pred_region
          _
        $region28: #{style_pyramid_forward.3} parent=11 // pred_fallthru
          _
        // Predicated region
        $region29: #{style_pyramid_forward.3} parent=11 // pred_check
          %p595 = pneg %p164
        $region30: #{style_pyramid_forward.3} parent=11 // pred_check_branch
          %597 = sbr.rel (%p595) target = $region32
        $region31: #{style_pyramid_forward.3} parent=11 // pred_region
          _
        $region32: #{style_pyramid_forward.3} parent=11 // pred_fallthru
          _
        // Predicated region
        $region33: #{style_pyramid_forward.3} parent=11 // pred_check
          %p598 = pneg %p185
        $region34: #{style_pyramid_forward.3} parent=11 // pred_check_branch
          %600 = sbr.rel (%p598) target = $region36
        $region35: #{style_pyramid_forward.3} parent=11 // pred_region
          _
        $region36: #{style_pyramid_forward.3} parent=11 // pred_fallthru
          _
        // Predicated region
        $region37: #{style_pyramid_forward.3} parent=11 // pred_check
          %p601 = pneg %p206
        $region38: #{style_pyramid_forward.3} parent=11 // pred_check_branch
          %603 = sbr.rel (%p601) target = $region40
        $region39: #{style_pyramid_forward.3} parent=11 // pred_region
          _
        $region40: #{style_pyramid_forward.3} parent=11 // pred_fallthru
          _
        // Predicated region
        $region41: #{style_pyramid_forward.3} parent=11 // pred_check
          %p604 = pneg %p227
        $region42: #{style_pyramid_forward.3} parent=11 // pred_check_branch
          %606 = sbr.rel (%p604) target = $region44
        $region43: #{style_pyramid_forward.3} parent=11 // pred_region
          _
        $region44: #{style_pyramid_forward.3} parent=11 // pred_fallthru
          _
        // Predicated region
        $region45: #{style_pyramid_forward.3} parent=11 // pred_check
          %p607 = pneg %p248
        $region46: #{style_pyramid_forward.3} parent=11 // pred_check_branch
          %609 = sbr.rel (%p607) target = $region48
        $region47: #{style_pyramid_forward.3} parent=11 // pred_region
          _
        $region48: #{style_pyramid_forward.3} parent=11 // pred_fallthru
          _
        // Predicated region
        $region49: #{style_pyramid_forward.3} parent=11 // pred_check
          %p610 = pneg %p269
        $region50: #{style_pyramid_forward.3} parent=11 // pred_check_branch
          %612 = sbr.rel (%p610) target = $region52
        $region51: #{style_pyramid_forward.3} parent=11 // pred_region
          _
        $region52: #{style_pyramid_forward.3} parent=11 // pred_fallthru
          _
        // Predicated region
        $region53: #{style_pyramid_forward.3} parent=11 // pred_check
          %p613 = pneg %p290
        $region54: #{style_pyramid_forward.3} parent=11 // pred_check_branch
          %615 = sbr.rel (%p613) target = $region56
        $region55: #{style_pyramid_forward.3} parent=11 // pred_region
          _
        $region56: #{style_pyramid_forward.3} parent=11 // pred_fallthru
          _
        // Predicated region
        $region57: #{style_pyramid_forward.3} parent=11 // pred_check
          %p616 = pneg %p311
        $region58: #{style_pyramid_forward.3} parent=11 // pred_check_branch
          %618 = sbr.rel (%p616) target = $region60
        $region59: #{style_pyramid_forward.3} parent=11 // pred_region
          _
        $region60: #{style_pyramid_forward.3} parent=11 // pred_fallthru
          _
        // Predicated region
        $region61: #{style_pyramid_forward.3} parent=11 // pred_check
          %p619 = pneg %p332
        $region62: #{style_pyramid_forward.3} parent=11 // pred_check_branch
          %621 = sbr.rel (%p619) target = $region64
        $region63: #{style_pyramid_forward.3} parent=11 // pred_region
          _
        $region64: #{style_pyramid_forward.3} parent=11 // pred_fallthru
          _
        // Predicated region
        $region65: #{style_pyramid_forward.3} parent=11 // pred_check
          %p622 = pneg %p353
        $region66: #{style_pyramid_forward.3} parent=11 // pred_check_branch
          %624 = sbr.rel (%p622) target = $region68
        $region67: #{style_pyramid_forward.3} parent=11 // pred_region
          _
        $region68: #{style_pyramid_forward.3} parent=11 // pred_fallthru
          _
        // Predicated region
        $region69: #{style_pyramid_forward.3} parent=11 // pred_check
          %p625 = pneg %p374
        $region70: #{style_pyramid_forward.3} parent=11 // pred_check_branch
          %627 = sbr.rel (%p625) target = $region72
        $region71: #{style_pyramid_forward.3} parent=11 // pred_region
          _
        $region72: #{style_pyramid_forward.3} parent=11 // pred_fallthru
          _
        // Predicated region
        $region73: #{style_pyramid_forward.3} parent=11 // pred_check
          %p628 = pneg %p395
        $region74: #{style_pyramid_forward.3} parent=11 // pred_check_branch
          %630 = sbr.rel (%p628) target = $region76
        $region75: #{style_pyramid_forward.3} parent=11 // pred_region
          _
        $region76: #{style_pyramid_forward.3} parent=11 // pred_fallthru
          _
        // Predicated region
        $region77: #{style_pyramid_forward.3} parent=11 // pred_check
          %p631 = pneg %p416
        $region78: #{style_pyramid_forward.3} parent=11 // pred_check_branch
          %633 = sbr.rel (%p631) target = $region80
        $region79: #{style_pyramid_forward.3} parent=11 // pred_region
          _
        $region80: #{style_pyramid_forward.3} parent=11 // pred_fallthru
          _
        // Predicated region
        $region81: #{style_pyramid_forward.3} parent=11 // pred_check
          %p634 = pneg %p437
        $region82: #{style_pyramid_forward.3} parent=11 // pred_check_branch
          %636 = sbr.rel (%p634) target = $region84
        $region83: #{style_pyramid_forward.3} parent=11 // pred_region
          _
        $region84: #{style_pyramid_forward.3} parent=11 // pred_fallthru
          _
        // Predicated region
        $region85: #{style_pyramid_forward.3} parent=11 // pred_check
          %p637 = pneg %p458
        $region86: #{style_pyramid_forward.3} parent=11 // pred_check_branch
          %639 = sbr.rel (%p637) target = $region88
        $region87: #{style_pyramid_forward.3} parent=11 // pred_region
          _
        $region88: #{style_pyramid_forward.3} parent=11 // pred_fallthru
          _
        // Predicated region
        $region89: #{style_pyramid_forward.3} parent=11 // pred_check
          %p640 = pneg %p479
        $region90: #{style_pyramid_forward.3} parent=11 // pred_check_branch
          %642 = sbr.rel (%p640) target = $region92
        $region91: #{style_pyramid_forward.3} parent=11 // pred_region
          _
        $region92: #{style_pyramid_forward.3} parent=11 // pred_fallthru
          _
        // Predicated region
        $region93: #{style_pyramid_forward.3} parent=11 // pred_check
          %p643 = pneg %p500
        $region94: #{style_pyramid_forward.3} parent=11 // pred_check_branch
          %645 = sbr.rel (%p643) target = $region96
        $region95: #{style_pyramid_forward.3} parent=11 // pred_region
          _
        $region96: #{style_pyramid_forward.3} parent=11 // pred_fallthru
          _
        // Predicated region
        $region97: #{style_pyramid_forward.3} parent=11 // pred_check
          %p646 = pneg %p521
        $region98: #{style_pyramid_forward.3} parent=11 // pred_check_branch
          %648 = sbr.rel (%p646) target = $region100
        $region99: #{style_pyramid_forward.3} parent=11 // pred_region
          _
        $region100: #{style_pyramid_forward.3} parent=11 // pred_fallthru
          _
        // Predicated region
        $region101: #{style_pyramid_forward.3} parent=11 // pred_check
          %p649 = pneg %p542
        $region102: #{style_pyramid_forward.3} parent=11 // pred_check_branch
          %651 = sbr.rel (%p649) target = $region104
        $region103: #{style_pyramid_forward.3} parent=11 // pred_region
          _
        $region104: #{style_pyramid_forward.3} parent=11 // pred_fallthru
          _
      $region12: #{style_pyramid_forward.3} parent=5 // pred_fallthru
        _
      %p652 = scmp.lt.s32.totalorder %s33, 2
      // Predicated region
      $region105: #{style_pyramid_forward.3} parent=5 // pred_check
        %p653 = pneg %p652
      $region106: #{style_pyramid_forward.3} parent=5 // pred_check_branch
        %655 = sbr.rel (%p653) target = $region108
      $region107: #{style_pyramid_forward.3} parent=5 // pred_region
        // Predicated region
        $region109: #{style_pyramid_forward.3} parent=107 // pred_check
          %p656 = pneg %p53
        $region110: #{style_pyramid_forward.3} parent=107 // pred_check_branch
          %658 = sbr.rel (%p656) target = $region112
        $region111: #{style_pyramid_forward.3} parent=107 // pred_region
          %p659 = scmp.lt.s32.totalorder %s33, 1
          %s660 = scalar_select %p659, %s33, 1
          %s661 = smul.addr %s660, 8
          %s662 = smul.addr %s661, 8
          %s663 = scalar_lea.vmem %s0, %s662
        $region112: #{style_pyramid_forward.3} parent=107 // pred_fallthru
          _
      $region108: #{style_pyramid_forward.3} parent=5 // pred_fallthru
        _
      %p664 = scmp.le.s32.totalorder 1, %s33
      %p665 = scmp.lt.s32.totalorder %s33, 3
      %p666 = pnand %p664, %p665
      %p667 = pneg %p666
      // Predicated region
      $region113: #{style_pyramid_forward.3} parent=5 // pred_check
        _
      $region114: #{style_pyramid_forward.3} parent=5 // pred_check_branch
        %669 = sbr.rel (%p666) target = $region116
      $region115: #{style_pyramid_forward.3} parent=5 // pred_region
        %s670 = ssub.s32 %s33, 1
        %p671 = scmp.lt.s32.totalorder %s38, 1
        %s672 = scalar_select %p671, %s38, 1
        %s673 = smul.addr %s672, 8
        %s674 = smul.addr %s673, 8
        %s675 = scalar_lea.vmem %s0, %s674
        %p676 = pneg %p59
        %p677 = pneg %p56
        %p678 = pneg %p80
        %p679 = pneg %p77
        %p680 = pneg %p101
        %p681 = pneg %p98
        %p682 = pneg %p122
        %p683 = pneg %p119
        %p684 = pneg %p143
        %p685 = pneg %p140
        %p686 = pneg %p164
        %p687 = pneg %p161
        %p688 = pneg %p185
        %p689 = pneg %p182
        %p690 = pneg %p206
        %p691 = pneg %p203
        %p692 = pneg %p227
        %p693 = pneg %p224
        %p694 = pneg %p248
        %p695 = pneg %p245
        %p696 = pneg %p269
        %p697 = pneg %p266
        %p698 = pneg %p290
        %p699 = pneg %p287
        %p700 = pneg %p311
        %p701 = pneg %p308
        %p702 = pneg %p332
        %p703 = pneg %p329
        %p704 = pneg %p353
        %p705 = pneg %p350
        %p706 = pneg %p374
        %p707 = pneg %p371
        %p708 = pneg %p395
        %p709 = pneg %p392
        %p710 = pneg %p416
        %p711 = pneg %p413
        %p712 = pneg %p437
        %p713 = pneg %p434
        %p714 = pneg %p458
        %p715 = pneg %p455
        %p716 = pneg %p479
        %p717 = pneg %p476
        %p718 = pneg %p500
        %p719 = pneg %p497
        %p720 = pneg %p521
        %p721 = pneg %p518
        %p722 = pneg %p542
        %p723 = pneg %p539
        %p724 = pneg %p568
        %p725 = pneg %p565
        %s726 = sand.u32 %s555, 1
        %s727 = scalar_lea.sflag [#allocation3], %s726
        %s728 = sand.u32 %s555, 1
        %s729 = smul.addr %s728, 4
        %s730 = scalar_lea.vmem [#allocation2], %s729
        %p731 = scmp.lt.s32.totalorder %s38, 1
        %s732 = scalar_select %p731, %s38, 1
        %s733 = smul.addr %s732, 8
        %s734 = smul.addr %s733, 8
        %s735 = scalar_lea.vmem %s0, %s734
        %v737 = vld [vmem:[%s1] sm:$0xff]
        %v738 = vld [vmem:[%s1 + $0x8] sm:$0xff]
        %v739 = vld [vmem:[%s1 + $0x10] sm:$0xff]
        %v740 = vld [vmem:[%s1 + $0x18] sm:$0xff]
        %v741 = vld [vmem:[%s1 + $0x20] sm:$0xff]
        %v742 = vld [vmem:[%s1 + $0x28] sm:$0xff]
        %v743 = vld [vmem:[%s1 + $0x30] sm:$0xff]
        %v744 = vld [vmem:[%s1 + $0x38] sm:$0xff]
        %v745 = vld [vmem:[%s735] sm:$0xff]
        %v746 = vld [vmem:[%s735 + $0x8] sm:$0xff]
        %v747 = vld [vmem:[%s735 + $0x10] sm:$0xff]
        %v748 = vld [vmem:[%s735 + $0x18] sm:$0xff]
        %v749 = vld [vmem:[%s735 + $0x20] sm:$0xff]
        %v750 = vld [vmem:[%s735 + $0x28] sm:$0xff]
        %v751 = vld [vmem:[%s735 + $0x30] sm:$0xff]
        %v752 = vld [vmem:[%s735 + $0x38] sm:$0xff]
        %vm753 = vcmask 523264
        %v754 = vsel %vm753, %v745, 0.0
        %v755 = vsel %vm753, %v746, 0.0
        %v756 = vadd.f32 %v754, %v755
        %v757 = vsel %vm753, %v747, 0.0
        %v758 = vadd.f32 %v756, %v757
        %v759 = vsel %vm753, %v748, 0.0
        %v760 = vadd.f32 %v758, %v759
        %v761 = vsel %vm753, %v749, 0.0
        %v762 = vadd.f32 %v760, %v761
        %v763 = vsel %vm753, %v750, 0.0
        %v764 = vadd.f32 %v762, %v763
        %v765 = vsel %vm753, %v751, 0.0
        %v766 = vadd.f32 %v764, %v765
        %v767 = vsel %vm753, %v752, 0.0
        %v768 = vadd.f32 %v766, %v767
        %v769 = vrot.slane %v768, 4
        %v770 = vadd.f32 %v768, %v769
        %v771 = vrot.slane %v770, 2
        %v772 = vadd.f32 %v770, %v771
        %v773 = vrot.slane %v772, 1
        %v774 = vadd.f32 %v772, %v773
        %v775 = vmul.f32 %v774, 0.0078125
        %v777 = vsel %vm753, %v775, 0
        %779 = vmatprep.subr.mxu0 0.0
        %780 = vmatpush1.msra.mxu0 0.0
        %781 = vmatprep.subr.mxu0 0.0
        %782 = vmatpush1.msra.mxu0 0.0
        %783 = vmatprep.subr.mxu0 0.0
        %784 = vmatpush1.msra.mxu0 0.0
        %785 = vmatprep.subr.mxu0 0.0
        %786 = vmatpush1.msra.mxu0 0.0
        %787 = vmatprep.subr.mxu0 0.0
        %788 = vmatpush1.msra.mxu0 0.0
        %789 = vmatprep.subr.mxu0 0.0
        %790 = vmatpush1.msra.mxu0 0.0
        %791 = vmatprep.subr.mxu0 0.0
        %792 = vmatpush1.msra.mxu0 0.0
        %793 = vmatprep.subr.mxu0 0.0
        %794 = vmatpush1.msra.mxu0 0.0
        %795 = vmatprep.subr.mxu0 0.0
        %796 = vmatpush1.msra.mxu0 %v744
        %797 = vmatprep.subr.mxu0 0.0
        %798 = vmatpush1.msra.mxu0 %v743
        %799 = vmatprep.subr.mxu0 0.0
        %800 = vmatpush1.msra.mxu0 %v742
        %801 = vmatprep.subr.mxu0 0.0
        %802 = vmatpush1.msra.mxu0 %v741
        %803 = vmatprep.subr.mxu0 0.0
        %804 = vmatpush1.msra.mxu0 %v740
        %805 = vmatprep.subr.mxu0 0.0
        %806 = vmatpush1.msra.mxu0 %v739
        %807 = vmatprep.subr.mxu0 0.0
        %808 = vmatpush1.msra.mxu0 %v738
        %809 = vmatprep.subr.mxu0 0.0
        %810 = vmatpush1.msra.mxu0 %v737
        %811 = vmatprep.subr.mxu0 0.0
        %812 = vmatpush2.msra.mxu0 0.0
        %813 = vmatprep.subr.mxu0 0.0
        %814 = vmatpush2.msra.mxu0 0.0
        %815 = vmatprep.subr.mxu0 0.0
        %816 = vmatpush2.msra.mxu0 0.0
        %817 = vmatprep.subr.mxu0 0.0
        %818 = vmatpush2.msra.mxu0 0.0
        %819 = vmatprep.subr.mxu0 0.0
        %820 = vmatpush2.msra.mxu0 0.0
        %821 = vmatprep.subr.mxu0 0.0
        %822 = vmatpush2.msra.mxu0 0.0
        %823 = vmatprep.subr.mxu0 0.0
        %824 = vmatpush2.msra.mxu0 0.0
        %825 = vmatprep.subr.mxu0 0.0
        %826 = vmatpush2.msra.mxu0 0.0
        %827 = vmatprep.subr.mxu0 0.0
        %828 = vmatpush2.msra.mxu0 0.0
        %829 = vmatprep.subr.mxu0 0.0
        %830 = vmatpush2.msra.mxu0 0.0
        %831 = vmatprep.subr.mxu0 0.0
        %832 = vmatpush2.msra.mxu0 0.0
        %833 = vmatprep.subr.mxu0 0.0
        %834 = vmatpush2.msra.mxu0 0.0
        %835 = vmatprep.subr.mxu0 0.0
        %836 = vmatpush2.msra.mxu0 0.0
        %837 = vmatprep.subr.mxu0 0.0
        %838 = vmatpush2.msra.mxu0 0.0
        %839 = vmatprep.subr.mxu0 0.0
        %840 = vmatpush2.msra.mxu0 0.0
        %841 = vmatprep.subr.mxu0 0.0
        %842 = vmatpush2.msra.mxu0 0.0
        %843 = vmatprep.mubr.f32.mxu0 0.0
        %844 = vmatmul.mubr.f32.gmra.mxu0 %v777
        %v845 = vpop.f32.mrf.mxu0
        %v846 = vadd.f32 0.0, %v845
        %v847 = vpop.f32.mrf.mxu0
        %848 = vdwg.mxu0
        %v849 = vlaneseq
        %v850 = vshrl.u32 %v849, 7
        %v851 = vsub.s32 0, %v850
        %v852 = vrot.slane %v846, %v851
        %v853 = vsub.f32 %v745, %v852
        %v854 = vsub.f32 %v746, %v852
        %v855 = vsub.f32 %v747, %v852
        %v856 = vsub.f32 %v748, %v852
        %v857 = vsub.f32 %v749, %v852
        %v858 = vsub.f32 %v750, %v852
        %v859 = vsub.f32 %v751, %v852
        %v860 = vsub.f32 %v752, %v852
        %v861 = vmul.f32 %v853, %v853
        %v862 = vmul.f32 %v854, %v854
        %v863 = vmul.f32 %v855, %v855
        %v864 = vmul.f32 %v856, %v856
        %v865 = vmul.f32 %v857, %v857
        %v866 = vmul.f32 %v858, %v858
        %v867 = vmul.f32 %v859, %v859
        %v868 = vmul.f32 %v860, %v860
        %v869 = vsel %vm753, %v861, 0.0
        %v870 = vsel %vm753, %v862, 0.0
        %v871 = vadd.f32 %v869, %v870
        %v872 = vsel %vm753, %v863, 0.0
        %v873 = vadd.f32 %v871, %v872
        %v874 = vsel %vm753, %v864, 0.0
        %v875 = vadd.f32 %v873, %v874
        %v876 = vsel %vm753, %v865, 0.0
        %v877 = vadd.f32 %v875, %v876
        %v878 = vsel %vm753, %v866, 0.0
        %v879 = vadd.f32 %v877, %v878
        %v880 = vsel %vm753, %v867, 0.0
        %v881 = vadd.f32 %v879, %v880
        %v882 = vsel %vm753, %v868, 0.0
        %v883 = vadd.f32 %v881, %v882
        %v884 = vrot.slane %v883, 4
        %v885 = vadd.f32 %v883, %v884
        %v886 = vrot.slane %v885, 2
        %v887 = vadd.f32 %v885, %v886
        %v888 = vrot.slane %v887, 1
        %v889 = vadd.f32 %v887, %v888
        %v890 = vmul.f32 %v889, 0.0078125
        %v892 = vsel %vm753, %v890, 0
        %894 = vmatprep.subr.mxu0 0.0
        %895 = vmatpush1.msra.mxu0 0.0
        %896 = vmatprep.subr.mxu0 0.0
        %897 = vmatpush1.msra.mxu0 0.0
        %898 = vmatprep.subr.mxu0 0.0
        %899 = vmatpush1.msra.mxu0 0.0
        %900 = vmatprep.subr.mxu0 0.0
        %901 = vmatpush1.msra.mxu0 0.0
        %902 = vmatprep.subr.mxu0 0.0
        %903 = vmatpush1.msra.mxu0 0.0
        %904 = vmatprep.subr.mxu0 0.0
        %905 = vmatpush1.msra.mxu0 0.0
        %906 = vmatprep.subr.mxu0 0.0
        %907 = vmatpush1.msra.mxu0 0.0
        %908 = vmatprep.subr.mxu0 0.0
        %909 = vmatpush1.msra.mxu0 0.0
        %910 = vmatprep.subr.mxu0 0.0
        %911 = vmatpush1.msra.mxu0 %v744
        %912 = vmatprep.subr.mxu0 0.0
        %913 = vmatpush1.msra.mxu0 %v743
        %914 = vmatprep.subr.mxu0 0.0
        %915 = vmatpush1.msra.mxu0 %v742
        %916 = vmatprep.subr.mxu0 0.0
        %917 = vmatpush1.msra.mxu0 %v741
        %918 = vmatprep.subr.mxu0 0.0
        %919 = vmatpush1.msra.mxu0 %v740
        %920 = vmatprep.subr.mxu0 0.0
        %921 = vmatpush1.msra.mxu0 %v739
        %922 = vmatprep.subr.mxu0 0.0
        %923 = vmatpush1.msra.mxu0 %v738
        %924 = vmatprep.subr.mxu0 0.0
        %925 = vmatpush1.msra.mxu0 %v737
        %926 = vmatprep.subr.mxu0 0.0
        %927 = vmatpush2.msra.mxu0 0.0
        %928 = vmatprep.subr.mxu0 0.0
        %929 = vmatpush2.msra.mxu0 0.0
        %930 = vmatprep.subr.mxu0 0.0
        %931 = vmatpush2.msra.mxu0 0.0
        %932 = vmatprep.subr.mxu0 0.0
        %933 = vmatpush2.msra.mxu0 0.0
        %934 = vmatprep.subr.mxu0 0.0
        %935 = vmatpush2.msra.mxu0 0.0
        %936 = vmatprep.subr.mxu0 0.0
        %937 = vmatpush2.msra.mxu0 0.0
        %938 = vmatprep.subr.mxu0 0.0
        %939 = vmatpush2.msra.mxu0 0.0
        %940 = vmatprep.subr.mxu0 0.0
        %941 = vmatpush2.msra.mxu0 0.0
        %942 = vmatprep.subr.mxu0 0.0
        %943 = vmatpush2.msra.mxu0 0.0
        %944 = vmatprep.subr.mxu0 0.0
        %945 = vmatpush2.msra.mxu0 0.0
        %946 = vmatprep.subr.mxu0 0.0
        %947 = vmatpush2.msra.mxu0 0.0
        %948 = vmatprep.subr.mxu0 0.0
        %949 = vmatpush2.msra.mxu0 0.0
        %950 = vmatprep.subr.mxu0 0.0
        %951 = vmatpush2.msra.mxu0 0.0
        %952 = vmatprep.subr.mxu0 0.0
        %953 = vmatpush2.msra.mxu0 0.0
        %954 = vmatprep.subr.mxu0 0.0
        %955 = vmatpush2.msra.mxu0 0.0
        %956 = vmatprep.subr.mxu0 0.0
        %957 = vmatpush2.msra.mxu0 0.0
        %958 = vmatprep.mubr.f32.mxu0 0.0
        %959 = vmatmul.mubr.f32.gmra.mxu0 %v892
        %v960 = vpop.f32.mrf.mxu0
        %v961 = vadd.f32 1e-06, %v960
        %v962 = vpop.f32.mrf.mxu0
        %963 = vdwg.mxu0
        %v964 = vrsqrt.pop %v961
        %v965 = vlaneseq
        %v966 = vshrl.u32 %v965, 7
        %v967 = vsub.s32 0, %v966
        %v968 = vrot.slane %v964, %v967
        %v969 = vmul.f32 %v853, %v968
        %v970 = vmul.f32 %v854, %v968
        %v971 = vmul.f32 %v855, %v968
        %v972 = vmul.f32 %v856, %v968
        %v973 = vmul.f32 %v857, %v968
        %v974 = vmul.f32 %v858, %v968
        %v975 = vmul.f32 %v859, %v968
        %v976 = vmul.f32 %v860, %v968
        %v977 = vld [vmem:[%s6] sm:$0x1]
        %v979 = vlaneseq
        %v980 = vshrl.u32 %v979, 7
        %v981 = vsub.s32 0, %v980
        %v982 = vrot.slane %v977, %v981
        %v984 = vmul.f32 %v969, %v982
        %v985 = vmul.f32 %v970, %v982
        %v986 = vmul.f32 %v971, %v982
        %v987 = vmul.f32 %v972, %v982
        %v988 = vmul.f32 %v973, %v982
        %v989 = vmul.f32 %v974, %v982
        %v990 = vmul.f32 %v975, %v982
        %v991 = vmul.f32 %v976, %v982
        %v992 = vld [vmem:[%s7] sm:$0x1]
        %v994 = vlaneseq
        %v995 = vshrl.u32 %v994, 7
        %v996 = vsub.s32 0, %v995
        %v997 = vrot.slane %v992, %v996
        %v999 = vadd.f32 %v984, %v997
        %v1000 = vadd.f32 %v985, %v997
        %v1001 = vadd.f32 %v986, %v997
        %v1002 = vadd.f32 %v987, %v997
        %v1003 = vadd.f32 %v988, %v997
        %v1004 = vadd.f32 %v989, %v997
        %v1005 = vadd.f32 %v990, %v997
        %v1006 = vadd.f32 %v991, %v997
        %v1007 = vxor.u32 %v999, 2147483648
        %v1008 = vxor.u32 %v1000, 2147483648
        %v1009 = vxor.u32 %v1001, 2147483648
        %v1010 = vxor.u32 %v1002, 2147483648
        %v1011 = vxor.u32 %v1003, 2147483648
        %v1012 = vxor.u32 %v1004, 2147483648
        %v1013 = vxor.u32 %v1005, 2147483648
        %v1014 = vxor.u32 %v1006, 2147483648
        %v1015 = vmul.f32 %v1007, 1.442695
        %v1016 = vpow.pop %v1015
        %v1017 = vmul.f32 %v1008, 1.442695
        %v1018 = vpow.pop %v1017
        %v1019 = vmul.f32 %v1009, 1.442695
        %v1020 = vpow.pop %v1019
        %v1021 = vmul.f32 %v1010, 1.442695
        %v1022 = vpow.pop %v1021
        %v1023 = vmul.f32 %v1011, 1.442695
        %v1024 = vpow.pop %v1023
        %v1025 = vmul.f32 %v1012, 1.442695
        %v1026 = vpow.pop %v1025
        %v1027 = vmul.f32 %v1013, 1.442695
        %v1028 = vpow.pop %v1027
        %v1029 = vmul.f32 %v1014, 1.442695
        %v1030 = vpow.pop %v1029
        %v1031 = vadd.f32 %v1016, 1.0
        %v1032 = vadd.f32 %v1018, 1.0
        %v1033 = vadd.f32 %v1020, 1.0
        %v1034 = vadd.f32 %v1022, 1.0
        %v1035 = vadd.f32 %v1024, 1.0
        %v1036 = vadd.f32 %v1026, 1.0
        %v1037 = vadd.f32 %v1028, 1.0
        %v1038 = vadd.f32 %v1030, 1.0
        %v1039 = vrcp.pop %v1031
        %v1040 = vmul.f32 1.0, %v1039
        %v1041 = vrcp.pop %v1032
        %v1042 = vmul.f32 1.0, %v1041
        %v1043 = vrcp.pop %v1033
        %v1044 = vmul.f32 1.0, %v1043
        %v1045 = vrcp.pop %v1034
        %v1046 = vmul.f32 1.0, %v1045
        %v1047 = vrcp.pop %v1035
        %v1048 = vmul.f32 1.0, %v1047
        %v1049 = vrcp.pop %v1036
        %v1050 = vmul.f32 1.0, %v1049
        %v1051 = vrcp.pop %v1037
        %v1052 = vmul.f32 1.0, %v1051
        %v1053 = vrcp.pop %v1038
        %v1054 = vmul.f32 1.0, %v1053
        %v1055 = vmul.f32 %v999, %v1040
        %v1056 = vmul.f32 %v1000, %v1042
        %v1057 = vmul.f32 %v1001, %v1044
        %v1058 = vmul.f32 %v1002, %v1046
        %v1059 = vmul.f32 %v1003, %v1048
        %v1060 = vmul.f32 %v1004, %v1050
        %v1061 = vmul.f32 %v1005, %v1052
        %v1062 = vmul.f32 %v1006, %v1054
        %v1063 = vld [vmem:[%s2] sm:$0xf]
        %v1064 = vld [vmem:[%s2 + $0x4] sm:$0xf]
        %v1065 = vpack.c.bf16 %v746, %v745
        %v1066 = vpack.c.bf16 %v748, %v747
        %v1067 = vpack.c.bf16 %v750, %v749
        %v1068 = vpack.c.bf16 %v752, %v751
        %v1069 = vpack.c.bf16 %v1056, %v1055
        %v1070 = vpack.c.bf16 %v1058, %v1057
        %v1071 = vpack.c.bf16 %v1060, %v1059
        %v1072 = vpack.c.bf16 %v1062, %v1061
        %v1075 = vunpack.c.l.b16 %v1063
        %v1076 = vunpack.c.l.b16 %v1064
        %v1077 = vpack.c.b16 %v1076, %v1075
        %v1079 = vsel %vm753, %v1077, 0
        %1081 = vmatprep.subr.bf16.mxu0 0
        %1082 = vmatpush1.bf16.msra.mxu0 0
        %1083 = vmatprep.subr.bf16.mxu0 0
        %1084 = vmatpush1.bf16.msra.mxu0 0
        %1085 = vmatprep.subr.bf16.mxu0 0
        %1086 = vmatpush1.bf16.msra.mxu0 0
        %1087 = vmatprep.subr.bf16.mxu0 0
        %1088 = vmatpush1.bf16.msra.mxu0 0
        %1089 = vmatprep.subr.bf16.mxu0 0
        %1090 = vmatpush1.bf16.msra.mxu0 %v1072
        %1091 = vmatprep.subr.bf16.mxu0 0
        %1092 = vmatpush1.bf16.msra.mxu0 %v1071
        %1093 = vmatprep.subr.bf16.mxu0 0
        %1094 = vmatpush1.bf16.msra.mxu0 %v1070
        %1095 = vmatprep.subr.bf16.mxu0 0
        %1096 = vmatpush1.bf16.msra.mxu0 %v1069
        %1097 = vmatprep.subr.bf16.mxu0 0
        %1098 = vmatpush2.bf16.msra.mxu0 0
        %1099 = vmatprep.subr.bf16.mxu0 0
        %1100 = vmatpush2.bf16.msra.mxu0 0
        %1101 = vmatprep.subr.bf16.mxu0 0
        %1102 = vmatpush2.bf16.msra.mxu0 0
        %1103 = vmatprep.subr.bf16.mxu0 0
        %1104 = vmatpush2.bf16.msra.mxu0 0
        %1105 = vmatprep.subr.bf16.mxu0 0
        %1106 = vmatpush2.bf16.msra.mxu0 0
        %1107 = vmatprep.subr.bf16.mxu0 0
        %1108 = vmatpush2.bf16.msra.mxu0 0
        %1109 = vmatprep.subr.bf16.mxu0 0
        %1110 = vmatpush2.bf16.msra.mxu0 0
        %1111 = vmatprep.subr.bf16.mxu0 0
        %1112 = vmatpush2.bf16.msra.mxu0 0
        %1113 = vmatprep.mubr.bf16.mxu0 0
        %1114 = vmatmul.mubr.bf16.gmra.mxu0 %v1079
        %v1115 = vpop.f32.mrf.mxu0
        %v1116 = vadd.f32 0.0, %v1115
        %v1117 = vpop.f32.mrf.mxu0
        %v1118 = vpop.f32.mrf.mxu0
        %v1119 = vadd.f32 0.0, %v1118
        %v1120 = vpop.f32.mrf.mxu0
        %1121 = vdwg.mxu0
        %v1122 = vld [vmem:[%s3] sm:$0xf]
        %v1123 = vld [vmem:[%s3 + $0x4] sm:$0xf]
        %v1124 = vld [vmem:[%s3 + $0x8] sm:$0xf]
        %v1125 = vld [vmem:[%s3 + $0xc] sm:$0xf]
        %v1126 = vld [vmem:[%s3 + $0x10] sm:$0xf]
        %v1127 = vld [vmem:[%s3 + $0x14] sm:$0xf]
        %v1128 = vld [vmem:[%s3 + $0x18] sm:$0xf]
        %v1129 = vld [vmem:[%s3 + $0x1c] sm:$0xf]
        %v1130 = vld [vmem:[%s3 + $0x20] sm:$0xf]
        %v1131 = vld [vmem:[%s3 + $0x24] sm:$0xf]
        %v1132 = vld [vmem:[%s3 + $0x28] sm:$0xf]
        %v1133 = vld [vmem:[%s3 + $0x2c] sm:$0xf]
        %v1134 = vld [vmem:[%s3 + $0x30] sm:$0xf]
        %v1135 = vld [vmem:[%s3 + $0x34] sm:$0xf]
        %v1136 = vld [vmem:[%s3 + $0x38] sm:$0xf]
        %v1137 = vld [vmem:[%s3 + $0x3c] sm:$0xf]
        %v1138 = vld [vmem:[%s3 + $0x40] sm:$0xf]
        %v1139 = vld [vmem:[%s3 + $0x44] sm:$0xf]
        %v1140 = vpack.c.bf16 %v1119, %v1116
        %v1159 = vunpack.c.l.b16 %v1122
        %v1160 = vunpack.c.l.b16 %v1123
        %v1161 = vunpack.c.l.b16 %v1124
        %v1162 = vunpack.c.l.b16 %v1125
        %v1163 = vunpack.c.l.b16 %v1126
        %v1164 = vunpack.c.l.b16 %v1127
        %v1165 = vunpack.c.l.b16 %v1128
        %v1166 = vunpack.c.l.b16 %v1129
        %v1167 = vunpack.c.l.b16 %v1130
        %v1168 = vunpack.c.l.b16 %v1131
        %v1169 = vunpack.c.l.b16 %v1132
        %v1170 = vunpack.c.l.b16 %v1133
        %v1171 = vunpack.c.l.b16 %v1134
        %v1172 = vunpack.c.l.b16 %v1135
        %v1173 = vunpack.c.l.b16 %v1136
        %v1174 = vunpack.c.l.b16 %v1137
        %v1175 = vunpack.c.l.b16 %v1138
        %v1176 = vunpack.c.l.b16 %v1139
        %v1177 = vpack.c.b16 %v1160, %v1159
        %v1178 = vpack.c.b16 %v1162, %v1161
        %v1179 = vpack.c.b16 %v1164, %v1163
        %v1180 = vpack.c.b16 %v1166, %v1165
        %v1181 = vpack.c.b16 %v1168, %v1167
        %v1182 = vpack.c.b16 %v1170, %v1169
        %v1183 = vpack.c.b16 %v1172, %v1171
        %v1184 = vpack.c.b16 %v1174, %v1173
        %v1185 = vpack.c.b16 %v1176, %v1175
        %vm1186 = vcmask 130048
        %v1188 = vsel %vm1186, %v1177, 0
        %v1191 = vsel %vm1186, %v1178, 0
        %v1194 = vsel %vm1186, %v1179, 0
        %v1197 = vsel %vm1186, %v1180, 0
        %v1200 = vsel %vm1186, %v1181, 0
        %v1203 = vsel %vm1186, %v1182, 0
        %v1206 = vsel %vm1186, %v1183, 0
        %v1209 = vsel %vm1186, %v1184, 0
        %v1212 = vsel %vm1186, %v1185, 0
        %1214 = vmatprep.subr.bf16.mxu0 0
        %1215 = vmatpush1.bf16.msra.mxu0 0
        %1216 = vmatprep.subr.bf16.mxu0 0
        %1217 = vmatpush1.bf16.msra.mxu0 0
        %1218 = vmatprep.subr.bf16.mxu0 0
        %1219 = vmatpush1.bf16.msra.mxu0 0
        %1220 = vmatprep.subr.bf16.mxu0 0
        %1221 = vmatpush1.bf16.msra.mxu0 0
        %1222 = vmatprep.subr.bf16.mxu0 0
        %1223 = vmatpush1.bf16.msra.mxu0 0
        %1224 = vmatprep.subr.bf16.mxu0 0
        %1225 = vmatpush1.bf16.msra.mxu0 0
        %1226 = vmatprep.subr.bf16.mxu0 0
        %1227 = vmatpush1.bf16.msra.mxu0 0
        %1228 = vmatprep.subr.bf16.mxu0 0
        %1229 = vmatpush1.bf16.msra.mxu0 %v1140
        %1230 = vmatprep.subr.bf16.mxu0 0
        %1231 = vmatpush2.bf16.msra.mxu0 0
        %1232 = vmatprep.subr.bf16.mxu0 0
        %1233 = vmatpush2.bf16.msra.mxu0 0
        %1234 = vmatprep.subr.bf16.mxu0 0
        %1235 = vmatpush2.bf16.msra.mxu0 0
        %1236 = vmatprep.subr.bf16.mxu0 0
        %1237 = vmatpush2.bf16.msra.mxu0 0
        %1238 = vmatprep.subr.bf16.mxu0 0
        %1239 = vmatpush2.bf16.msra.mxu0 0
        %1240 = vmatprep.subr.bf16.mxu0 0
        %1241 = vmatpush2.bf16.msra.mxu0 0
        %1242 = vmatprep.subr.bf16.mxu0 0
        %1243 = vmatpush2.bf16.msra.mxu0 0
        %1244 = vmatprep.subr.bf16.mxu0 0
        %1245 = vmatpush2.bf16.msra.mxu0 0
        %1246 = vmatprep.mubr.bf16.mxu0 0
        %1247 = vmatmul.mubr.bf16.gmra.mxu0 %v1188
        %v1248 = vpop.f32.mrf.mxu0
        %v1249 = vadd.f32 0.0, %v1248
        %v1250 = vpop.f32.mrf.mxu0
        %v1251 = vpop.f32.mrf.mxu0
        %v1252 = vadd.f32 0.0, %v1251
        %v1253 = vpop.f32.mrf.mxu0
        %1254 = vmatprep.mubr.bf16.mxu0 0
        %1255 = vmatmul.mubr.bf16.gmra.mxu0 %v1191
        %v1256 = vpop.f32.mrf.mxu0
        %v1257 = vadd.f32 0.0, %v1256
        %v1258 = vpop.f32.mrf.mxu0
        %v1259 = vpop.f32.mrf.mxu0
        %v1260 = vadd.f32 0.0, %v1259
        %v1261 = vpop.f32.mrf.mxu0
        %1262 = vmatprep.mubr.bf16.mxu0 0
        %1263 = vmatmul.mubr.bf16.gmra.mxu0 %v1194
        %v1264 = vpop.f32.mrf.mxu0
        %v1265 = vadd.f32 0.0, %v1264
        %v1266 = vpop.f32.mrf.mxu0
        %v1267 = vpop.f32.mrf.mxu0
        %v1268 = vadd.f32 0.0, %v1267
        %v1269 = vpop.f32.mrf.mxu0
        %1270 = vmatprep.mubr.bf16.mxu0 0
        %1271 = vmatmul.mubr.bf16.gmra.mxu0 %v1197
        %v1272 = vpop.f32.mrf.mxu0
        %v1273 = vadd.f32 0.0, %v1272
        %v1274 = vpop.f32.mrf.mxu0
        %v1275 = vpop.f32.mrf.mxu0
        %v1276 = vadd.f32 0.0, %v1275
        %v1277 = vpop.f32.mrf.mxu0
        %1278 = vmatprep.mubr.bf16.mxu0 0
        %1279 = vmatmul.mubr.bf16.gmra.mxu0 %v1200
        %v1280 = vpop.f32.mrf.mxu0
        %v1281 = vadd.f32 0.0, %v1280
        %v1282 = vpop.f32.mrf.mxu0
        %v1283 = vpop.f32.mrf.mxu0
        %v1284 = vadd.f32 0.0, %v1283
        %v1285 = vpop.f32.mrf.mxu0
        %1286 = vmatprep.mubr.bf16.mxu0 0
        %1287 = vmatmul.mubr.bf16.gmra.mxu0 %v1203
        %v1288 = vpop.f32.mrf.mxu0
        %v1289 = vadd.f32 0.0, %v1288
        %v1290 = vpop.f32.mrf.mxu0
        %v1291 = vpop.f32.mrf.mxu0
        %v1292 = vadd.f32 0.0, %v1291
        %v1293 = vpop.f32.mrf.mxu0
        %1294 = vmatprep.mubr.bf16.mxu0 0
        %1295 = vmatmul.mubr.bf16.gmra.mxu0 %v1206
        %v1296 = vpop.f32.mrf.mxu0
        %v1297 = vadd.f32 0.0, %v1296
        %v1298 = vpop.f32.mrf.mxu0
        %v1299 = vpop.f32.mrf.mxu0
        %v1300 = vadd.f32 0.0, %v1299
        %v1301 = vpop.f32.mrf.mxu0
        %1302 = vmatprep.mubr.bf16.mxu0 0
        %1303 = vmatmul.mubr.bf16.gmra.mxu0 %v1209
        %v1304 = vpop.f32.mrf.mxu0
        %v1305 = vadd.f32 0.0, %v1304
        %v1306 = vpop.f32.mrf.mxu0
        %v1307 = vpop.f32.mrf.mxu0
        %v1308 = vadd.f32 0.0, %v1307
        %v1309 = vpop.f32.mrf.mxu0
        %1310 = vmatprep.mubr.bf16.mxu0 0
        %1311 = vmatmul.mubr.bf16.gmra.mxu0 %v1212
        %v1312 = vpop.f32.mrf.mxu0
        %v1313 = vadd.f32 0.0, %v1312
        %v1314 = vpop.f32.mrf.mxu0
        %v1315 = vpop.f32.mrf.mxu0
        %v1316 = vadd.f32 0.0, %v1315
        %v1317 = vpop.f32.mrf.mxu0
        %1318 = vdwg.mxu0
        %1321 = vrot.lane.b32.xlu0 %v1257, 64
        %v1322 = vpop.permute.xlu0 %1321
        %1323 = vrot.lane.b32.xlu0 %v1260, 64
        %v1324 = vpop.permute.xlu0 %1323
        %1329 = vrot.lane.b32.xlu0 %v1273, 64
        %v1330 = vpop.permute.xlu0 %1329
        %1331 = vrot.lane.b32.xlu0 %v1276, 64
        %v1332 = vpop.permute.xlu0 %1331
        %1337 = vrot.lane.b32.xlu0 %v1289, 64
        %v1338 = vpop.permute.xlu0 %1337
        %1339 = vrot.lane.b32.xlu0 %v1292, 64
        %v1340 = vpop.permute.xlu0 %1339
        %1345 = vrot.lane.b32.xlu0 %v1305, 64
        %v1346 = vpop.permute.xlu0 %1345
        %1347 = vrot.lane.b32.xlu0 %v1308, 64
        %v1348 = vpop.permute.xlu0 %1347
        %v1351 = vsel %vm753, %v1249, %v1322
        %v1352 = vsel %vm753, %v1252, %v1324
        %v1353 = vsel %vm753, %v1265, %v1330
        %v1354 = vsel %vm753, %v1268, %v1332
        %v1355 = vsel %vm753, %v1281, %v1338
        %v1356 = vsel %vm753, %v1284, %v1340
        %v1357 = vsel %vm753, %v1297, %v1346
        %v1358 = vsel %vm753, %v1300, %v1348
        %v1359 = vpack.c.bf16 %v1352, %v1351
        %v1360 = vpack.c.bf16 %v1354, %v1353
        %v1361 = vpack.c.bf16 %v1356, %v1355
        %v1362 = vpack.c.bf16 %v1358, %v1357
        %v1363 = vpack.c.bf16 %v1316, %v1313
        %v1364 = vld [vmem:[%s8] sm:$0xf]
        %v1365 = vld [vmem:[%s8 + $0x4] sm:$0xf]
        %v1366 = vld [vmem:[%s8 + $0x8] sm:$0xf]
        %v1367 = vld [vmem:[%s8 + $0xc] sm:$0xf]
        %v1368 = vld [vmem:[%s8 + $0x10] sm:$0xf]
        %v1369 = vld [vmem:[%s8 + $0x14] sm:$0xf]
        %v1370 = vld [vmem:[%s8 + $0x18] sm:$0xf]
        %v1371 = vld [vmem:[%s8 + $0x1c] sm:$0xf]
        %v1372 = vld [vmem:[%s8 + $0x20] sm:$0xf]
        %v1373 = vld [vmem:[%s8 + $0x24] sm:$0xf]
        %v1374 = vld [vmem:[%s8 + $0x28] sm:$0xf]
        %v1375 = vld [vmem:[%s8 + $0x2c] sm:$0xf]
        %v1376 = vld [vmem:[%s8 + $0x30] sm:$0xf]
        %v1377 = vld [vmem:[%s8 + $0x34] sm:$0xf]
        %v1378 = vld [vmem:[%s8 + $0x38] sm:$0xf]
        %v1379 = vld [vmem:[%s8 + $0x3c] sm:$0xf]
        %v1380 = vld [vmem:[%s8 + $0x40] sm:$0xf]
        %v1381 = vld [vmem:[%s8 + $0x44] sm:$0xf]
        %v1382 = vld [vmem:[%s8 + $0x48] sm:$0xf]
        %v1383 = vld [vmem:[%s8 + $0x4c] sm:$0xf]
        %v1384 = vld [vmem:[%s8 + $0x50] sm:$0xf]
        %v1385 = vld [vmem:[%s8 + $0x54] sm:$0xf]
        %v1386 = vld [vmem:[%s8 + $0x58] sm:$0xf]
        %v1387 = vld [vmem:[%s8 + $0x5c] sm:$0xf]
        %v1388 = vld [vmem:[%s8 + $0x60] sm:$0xf]
        %v1389 = vld [vmem:[%s8 + $0x64] sm:$0xf]
        %v1390 = vld [vmem:[%s8 + $0x68] sm:$0xf]
        %v1391 = vld [vmem:[%s8 + $0x6c] sm:$0xf]
        %v1392 = vld [vmem:[%s8 + $0x70] sm:$0xf]
        %v1393 = vld [vmem:[%s8 + $0x74] sm:$0xf]
        %v1394 = vld [vmem:[%s8 + $0x78] sm:$0xf]
        %v1395 = vld [vmem:[%s8 + $0x7c] sm:$0xf]
        %v1396 = vld [vmem:[%s8 + $0x80] sm:$0xf]
        %v1397 = vld [vmem:[%s8 + $0x84] sm:$0xf]
        %v1398 = vld [vmem:[%s8 + $0x88] sm:$0xf]
        %v1399 = vld [vmem:[%s8 + $0x8c] sm:$0xf]
        %v1400 = vld [vmem:[%s8 + $0x90] sm:$0xf]
        %v1401 = vld [vmem:[%s8 + $0x94] sm:$0xf]
        %v1402 = vld [vmem:[%s8 + $0x98] sm:$0xf]
        %v1403 = vld [vmem:[%s8 + $0x9c] sm:$0xf]
        %v1404 = vld [vmem:[%s8 + $0xa0] sm:$0xf]
        %v1405 = vld [vmem:[%s8 + $0xa4] sm:$0xf]
        %v1406 = vld [vmem:[%s8 + $0xa8] sm:$0xf]
        %v1407 = vld [vmem:[%s8 + $0xac] sm:$0xf]
        %v1408 = vld [vmem:[%s8 + $0xb0] sm:$0xf]
        %v1409 = vld [vmem:[%s8 + $0xb4] sm:$0xf]
        %v1410 = vld [vmem:[%s8 + $0xb8] sm:$0xf]
        %v1411 = vld [vmem:[%s8 + $0xbc] sm:$0xf]
        %v1412 = vld [vmem:[%s8 + $0xc0] sm:$0xf]
        %v1413 = vld [vmem:[%s8 + $0xc4] sm:$0xf]
        %v1414 = vld [vmem:[%s8 + $0xc8] sm:$0xf]
        %v1415 = vld [vmem:[%s8 + $0xcc] sm:$0xf]
        %v1416 = vld [vmem:[%s8 + $0xd0] sm:$0xf]
        %v1417 = vld [vmem:[%s8 + $0xd4] sm:$0xf]
        %v1418 = vld [vmem:[%s8 + $0xd8] sm:$0xf]
        %v1419 = vld [vmem:[%s8 + $0xdc] sm:$0xf]
        %v1420 = vld [vmem:[%s8 + $0xe0] sm:$0xf]
        %v1421 = vld [vmem:[%s8 + $0xe4] sm:$0xf]
        %v1422 = vld [vmem:[%s8 + $0xe8] sm:$0xf]
        %v1423 = vld [vmem:[%s8 + $0xec] sm:$0xf]
        %v1424 = vld [vmem:[%s8 + $0xf0] sm:$0xf]
        %v1425 = vld [vmem:[%s8 + $0xf4] sm:$0xf]
        %v1426 = vld [vmem:[%s8 + $0xf8] sm:$0xf]
        %v1427 = vld [vmem:[%s8 + $0xfc] sm:$0xf]
        %v1428 = vld [vmem:[%s8 + $0x100] sm:$0xf]
        %v1429 = vld [vmem:[%s8 + $0x104] sm:$0xf]
        %v1430 = vld [vmem:[%s8 + $0x108] sm:$0xf]
        %v1431 = vld [vmem:[%s8 + $0x10c] sm:$0xf]
        %v1432 = vld [vmem:[%s8 + $0x110] sm:$0xf]
        %v1433 = vld [vmem:[%s8 + $0x114] sm:$0xf]
        %v1434 = vld [vmem:[%s8 + $0x118] sm:$0xf]
        %v1435 = vld [vmem:[%s8 + $0x11c] sm:$0xf]
        %v1436 = vld [vmem:[%s9] sm:$0x1]
        %v1438 = vlaneseq
        %v1439 = vshrl.u32 %v1438, 7
        %v1440 = vsub.s32 0, %v1439
        %v1441 = vrot.slane %v1436, %v1440
        %v1515 = vunpack.c.l.b16 %v1364
        %v1516 = vunpack.c.l.b16 %v1365
        %v1517 = vunpack.c.l.b16 %v1366
        %v1518 = vunpack.c.l.b16 %v1367
        %v1519 = vunpack.c.l.b16 %v1368
        %v1520 = vunpack.c.l.b16 %v1369
        %v1521 = vunpack.c.l.b16 %v1370
        %v1522 = vunpack.c.l.b16 %v1371
        %v1523 = vunpack.c.l.b16 %v1372
        %v1524 = vunpack.c.l.b16 %v1373
        %v1525 = vunpack.c.l.b16 %v1374
        %v1526 = vunpack.c.l.b16 %v1375
        %v1527 = vunpack.c.l.b16 %v1376
        %v1528 = vunpack.c.l.b16 %v1377
        %v1529 = vunpack.c.l.b16 %v1378
        %v1530 = vunpack.c.l.b16 %v1379
        %v1531 = vunpack.c.l.b16 %v1380
        %v1532 = vunpack.c.l.b16 %v1381
        %v1533 = vunpack.c.l.b16 %v1382
        %v1534 = vunpack.c.l.b16 %v1383
        %v1535 = vunpack.c.l.b16 %v1384
        %v1536 = vunpack.c.l.b16 %v1385
        %v1537 = vunpack.c.l.b16 %v1386
        %v1538 = vunpack.c.l.b16 %v1387
        %v1539 = vunpack.c.l.b16 %v1388
        %v1540 = vunpack.c.l.b16 %v1389
        %v1541 = vunpack.c.l.b16 %v1390
        %v1542 = vunpack.c.l.b16 %v1391
        %v1543 = vunpack.c.l.b16 %v1392
        %v1544 = vunpack.c.l.b16 %v1393
        %v1545 = vunpack.c.l.b16 %v1394
        %v1546 = vunpack.c.l.b16 %v1395
        %v1547 = vunpack.c.l.b16 %v1396
        %v1548 = vunpack.c.l.b16 %v1397
        %v1549 = vunpack.c.l.b16 %v1398
        %v1550 = vunpack.c.l.b16 %v1399
        %v1551 = vunpack.c.l.b16 %v1400
        %v1552 = vunpack.c.l.b16 %v1401
        %v1553 = vunpack.c.l.b16 %v1402
        %v1554 = vunpack.c.l.b16 %v1403
        %v1555 = vunpack.c.l.b16 %v1404
        %v1556 = vunpack.c.l.b16 %v1405
        %v1557 = vunpack.c.l.b16 %v1406
        %v1558 = vunpack.c.l.b16 %v1407
        %v1559 = vunpack.c.l.b16 %v1408
        %v1560 = vunpack.c.l.b16 %v1409
        %v1561 = vunpack.c.l.b16 %v1410
        %v1562 = vunpack.c.l.b16 %v1411
        %v1563 = vunpack.c.l.b16 %v1412
        %v1564 = vunpack.c.l.b16 %v1413
        %v1565 = vunpack.c.l.b16 %v1414
        %v1566 = vunpack.c.l.b16 %v1415
        %v1567 = vunpack.c.l.b16 %v1416
        %v1568 = vunpack.c.l.b16 %v1417
        %v1569 = vunpack.c.l.b16 %v1418
        %v1570 = vunpack.c.l.b16 %v1419
        %v1571 = vunpack.c.l.b16 %v1420
        %v1572 = vunpack.c.l.b16 %v1421
        %v1573 = vunpack.c.l.b16 %v1422
        %v1574 = vunpack.c.l.b16 %v1423
        %v1575 = vunpack.c.l.b16 %v1424
        %v1576 = vunpack.c.l.b16 %v1425
        %v1577 = vunpack.c.l.b16 %v1426
        %v1578 = vunpack.c.l.b16 %v1427
        %v1579 = vunpack.c.l.b16 %v1428
        %v1580 = vunpack.c.l.b16 %v1429
        %v1581 = vunpack.c.l.b16 %v1430
        %v1582 = vunpack.c.l.b16 %v1431
        %v1583 = vunpack.c.l.b16 %v1432
        %v1584 = vunpack.c.l.b16 %v1433
        %v1585 = vunpack.c.l.b16 %v1434
        %v1586 = vunpack.c.l.b16 %v1435
        %v1587 = vpack.c.b16 %v1516, %v1515
        %v1588 = vpack.c.b16 %v1518, %v1517
        %v1589 = vpack.c.b16 %v1520, %v1519
        %v1590 = vpack.c.b16 %v1522, %v1521
        %v1591 = vpack.c.b16 %v1524, %v1523
        %v1592 = vpack.c.b16 %v1526, %v1525
        %v1593 = vpack.c.b16 %v1528, %v1527
        %v1594 = vpack.c.b16 %v1530, %v1529
        %v1595 = vpack.c.b16 %v1532, %v1531
        %v1596 = vpack.c.b16 %v1534, %v1533
        %v1597 = vpack.c.b16 %v1536, %v1535
        %v1598 = vpack.c.b16 %v1538, %v1537
        %v1599 = vpack.c.b16 %v1540, %v1539
        %v1600 = vpack.c.b16 %v1542, %v1541
        %v1601 = vpack.c.b16 %v1544, %v1543
        %v1602 = vpack.c.b16 %v1546, %v1545
        %v1603 = vpack.c.b16 %v1548, %v1547
        %v1604 = vpack.c.b16 %v1550, %v1549
        %v1605 = vpack.c.b16 %v1552, %v1551
        %v1606 = vpack.c.b16 %v1554, %v1553
        %v1607 = vpack.c.b16 %v1556, %v1555
        %v1608 = vpack.c.b16 %v1558, %v1557
        %v1609 = vpack.c.b16 %v1560, %v1559
        %v1610 = vpack.c.b16 %v1562, %v1561
        %v1611 = vpack.c.b16 %v1564, %v1563
        %v1612 = vpack.c.b16 %v1566, %v1565
        %v1613 = vpack.c.b16 %v1568, %v1567
        %v1614 = vpack.c.b16 %v1570, %v1569
        %v1615 = vpack.c.b16 %v1572, %v1571
        %v1616 = vpack.c.b16 %v1574, %v1573
        %v1617 = vpack.c.b16 %v1576, %v1575
        %v1618 = vpack.c.b16 %v1578, %v1577
        %v1619 = vpack.c.b16 %v1580, %v1579
        %v1620 = vpack.c.b16 %v1582, %v1581
        %v1621 = vpack.c.b16 %v1584, %v1583
        %v1622 = vpack.c.b16 %v1586, %v1585
        %v1660 = vsel %vm753, %v1363, 0
        %1662 = vmatprep.subr.bf16.mxu0 0
        %1663 = vmatpush1.bf16.msra.mxu0 %v1594
        %1664 = vmatprep.subr.bf16.mxu0 0
        %1665 = vmatpush1.bf16.msra.mxu0 %v1593
        %1666 = vmatprep.subr.bf16.mxu0 0
        %1667 = vmatpush1.bf16.msra.mxu0 %v1592
        %1668 = vmatprep.subr.bf16.mxu0 0
        %1669 = vmatpush1.bf16.msra.mxu0 %v1591
        %1670 = vmatprep.subr.bf16.mxu0 0
        %1671 = vmatpush1.bf16.msra.mxu0 %v1590
        %1672 = vmatprep.subr.bf16.mxu0 0
        %1673 = vmatpush1.bf16.msra.mxu0 %v1589
        %1674 = vmatprep.subr.bf16.mxu0 0
        %1675 = vmatpush1.bf16.msra.mxu0 %v1588
        %1676 = vmatprep.subr.bf16.mxu0 0
        %1677 = vmatpush1.bf16.msra.mxu0 %v1587
        %1678 = vmatprep.subr.bf16.mxu0 0
        %1679 = vmatpush2.bf16.msra.mxu0 %v1602
        %1680 = vmatprep.subr.bf16.mxu0 0
        %1681 = vmatpush2.bf16.msra.mxu0 %v1601
        %1682 = vmatprep.subr.bf16.mxu0 0
        %1683 = vmatpush2.bf16.msra.mxu0 %v1600
        %1684 = vmatprep.subr.bf16.mxu0 0
        %1685 = vmatpush2.bf16.msra.mxu0 %v1599
        %1686 = vmatprep.subr.bf16.mxu0 0
        %1687 = vmatpush2.bf16.msra.mxu0 %v1598
        %1688 = vmatprep.subr.bf16.mxu0 0
        %1689 = vmatpush2.bf16.msra.mxu0 %v1597
        %1690 = vmatprep.subr.bf16.mxu0 0
        %1691 = vmatpush2.bf16.msra.mxu0 %v1596
        %1692 = vmatprep.subr.bf16.mxu0 0
        %1693 = vmatpush2.bf16.msra.mxu0 %v1595
        %1694 = vmatprep.mubr.bf16.mxu0 %v1360
        %1695 = vmatmul.mubr.bf16.gmra.mxu0 %v1359
        %v1696 = vpop.f32.mrf.mxu0
        %v1697 = vadd.f32 %v1441, %v1696
        %v1698 = vpop.f32.mrf.mxu0
        %v1699 = vpop.f32.mrf.mxu0
        %v1700 = vadd.f32 %v1441, %v1699
        %v1701 = vpop.f32.mrf.mxu0
        %1702 = vdwg.mxu0
        %1703 = vmatprep.subr.bf16.mxu0 0
        %1704 = vmatpush1.bf16.msra.mxu0 %v1610
        %1705 = vmatprep.subr.bf16.mxu0 0
        %1706 = vmatpush1.bf16.msra.mxu0 %v1609
        %1707 = vmatprep.subr.bf16.mxu0 0
        %1708 = vmatpush1.bf16.msra.mxu0 %v1608
        %1709 = vmatprep.subr.bf16.mxu0 0
        %1710 = vmatpush1.bf16.msra.mxu0 %v1607
        %1711 = vmatprep.subr.bf16.mxu0 0
        %1712 = vmatpush1.bf16.msra.mxu0 %v1606
        %1713 = vmatprep.subr.bf16.mxu0 0
        %1714 = vmatpush1.bf16.msra.mxu0 %v1605
        %1715 = vmatprep.subr.bf16.mxu0 0
        %1716 = vmatpush1.bf16.msra.mxu0 %v1604
        %1717 = vmatprep.subr.bf16.mxu0 0
        %1718 = vmatpush1.bf16.msra.mxu0 %v1603
        %1719 = vmatprep.subr.bf16.mxu0 0
        %1720 = vmatpush2.bf16.msra.mxu0 %v1618
        %1721 = vmatprep.subr.bf16.mxu0 0
        %1722 = vmatpush2.bf16.msra.mxu0 %v1617
        %1723 = vmatprep.subr.bf16.mxu0 0
        %1724 = vmatpush2.bf16.msra.mxu0 %v1616
        %1725 = vmatprep.subr.bf16.mxu0 0
        %1726 = vmatpush2.bf16.msra.mxu0 %v1615
        %1727 = vmatprep.subr.bf16.mxu0 0
        %1728 = vmatpush2.bf16.msra.mxu0 %v1614
        %1729 = vmatprep.subr.bf16.mxu0 0
        %1730 = vmatpush2.bf16.msra.mxu0 %v1613
        %1731 = vmatprep.subr.bf16.mxu0 0
        %1732 = vmatpush2.bf16.msra.mxu0 %v1612
        %1733 = vmatprep.subr.bf16.mxu0 0
        %1734 = vmatpush2.bf16.msra.mxu0 %v1611
        %1735 = vmatprep.mubr.bf16.mxu0 %v1362
        %1736 = vmatmul.mubr.bf16.gmra.mxu0 %v1361
        %v1737 = vpop.f32.mrf.mxu0
        %v1738 = vadd.f32 %v1697, %v1737
        %v1739 = vpop.f32.mrf.mxu0
        %v1740 = vpop.f32.mrf.mxu0
        %v1741 = vadd.f32 %v1700, %v1740
        %v1742 = vpop.f32.mrf.mxu0
        %1743 = vdwg.mxu0
        %1744 = vmatprep.subr.bf16.mxu0 0
        %1745 = vmatpush1.bf16.msra.mxu0 0
        %1746 = vmatprep.subr.bf16.mxu0 0
        %1747 = vmatpush1.bf16.msra.mxu0 0
        %1748 = vmatprep.subr.bf16.mxu0 0
        %1749 = vmatpush1.bf16.msra.mxu0 0
        %1750 = vmatprep.subr.bf16.mxu0 0
        %1751 = vmatpush1.bf16.msra.mxu0 0
        %1752 = vmatprep.subr.bf16.mxu0 0
        %1753 = vmatpush1.bf16.msra.mxu0 %v1622
        %1754 = vmatprep.subr.bf16.mxu0 0
        %1755 = vmatpush1.bf16.msra.mxu0 %v1621
        %1756 = vmatprep.subr.bf16.mxu0 0
        %1757 = vmatpush1.bf16.msra.mxu0 %v1620
        %1758 = vmatprep.subr.bf16.mxu0 0
        %1759 = vmatpush1.bf16.msra.mxu0 %v1619
        %1760 = vmatprep.subr.bf16.mxu0 0
        %1761 = vmatpush2.bf16.msra.mxu0 0
        %1762 = vmatprep.subr.bf16.mxu0 0
        %1763 = vmatpush2.bf16.msra.mxu0 0
        %1764 = vmatprep.subr.bf16.mxu0 0
        %1765 = vmatpush2.bf16.msra.mxu0 0
        %1766 = vmatprep.subr.bf16.mxu0 0
        %1767 = vmatpush2.bf16.msra.mxu0 0
        %1768 = vmatprep.subr.bf16.mxu0 0
        %1769 = vmatpush2.bf16.msra.mxu0 0
        %1770 = vmatprep.subr.bf16.mxu0 0
        %1771 = vmatpush2.bf16.msra.mxu0 0
        %1772 = vmatprep.subr.bf16.mxu0 0
        %1773 = vmatpush2.bf16.msra.mxu0 0
        %1774 = vmatprep.subr.bf16.mxu0 0
        %1775 = vmatpush2.bf16.msra.mxu0 0
        %1776 = vmatprep.mubr.bf16.mxu0 0
        %1777 = vmatmul.mubr.bf16.gmra.mxu0 %v1660
        %v1778 = vpop.f32.mrf.mxu0
        %v1779 = vadd.f32 %v1738, %v1778
        %v1780 = vpop.f32.mrf.mxu0
        %v1781 = vpop.f32.mrf.mxu0
        %v1782 = vadd.f32 %v1741, %v1781
        %v1783 = vpop.f32.mrf.mxu0
        %1784 = vdwg.mxu0
        %v1785 = vsel %vm753, %v1779, 0.0
        %v1786 = vsel %vm753, %v1782, 0.0
        %v1787 = vadd.f32 %v1785, %v1786
        %v1788 = vrot.slane %v1787, 4
        %v1789 = vadd.f32 %v1787, %v1788
        %v1790 = vrot.slane %v1789, 2
        %v1791 = vadd.f32 %v1789, %v1790
        %v1792 = vrot.slane %v1791, 1
        %v1793 = vadd.f32 %v1791, %v1792
        %v1794 = vmul.f32 %v1793, 0.03125
        %v1796 = vsel %vm753, %v1794, 0
        %1798 = vmatprep.subr.mxu0 0.0
        %1799 = vmatpush1.msra.mxu0 0.0
        %1800 = vmatprep.subr.mxu0 0.0
        %1801 = vmatpush1.msra.mxu0 0.0
        %1802 = vmatprep.subr.mxu0 0.0
        %1803 = vmatpush1.msra.mxu0 0.0
        %1804 = vmatprep.subr.mxu0 0.0
        %1805 = vmatpush1.msra.mxu0 0.0
        %1806 = vmatprep.subr.mxu0 0.0
        %1807 = vmatpush1.msra.mxu0 0.0
        %1808 = vmatprep.subr.mxu0 0.0
        %1809 = vmatpush1.msra.mxu0 0.0
        %1810 = vmatprep.subr.mxu0 0.0
        %1811 = vmatpush1.msra.mxu0 0.0
        %1812 = vmatprep.subr.mxu0 0.0
        %1813 = vmatpush1.msra.mxu0 0.0
        %1814 = vmatprep.subr.mxu0 0.0
        %1815 = vmatpush1.msra.mxu0 %v744
        %1816 = vmatprep.subr.mxu0 0.0
        %1817 = vmatpush1.msra.mxu0 %v743
        %1818 = vmatprep.subr.mxu0 0.0
        %1819 = vmatpush1.msra.mxu0 %v742
        %1820 = vmatprep.subr.mxu0 0.0
        %1821 = vmatpush1.msra.mxu0 %v741
        %1822 = vmatprep.subr.mxu0 0.0
        %1823 = vmatpush1.msra.mxu0 %v740
        %1824 = vmatprep.subr.mxu0 0.0
        %1825 = vmatpush1.msra.mxu0 %v739
        %1826 = vmatprep.subr.mxu0 0.0
        %1827 = vmatpush1.msra.mxu0 %v738
        %1828 = vmatprep.subr.mxu0 0.0
        %1829 = vmatpush1.msra.mxu0 %v737
        %1830 = vmatprep.subr.mxu0 0.0
        %1831 = vmatpush2.msra.mxu0 0.0
        %1832 = vmatprep.subr.mxu0 0.0
        %1833 = vmatpush2.msra.mxu0 0.0
        %1834 = vmatprep.subr.mxu0 0.0
        %1835 = vmatpush2.msra.mxu0 0.0
        %1836 = vmatprep.subr.mxu0 0.0
        %1837 = vmatpush2.msra.mxu0 0.0
        %1838 = vmatprep.subr.mxu0 0.0
        %1839 = vmatpush2.msra.mxu0 0.0
        %1840 = vmatprep.subr.mxu0 0.0
        %1841 = vmatpush2.msra.mxu0 0.0
        %1842 = vmatprep.subr.mxu0 0.0
        %1843 = vmatpush2.msra.mxu0 0.0
        %1844 = vmatprep.subr.mxu0 0.0
        %1845 = vmatpush2.msra.mxu0 0.0
        %1846 = vmatprep.subr.mxu0 0.0
        %1847 = vmatpush2.msra.mxu0 0.0
        %1848 = vmatprep.subr.mxu0 0.0
        %1849 = vmatpush2.msra.mxu0 0.0
        %1850 = vmatprep.subr.mxu0 0.0
        %1851 = vmatpush2.msra.mxu0 0.0
        %1852 = vmatprep.subr.mxu0 0.0
        %1853 = vmatpush2.msra.mxu0 0.0
        %1854 = vmatprep.subr.mxu0 0.0
        %1855 = vmatpush2.msra.mxu0 0.0
        %1856 = vmatprep.subr.mxu0 0.0
        %1857 = vmatpush2.msra.mxu0 0.0
        %1858 = vmatprep.subr.mxu0 0.0
        %1859 = vmatpush2.msra.mxu0 0.0
        %1860 = vmatprep.subr.mxu0 0.0
        %1861 = vmatpush2.msra.mxu0 0.0
        %1862 = vmatprep.mubr.f32.mxu0 0.0
        %1863 = vmatmul.mubr.f32.gmra.mxu0 %v1796
        %v1864 = vpop.f32.mrf.mxu0
        %v1865 = vadd.f32 0.0, %v1864
        %v1866 = vpop.f32.mrf.mxu0
        %1867 = vdwg.mxu0
        %v1868 = vlaneseq
        %v1869 = vshrl.u32 %v1868, 7
        %v1870 = vsub.s32 0, %v1869
        %v1871 = vrot.slane %v1865, %v1870
        %v1872 = vsub.f32 %v1779, %v1871
        %v1873 = vsub.f32 %v1782, %v1871
        %v1874 = vmul.f32 %v1872, %v1872
        %v1875 = vmul.f32 %v1873, %v1873
        %v1876 = vsel %vm753, %v1874, 0.0
        %v1877 = vsel %vm753, %v1875, 0.0
        %v1878 = vadd.f32 %v1876, %v1877
        %v1879 = vrot.slane %v1878, 4
        %v1880 = vadd.f32 %v1878, %v1879
        %v1881 = vrot.slane %v1880, 2
        %v1882 = vadd.f32 %v1880, %v1881
        %v1883 = vrot.slane %v1882, 1
        %v1884 = vadd.f32 %v1882, %v1883
        %v1885 = vmul.f32 %v1884, 0.03125
        %v1887 = vsel %vm753, %v1885, 0
        %1889 = vmatprep.subr.mxu0 0.0
        %1890 = vmatpush1.msra.mxu0 0.0
        %1891 = vmatprep.subr.mxu0 0.0
        %1892 = vmatpush1.msra.mxu0 0.0
        %1893 = vmatprep.subr.mxu0 0.0
        %1894 = vmatpush1.msra.mxu0 0.0
        %1895 = vmatprep.subr.mxu0 0.0
        %1896 = vmatpush1.msra.mxu0 0.0
        %1897 = vmatprep.subr.mxu0 0.0
        %1898 = vmatpush1.msra.mxu0 0.0
        %1899 = vmatprep.subr.mxu0 0.0
        %1900 = vmatpush1.msra.mxu0 0.0
        %1901 = vmatprep.subr.mxu0 0.0
        %1902 = vmatpush1.msra.mxu0 0.0
        %1903 = vmatprep.subr.mxu0 0.0
        %1904 = vmatpush1.msra.mxu0 0.0
        %1905 = vmatprep.subr.mxu0 0.0
        %1906 = vmatpush1.msra.mxu0 %v744
        %1907 = vmatprep.subr.mxu0 0.0
        %1908 = vmatpush1.msra.mxu0 %v743
        %1909 = vmatprep.subr.mxu0 0.0
        %1910 = vmatpush1.msra.mxu0 %v742
        %1911 = vmatprep.subr.mxu0 0.0
        %1912 = vmatpush1.msra.mxu0 %v741
        %1913 = vmatprep.subr.mxu0 0.0
        %1914 = vmatpush1.msra.mxu0 %v740
        %1915 = vmatprep.subr.mxu0 0.0
        %1916 = vmatpush1.msra.mxu0 %v739
        %1917 = vmatprep.subr.mxu0 0.0
        %1918 = vmatpush1.msra.mxu0 %v738
        %1919 = vmatprep.subr.mxu0 0.0
        %1920 = vmatpush1.msra.mxu0 %v737
        %1921 = vmatprep.subr.mxu0 0.0
        %1922 = vmatpush2.msra.mxu0 0.0
        %1923 = vmatprep.subr.mxu0 0.0
        %1924 = vmatpush2.msra.mxu0 0.0
        %1925 = vmatprep.subr.mxu0 0.0
        %1926 = vmatpush2.msra.mxu0 0.0
        %1927 = vmatprep.subr.mxu0 0.0
        %1928 = vmatpush2.msra.mxu0 0.0
        %1929 = vmatprep.subr.mxu0 0.0
        %1930 = vmatpush2.msra.mxu0 0.0
        %1931 = vmatprep.subr.mxu0 0.0
        %1932 = vmatpush2.msra.mxu0 0.0
        %1933 = vmatprep.subr.mxu0 0.0
        %1934 = vmatpush2.msra.mxu0 0.0
        %1935 = vmatprep.subr.mxu0 0.0
        %1936 = vmatpush2.msra.mxu0 0.0
        %1937 = vmatprep.subr.mxu0 0.0
        %1938 = vmatpush2.msra.mxu0 0.0
        %1939 = vmatprep.subr.mxu0 0.0
        %1940 = vmatpush2.msra.mxu0 0.0
        %1941 = vmatprep.subr.mxu0 0.0
        %1942 = vmatpush2.msra.mxu0 0.0
        %1943 = vmatprep.subr.mxu0 0.0
        %1944 = vmatpush2.msra.mxu0 0.0
        %1945 = vmatprep.subr.mxu0 0.0
        %1946 = vmatpush2.msra.mxu0 0.0
        %1947 = vmatprep.subr.mxu0 0.0
        %1948 = vmatpush2.msra.mxu0 0.0
        %1949 = vmatprep.subr.mxu0 0.0
        %1950 = vmatpush2.msra.mxu0 0.0
        %1951 = vmatprep.subr.mxu0 0.0
        %1952 = vmatpush2.msra.mxu0 0.0
        %1953 = vmatprep.mubr.f32.mxu0 0.0
        %1954 = vmatmul.mubr.f32.gmra.mxu0 %v1887
        %v1955 = vpop.f32.mrf.mxu0
        %v1956 = vadd.f32 1e-06, %v1955
        %v1957 = vpop.f32.mrf.mxu0
        %1958 = vdwg.mxu0
        %v1959 = vrsqrt.pop %v1956
        %v1960 = vlaneseq
        %v1961 = vshrl.u32 %v1960, 7
        %v1962 = vsub.s32 0, %v1961
        %v1963 = vrot.slane %v1959, %v1962
        %v1964 = vmul.f32 %v1872, %v1963
        %v1965 = vmul.f32 %v1873, %v1963
        %v1966 = vld [vmem:[%s10] sm:$0x1]
        %v1968 = vlaneseq
        %v1969 = vshrl.u32 %v1968, 7
        %v1970 = vsub.s32 0, %v1969
        %v1971 = vrot.slane %v1966, %v1970
        %v1973 = vmul.f32 %v1964, %v1971
        %v1974 = vmul.f32 %v1965, %v1971
        %v1975 = vld [vmem:[%s11] sm:$0x1]
        %v1977 = vlaneseq
        %v1978 = vshrl.u32 %v1977, 7
        %v1979 = vsub.s32 0, %v1978
        %v1980 = vrot.slane %v1975, %v1979
        %v1982 = vadd.f32 %v1973, %v1980
        %v1983 = vadd.f32 %v1974, %v1980
        %v1984 = vxor.u32 %v1982, 2147483648
        %v1985 = vxor.u32 %v1983, 2147483648
        %v1986 = vmul.f32 %v1984, 1.442695
        %v1987 = vpow.pop %v1986
        %v1988 = vmul.f32 %v1985, 1.442695
        %v1989 = vpow.pop %v1988
        %v1990 = vadd.f32 %v1987, 1.0
        %v1991 = vadd.f32 %v1989, 1.0
        %v1992 = vrcp.pop %v1990
        %v1993 = vmul.f32 1.0, %v1992
        %v1994 = vrcp.pop %v1991
        %v1995 = vmul.f32 1.0, %v1994
        %v1996 = vmul.f32 %v1982, %v1993
        %v1997 = vmul.f32 %v1983, %v1995
        %v1998 = vpack.c.bf16 %v1997, %v1996
        %1999 = vmatprep.subr.bf16.mxu0 0
        %2000 = vmatpush1.bf16.msra.mxu0 0
        %2001 = vmatprep.subr.bf16.mxu0 0
        %2002 = vmatpush1.bf16.msra.mxu0 0
        %2003 = vmatprep.subr.bf16.mxu0 0
        %2004 = vmatpush1.bf16.msra.mxu0 0
        %2005 = vmatprep.subr.bf16.mxu0 0
        %2006 = vmatpush1.bf16.msra.mxu0 0
        %2007 = vmatprep.subr.bf16.mxu0 0
        %2008 = vmatpush1.bf16.msra.mxu0 0
        %2009 = vmatprep.subr.bf16.mxu0 0
        %2010 = vmatpush1.bf16.msra.mxu0 0
        %2011 = vmatprep.subr.bf16.mxu0 0
        %2012 = vmatpush1.bf16.msra.mxu0 0
        %2013 = vmatprep.subr.bf16.mxu0 0
        %2014 = vmatpush1.bf16.msra.mxu0 %v1998
        %2015 = vmatprep.subr.bf16.mxu0 0
        %2016 = vmatpush2.bf16.msra.mxu0 0
        %2017 = vmatprep.subr.bf16.mxu0 0
        %2018 = vmatpush2.bf16.msra.mxu0 0
        %2019 = vmatprep.subr.bf16.mxu0 0
        %2020 = vmatpush2.bf16.msra.mxu0 0
        %2021 = vmatprep.subr.bf16.mxu0 0
        %2022 = vmatpush2.bf16.msra.mxu0 0
        %2023 = vmatprep.subr.bf16.mxu0 0
        %2024 = vmatpush2.bf16.msra.mxu0 0
        %2025 = vmatprep.subr.bf16.mxu0 0
        %2026 = vmatpush2.bf16.msra.mxu0 0
        %2027 = vmatprep.subr.bf16.mxu0 0
        %2028 = vmatpush2.bf16.msra.mxu0 0
        %2029 = vmatprep.subr.bf16.mxu0 0
        %2030 = vmatpush2.bf16.msra.mxu0 0
        %2031 = vmatprep.mubr.bf16.mxu0 0
        %2032 = vmatmul.mubr.bf16.gmra.mxu0 %v1188
        %v2033 = vpop.f32.mrf.mxu0
        %v2034 = vadd.f32 0.0, %v2033
        %v2035 = vpop.f32.mrf.mxu0
        %v2036 = vpop.f32.mrf.mxu0
        %v2037 = vadd.f32 0.0, %v2036
        %v2038 = vpop.f32.mrf.mxu0
        %2039 = vmatprep.mubr.bf16.mxu0 0
        %2040 = vmatmul.mubr.bf16.gmra.mxu0 %v1191
        %v2041 = vpop.f32.mrf.mxu0
        %v2042 = vadd.f32 0.0, %v2041
        %v2043 = vpop.f32.mrf.mxu0
        %v2044 = vpop.f32.mrf.mxu0
        %v2045 = vadd.f32 0.0, %v2044
        %v2046 = vpop.f32.mrf.mxu0
        %2047 = vmatprep.mubr.bf16.mxu0 0
        %2048 = vmatmul.mubr.bf16.gmra.mxu0 %v1194
        %v2049 = vpop.f32.mrf.mxu0
        %v2050 = vadd.f32 0.0, %v2049
        %v2051 = vpop.f32.mrf.mxu0
        %v2052 = vpop.f32.mrf.mxu0
        %v2053 = vadd.f32 0.0, %v2052
        %v2054 = vpop.f32.mrf.mxu0
        %2055 = vmatprep.mubr.bf16.mxu0 0
        %2056 = vmatmul.mubr.bf16.gmra.mxu0 %v1197
        %v2057 = vpop.f32.mrf.mxu0
        %v2058 = vadd.f32 0.0, %v2057
        %v2059 = vpop.f32.mrf.mxu0
        %v2060 = vpop.f32.mrf.mxu0
        %v2061 = vadd.f32 0.0, %v2060
        %v2062 = vpop.f32.mrf.mxu0
        %2063 = vmatprep.mubr.bf16.mxu0 0
        %2064 = vmatmul.mubr.bf16.gmra.mxu0 %v1200
        %v2065 = vpop.f32.mrf.mxu0
        %v2066 = vadd.f32 0.0, %v2065
        %v2067 = vpop.f32.mrf.mxu0
        %v2068 = vpop.f32.mrf.mxu0
        %v2069 = vadd.f32 0.0, %v2068
        %v2070 = vpop.f32.mrf.mxu0
        %2071 = vmatprep.mubr.bf16.mxu0 0
        %2072 = vmatmul.mubr.bf16.gmra.mxu0 %v1203
        %v2073 = vpop.f32.mrf.mxu0
        %v2074 = vadd.f32 0.0, %v2073
        %v2075 = vpop.f32.mrf.mxu0
        %v2076 = vpop.f32.mrf.mxu0
        %v2077 = vadd.f32 0.0, %v2076
        %v2078 = vpop.f32.mrf.mxu0
        %2079 = vmatprep.mubr.bf16.mxu0 0
        %2080 = vmatmul.mubr.bf16.gmra.mxu0 %v1206
        %v2081 = vpop.f32.mrf.mxu0
        %v2082 = vadd.f32 0.0, %v2081
        %v2083 = vpop.f32.mrf.mxu0
        %v2084 = vpop.f32.mrf.mxu0
        %v2085 = vadd.f32 0.0, %v2084
        %v2086 = vpop.f32.mrf.mxu0
        %2087 = vmatprep.mubr.bf16.mxu0 0
        %2088 = vmatmul.mubr.bf16.gmra.mxu0 %v1209
        %v2089 = vpop.f32.mrf.mxu0
        %v2090 = vadd.f32 0.0, %v2089
        %v2091 = vpop.f32.mrf.mxu0
        %v2092 = vpop.f32.mrf.mxu0
        %v2093 = vadd.f32 0.0, %v2092
        %v2094 = vpop.f32.mrf.mxu0
        %2095 = vmatprep.mubr.bf16.mxu0 0
        %2096 = vmatmul.mubr.bf16.gmra.mxu0 %v1212
        %v2097 = vpop.f32.mrf.mxu0
        %v2098 = vadd.f32 0.0, %v2097
        %v2099 = vpop.f32.mrf.mxu0
        %v2100 = vpop.f32.mrf.mxu0
        %v2101 = vadd.f32 0.0, %v2100
        %v2102 = vpop.f32.mrf.mxu0
        %2103 = vdwg.mxu0
        %2106 = vrot.lane.b32.xlu0 %v2042, 64
        %v2107 = vpop.permute.xlu0 %2106
        %2108 = vrot.lane.b32.xlu0 %v2045, 64
        %v2109 = vpop.permute.xlu0 %2108
        %2114 = vrot.lane.b32.xlu0 %v2058, 64
        %v2115 = vpop.permute.xlu0 %2114
        %2116 = vrot.lane.b32.xlu0 %v2061, 64
        %v2117 = vpop.permute.xlu0 %2116
        %2122 = vrot.lane.b32.xlu0 %v2074, 64
        %v2123 = vpop.permute.xlu0 %2122
        %2124 = vrot.lane.b32.xlu0 %v2077, 64
        %v2125 = vpop.permute.xlu0 %2124
        %2130 = vrot.lane.b32.xlu0 %v2090, 64
        %v2131 = vpop.permute.xlu0 %2130
        %2132 = vrot.lane.b32.xlu0 %v2093, 64
        %v2133 = vpop.permute.xlu0 %2132
        %v2136 = vsel %vm753, %v2034, %v2107
        %v2137 = vsel %vm753, %v2037, %v2109
        %v2138 = vsel %vm753, %v2050, %v2115
        %v2139 = vsel %vm753, %v2053, %v2117
        %v2140 = vsel %vm753, %v2066, %v2123
        %v2141 = vsel %vm753, %v2069, %v2125
        %v2142 = vsel %vm753, %v2082, %v2131
        %v2143 = vsel %vm753, %v2085, %v2133
        %v2144 = vpack.c.bf16 %v2137, %v2136
        %v2145 = vpack.c.bf16 %v2139, %v2138
        %v2146 = vpack.c.bf16 %v2141, %v2140
        %v2147 = vpack.c.bf16 %v2143, %v2142
        %v2148 = vpack.c.bf16 %v2101, %v2098
        %v2149 = vld [vmem:[%s12] sm:$0xf]
        %v2150 = vld [vmem:[%s12 + $0x4] sm:$0xf]
        %v2151 = vld [vmem:[%s12 + $0x8] sm:$0xf]
        %v2152 = vld [vmem:[%s12 + $0xc] sm:$0xf]
        %v2153 = vld [vmem:[%s12 + $0x10] sm:$0xf]
        %v2154 = vld [vmem:[%s12 + $0x14] sm:$0xf]
        %v2155 = vld [vmem:[%s12 + $0x18] sm:$0xf]
        %v2156 = vld [vmem:[%s12 + $0x1c] sm:$0xf]
        %v2157 = vld [vmem:[%s12 + $0x20] sm:$0xf]
        %v2158 = vld [vmem:[%s12 + $0x24] sm:$0xf]
        %v2159 = vld [vmem:[%s12 + $0x28] sm:$0xf]
        %v2160 = vld [vmem:[%s12 + $0x2c] sm:$0xf]
        %v2161 = vld [vmem:[%s12 + $0x30] sm:$0xf]
        %v2162 = vld [vmem:[%s12 + $0x34] sm:$0xf]
        %v2163 = vld [vmem:[%s12 + $0x38] sm:$0xf]
        %v2164 = vld [vmem:[%s12 + $0x3c] sm:$0xf]
        %v2165 = vld [vmem:[%s12 + $0x40] sm:$0xf]
        %v2166 = vld [vmem:[%s12 + $0x44] sm:$0xf]
        %v2167 = vld [vmem:[%s12 + $0x48] sm:$0xf]
        %v2168 = vld [vmem:[%s12 + $0x4c] sm:$0xf]
        %v2169 = vld [vmem:[%s12 + $0x50] sm:$0xf]
        %v2170 = vld [vmem:[%s12 + $0x54] sm:$0xf]
        %v2171 = vld [vmem:[%s12 + $0x58] sm:$0xf]
        %v2172 = vld [vmem:[%s12 + $0x5c] sm:$0xf]
        %v2173 = vld [vmem:[%s12 + $0x60] sm:$0xf]
        %v2174 = vld [vmem:[%s12 + $0x64] sm:$0xf]
        %v2175 = vld [vmem:[%s12 + $0x68] sm:$0xf]
        %v2176 = vld [vmem:[%s12 + $0x6c] sm:$0xf]
        %v2177 = vld [vmem:[%s12 + $0x70] sm:$0xf]
        %v2178 = vld [vmem:[%s12 + $0x74] sm:$0xf]
        %v2179 = vld [vmem:[%s12 + $0x78] sm:$0xf]
        %v2180 = vld [vmem:[%s12 + $0x7c] sm:$0xf]
        %v2181 = vld [vmem:[%s12 + $0x80] sm:$0xf]
        %v2182 = vld [vmem:[%s12 + $0x84] sm:$0xf]
        %v2183 = vld [vmem:[%s12 + $0x88] sm:$0xf]
        %v2184 = vld [vmem:[%s12 + $0x8c] sm:$0xf]
        %v2185 = vld [vmem:[%s12 + $0x90] sm:$0xf]
        %v2186 = vld [vmem:[%s12 + $0x94] sm:$0xf]
        %v2187 = vld [vmem:[%s12 + $0x98] sm:$0xf]
        %v2188 = vld [vmem:[%s12 + $0x9c] sm:$0xf]
        %v2189 = vld [vmem:[%s12 + $0xa0] sm:$0xf]
        %v2190 = vld [vmem:[%s12 + $0xa4] sm:$0xf]
        %v2191 = vld [vmem:[%s12 + $0xa8] sm:$0xf]
        %v2192 = vld [vmem:[%s12 + $0xac] sm:$0xf]
        %v2193 = vld [vmem:[%s12 + $0xb0] sm:$0xf]
        %v2194 = vld [vmem:[%s12 + $0xb4] sm:$0xf]
        %v2195 = vld [vmem:[%s12 + $0xb8] sm:$0xf]
        %v2196 = vld [vmem:[%s12 + $0xbc] sm:$0xf]
        %v2197 = vld [vmem:[%s12 + $0xc0] sm:$0xf]
        %v2198 = vld [vmem:[%s12 + $0xc4] sm:$0xf]
        %v2199 = vld [vmem:[%s12 + $0xc8] sm:$0xf]
        %v2200 = vld [vmem:[%s12 + $0xcc] sm:$0xf]
        %v2201 = vld [vmem:[%s12 + $0xd0] sm:$0xf]
        %v2202 = vld [vmem:[%s12 + $0xd4] sm:$0xf]
        %v2203 = vld [vmem:[%s12 + $0xd8] sm:$0xf]
        %v2204 = vld [vmem:[%s12 + $0xdc] sm:$0xf]
        %v2205 = vld [vmem:[%s12 + $0xe0] sm:$0xf]
        %v2206 = vld [vmem:[%s12 + $0xe4] sm:$0xf]
        %v2207 = vld [vmem:[%s12 + $0xe8] sm:$0xf]
        %v2208 = vld [vmem:[%s12 + $0xec] sm:$0xf]
        %v2209 = vld [vmem:[%s12 + $0xf0] sm:$0xf]
        %v2210 = vld [vmem:[%s12 + $0xf4] sm:$0xf]
        %v2211 = vld [vmem:[%s12 + $0xf8] sm:$0xf]
        %v2212 = vld [vmem:[%s12 + $0xfc] sm:$0xf]
        %v2213 = vld [vmem:[%s12 + $0x100] sm:$0xf]
        %v2214 = vld [vmem:[%s12 + $0x104] sm:$0xf]
        %v2215 = vld [vmem:[%s12 + $0x108] sm:$0xf]
        %v2216 = vld [vmem:[%s12 + $0x10c] sm:$0xf]
        %v2217 = vld [vmem:[%s12 + $0x110] sm:$0xf]
        %v2218 = vld [vmem:[%s12 + $0x114] sm:$0xf]
        %v2219 = vld [vmem:[%s12 + $0x118] sm:$0xf]
        %v2220 = vld [vmem:[%s12 + $0x11c] sm:$0xf]
        %v2221 = vld [vmem:[%s13] sm:$0x1]
        %v2223 = vlaneseq
        %v2224 = vshrl.u32 %v2223, 7
        %v2225 = vsub.s32 0, %v2224
        %v2226 = vrot.slane %v2221, %v2225
        %v2300 = vunpack.c.l.b16 %v2149
        %v2301 = vunpack.c.l.b16 %v2150
        %v2302 = vunpack.c.l.b16 %v2151
        %v2303 = vunpack.c.l.b16 %v2152
        %v2304 = vunpack.c.l.b16 %v2153
        %v2305 = vunpack.c.l.b16 %v2154
        %v2306 = vunpack.c.l.b16 %v2155
        %v2307 = vunpack.c.l.b16 %v2156
        %v2308 = vunpack.c.l.b16 %v2157
        %v2309 = vunpack.c.l.b16 %v2158
        %v2310 = vunpack.c.l.b16 %v2159
        %v2311 = vunpack.c.l.b16 %v2160
        %v2312 = vunpack.c.l.b16 %v2161
        %v2313 = vunpack.c.l.b16 %v2162
        %v2314 = vunpack.c.l.b16 %v2163
        %v2315 = vunpack.c.l.b16 %v2164
        %v2316 = vunpack.c.l.b16 %v2165
        %v2317 = vunpack.c.l.b16 %v2166
        %v2318 = vunpack.c.l.b16 %v2167
        %v2319 = vunpack.c.l.b16 %v2168
        %v2320 = vunpack.c.l.b16 %v2169
        %v2321 = vunpack.c.l.b16 %v2170
        %v2322 = vunpack.c.l.b16 %v2171
        %v2323 = vunpack.c.l.b16 %v2172
        %v2324 = vunpack.c.l.b16 %v2173
        %v2325 = vunpack.c.l.b16 %v2174
        %v2326 = vunpack.c.l.b16 %v2175
        %v2327 = vunpack.c.l.b16 %v2176
        %v2328 = vunpack.c.l.b16 %v2177
        %v2329 = vunpack.c.l.b16 %v2178
        %v2330 = vunpack.c.l.b16 %v2179
        %v2331 = vunpack.c.l.b16 %v2180
        %v2332 = vunpack.c.l.b16 %v2181
        %v2333 = vunpack.c.l.b16 %v2182
        %v2334 = vunpack.c.l.b16 %v2183
        %v2335 = vunpack.c.l.b16 %v2184
        %v2336 = vunpack.c.l.b16 %v2185
        %v2337 = vunpack.c.l.b16 %v2186
        %v2338 = vunpack.c.l.b16 %v2187
        %v2339 = vunpack.c.l.b16 %v2188
        %v2340 = vunpack.c.l.b16 %v2189
        %v2341 = vunpack.c.l.b16 %v2190
        %v2342 = vunpack.c.l.b16 %v2191
        %v2343 = vunpack.c.l.b16 %v2192
        %v2344 = vunpack.c.l.b16 %v2193
        %v2345 = vunpack.c.l.b16 %v2194
        %v2346 = vunpack.c.l.b16 %v2195
        %v2347 = vunpack.c.l.b16 %v2196
        %v2348 = vunpack.c.l.b16 %v2197
        %v2349 = vunpack.c.l.b16 %v2198
        %v2350 = vunpack.c.l.b16 %v2199
        %v2351 = vunpack.c.l.b16 %v2200
        %v2352 = vunpack.c.l.b16 %v2201
        %v2353 = vunpack.c.l.b16 %v2202
        %v2354 = vunpack.c.l.b16 %v2203
        %v2355 = vunpack.c.l.b16 %v2204
        %v2356 = vunpack.c.l.b16 %v2205
        %v2357 = vunpack.c.l.b16 %v2206
        %v2358 = vunpack.c.l.b16 %v2207
        %v2359 = vunpack.c.l.b16 %v2208
        %v2360 = vunpack.c.l.b16 %v2209
        %v2361 = vunpack.c.l.b16 %v2210
        %v2362 = vunpack.c.l.b16 %v2211
        %v2363 = vunpack.c.l.b16 %v2212
        %v2364 = vunpack.c.l.b16 %v2213
        %v2365 = vunpack.c.l.b16 %v2214
        %v2366 = vunpack.c.l.b16 %v2215
        %v2367 = vunpack.c.l.b16 %v2216
        %v2368 = vunpack.c.l.b16 %v2217
        %v2369 = vunpack.c.l.b16 %v2218
        %v2370 = vunpack.c.l.b16 %v2219
        %v2371 = vunpack.c.l.b16 %v2220
        %v2372 = vpack.c.b16 %v2301, %v2300
        %v2373 = vpack.c.b16 %v2303, %v2302
        %v2374 = vpack.c.b16 %v2305, %v2304
        %v2375 = vpack.c.b16 %v2307, %v2306
        %v2376 = vpack.c.b16 %v2309, %v2308
        %v2377 = vpack.c.b16 %v2311, %v2310
        %v2378 = vpack.c.b16 %v2313, %v2312
        %v2379 = vpack.c.b16 %v2315, %v2314
        %v2380 = vpack.c.b16 %v2317, %v2316
        %v2381 = vpack.c.b16 %v2319, %v2318
        %v2382 = vpack.c.b16 %v2321, %v2320
        %v2383 = vpack.c.b16 %v2323, %v2322
        %v2384 = vpack.c.b16 %v2325, %v2324
        %v2385 = vpack.c.b16 %v2327, %v2326
        %v2386 = vpack.c.b16 %v2329, %v2328
        %v2387 = vpack.c.b16 %v2331, %v2330
        %v2388 = vpack.c.b16 %v2333, %v2332
        %v2389 = vpack.c.b16 %v2335, %v2334
        %v2390 = vpack.c.b16 %v2337, %v2336
        %v2391 = vpack.c.b16 %v2339, %v2338
        %v2392 = vpack.c.b16 %v2341, %v2340
        %v2393 = vpack.c.b16 %v2343, %v2342
        %v2394 = vpack.c.b16 %v2345, %v2344
        %v2395 = vpack.c.b16 %v2347, %v2346
        %v2396 = vpack.c.b16 %v2349, %v2348
        %v2397 = vpack.c.b16 %v2351, %v2350
        %v2398 = vpack.c.b16 %v2353, %v2352
        %v2399 = vpack.c.b16 %v2355, %v2354
        %v2400 = vpack.c.b16 %v2357, %v2356
        %v2401 = vpack.c.b16 %v2359, %v2358
        %v2402 = vpack.c.b16 %v2361, %v2360
        %v2403 = vpack.c.b16 %v2363, %v2362
        %v2404 = vpack.c.b16 %v2365, %v2364
        %v2405 = vpack.c.b16 %v2367, %v2366
        %v2406 = vpack.c.b16 %v2369, %v2368
        %v2407 = vpack.c.b16 %v2371, %v2370
        %v2445 = vsel %vm753, %v2148, 0
        %2447 = vmatprep.subr.bf16.mxu0 0
        %2448 = vmatpush1.bf16.msra.mxu0 %v2379
        %2449 = vmatprep.subr.bf16.mxu0 0
        %2450 = vmatpush1.bf16.msra.mxu0 %v2378
        %2451 = vmatprep.subr.bf16.mxu0 0
        %2452 = vmatpush1.bf16.msra.mxu0 %v2377
        %2453 = vmatprep.subr.bf16.mxu0 0
        %2454 = vmatpush1.bf16.msra.mxu0 %v2376
        %2455 = vmatprep.subr.bf16.mxu0 0
        %2456 = vmatpush1.bf16.msra.mxu0 %v2375
        %2457 = vmatprep.subr.bf16.mxu0 0
        %2458 = vmatpush1.bf16.msra.mxu0 %v2374
        %2459 = vmatprep.subr.bf16.mxu0 0
        %2460 = vmatpush1.bf16.msra.mxu0 %v2373
        %2461 = vmatprep.subr.bf16.mxu0 0
        %2462 = vmatpush1.bf16.msra.mxu0 %v2372
        %2463 = vmatprep.subr.bf16.mxu0 0
        %2464 = vmatpush2.bf16.msra.mxu0 %v2387
        %2465 = vmatprep.subr.bf16.mxu0 0
        %2466 = vmatpush2.bf16.msra.mxu0 %v2386
        %2467 = vmatprep.subr.bf16.mxu0 0
        %2468 = vmatpush2.bf16.msra.mxu0 %v2385
        %2469 = vmatprep.subr.bf16.mxu0 0
        %2470 = vmatpush2.bf16.msra.mxu0 %v2384
        %2471 = vmatprep.subr.bf16.mxu0 0
        %2472 = vmatpush2.bf16.msra.mxu0 %v2383
        %2473 = vmatprep.subr.bf16.mxu0 0
        %2474 = vmatpush2.bf16.msra.mxu0 %v2382
        %2475 = vmatprep.subr.bf16.mxu0 0
        %2476 = vmatpush2.bf16.msra.mxu0 %v2381
        %2477 = vmatprep.subr.bf16.mxu0 0
        %2478 = vmatpush2.bf16.msra.mxu0 %v2380
        %2479 = vmatprep.mubr.bf16.mxu0 %v2145
        %2480 = vmatmul.mubr.bf16.gmra.mxu0 %v2144
        %v2481 = vpop.f32.mrf.mxu0
        %v2482 = vadd.f32 %v2226, %v2481
        %v2483 = vpop.f32.mrf.mxu0
        %v2484 = vpop.f32.mrf.mxu0
        %v2485 = vadd.f32 %v2226, %v2484
        %v2486 = vpop.f32.mrf.mxu0
        %2487 = vdwg.mxu0
        %2488 = vmatprep.subr.bf16.mxu0 0
        %2489 = vmatpush1.bf16.msra.mxu0 %v2395
        %2490 = vmatprep.subr.bf16.mxu0 0
        %2491 = vmatpush1.bf16.msra.mxu0 %v2394
        %2492 = vmatprep.subr.bf16.mxu0 0
        %2493 = vmatpush1.bf16.msra.mxu0 %v2393
        %2494 = vmatprep.subr.bf16.mxu0 0
        %2495 = vmatpush1.bf16.msra.mxu0 %v2392
        %2496 = vmatprep.subr.bf16.mxu0 0
        %2497 = vmatpush1.bf16.msra.mxu0 %v2391
        %2498 = vmatprep.subr.bf16.mxu0 0
        %2499 = vmatpush1.bf16.msra.mxu0 %v2390
        %2500 = vmatprep.subr.bf16.mxu0 0
        %2501 = vmatpush1.bf16.msra.mxu0 %v2389
        %2502 = vmatprep.subr.bf16.mxu0 0
        %2503 = vmatpush1.bf16.msra.mxu0 %v2388
        %2504 = vmatprep.subr.bf16.mxu0 0
        %2505 = vmatpush2.bf16.msra.mxu0 %v2403
        %2506 = vmatprep.subr.bf16.mxu0 0
        %2507 = vmatpush2.bf16.msra.mxu0 %v2402
        %2508 = vmatprep.subr.bf16.mxu0 0
        %2509 = vmatpush2.bf16.msra.mxu0 %v2401
        %2510 = vmatprep.subr.bf16.mxu0 0
        %2511 = vmatpush2.bf16.msra.mxu0 %v2400
        %2512 = vmatprep.subr.bf16.mxu0 0
        %2513 = vmatpush2.bf16.msra.mxu0 %v2399
        %2514 = vmatprep.subr.bf16.mxu0 0
        %2515 = vmatpush2.bf16.msra.mxu0 %v2398
        %2516 = vmatprep.subr.bf16.mxu0 0
        %2517 = vmatpush2.bf16.msra.mxu0 %v2397
        %2518 = vmatprep.subr.bf16.mxu0 0
        %2519 = vmatpush2.bf16.msra.mxu0 %v2396
        %2520 = vmatprep.mubr.bf16.mxu0 %v2147
        %2521 = vmatmul.mubr.bf16.gmra.mxu0 %v2146
        %v2522 = vpop.f32.mrf.mxu0
        %v2523 = vadd.f32 %v2482, %v2522
        %v2524 = vpop.f32.mrf.mxu0
        %v2525 = vpop.f32.mrf.mxu0
        %v2526 = vadd.f32 %v2485, %v2525
        %v2527 = vpop.f32.mrf.mxu0
        %2528 = vdwg.mxu0
        %2529 = vmatprep.subr.bf16.mxu0 0
        %2530 = vmatpush1.bf16.msra.mxu0 0
        %2531 = vmatprep.subr.bf16.mxu0 0
        %2532 = vmatpush1.bf16.msra.mxu0 0
        %2533 = vmatprep.subr.bf16.mxu0 0
        %2534 = vmatpush1.bf16.msra.mxu0 0
        %2535 = vmatprep.subr.bf16.mxu0 0
        %2536 = vmatpush1.bf16.msra.mxu0 0
        %2537 = vmatprep.subr.bf16.mxu0 0
        %2538 = vmatpush1.bf16.msra.mxu0 %v2407
        %2539 = vmatprep.subr.bf16.mxu0 0
        %2540 = vmatpush1.bf16.msra.mxu0 %v2406
        %2541 = vmatprep.subr.bf16.mxu0 0
        %2542 = vmatpush1.bf16.msra.mxu0 %v2405
        %2543 = vmatprep.subr.bf16.mxu0 0
        %2544 = vmatpush1.bf16.msra.mxu0 %v2404
        %2545 = vmatprep.subr.bf16.mxu0 0
        %2546 = vmatpush2.bf16.msra.mxu0 0
        %2547 = vmatprep.subr.bf16.mxu0 0
        %2548 = vmatpush2.bf16.msra.mxu0 0
        %2549 = vmatprep.subr.bf16.mxu0 0
        %2550 = vmatpush2.bf16.msra.mxu0 0
        %2551 = vmatprep.subr.bf16.mxu0 0
        %2552 = vmatpush2.bf16.msra.mxu0 0
        %2553 = vmatprep.subr.bf16.mxu0 0
        %2554 = vmatpush2.bf16.msra.mxu0 0
        %2555 = vmatprep.subr.bf16.mxu0 0
        %2556 = vmatpush2.bf16.msra.mxu0 0
        %2557 = vmatprep.subr.bf16.mxu0 0
        %2558 = vmatpush2.bf16.msra.mxu0 0
        %2559 = vmatprep.subr.bf16.mxu0 0
        %2560 = vmatpush2.bf16.msra.mxu0 0
        %2561 = vmatprep.mubr.bf16.mxu0 0
        %2562 = vmatmul.mubr.bf16.gmra.mxu0 %v2445
        %v2563 = vpop.f32.mrf.mxu0
        %v2564 = vadd.f32 %v2523, %v2563
        %v2565 = vpop.f32.mrf.mxu0
        %v2566 = vpop.f32.mrf.mxu0
        %v2567 = vadd.f32 %v2526, %v2566
        %v2568 = vpop.f32.mrf.mxu0
        %2569 = vdwg.mxu0
        %2570 = vmatprep.subr.bf16.mxu0 0
        %2571 = vmatpush1.bf16.msra.mxu0 0
        %2572 = vmatprep.subr.bf16.mxu0 0
        %2573 = vmatpush1.bf16.msra.mxu0 0
        %2574 = vmatprep.subr.bf16.mxu0 0
        %2575 = vmatpush1.bf16.msra.mxu0 0
        %2576 = vmatprep.subr.bf16.mxu0 0
        %2577 = vmatpush1.bf16.msra.mxu0 0
        %2578 = vmatprep.subr.bf16.mxu0 0
        %2579 = vmatpush1.bf16.msra.mxu0 %v1068
        %2580 = vmatprep.subr.bf16.mxu0 0
        %2581 = vmatpush1.bf16.msra.mxu0 %v1067
        %2582 = vmatprep.subr.bf16.mxu0 0
        %2583 = vmatpush1.bf16.msra.mxu0 %v1066
        %2584 = vmatprep.subr.bf16.mxu0 0
        %2585 = vmatpush1.bf16.msra.mxu0 %v1065
        %2586 = vmatprep.subr.bf16.mxu0 0
        %2587 = vmatpush2.bf16.msra.mxu0 0
        %2588 = vmatprep.subr.bf16.mxu0 0
        %2589 = vmatpush2.bf16.msra.mxu0 0
        %2590 = vmatprep.subr.bf16.mxu0 0
        %2591 = vmatpush2.bf16.msra.mxu0 0
        %2592 = vmatprep.subr.bf16.mxu0 0
        %2593 = vmatpush2.bf16.msra.mxu0 0
        %2594 = vmatprep.subr.bf16.mxu0 0
        %2595 = vmatpush2.bf16.msra.mxu0 0
        %2596 = vmatprep.subr.bf16.mxu0 0
        %2597 = vmatpush2.bf16.msra.mxu0 0
        %2598 = vmatprep.subr.bf16.mxu0 0
        %2599 = vmatpush2.bf16.msra.mxu0 0
        %2600 = vmatprep.subr.bf16.mxu0 0
        %2601 = vmatpush2.bf16.msra.mxu0 0
        %2602 = vmatprep.mubr.bf16.mxu0 0
        %2603 = vmatmul.mubr.bf16.gmra.mxu0 %v1079
        %v2604 = vpop.f32.mrf.mxu0
        %v2605 = vadd.f32 %v2564, %v2604
        %v2606 = vpop.f32.mrf.mxu0
        %v2607 = vpop.f32.mrf.mxu0
        %v2608 = vadd.f32 %v2567, %v2607
        %v2609 = vpop.f32.mrf.mxu0
        %2610 = vdwg.mxu0
        %v2611 = vsel %vm753, %v2605, 0.0
        %v2612 = vsel %vm753, %v2608, 0.0
        %v2613 = vadd.f32 %v2611, %v2612
        %v2614 = vrot.slane %v2613, 4
        %v2615 = vadd.f32 %v2613, %v2614
        %v2616 = vrot.slane %v2615, 2
        %v2617 = vadd.f32 %v2615, %v2616
        %v2618 = vrot.slane %v2617, 1
        %v2619 = vadd.f32 %v2617, %v2618
        %v2620 = vmul.f32 %v2619, 0.03125
        %v2622 = vsel %vm753, %v2620, 0
        %2624 = vmatprep.subr.mxu0 0.0
        %2625 = vmatpush1.msra.mxu0 0.0
        %2626 = vmatprep.subr.mxu0 0.0
        %2627 = vmatpush1.msra.mxu0 0.0
        %2628 = vmatprep.subr.mxu0 0.0
        %2629 = vmatpush1.msra.mxu0 0.0
        %2630 = vmatprep.subr.mxu0 0.0
        %2631 = vmatpush1.msra.mxu0 0.0
        %2632 = vmatprep.subr.mxu0 0.0
        %2633 = vmatpush1.msra.mxu0 0.0
        %2634 = vmatprep.subr.mxu0 0.0
        %2635 = vmatpush1.msra.mxu0 0.0
        %2636 = vmatprep.subr.mxu0 0.0
        %2637 = vmatpush1.msra.mxu0 0.0
        %2638 = vmatprep.subr.mxu0 0.0
        %2639 = vmatpush1.msra.mxu0 0.0
        %2640 = vmatprep.subr.mxu0 0.0
        %2641 = vmatpush1.msra.mxu0 %v744
        %2642 = vmatprep.subr.mxu0 0.0
        %2643 = vmatpush1.msra.mxu0 %v743
        %2644 = vmatprep.subr.mxu0 0.0
        %2645 = vmatpush1.msra.mxu0 %v742
        %2646 = vmatprep.subr.mxu0 0.0
        %2647 = vmatpush1.msra.mxu0 %v741
        %2648 = vmatprep.subr.mxu0 0.0
        %2649 = vmatpush1.msra.mxu0 %v740
        %2650 = vmatprep.subr.mxu0 0.0
        %2651 = vmatpush1.msra.mxu0 %v739
        %2652 = vmatprep.subr.mxu0 0.0
        %2653 = vmatpush1.msra.mxu0 %v738
        %2654 = vmatprep.subr.mxu0 0.0
        %2655 = vmatpush1.msra.mxu0 %v737
        %2656 = vmatprep.subr.mxu0 0.0
        %2657 = vmatpush2.msra.mxu0 0.0
        %2658 = vmatprep.subr.mxu0 0.0
        %2659 = vmatpush2.msra.mxu0 0.0
        %2660 = vmatprep.subr.mxu0 0.0
        %2661 = vmatpush2.msra.mxu0 0.0
        %2662 = vmatprep.subr.mxu0 0.0
        %2663 = vmatpush2.msra.mxu0 0.0
        %2664 = vmatprep.subr.mxu0 0.0
        %2665 = vmatpush2.msra.mxu0 0.0
        %2666 = vmatprep.subr.mxu0 0.0
        %2667 = vmatpush2.msra.mxu0 0.0
        %2668 = vmatprep.subr.mxu0 0.0
        %2669 = vmatpush2.msra.mxu0 0.0
        %2670 = vmatprep.subr.mxu0 0.0
        %2671 = vmatpush2.msra.mxu0 0.0
        %2672 = vmatprep.subr.mxu0 0.0
        %2673 = vmatpush2.msra.mxu0 0.0
        %2674 = vmatprep.subr.mxu0 0.0
        %2675 = vmatpush2.msra.mxu0 0.0
        %2676 = vmatprep.subr.mxu0 0.0
        %2677 = vmatpush2.msra.mxu0 0.0
        %2678 = vmatprep.subr.mxu0 0.0
        %2679 = vmatpush2.msra.mxu0 0.0
        %2680 = vmatprep.subr.mxu0 0.0
        %2681 = vmatpush2.msra.mxu0 0.0
        %2682 = vmatprep.subr.mxu0 0.0
        %2683 = vmatpush2.msra.mxu0 0.0
        %2684 = vmatprep.subr.mxu0 0.0
        %2685 = vmatpush2.msra.mxu0 0.0
        %2686 = vmatprep.subr.mxu0 0.0
        %2687 = vmatpush2.msra.mxu0 0.0
        %2688 = vmatprep.mubr.f32.mxu0 0.0
        %2689 = vmatmul.mubr.f32.gmra.mxu0 %v2622
        %v2690 = vpop.f32.mrf.mxu0
        %v2691 = vadd.f32 0.0, %v2690
        %v2692 = vpop.f32.mrf.mxu0
        %2693 = vdwg.mxu0
        %v2694 = vlaneseq
        %v2695 = vshrl.u32 %v2694, 7
        %v2696 = vsub.s32 0, %v2695
        %v2697 = vrot.slane %v2691, %v2696
        %v2698 = vsub.f32 %v2605, %v2697
        %v2699 = vsub.f32 %v2608, %v2697
        %v2700 = vmul.f32 %v2698, %v2698
        %v2701 = vmul.f32 %v2699, %v2699
        %v2702 = vsel %vm753, %v2700, 0.0
        %v2703 = vsel %vm753, %v2701, 0.0
        %v2704 = vadd.f32 %v2702, %v2703
        %v2705 = vrot.slane %v2704, 4
        %v2706 = vadd.f32 %v2704, %v2705
        %v2707 = vrot.slane %v2706, 2
        %v2708 = vadd.f32 %v2706, %v2707
        %v2709 = vrot.slane %v2708, 1
        %v2710 = vadd.f32 %v2708, %v2709
        %v2711 = vmul.f32 %v2710, 0.03125
        %v2713 = vsel %vm753, %v2711, 0
        %2715 = vmatprep.subr.mxu0 0.0
        %2716 = vmatpush1.msra.mxu0 0.0
        %2717 = vmatprep.subr.mxu0 0.0
        %2718 = vmatpush1.msra.mxu0 0.0
        %2719 = vmatprep.subr.mxu0 0.0
        %2720 = vmatpush1.msra.mxu0 0.0
        %2721 = vmatprep.subr.mxu0 0.0
        %2722 = vmatpush1.msra.mxu0 0.0
        %2723 = vmatprep.subr.mxu0 0.0
        %2724 = vmatpush1.msra.mxu0 0.0
        %2725 = vmatprep.subr.mxu0 0.0
        %2726 = vmatpush1.msra.mxu0 0.0
        %2727 = vmatprep.subr.mxu0 0.0
        %2728 = vmatpush1.msra.mxu0 0.0
        %2729 = vmatprep.subr.mxu0 0.0
        %2730 = vmatpush1.msra.mxu0 0.0
        %2731 = vmatprep.subr.mxu0 0.0
        %2732 = vmatpush1.msra.mxu0 %v744
        %2733 = vmatprep.subr.mxu0 0.0
        %2734 = vmatpush1.msra.mxu0 %v743
        %2735 = vmatprep.subr.mxu0 0.0
        %2736 = vmatpush1.msra.mxu0 %v742
        %2737 = vmatprep.subr.mxu0 0.0
        %2738 = vmatpush1.msra.mxu0 %v741
        %2739 = vmatprep.subr.mxu0 0.0
        %2740 = vmatpush1.msra.mxu0 %v740
        %2741 = vmatprep.subr.mxu0 0.0
        %2742 = vmatpush1.msra.mxu0 %v739
        %2743 = vmatprep.subr.mxu0 0.0
        %2744 = vmatpush1.msra.mxu0 %v738
        %2745 = vmatprep.subr.mxu0 0.0
        %2746 = vmatpush1.msra.mxu0 %v737
        %2747 = vmatprep.subr.mxu0 0.0
        %2748 = vmatpush2.msra.mxu0 0.0
        %2749 = vmatprep.subr.mxu0 0.0
        %2750 = vmatpush2.msra.mxu0 0.0
        %2751 = vmatprep.subr.mxu0 0.0
        %2752 = vmatpush2.msra.mxu0 0.0
        %2753 = vmatprep.subr.mxu0 0.0
        %2754 = vmatpush2.msra.mxu0 0.0
        %2755 = vmatprep.subr.mxu0 0.0
        %2756 = vmatpush2.msra.mxu0 0.0
        %2757 = vmatprep.subr.mxu0 0.0
        %2758 = vmatpush2.msra.mxu0 0.0
        %2759 = vmatprep.subr.mxu0 0.0
        %2760 = vmatpush2.msra.mxu0 0.0
        %2761 = vmatprep.subr.mxu0 0.0
        %2762 = vmatpush2.msra.mxu0 0.0
        %2763 = vmatprep.subr.mxu0 0.0
        %2764 = vmatpush2.msra.mxu0 0.0
        %2765 = vmatprep.subr.mxu0 0.0
        %2766 = vmatpush2.msra.mxu0 0.0
        %2767 = vmatprep.subr.mxu0 0.0
        %2768 = vmatpush2.msra.mxu0 0.0
        %2769 = vmatprep.subr.mxu0 0.0
        %2770 = vmatpush2.msra.mxu0 0.0
        %2771 = vmatprep.subr.mxu0 0.0
        %2772 = vmatpush2.msra.mxu0 0.0
        %2773 = vmatprep.subr.mxu0 0.0
        %2774 = vmatpush2.msra.mxu0 0.0
        %2775 = vmatprep.subr.mxu0 0.0
        %2776 = vmatpush2.msra.mxu0 0.0
        %2777 = vmatprep.subr.mxu0 0.0
        %2778 = vmatpush2.msra.mxu0 0.0
        %2779 = vmatprep.mubr.f32.mxu0 0.0
        %2780 = vmatmul.mubr.f32.gmra.mxu0 %v2713
        %v2781 = vpop.f32.mrf.mxu0
        %v2782 = vadd.f32 1e-06, %v2781
        %v2783 = vpop.f32.mrf.mxu0
        %2784 = vdwg.mxu0
        %v2785 = vrsqrt.pop %v2782
        %v2786 = vlaneseq
        %v2787 = vshrl.u32 %v2786, 7
        %v2788 = vsub.s32 0, %v2787
        %v2789 = vrot.slane %v2785, %v2788
        %v2790 = vmul.f32 %v2698, %v2789
        %v2791 = vmul.f32 %v2699, %v2789
        %v2792 = vld [vmem:[%s14] sm:$0x1]
        %v2794 = vlaneseq
        %v2795 = vshrl.u32 %v2794, 7
        %v2796 = vsub.s32 0, %v2795
        %v2797 = vrot.slane %v2792, %v2796
        %v2799 = vmul.f32 %v2790, %v2797
        %v2800 = vmul.f32 %v2791, %v2797
        %v2801 = vld [vmem:[%s15] sm:$0x1]
        %v2803 = vlaneseq
        %v2804 = vshrl.u32 %v2803, 7
        %v2805 = vsub.s32 0, %v2804
        %v2806 = vrot.slane %v2801, %v2805
        %v2808 = vadd.f32 %v2799, %v2806
        %v2809 = vadd.f32 %v2800, %v2806
        %v2810 = vxor.u32 %v2808, 2147483648
        %v2811 = vxor.u32 %v2809, 2147483648
        %v2812 = vmul.f32 %v2810, 1.442695
        %v2813 = vpow.pop %v2812
        %v2814 = vmul.f32 %v2811, 1.442695
        %v2815 = vpow.pop %v2814
        %v2816 = vadd.f32 %v2813, 1.0
        %v2817 = vadd.f32 %v2815, 1.0
        %v2818 = vrcp.pop %v2816
        %v2819 = vmul.f32 1.0, %v2818
        %v2820 = vrcp.pop %v2817
        %v2821 = vmul.f32 1.0, %v2820
        %v2822 = vmul.f32 %v2808, %v2819
        %v2823 = vmul.f32 %v2809, %v2821
        %v2824 = vld [vmem:[%s4] sm:$0x3]
        %v2825 = vpack.c.bf16 %v2608, %v2605
        %v2826 = vpack.c.bf16 %v2823, %v2822
        %v2828 = vsel %vm1186, %v2824, 0
        %2830 = vmatprep.subr.bf16.mxu0 0
        %2831 = vmatpush1.bf16.msra.mxu0 0
        %2832 = vmatprep.subr.bf16.mxu0 0
        %2833 = vmatpush1.bf16.msra.mxu0 0
        %2834 = vmatprep.subr.bf16.mxu0 0
        %2835 = vmatpush1.bf16.msra.mxu0 0
        %2836 = vmatprep.subr.bf16.mxu0 0
        %2837 = vmatpush1.bf16.msra.mxu0 0
        %2838 = vmatprep.subr.bf16.mxu0 0
        %2839 = vmatpush1.bf16.msra.mxu0 0
        %2840 = vmatprep.subr.bf16.mxu0 0
        %2841 = vmatpush1.bf16.msra.mxu0 0
        %2842 = vmatprep.subr.bf16.mxu0 0
        %2843 = vmatpush1.bf16.msra.mxu0 0
        %2844 = vmatprep.subr.bf16.mxu0 0
        %2845 = vmatpush1.bf16.msra.mxu0 %v2826
        %2846 = vmatprep.subr.bf16.mxu0 0
        %2847 = vmatpush2.bf16.msra.mxu0 0
        %2848 = vmatprep.subr.bf16.mxu0 0
        %2849 = vmatpush2.bf16.msra.mxu0 0
        %2850 = vmatprep.subr.bf16.mxu0 0
        %2851 = vmatpush2.bf16.msra.mxu0 0
        %2852 = vmatprep.subr.bf16.mxu0 0
        %2853 = vmatpush2.bf16.msra.mxu0 0
        %2854 = vmatprep.subr.bf16.mxu0 0
        %2855 = vmatpush2.bf16.msra.mxu0 0
        %2856 = vmatprep.subr.bf16.mxu0 0
        %2857 = vmatpush2.bf16.msra.mxu0 0
        %2858 = vmatprep.subr.bf16.mxu0 0
        %2859 = vmatpush2.bf16.msra.mxu0 0
        %2860 = vmatprep.subr.bf16.mxu0 0
        %2861 = vmatpush2.bf16.msra.mxu0 0
        %2862 = vmatprep.mubr.bf16.mxu0 0
        %2863 = vmatmul.mubr.bf16.gmra.mxu0 %v2828
        %v2864 = vpop.f32.mrf.mxu0
        %v2865 = vadd.f32 0.0, %v2864
        %v2866 = vpop.f32.mrf.mxu0
        %v2867 = vpop.f32.mrf.mxu0
        %v2868 = vpop.f32.mrf.mxu0
        %2869 = vdwg.mxu0
        %v2870 = vld [vmem:[%s5] sm:$0xf]
        %v2871 = vld [vmem:[%s5 + $0x4] sm:$0xf]
        %v2872 = vld [vmem:[%s5 + $0x8] sm:$0xf]
        %v2873 = vld [vmem:[%s5 + $0xc] sm:$0xf]
        %v2874 = vld [vmem:[%s5 + $0x10] sm:$0x3]
        %v2875 = vpack.c.bf16 %v2865, %v2865
        %v2881 = vunpack.c.l.b16 %v2870
        %v2882 = vunpack.c.l.b16 %v2871
        %v2883 = vunpack.c.l.b16 %v2872
        %v2884 = vunpack.c.l.b16 %v2873
        %v2885 = vunpack.c.l.b16 %v2874
        %v2886 = vpack.c.b16 %v2882, %v2881
        %v2887 = vpack.c.b16 %v2884, %v2883
        %v2888 = vpack.c.b16 %v2885, %v2885
        %vm2889 = vcmask 31744
        %v2891 = vsel %vm2889, %v2886, 0
        %v2894 = vsel %vm2889, %v2887, 0
        %v2897 = vsel %vm2889, %v2888, 0
        %vm2899 = vcmask 1041408
        %v2901 = vsel %vm2899, %v2875, 0
        %2903 = vmatprep.subr.bf16.mxu0 0
        %2904 = vmatpush1.bf16.msra.mxu0 0
        %2905 = vmatprep.subr.bf16.mxu0 0
        %2906 = vmatpush1.bf16.msra.mxu0 0
        %2907 = vmatprep.subr.bf16.mxu0 0
        %2908 = vmatpush1.bf16.msra.mxu0 0
        %2909 = vmatprep.subr.bf16.mxu0 0
        %2910 = vmatpush1.bf16.msra.mxu0 0
        %2911 = vmatprep.subr.bf16.mxu0 0
        %2912 = vmatpush1.bf16.msra.mxu0 0
        %2913 = vmatprep.subr.bf16.mxu0 0
        %2914 = vmatpush1.bf16.msra.mxu0 0
        %2915 = vmatprep.subr.bf16.mxu0 0
        %2916 = vmatpush1.bf16.msra.mxu0 0
        %2917 = vmatprep.subr.bf16.mxu0 0
        %2918 = vmatpush1.bf16.msra.mxu0 %v2901
        %2919 = vmatprep.subr.bf16.mxu0 0
        %2920 = vmatpush2.bf16.msra.mxu0 0
        %2921 = vmatprep.subr.bf16.mxu0 0
        %2922 = vmatpush2.bf16.msra.mxu0 0
        %2923 = vmatprep.subr.bf16.mxu0 0
        %2924 = vmatpush2.bf16.msra.mxu0 0
        %2925 = vmatprep.subr.bf16.mxu0 0
        %2926 = vmatpush2.bf16.msra.mxu0 0
        %2927 = vmatprep.subr.bf16.mxu0 0
        %2928 = vmatpush2.bf16.msra.mxu0 0
        %2929 = vmatprep.subr.bf16.mxu0 0
        %2930 = vmatpush2.bf16.msra.mxu0 0
        %2931 = vmatprep.subr.bf16.mxu0 0
        %2932 = vmatpush2.bf16.msra.mxu0 0
        %2933 = vmatprep.subr.bf16.mxu0 0
        %2934 = vmatpush2.bf16.msra.mxu0 0
        %2935 = vmatprep.mubr.bf16.mxu0 0
        %2936 = vmatmul.mubr.bf16.gmra.mxu0 %v2891
        %v2937 = vpop.f32.mrf.mxu0
        %v2938 = vadd.f32 0.0, %v2937
        %v2939 = vpop.f32.mrf.mxu0
        %v2940 = vpop.f32.mrf.mxu0
        %v2941 = vadd.f32 0.0, %v2940
        %v2942 = vpop.f32.mrf.mxu0
        %2943 = vmatprep.mubr.bf16.mxu0 0
        %2944 = vmatmul.mubr.bf16.gmra.mxu0 %v2894
        %v2945 = vpop.f32.mrf.mxu0
        %v2946 = vadd.f32 0.0, %v2945
        %v2947 = vpop.f32.mrf.mxu0
        %v2948 = vpop.f32.mrf.mxu0
        %v2949 = vadd.f32 0.0, %v2948
        %v2950 = vpop.f32.mrf.mxu0
        %2951 = vmatprep.mubr.bf16.mxu0 0
        %2952 = vmatmul.mubr.bf16.gmra.mxu0 %v2897
        %v2953 = vpop.f32.mrf.mxu0
        %v2954 = vadd.f32 0.0, %v2953
        %v2955 = vpop.f32.mrf.mxu0
        %v2956 = vpop.f32.mrf.mxu0
        %v2957 = vpop.f32.mrf.mxu0
        %2958 = vdwg.mxu0
        %v2960 = vrot.slane %v2938, 4
        %2961 = vrot.lane.b32.xlu0 %v2960, 64
        %v2962 = vpop.permute.xlu0 %2961
        %v2965 = vrot.slane %v2941, 4
        %2966 = vrot.lane.b32.xlu0 %v2965, 64
        %v2967 = vpop.permute.xlu0 %2966
        %v2970 = vrot.slane %v2946, 4
        %2971 = vrot.lane.b32.xlu0 %v2970, 64
        %v2972 = vpop.permute.xlu0 %2971
        %v2975 = vrot.slane %v2949, 4
        %2976 = vrot.lane.b32.xlu0 %v2975, 64
        %v2977 = vpop.permute.xlu0 %2976
        %v2979 = vsel %vm753, %v2938, %v2962
        %v2980 = vsel %vm753, %v2941, %v2967
        %v2981 = vsel %vm753, %v2946, %v2972
        %v2982 = vsel %vm753, %v2949, %v2977
        %v2983 = vpack.c.bf16 %v2979, %v2979
        %v2984 = vpack.c.bf16 %v2980, %v2980
        %v2985 = vpack.c.bf16 %v2981, %v2981
        %v2986 = vpack.c.bf16 %v2982, %v2982
        %v2987 = vpack.c.bf16 %v2954, %v2954
        %v2988 = vld [vmem:[%s16] sm:$0xf]
        %v2989 = vld [vmem:[%s16 + $0x4] sm:$0xf]
        %v2990 = vld [vmem:[%s16 + $0x8] sm:$0xf]
        %v2991 = vld [vmem:[%s16 + $0xc] sm:$0xf]
        %v2992 = vld [vmem:[%s16 + $0x10] sm:$0xf]
        %v2993 = vld [vmem:[%s16 + $0x14] sm:$0xf]
        %v2994 = vld [vmem:[%s16 + $0x18] sm:$0xf]
        %v2995 = vld [vmem:[%s16 + $0x1c] sm:$0xf]
        %v2996 = vld [vmem:[%s16 + $0x20] sm:$0xf]
        %v2997 = vld [vmem:[%s16 + $0x24] sm:$0xf]
        %v2998 = vld [vmem:[%s16 + $0x28] sm:$0xf]
        %v2999 = vld [vmem:[%s16 + $0x2c] sm:$0xf]
        %v3000 = vld [vmem:[%s16 + $0x30] sm:$0xf]
        %v3001 = vld [vmem:[%s16 + $0x34] sm:$0xf]
        %v3002 = vld [vmem:[%s16 + $0x38] sm:$0xf]
        %v3003 = vld [vmem:[%s16 + $0x3c] sm:$0xf]
        %v3004 = vld [vmem:[%s16 + $0x40] sm:$0xf]
        %v3005 = vld [vmem:[%s16 + $0x44] sm:$0xf]
        %v3006 = vld [vmem:[%s16 + $0x48] sm:$0xf]
        %v3007 = vld [vmem:[%s16 + $0x4c] sm:$0xf]
        %v3008 = vld [vmem:[%s16 + $0x50] sm:$0xf]
        %v3009 = vld [vmem:[%s16 + $0x54] sm:$0xf]
        %v3010 = vld [vmem:[%s16 + $0x58] sm:$0xf]
        %v3011 = vld [vmem:[%s16 + $0x5c] sm:$0xf]
        %v3012 = vld [vmem:[%s16 + $0x60] sm:$0xf]
        %v3013 = vld [vmem:[%s16 + $0x64] sm:$0xf]
        %v3014 = vld [vmem:[%s16 + $0x68] sm:$0xf]
        %v3015 = vld [vmem:[%s16 + $0x6c] sm:$0xf]
        %v3016 = vld [vmem:[%s16 + $0x70] sm:$0xf]
        %v3017 = vld [vmem:[%s16 + $0x74] sm:$0xf]
        %v3018 = vld [vmem:[%s16 + $0x78] sm:$0xf]
        %v3019 = vld [vmem:[%s16 + $0x7c] sm:$0xf]
        %v3020 = vld [vmem:[%s16 + $0x80] sm:$0xf]
        %v3021 = vld [vmem:[%s16 + $0x84] sm:$0xf]
        %v3022 = vld [vmem:[%s16 + $0x88] sm:$0xf]
        %v3023 = vld [vmem:[%s16 + $0x8c] sm:$0xf]
        %v3024 = vld [vmem:[%s16 + $0x90] sm:$0xf]
        %v3025 = vld [vmem:[%s16 + $0x94] sm:$0xf]
        %v3026 = vld [vmem:[%s16 + $0x98] sm:$0xf]
        %v3027 = vld [vmem:[%s16 + $0x9c] sm:$0xf]
        %v3028 = vld [vmem:[%s16 + $0xa0] sm:$0xf]
        %v3029 = vld [vmem:[%s16 + $0xa4] sm:$0xf]
        %v3030 = vld [vmem:[%s16 + $0xa8] sm:$0xf]
        %v3031 = vld [vmem:[%s16 + $0xac] sm:$0xf]
        %v3032 = vld [vmem:[%s16 + $0xb0] sm:$0xf]
        %v3033 = vld [vmem:[%s16 + $0xb4] sm:$0xf]
        %v3034 = vld [vmem:[%s16 + $0xb8] sm:$0xf]
        %v3035 = vld [vmem:[%s16 + $0xbc] sm:$0xf]
        %v3036 = vld [vmem:[%s16 + $0xc0] sm:$0xf]
        %v3037 = vld [vmem:[%s16 + $0xc4] sm:$0xf]
        %v3038 = vld [vmem:[%s16 + $0xc8] sm:$0xf]
        %v3039 = vld [vmem:[%s16 + $0xcc] sm:$0xf]
        %v3040 = vld [vmem:[%s16 + $0xd0] sm:$0xf]
        %v3041 = vld [vmem:[%s16 + $0xd4] sm:$0xf]
        %v3042 = vld [vmem:[%s16 + $0xd8] sm:$0xf]
        %v3043 = vld [vmem:[%s16 + $0xdc] sm:$0xf]
        %v3044 = vld [vmem:[%s16 + $0xe0] sm:$0xf]
        %v3045 = vld [vmem:[%s16 + $0xe4] sm:$0xf]
        %v3046 = vld [vmem:[%s16 + $0xe8] sm:$0xf]
        %v3047 = vld [vmem:[%s16 + $0xec] sm:$0xf]
        %v3048 = vld [vmem:[%s16 + $0xf0] sm:$0xf]
        %v3049 = vld [vmem:[%s16 + $0xf4] sm:$0xf]
        %v3050 = vld [vmem:[%s16 + $0xf8] sm:$0xf]
        %v3051 = vld [vmem:[%s16 + $0xfc] sm:$0xf]
        %v3052 = vld [vmem:[%s16 + $0x100] sm:$0xf]
        %v3053 = vld [vmem:[%s16 + $0x104] sm:$0xf]
        %v3054 = vld [vmem:[%s16 + $0x108] sm:$0xf]
        %v3055 = vld [vmem:[%s16 + $0x10c] sm:$0xf]
        %v3056 = vld [vmem:[%s16 + $0x110] sm:$0xf]
        %v3057 = vld [vmem:[%s16 + $0x114] sm:$0xf]
        %v3058 = vld [vmem:[%s16 + $0x118] sm:$0xf]
        %v3059 = vld [vmem:[%s16 + $0x11c] sm:$0xf]
        %v3060 = vld [vmem:[%s17] sm:$0x1]
        %v3062 = vlaneseq
        %v3063 = vshrl.u32 %v3062, 7
        %v3064 = vsub.s32 0, %v3063
        %v3065 = vrot.slane %v3060, %v3064
        %v3139 = vunpack.c.l.b16 %v2988
        %v3140 = vunpack.c.l.b16 %v2989
        %v3141 = vunpack.c.l.b16 %v2990
        %v3142 = vunpack.c.l.b16 %v2991
        %v3143 = vunpack.c.l.b16 %v2992
        %v3144 = vunpack.c.l.b16 %v2993
        %v3145 = vunpack.c.l.b16 %v2994
        %v3146 = vunpack.c.l.b16 %v2995
        %v3147 = vunpack.c.l.b16 %v2996
        %v3148 = vunpack.c.l.b16 %v2997
        %v3149 = vunpack.c.l.b16 %v2998
        %v3150 = vunpack.c.l.b16 %v2999
        %v3151 = vunpack.c.l.b16 %v3000
        %v3152 = vunpack.c.l.b16 %v3001
        %v3153 = vunpack.c.l.b16 %v3002
        %v3154 = vunpack.c.l.b16 %v3003
        %v3155 = vunpack.c.l.b16 %v3004
        %v3156 = vunpack.c.l.b16 %v3005
        %v3157 = vunpack.c.l.b16 %v3006
        %v3158 = vunpack.c.l.b16 %v3007
        %v3159 = vunpack.c.l.b16 %v3008
        %v3160 = vunpack.c.l.b16 %v3009
        %v3161 = vunpack.c.l.b16 %v3010
        %v3162 = vunpack.c.l.b16 %v3011
        %v3163 = vunpack.c.l.b16 %v3012
        %v3164 = vunpack.c.l.b16 %v3013
        %v3165 = vunpack.c.l.b16 %v3014
        %v3166 = vunpack.c.l.b16 %v3015
        %v3167 = vunpack.c.l.b16 %v3016
        %v3168 = vunpack.c.l.b16 %v3017
        %v3169 = vunpack.c.l.b16 %v3018
        %v3170 = vunpack.c.l.b16 %v3019
        %v3171 = vunpack.c.l.b16 %v3020
        %v3172 = vunpack.c.l.b16 %v3021
        %v3173 = vunpack.c.l.b16 %v3022
        %v3174 = vunpack.c.l.b16 %v3023
        %v3175 = vunpack.c.l.b16 %v3024
        %v3176 = vunpack.c.l.b16 %v3025
        %v3177 = vunpack.c.l.b16 %v3026
        %v3178 = vunpack.c.l.b16 %v3027
        %v3179 = vunpack.c.l.b16 %v3028
        %v3180 = vunpack.c.l.b16 %v3029
        %v3181 = vunpack.c.l.b16 %v3030
        %v3182 = vunpack.c.l.b16 %v3031
        %v3183 = vunpack.c.l.b16 %v3032
        %v3184 = vunpack.c.l.b16 %v3033
        %v3185 = vunpack.c.l.b16 %v3034
        %v3186 = vunpack.c.l.b16 %v3035
        %v3187 = vunpack.c.l.b16 %v3036
        %v3188 = vunpack.c.l.b16 %v3037
        %v3189 = vunpack.c.l.b16 %v3038
        %v3190 = vunpack.c.l.b16 %v3039
        %v3191 = vunpack.c.l.b16 %v3040
        %v3192 = vunpack.c.l.b16 %v3041
        %v3193 = vunpack.c.l.b16 %v3042
        %v3194 = vunpack.c.l.b16 %v3043
        %v3195 = vunpack.c.l.b16 %v3044
        %v3196 = vunpack.c.l.b16 %v3045
        %v3197 = vunpack.c.l.b16 %v3046
        %v3198 = vunpack.c.l.b16 %v3047
        %v3199 = vunpack.c.l.b16 %v3048
        %v3200 = vunpack.c.l.b16 %v3049
        %v3201 = vunpack.c.l.b16 %v3050
        %v3202 = vunpack.c.l.b16 %v3051
        %v3203 = vunpack.c.l.b16 %v3052
        %v3204 = vunpack.c.l.b16 %v3053
        %v3205 = vunpack.c.l.b16 %v3054
        %v3206 = vunpack.c.l.b16 %v3055
        %v3207 = vunpack.c.l.b16 %v3056
        %v3208 = vunpack.c.l.b16 %v3057
        %v3209 = vunpack.c.l.b16 %v3058
        %v3210 = vunpack.c.l.b16 %v3059
        %v3211 = vpack.c.b16 %v3140, %v3139
        %v3212 = vpack.c.b16 %v3142, %v3141
        %v3213 = vpack.c.b16 %v3144, %v3143
        %v3214 = vpack.c.b16 %v3146, %v3145
        %v3215 = vpack.c.b16 %v3148, %v3147
        %v3216 = vpack.c.b16 %v3150, %v3149
        %v3217 = vpack.c.b16 %v3152, %v3151
        %v3218 = vpack.c.b16 %v3154, %v3153
        %v3219 = vpack.c.b16 %v3156, %v3155
        %v3220 = vpack.c.b16 %v3158, %v3157
        %v3221 = vpack.c.b16 %v3160, %v3159
        %v3222 = vpack.c.b16 %v3162, %v3161
        %v3223 = vpack.c.b16 %v3164, %v3163
        %v3224 = vpack.c.b16 %v3166, %v3165
        %v3225 = vpack.c.b16 %v3168, %v3167
        %v3226 = vpack.c.b16 %v3170, %v3169
        %v3227 = vpack.c.b16 %v3172, %v3171
        %v3228 = vpack.c.b16 %v3174, %v3173
        %v3229 = vpack.c.b16 %v3176, %v3175
        %v3230 = vpack.c.b16 %v3178, %v3177
        %v3231 = vpack.c.b16 %v3180, %v3179
        %v3232 = vpack.c.b16 %v3182, %v3181
        %v3233 = vpack.c.b16 %v3184, %v3183
        %v3234 = vpack.c.b16 %v3186, %v3185
        %v3235 = vpack.c.b16 %v3188, %v3187
        %v3236 = vpack.c.b16 %v3190, %v3189
        %v3237 = vpack.c.b16 %v3192, %v3191
        %v3238 = vpack.c.b16 %v3194, %v3193
        %v3239 = vpack.c.b16 %v3196, %v3195
        %v3240 = vpack.c.b16 %v3198, %v3197
        %v3241 = vpack.c.b16 %v3200, %v3199
        %v3242 = vpack.c.b16 %v3202, %v3201
        %v3243 = vpack.c.b16 %v3204, %v3203
        %v3244 = vpack.c.b16 %v3206, %v3205
        %v3245 = vpack.c.b16 %v3208, %v3207
        %v3246 = vpack.c.b16 %v3210, %v3209
        %v3284 = vsel %vm753, %v2987, 0
        %3286 = vmatprep.subr.bf16.mxu0 0
        %3287 = vmatpush1.bf16.msra.mxu0 %v3218
        %3288 = vmatprep.subr.bf16.mxu0 0
        %3289 = vmatpush1.bf16.msra.mxu0 %v3217
        %3290 = vmatprep.subr.bf16.mxu0 0
        %3291 = vmatpush1.bf16.msra.mxu0 %v3216
        %3292 = vmatprep.subr.bf16.mxu0 0
        %3293 = vmatpush1.bf16.msra.mxu0 %v3215
        %3294 = vmatprep.subr.bf16.mxu0 0
        %3295 = vmatpush1.bf16.msra.mxu0 %v3214
        %3296 = vmatprep.subr.bf16.mxu0 0
        %3297 = vmatpush1.bf16.msra.mxu0 %v3213
        %3298 = vmatprep.subr.bf16.mxu0 0
        %3299 = vmatpush1.bf16.msra.mxu0 %v3212
        %3300 = vmatprep.subr.bf16.mxu0 0
        %3301 = vmatpush1.bf16.msra.mxu0 %v3211
        %3302 = vmatprep.subr.bf16.mxu0 0
        %3303 = vmatpush2.bf16.msra.mxu0 %v3226
        %3304 = vmatprep.subr.bf16.mxu0 0
        %3305 = vmatpush2.bf16.msra.mxu0 %v3225
        %3306 = vmatprep.subr.bf16.mxu0 0
        %3307 = vmatpush2.bf16.msra.mxu0 %v3224
        %3308 = vmatprep.subr.bf16.mxu0 0
        %3309 = vmatpush2.bf16.msra.mxu0 %v3223
        %3310 = vmatprep.subr.bf16.mxu0 0
        %3311 = vmatpush2.bf16.msra.mxu0 %v3222
        %3312 = vmatprep.subr.bf16.mxu0 0
        %3313 = vmatpush2.bf16.msra.mxu0 %v3221
        %3314 = vmatprep.subr.bf16.mxu0 0
        %3315 = vmatpush2.bf16.msra.mxu0 %v3220
        %3316 = vmatprep.subr.bf16.mxu0 0
        %3317 = vmatpush2.bf16.msra.mxu0 %v3219
        %3318 = vmatprep.mubr.bf16.mxu0 %v2984
        %3319 = vmatmul.mubr.bf16.gmra.mxu0 %v2983
        %v3320 = vpop.f32.mrf.mxu0
        %v3321 = vadd.f32 %v3065, %v3320
        %v3322 = vpop.f32.mrf.mxu0
        %v3323 = vpop.f32.mrf.mxu0
        %v3324 = vpop.f32.mrf.mxu0
        %3325 = vdwg.mxu0
        %3326 = vmatprep.subr.bf16.mxu0 0
        %3327 = vmatpush1.bf16.msra.mxu0 %v3234
        %3328 = vmatprep.subr.bf16.mxu0 0
        %3329 = vmatpush1.bf16.msra.mxu0 %v3233
        %3330 = vmatprep.subr.bf16.mxu0 0
        %3331 = vmatpush1.bf16.msra.mxu0 %v3232
        %3332 = vmatprep.subr.bf16.mxu0 0
        %3333 = vmatpush1.bf16.msra.mxu0 %v3231
        %3334 = vmatprep.subr.bf16.mxu0 0
        %3335 = vmatpush1.bf16.msra.mxu0 %v3230
        %3336 = vmatprep.subr.bf16.mxu0 0
        %3337 = vmatpush1.bf16.msra.mxu0 %v3229
        %3338 = vmatprep.subr.bf16.mxu0 0
        %3339 = vmatpush1.bf16.msra.mxu0 %v3228
        %3340 = vmatprep.subr.bf16.mxu0 0
        %3341 = vmatpush1.bf16.msra.mxu0 %v3227
        %3342 = vmatprep.subr.bf16.mxu0 0
        %3343 = vmatpush2.bf16.msra.mxu0 %v3242
        %3344 = vmatprep.subr.bf16.mxu0 0
        %3345 = vmatpush2.bf16.msra.mxu0 %v3241
        %3346 = vmatprep.subr.bf16.mxu0 0
        %3347 = vmatpush2.bf16.msra.mxu0 %v3240
        %3348 = vmatprep.subr.bf16.mxu0 0
        %3349 = vmatpush2.bf16.msra.mxu0 %v3239
        %3350 = vmatprep.subr.bf16.mxu0 0
        %3351 = vmatpush2.bf16.msra.mxu0 %v3238
        %3352 = vmatprep.subr.bf16.mxu0 0
        %3353 = vmatpush2.bf16.msra.mxu0 %v3237
        %3354 = vmatprep.subr.bf16.mxu0 0
        %3355 = vmatpush2.bf16.msra.mxu0 %v3236
        %3356 = vmatprep.subr.bf16.mxu0 0
        %3357 = vmatpush2.bf16.msra.mxu0 %v3235
        %3358 = vmatprep.mubr.bf16.mxu0 %v2986
        %3359 = vmatmul.mubr.bf16.gmra.mxu0 %v2985
        %v3360 = vpop.f32.mrf.mxu0
        %v3361 = vadd.f32 %v3321, %v3360
        %v3362 = vpop.f32.mrf.mxu0
        %v3363 = vpop.f32.mrf.mxu0
        %v3364 = vpop.f32.mrf.mxu0
        %3365 = vdwg.mxu0
        %3366 = vmatprep.subr.bf16.mxu0 0
        %3367 = vmatpush1.bf16.msra.mxu0 0
        %3368 = vmatprep.subr.bf16.mxu0 0
        %3369 = vmatpush1.bf16.msra.mxu0 0
        %3370 = vmatprep.subr.bf16.mxu0 0
        %3371 = vmatpush1.bf16.msra.mxu0 0
        %3372 = vmatprep.subr.bf16.mxu0 0
        %3373 = vmatpush1.bf16.msra.mxu0 0
        %3374 = vmatprep.subr.bf16.mxu0 0
        %3375 = vmatpush1.bf16.msra.mxu0 %v3246
        %3376 = vmatprep.subr.bf16.mxu0 0
        %3377 = vmatpush1.bf16.msra.mxu0 %v3245
        %3378 = vmatprep.subr.bf16.mxu0 0
        %3379 = vmatpush1.bf16.msra.mxu0 %v3244
        %3380 = vmatprep.subr.bf16.mxu0 0
        %3381 = vmatpush1.bf16.msra.mxu0 %v3243
        %3382 = vmatprep.subr.bf16.mxu0 0
        %3383 = vmatpush2.bf16.msra.mxu0 0
        %3384 = vmatprep.subr.bf16.mxu0 0
        %3385 = vmatpush2.bf16.msra.mxu0 0
        %3386 = vmatprep.subr.bf16.mxu0 0
        %3387 = vmatpush2.bf16.msra.mxu0 0
        %3388 = vmatprep.subr.bf16.mxu0 0
        %3389 = vmatpush2.bf16.msra.mxu0 0
        %3390 = vmatprep.subr.bf16.mxu0 0
        %3391 = vmatpush2.bf16.msra.mxu0 0
        %3392 = vmatprep.subr.bf16.mxu0 0
        %3393 = vmatpush2.bf16.msra.mxu0 0
        %3394 = vmatprep.subr.bf16.mxu0 0
        %3395 = vmatpush2.bf16.msra.mxu0 0
        %3396 = vmatprep.subr.bf16.mxu0 0
        %3397 = vmatpush2.bf16.msra.mxu0 0
        %3398 = vmatprep.mubr.bf16.mxu0 0
        %3399 = vmatmul.mubr.bf16.gmra.mxu0 %v3284
        %v3400 = vpop.f32.mrf.mxu0
        %v3401 = vadd.f32 %v3361, %v3400
        %v3402 = vpop.f32.mrf.mxu0
        %v3403 = vpop.f32.mrf.mxu0
        %v3404 = vpop.f32.mrf.mxu0
        %3405 = vdwg.mxu0
        %vm3406 = vcmask 519168
        %v3407 = vsel %vm3406, %v3401, 0.0
        %v3408 = vrot.slane %v3407, 4
        %v3409 = vadd.f32 %v3407, %v3408
        %v3410 = vrot.slane %v3409, 2
        %v3411 = vadd.f32 %v3409, %v3410
        %v3412 = vrot.slane %v3411, 1
        %v3413 = vadd.f32 %v3411, %v3412
        %v3414 = vmul.f32 %v3413, 0.125
        %v3416 = vsel %vm753, %v3414, 0
        %3418 = vmatprep.subr.mxu0 0.0
        %3419 = vmatpush1.msra.mxu0 0.0
        %3420 = vmatprep.subr.mxu0 0.0
        %3421 = vmatpush1.msra.mxu0 0.0
        %3422 = vmatprep.subr.mxu0 0.0
        %3423 = vmatpush1.msra.mxu0 0.0
        %3424 = vmatprep.subr.mxu0 0.0
        %3425 = vmatpush1.msra.mxu0 0.0
        %3426 = vmatprep.subr.mxu0 0.0
        %3427 = vmatpush1.msra.mxu0 0.0
        %3428 = vmatprep.subr.mxu0 0.0
        %3429 = vmatpush1.msra.mxu0 0.0
        %3430 = vmatprep.subr.mxu0 0.0
        %3431 = vmatpush1.msra.mxu0 0.0
        %3432 = vmatprep.subr.mxu0 0.0
        %3433 = vmatpush1.msra.mxu0 0.0
        %3434 = vmatprep.subr.mxu0 0.0
        %3435 = vmatpush1.msra.mxu0 %v744
        %3436 = vmatprep.subr.mxu0 0.0
        %3437 = vmatpush1.msra.mxu0 %v743
        %3438 = vmatprep.subr.mxu0 0.0
        %3439 = vmatpush1.msra.mxu0 %v742
        %3440 = vmatprep.subr.mxu0 0.0
        %3441 = vmatpush1.msra.mxu0 %v741
        %3442 = vmatprep.subr.mxu0 0.0
        %3443 = vmatpush1.msra.mxu0 %v740
        %3444 = vmatprep.subr.mxu0 0.0
        %3445 = vmatpush1.msra.mxu0 %v739
        %3446 = vmatprep.subr.mxu0 0.0
        %3447 = vmatpush1.msra.mxu0 %v738
        %3448 = vmatprep.subr.mxu0 0.0
        %3449 = vmatpush1.msra.mxu0 %v737
        %3450 = vmatprep.subr.mxu0 0.0
        %3451 = vmatpush2.msra.mxu0 0.0
        %3452 = vmatprep.subr.mxu0 0.0
        %3453 = vmatpush2.msra.mxu0 0.0
        %3454 = vmatprep.subr.mxu0 0.0
        %3455 = vmatpush2.msra.mxu0 0.0
        %3456 = vmatprep.subr.mxu0 0.0
        %3457 = vmatpush2.msra.mxu0 0.0
        %3458 = vmatprep.subr.mxu0 0.0
        %3459 = vmatpush2.msra.mxu0 0.0
        %3460 = vmatprep.subr.mxu0 0.0
        %3461 = vmatpush2.msra.mxu0 0.0
        %3462 = vmatprep.subr.mxu0 0.0
        %3463 = vmatpush2.msra.mxu0 0.0
        %3464 = vmatprep.subr.mxu0 0.0
        %3465 = vmatpush2.msra.mxu0 0.0
        %3466 = vmatprep.subr.mxu0 0.0
        %3467 = vmatpush2.msra.mxu0 0.0
        %3468 = vmatprep.subr.mxu0 0.0
        %3469 = vmatpush2.msra.mxu0 0.0
        %3470 = vmatprep.subr.mxu0 0.0
        %3471 = vmatpush2.msra.mxu0 0.0
        %3472 = vmatprep.subr.mxu0 0.0
        %3473 = vmatpush2.msra.mxu0 0.0
        %3474 = vmatprep.subr.mxu0 0.0
        %3475 = vmatpush2.msra.mxu0 0.0
        %3476 = vmatprep.subr.mxu0 0.0
        %3477 = vmatpush2.msra.mxu0 0.0
        %3478 = vmatprep.subr.mxu0 0.0
        %3479 = vmatpush2.msra.mxu0 0.0
        %3480 = vmatprep.subr.mxu0 0.0
        %3481 = vmatpush2.msra.mxu0 0.0
        %3482 = vmatprep.mubr.f32.mxu0 0.0
        %3483 = vmatmul.mubr.f32.gmra.mxu0 %v3416
        %v3484 = vpop.f32.mrf.mxu0
        %v3485 = vadd.f32 0.0, %v3484
        %v3486 = vpop.f32.mrf.mxu0
        %3487 = vdwg.mxu0
        %v3488 = vlaneseq
        %v3489 = vshrl.u32 %v3488, 7
        %v3490 = vsub.s32 0, %v3489
        %v3491 = vrot.slane %v3485, %v3490
        %v3492 = vsub.f32 %v3401, %v3491
        %v3493 = vmul.f32 %v3492, %v3492
        %v3494 = vsel %vm3406, %v3493, 0.0
        %v3495 = vrot.slane %v3494, 4
        %v3496 = vadd.f32 %v3494, %v3495
        %v3497 = vrot.slane %v3496, 2
        %v3498 = vadd.f32 %v3496, %v3497
        %v3499 = vrot.slane %v3498, 1
        %v3500 = vadd.f32 %v3498, %v3499
        %v3501 = vmul.f32 %v3500, 0.125
        %v3503 = vsel %vm753, %v3501, 0
        %3505 = vmatprep.subr.mxu0 0.0
        %3506 = vmatpush1.msra.mxu0 0.0
        %3507 = vmatprep.subr.mxu0 0.0
        %3508 = vmatpush1.msra.mxu0 0.0
        %3509 = vmatprep.subr.mxu0 0.0
        %3510 = vmatpush1.msra.mxu0 0.0
        %3511 = vmatprep.subr.mxu0 0.0
        %3512 = vmatpush1.msra.mxu0 0.0
        %3513 = vmatprep.subr.mxu0 0.0
        %3514 = vmatpush1.msra.mxu0 0.0
        %3515 = vmatprep.subr.mxu0 0.0
        %3516 = vmatpush1.msra.mxu0 0.0
        %3517 = vmatprep.subr.mxu0 0.0
        %3518 = vmatpush1.msra.mxu0 0.0
        %3519 = vmatprep.subr.mxu0 0.0
        %3520 = vmatpush1.msra.mxu0 0.0
        %3521 = vmatprep.subr.mxu0 0.0
        %3522 = vmatpush1.msra.mxu0 %v744
        %3523 = vmatprep.subr.mxu0 0.0
        %3524 = vmatpush1.msra.mxu0 %v743
        %3525 = vmatprep.subr.mxu0 0.0
        %3526 = vmatpush1.msra.mxu0 %v742
        %3527 = vmatprep.subr.mxu0 0.0
        %3528 = vmatpush1.msra.mxu0 %v741
        %3529 = vmatprep.subr.mxu0 0.0
        %3530 = vmatpush1.msra.mxu0 %v740
        %3531 = vmatprep.subr.mxu0 0.0
        %3532 = vmatpush1.msra.mxu0 %v739
        %3533 = vmatprep.subr.mxu0 0.0
        %3534 = vmatpush1.msra.mxu0 %v738
        %3535 = vmatprep.subr.mxu0 0.0
        %3536 = vmatpush1.msra.mxu0 %v737
        %3537 = vmatprep.subr.mxu0 0.0
        %3538 = vmatpush2.msra.mxu0 0.0
        %3539 = vmatprep.subr.mxu0 0.0
        %3540 = vmatpush2.msra.mxu0 0.0
        %3541 = vmatprep.subr.mxu0 0.0
        %3542 = vmatpush2.msra.mxu0 0.0
        %3543 = vmatprep.subr.mxu0 0.0
        %3544 = vmatpush2.msra.mxu0 0.0
        %3545 = vmatprep.subr.mxu0 0.0
        %3546 = vmatpush2.msra.mxu0 0.0
        %3547 = vmatprep.subr.mxu0 0.0
        %3548 = vmatpush2.msra.mxu0 0.0
        %3549 = vmatprep.subr.mxu0 0.0
        %3550 = vmatpush2.msra.mxu0 0.0
        %3551 = vmatprep.subr.mxu0 0.0
        %3552 = vmatpush2.msra.mxu0 0.0
        %3553 = vmatprep.subr.mxu0 0.0
        %3554 = vmatpush2.msra.mxu0 0.0
        %3555 = vmatprep.subr.mxu0 0.0
        %3556 = vmatpush2.msra.mxu0 0.0
        %3557 = vmatprep.subr.mxu0 0.0
        %3558 = vmatpush2.msra.mxu0 0.0
        %3559 = vmatprep.subr.mxu0 0.0
        %3560 = vmatpush2.msra.mxu0 0.0
        %3561 = vmatprep.subr.mxu0 0.0
        %3562 = vmatpush2.msra.mxu0 0.0
        %3563 = vmatprep.subr.mxu0 0.0
        %3564 = vmatpush2.msra.mxu0 0.0
        %3565 = vmatprep.subr.mxu0 0.0
        %3566 = vmatpush2.msra.mxu0 0.0
        %3567 = vmatprep.subr.mxu0 0.0
        %3568 = vmatpush2.msra.mxu0 0.0
        %3569 = vmatprep.mubr.f32.mxu0 0.0
        %3570 = vmatmul.mubr.f32.gmra.mxu0 %v3503
        %v3571 = vpop.f32.mrf.mxu0
        %v3572 = vadd.f32 1e-06, %v3571
        %v3573 = vpop.f32.mrf.mxu0
        %3574 = vdwg.mxu0
        %v3575 = vrsqrt.pop %v3572
        %v3576 = vlaneseq
        %v3577 = vshrl.u32 %v3576, 7
        %v3578 = vsub.s32 0, %v3577
        %v3579 = vrot.slane %v3575, %v3578
        %v3580 = vmul.f32 %v3492, %v3579
        %v3581 = vld [vmem:[%s18] sm:$0x1]
        %v3583 = vlaneseq
        %v3584 = vshrl.u32 %v3583, 7
        %v3585 = vsub.s32 0, %v3584
        %v3586 = vrot.slane %v3581, %v3585
        %v3588 = vmul.f32 %v3580, %v3586
        %v3589 = vld [vmem:[%s19] sm:$0x1]
        %v3591 = vlaneseq
        %v3592 = vshrl.u32 %v3591, 7
        %v3593 = vsub.s32 0, %v3592
        %v3594 = vrot.slane %v3589, %v3593
        %v3596 = vadd.f32 %v3588, %v3594
        %v3597 = vxor.u32 %v3596, 2147483648
        %v3598 = vmul.f32 %v3597, 1.442695
        %v3599 = vpow.pop %v3598
        %v3600 = vadd.f32 %v3599, 1.0
        %v3601 = vrcp.pop %v3600
        %v3602 = vmul.f32 1.0, %v3601
        %v3603 = vmul.f32 %v3596, %v3602
        %v3604 = vpack.c.bf16 %v3603, %v3603
        %v3606 = vsel %vm2899, %v3604, 0
        %3608 = vmatprep.subr.bf16.mxu0 0
        %3609 = vmatpush1.bf16.msra.mxu0 0
        %3610 = vmatprep.subr.bf16.mxu0 0
        %3611 = vmatpush1.bf16.msra.mxu0 0
        %3612 = vmatprep.subr.bf16.mxu0 0
        %3613 = vmatpush1.bf16.msra.mxu0 0
        %3614 = vmatprep.subr.bf16.mxu0 0
        %3615 = vmatpush1.bf16.msra.mxu0 0
        %3616 = vmatprep.subr.bf16.mxu0 0
        %3617 = vmatpush1.bf16.msra.mxu0 0
        %3618 = vmatprep.subr.bf16.mxu0 0
        %3619 = vmatpush1.bf16.msra.mxu0 0
        %3620 = vmatprep.subr.bf16.mxu0 0
        %3621 = vmatpush1.bf16.msra.mxu0 0
        %3622 = vmatprep.subr.bf16.mxu0 0
        %3623 = vmatpush1.bf16.msra.mxu0 %v3606
        %3624 = vmatprep.subr.bf16.mxu0 0
        %3625 = vmatpush2.bf16.msra.mxu0 0
        %3626 = vmatprep.subr.bf16.mxu0 0
        %3627 = vmatpush2.bf16.msra.mxu0 0
        %3628 = vmatprep.subr.bf16.mxu0 0
        %3629 = vmatpush2.bf16.msra.mxu0 0
        %3630 = vmatprep.subr.bf16.mxu0 0
        %3631 = vmatpush2.bf16.msra.mxu0 0
        %3632 = vmatprep.subr.bf16.mxu0 0
        %3633 = vmatpush2.bf16.msra.mxu0 0
        %3634 = vmatprep.subr.bf16.mxu0 0
        %3635 = vmatpush2.bf16.msra.mxu0 0
        %3636 = vmatprep.subr.bf16.mxu0 0
        %3637 = vmatpush2.bf16.msra.mxu0 0
        %3638 = vmatprep.subr.bf16.mxu0 0
        %3639 = vmatpush2.bf16.msra.mxu0 0
        %3640 = vmatprep.mubr.bf16.mxu0 0
        %3641 = vmatmul.mubr.bf16.gmra.mxu0 %v2891
        %v3642 = vpop.f32.mrf.mxu0
        %v3643 = vadd.f32 0.0, %v3642
        %v3644 = vpop.f32.mrf.mxu0
        %v3645 = vpop.f32.mrf.mxu0
        %v3646 = vadd.f32 0.0, %v3645
        %v3647 = vpop.f32.mrf.mxu0
        %3648 = vmatprep.mubr.bf16.mxu0 0
        %3649 = vmatmul.mubr.bf16.gmra.mxu0 %v2894
        %v3650 = vpop.f32.mrf.mxu0
        %v3651 = vadd.f32 0.0, %v3650
        %v3652 = vpop.f32.mrf.mxu0
        %v3653 = vpop.f32.mrf.mxu0
        %v3654 = vadd.f32 0.0, %v3653
        %v3655 = vpop.f32.mrf.mxu0
        %3656 = vmatprep.mubr.bf16.mxu0 0
        %3657 = vmatmul.mubr.bf16.gmra.mxu0 %v2897
        %v3658 = vpop.f32.mrf.mxu0
        %v3659 = vadd.f32 0.0, %v3658
        %v3660 = vpop.f32.mrf.mxu0
        %v3661 = vpop.f32.mrf.mxu0
        %v3662 = vpop.f32.mrf.mxu0
        %3663 = vdwg.mxu0
        %v3665 = vrot.slane %v3643, 4
        %3666 = vrot.lane.b32.xlu0 %v3665, 64
        %v3667 = vpop.permute.xlu0 %3666
        %v3670 = vrot.slane %v3646, 4
        %3671 = vrot.lane.b32.xlu0 %v3670, 64
        %v3672 = vpop.permute.xlu0 %3671
        %v3675 = vrot.slane %v3651, 4
        %3676 = vrot.lane.b32.xlu0 %v3675, 64
        %v3677 = vpop.permute.xlu0 %3676
        %v3680 = vrot.slane %v3654, 4
        %3681 = vrot.lane.b32.xlu0 %v3680, 64
        %v3682 = vpop.permute.xlu0 %3681
        %v3684 = vsel %vm753, %v3643, %v3667
        %v3685 = vsel %vm753, %v3646, %v3672
        %v3686 = vsel %vm753, %v3651, %v3677
        %v3687 = vsel %vm753, %v3654, %v3682
        %v3688 = vpack.c.bf16 %v3684, %v3684
        %v3689 = vpack.c.bf16 %v3685, %v3685
        %v3690 = vpack.c.bf16 %v3686, %v3686
        %v3691 = vpack.c.bf16 %v3687, %v3687
        %v3692 = vpack.c.bf16 %v3659, %v3659
        %v3693 = vld [vmem:[%s20] sm:$0xf]
        %v3694 = vld [vmem:[%s20 + $0x4] sm:$0xf]
        %v3695 = vld [vmem:[%s20 + $0x8] sm:$0xf]
        %v3696 = vld [vmem:[%s20 + $0xc] sm:$0xf]
        %v3697 = vld [vmem:[%s20 + $0x10] sm:$0xf]
        %v3698 = vld [vmem:[%s20 + $0x14] sm:$0xf]
        %v3699 = vld [vmem:[%s20 + $0x18] sm:$0xf]
        %v3700 = vld [vmem:[%s20 + $0x1c] sm:$0xf]
        %v3701 = vld [vmem:[%s20 + $0x20] sm:$0xf]
        %v3702 = vld [vmem:[%s20 + $0x24] sm:$0xf]
        %v3703 = vld [vmem:[%s20 + $0x28] sm:$0xf]
        %v3704 = vld [vmem:[%s20 + $0x2c] sm:$0xf]
        %v3705 = vld [vmem:[%s20 + $0x30] sm:$0xf]
        %v3706 = vld [vmem:[%s20 + $0x34] sm:$0xf]
        %v3707 = vld [vmem:[%s20 + $0x38] sm:$0xf]
        %v3708 = vld [vmem:[%s20 + $0x3c] sm:$0xf]
        %v3709 = vld [vmem:[%s20 + $0x40] sm:$0xf]
        %v3710 = vld [vmem:[%s20 + $0x44] sm:$0xf]
        %v3711 = vld [vmem:[%s20 + $0x48] sm:$0xf]
        %v3712 = vld [vmem:[%s20 + $0x4c] sm:$0xf]
        %v3713 = vld [vmem:[%s20 + $0x50] sm:$0xf]
        %v3714 = vld [vmem:[%s20 + $0x54] sm:$0xf]
        %v3715 = vld [vmem:[%s20 + $0x58] sm:$0xf]
        %v3716 = vld [vmem:[%s20 + $0x5c] sm:$0xf]
        %v3717 = vld [vmem:[%s20 + $0x60] sm:$0xf]
        %v3718 = vld [vmem:[%s20 + $0x64] sm:$0xf]
        %v3719 = vld [vmem:[%s20 + $0x68] sm:$0xf]
        %v3720 = vld [vmem:[%s20 + $0x6c] sm:$0xf]
        %v3721 = vld [vmem:[%s20 + $0x70] sm:$0xf]
        %v3722 = vld [vmem:[%s20 + $0x74] sm:$0xf]
        %v3723 = vld [vmem:[%s20 + $0x78] sm:$0xf]
        %v3724 = vld [vmem:[%s20 + $0x7c] sm:$0xf]
        %v3725 = vld [vmem:[%s20 + $0x80] sm:$0xf]
        %v3726 = vld [vmem:[%s20 + $0x84] sm:$0xf]
        %v3727 = vld [vmem:[%s20 + $0x88] sm:$0xf]
        %v3728 = vld [vmem:[%s20 + $0x8c] sm:$0xf]
        %v3729 = vld [vmem:[%s20 + $0x90] sm:$0xf]
        %v3730 = vld [vmem:[%s20 + $0x94] sm:$0xf]
        %v3731 = vld [vmem:[%s20 + $0x98] sm:$0xf]
        %v3732 = vld [vmem:[%s20 + $0x9c] sm:$0xf]
        %v3733 = vld [vmem:[%s20 + $0xa0] sm:$0xf]
        %v3734 = vld [vmem:[%s20 + $0xa4] sm:$0xf]
        %v3735 = vld [vmem:[%s20 + $0xa8] sm:$0xf]
        %v3736 = vld [vmem:[%s20 + $0xac] sm:$0xf]
        %v3737 = vld [vmem:[%s20 + $0xb0] sm:$0xf]
        %v3738 = vld [vmem:[%s20 + $0xb4] sm:$0xf]
        %v3739 = vld [vmem:[%s20 + $0xb8] sm:$0xf]
        %v3740 = vld [vmem:[%s20 + $0xbc] sm:$0xf]
        %v3741 = vld [vmem:[%s20 + $0xc0] sm:$0xf]
        %v3742 = vld [vmem:[%s20 + $0xc4] sm:$0xf]
        %v3743 = vld [vmem:[%s20 + $0xc8] sm:$0xf]
        %v3744 = vld [vmem:[%s20 + $0xcc] sm:$0xf]
        %v3745 = vld [vmem:[%s20 + $0xd0] sm:$0xf]
        %v3746 = vld [vmem:[%s20 + $0xd4] sm:$0xf]
        %v3747 = vld [vmem:[%s20 + $0xd8] sm:$0xf]
        %v3748 = vld [vmem:[%s20 + $0xdc] sm:$0xf]
        %v3749 = vld [vmem:[%s20 + $0xe0] sm:$0xf]
        %v3750 = vld [vmem:[%s20 + $0xe4] sm:$0xf]
        %v3751 = vld [vmem:[%s20 + $0xe8] sm:$0xf]
        %v3752 = vld [vmem:[%s20 + $0xec] sm:$0xf]
        %v3753 = vld [vmem:[%s20 + $0xf0] sm:$0xf]
        %v3754 = vld [vmem:[%s20 + $0xf4] sm:$0xf]
        %v3755 = vld [vmem:[%s20 + $0xf8] sm:$0xf]
        %v3756 = vld [vmem:[%s20 + $0xfc] sm:$0xf]
        %v3757 = vld [vmem:[%s20 + $0x100] sm:$0xf]
        %v3758 = vld [vmem:[%s20 + $0x104] sm:$0xf]
        %v3759 = vld [vmem:[%s20 + $0x108] sm:$0xf]
        %v3760 = vld [vmem:[%s20 + $0x10c] sm:$0xf]
        %v3761 = vld [vmem:[%s20 + $0x110] sm:$0xf]
        %v3762 = vld [vmem:[%s20 + $0x114] sm:$0xf]
        %v3763 = vld [vmem:[%s20 + $0x118] sm:$0xf]
        %v3764 = vld [vmem:[%s20 + $0x11c] sm:$0xf]
        %v3765 = vld [vmem:[%s21] sm:$0x1]
        %v3767 = vlaneseq
        %v3768 = vshrl.u32 %v3767, 7
        %v3769 = vsub.s32 0, %v3768
        %v3770 = vrot.slane %v3765, %v3769
        %v3844 = vunpack.c.l.b16 %v3693
        %v3845 = vunpack.c.l.b16 %v3694
        %v3846 = vunpack.c.l.b16 %v3695
        %v3847 = vunpack.c.l.b16 %v3696
        %v3848 = vunpack.c.l.b16 %v3697
        %v3849 = vunpack.c.l.b16 %v3698
        %v3850 = vunpack.c.l.b16 %v3699
        %v3851 = vunpack.c.l.b16 %v3700
        %v3852 = vunpack.c.l.b16 %v3701
        %v3853 = vunpack.c.l.b16 %v3702
        %v3854 = vunpack.c.l.b16 %v3703
        %v3855 = vunpack.c.l.b16 %v3704
        %v3856 = vunpack.c.l.b16 %v3705
        %v3857 = vunpack.c.l.b16 %v3706
        %v3858 = vunpack.c.l.b16 %v3707
        %v3859 = vunpack.c.l.b16 %v3708
        %v3860 = vunpack.c.l.b16 %v3709
        %v3861 = vunpack.c.l.b16 %v3710
        %v3862 = vunpack.c.l.b16 %v3711
        %v3863 = vunpack.c.l.b16 %v3712
        %v3864 = vunpack.c.l.b16 %v3713
        %v3865 = vunpack.c.l.b16 %v3714
        %v3866 = vunpack.c.l.b16 %v3715
        %v3867 = vunpack.c.l.b16 %v3716
        %v3868 = vunpack.c.l.b16 %v3717
        %v3869 = vunpack.c.l.b16 %v3718
        %v3870 = vunpack.c.l.b16 %v3719
        %v3871 = vunpack.c.l.b16 %v3720
        %v3872 = vunpack.c.l.b16 %v3721
        %v3873 = vunpack.c.l.b16 %v3722
        %v3874 = vunpack.c.l.b16 %v3723
        %v3875 = vunpack.c.l.b16 %v3724
        %v3876 = vunpack.c.l.b16 %v3725
        %v3877 = vunpack.c.l.b16 %v3726
        %v3878 = vunpack.c.l.b16 %v3727
        %v3879 = vunpack.c.l.b16 %v3728
        %v3880 = vunpack.c.l.b16 %v3729
        %v3881 = vunpack.c.l.b16 %v3730
        %v3882 = vunpack.c.l.b16 %v3731
        %v3883 = vunpack.c.l.b16 %v3732
        %v3884 = vunpack.c.l.b16 %v3733
        %v3885 = vunpack.c.l.b16 %v3734
        %v3886 = vunpack.c.l.b16 %v3735
        %v3887 = vunpack.c.l.b16 %v3736
        %v3888 = vunpack.c.l.b16 %v3737
        %v3889 = vunpack.c.l.b16 %v3738
        %v3890 = vunpack.c.l.b16 %v3739
        %v3891 = vunpack.c.l.b16 %v3740
        %v3892 = vunpack.c.l.b16 %v3741
        %v3893 = vunpack.c.l.b16 %v3742
        %v3894 = vunpack.c.l.b16 %v3743
        %v3895 = vunpack.c.l.b16 %v3744
        %v3896 = vunpack.c.l.b16 %v3745
        %v3897 = vunpack.c.l.b16 %v3746
        %v3898 = vunpack.c.l.b16 %v3747
        %v3899 = vunpack.c.l.b16 %v3748
        %v3900 = vunpack.c.l.b16 %v3749
        %v3901 = vunpack.c.l.b16 %v3750
        %v3902 = vunpack.c.l.b16 %v3751
        %v3903 = vunpack.c.l.b16 %v3752
        %v3904 = vunpack.c.l.b16 %v3753
        %v3905 = vunpack.c.l.b16 %v3754
        %v3906 = vunpack.c.l.b16 %v3755
        %v3907 = vunpack.c.l.b16 %v3756
        %v3908 = vunpack.c.l.b16 %v3757
        %v3909 = vunpack.c.l.b16 %v3758
        %v3910 = vunpack.c.l.b16 %v3759
        %v3911 = vunpack.c.l.b16 %v3760
        %v3912 = vunpack.c.l.b16 %v3761
        %v3913 = vunpack.c.l.b16 %v3762
        %v3914 = vunpack.c.l.b16 %v3763
        %v3915 = vunpack.c.l.b16 %v3764
        %v3916 = vpack.c.b16 %v3845, %v3844
        %v3917 = vpack.c.b16 %v3847, %v3846
        %v3918 = vpack.c.b16 %v3849, %v3848
        %v3919 = vpack.c.b16 %v3851, %v3850
        %v3920 = vpack.c.b16 %v3853, %v3852
        %v3921 = vpack.c.b16 %v3855, %v3854
        %v3922 = vpack.c.b16 %v3857, %v3856
        %v3923 = vpack.c.b16 %v3859, %v3858
        %v3924 = vpack.c.b16 %v3861, %v3860
        %v3925 = vpack.c.b16 %v3863, %v3862
        %v3926 = vpack.c.b16 %v3865, %v3864
        %v3927 = vpack.c.b16 %v3867, %v3866
        %v3928 = vpack.c.b16 %v3869, %v3868
        %v3929 = vpack.c.b16 %v3871, %v3870
        %v3930 = vpack.c.b16 %v3873, %v3872
        %v3931 = vpack.c.b16 %v3875, %v3874
        %v3932 = vpack.c.b16 %v3877, %v3876
        %v3933 = vpack.c.b16 %v3879, %v3878
        %v3934 = vpack.c.b16 %v3881, %v3880
        %v3935 = vpack.c.b16 %v3883, %v3882
        %v3936 = vpack.c.b16 %v3885, %v3884
        %v3937 = vpack.c.b16 %v3887, %v3886
        %v3938 = vpack.c.b16 %v3889, %v3888
        %v3939 = vpack.c.b16 %v3891, %v3890
        %v3940 = vpack.c.b16 %v3893, %v3892
        %v3941 = vpack.c.b16 %v3895, %v3894
        %v3942 = vpack.c.b16 %v3897, %v3896
        %v3943 = vpack.c.b16 %v3899, %v3898
        %v3944 = vpack.c.b16 %v3901, %v3900
        %v3945 = vpack.c.b16 %v3903, %v3902
        %v3946 = vpack.c.b16 %v3905, %v3904
        %v3947 = vpack.c.b16 %v3907, %v3906
        %v3948 = vpack.c.b16 %v3909, %v3908
        %v3949 = vpack.c.b16 %v3911, %v3910
        %v3950 = vpack.c.b16 %v3913, %v3912
        %v3951 = vpack.c.b16 %v3915, %v3914
        %v3989 = vsel %vm753, %v3692, 0
        %3991 = vmatprep.subr.bf16.mxu0 0
        %3992 = vmatpush1.bf16.msra.mxu0 %v3923
        %3993 = vmatprep.subr.bf16.mxu0 0
        %3994 = vmatpush1.bf16.msra.mxu0 %v3922
        %3995 = vmatprep.subr.bf16.mxu0 0
        %3996 = vmatpush1.bf16.msra.mxu0 %v3921
        %3997 = vmatprep.subr.bf16.mxu0 0
        %3998 = vmatpush1.bf16.msra.mxu0 %v3920
        %3999 = vmatprep.subr.bf16.mxu0 0
        %4000 = vmatpush1.bf16.msra.mxu0 %v3919
        %4001 = vmatprep.subr.bf16.mxu0 0
        %4002 = vmatpush1.bf16.msra.mxu0 %v3918
        %4003 = vmatprep.subr.bf16.mxu0 0
        %4004 = vmatpush1.bf16.msra.mxu0 %v3917
        %4005 = vmatprep.subr.bf16.mxu0 0
        %4006 = vmatpush1.bf16.msra.mxu0 %v3916
        %4007 = vmatprep.subr.bf16.mxu0 0
        %4008 = vmatpush2.bf16.msra.mxu0 %v3931
        %4009 = vmatprep.subr.bf16.mxu0 0
        %4010 = vmatpush2.bf16.msra.mxu0 %v3930
        %4011 = vmatprep.subr.bf16.mxu0 0
        %4012 = vmatpush2.bf16.msra.mxu0 %v3929
        %4013 = vmatprep.subr.bf16.mxu0 0
        %4014 = vmatpush2.bf16.msra.mxu0 %v3928
        %4015 = vmatprep.subr.bf16.mxu0 0
        %4016 = vmatpush2.bf16.msra.mxu0 %v3927
        %4017 = vmatprep.subr.bf16.mxu0 0
        %4018 = vmatpush2.bf16.msra.mxu0 %v3926
        %4019 = vmatprep.subr.bf16.mxu0 0
        %4020 = vmatpush2.bf16.msra.mxu0 %v3925
        %4021 = vmatprep.subr.bf16.mxu0 0
        %4022 = vmatpush2.bf16.msra.mxu0 %v3924
        %4023 = vmatprep.mubr.bf16.mxu0 %v3689
        %4024 = vmatmul.mubr.bf16.gmra.mxu0 %v3688
        %v4025 = vpop.f32.mrf.mxu0
        %v4026 = vadd.f32 %v3770, %v4025
        %v4027 = vpop.f32.mrf.mxu0
        %v4028 = vpop.f32.mrf.mxu0
        %v4029 = vpop.f32.mrf.mxu0
        %4030 = vdwg.mxu0
        %4031 = vmatprep.subr.bf16.mxu0 0
        %4032 = vmatpush1.bf16.msra.mxu0 %v3939
        %4033 = vmatprep.subr.bf16.mxu0 0
        %4034 = vmatpush1.bf16.msra.mxu0 %v3938
        %4035 = vmatprep.subr.bf16.mxu0 0
        %4036 = vmatpush1.bf16.msra.mxu0 %v3937
        %4037 = vmatprep.subr.bf16.mxu0 0
        %4038 = vmatpush1.bf16.msra.mxu0 %v3936
        %4039 = vmatprep.subr.bf16.mxu0 0
        %4040 = vmatpush1.bf16.msra.mxu0 %v3935
        %4041 = vmatprep.subr.bf16.mxu0 0
        %4042 = vmatpush1.bf16.msra.mxu0 %v3934
        %4043 = vmatprep.subr.bf16.mxu0 0
        %4044 = vmatpush1.bf16.msra.mxu0 %v3933
        %4045 = vmatprep.subr.bf16.mxu0 0
        %4046 = vmatpush1.bf16.msra.mxu0 %v3932
        %4047 = vmatprep.subr.bf16.mxu0 0
        %4048 = vmatpush2.bf16.msra.mxu0 %v3947
        %4049 = vmatprep.subr.bf16.mxu0 0
        %4050 = vmatpush2.bf16.msra.mxu0 %v3946
        %4051 = vmatprep.subr.bf16.mxu0 0
        %4052 = vmatpush2.bf16.msra.mxu0 %v3945
        %4053 = vmatprep.subr.bf16.mxu0 0
        %4054 = vmatpush2.bf16.msra.mxu0 %v3944
        %4055 = vmatprep.subr.bf16.mxu0 0
        %4056 = vmatpush2.bf16.msra.mxu0 %v3943
        %4057 = vmatprep.subr.bf16.mxu0 0
        %4058 = vmatpush2.bf16.msra.mxu0 %v3942
        %4059 = vmatprep.subr.bf16.mxu0 0
        %4060 = vmatpush2.bf16.msra.mxu0 %v3941
        %4061 = vmatprep.subr.bf16.mxu0 0
        %4062 = vmatpush2.bf16.msra.mxu0 %v3940
        %4063 = vmatprep.mubr.bf16.mxu0 %v3691
        %4064 = vmatmul.mubr.bf16.gmra.mxu0 %v3690
        %v4065 = vpop.f32.mrf.mxu0
        %v4066 = vadd.f32 %v4026, %v4065
        %v4067 = vpop.f32.mrf.mxu0
        %v4068 = vpop.f32.mrf.mxu0
        %v4069 = vpop.f32.mrf.mxu0
        %4070 = vdwg.mxu0
        %4071 = vmatprep.subr.bf16.mxu0 0
        %4072 = vmatpush1.bf16.msra.mxu0 0
        %4073 = vmatprep.subr.bf16.mxu0 0
        %4074 = vmatpush1.bf16.msra.mxu0 0
        %4075 = vmatprep.subr.bf16.mxu0 0
        %4076 = vmatpush1.bf16.msra.mxu0 0
        %4077 = vmatprep.subr.bf16.mxu0 0
        %4078 = vmatpush1.bf16.msra.mxu0 0
        %4079 = vmatprep.subr.bf16.mxu0 0
        %4080 = vmatpush1.bf16.msra.mxu0 %v3951
        %4081 = vmatprep.subr.bf16.mxu0 0
        %4082 = vmatpush1.bf16.msra.mxu0 %v3950
        %4083 = vmatprep.subr.bf16.mxu0 0
        %4084 = vmatpush1.bf16.msra.mxu0 %v3949
        %4085 = vmatprep.subr.bf16.mxu0 0
        %4086 = vmatpush1.bf16.msra.mxu0 %v3948
        %4087 = vmatprep.subr.bf16.mxu0 0
        %4088 = vmatpush2.bf16.msra.mxu0 0
        %4089 = vmatprep.subr.bf16.mxu0 0
        %4090 = vmatpush2.bf16.msra.mxu0 0
        %4091 = vmatprep.subr.bf16.mxu0 0
        %4092 = vmatpush2.bf16.msra.mxu0 0
        %4093 = vmatprep.subr.bf16.mxu0 0
        %4094 = vmatpush2.bf16.msra.mxu0 0
        %4095 = vmatprep.subr.bf16.mxu0 0
        %4096 = vmatpush2.bf16.msra.mxu0 0
        %4097 = vmatprep.subr.bf16.mxu0 0
        %4098 = vmatpush2.bf16.msra.mxu0 0
        %4099 = vmatprep.subr.bf16.mxu0 0
        %4100 = vmatpush2.bf16.msra.mxu0 0
        %4101 = vmatprep.subr.bf16.mxu0 0
        %4102 = vmatpush2.bf16.msra.mxu0 0
        %4103 = vmatprep.mubr.bf16.mxu0 0
        %4104 = vmatmul.mubr.bf16.gmra.mxu0 %v3989
        %v4105 = vpop.f32.mrf.mxu0
        %v4106 = vadd.f32 %v4066, %v4105
        %v4107 = vpop.f32.mrf.mxu0
        %v4108 = vpop.f32.mrf.mxu0
        %v4109 = vpop.f32.mrf.mxu0
        %4110 = vdwg.mxu0
        %4111 = vmatprep.subr.bf16.mxu0 0
        %4112 = vmatpush1.bf16.msra.mxu0 0
        %4113 = vmatprep.subr.bf16.mxu0 0
        %4114 = vmatpush1.bf16.msra.mxu0 0
        %4115 = vmatprep.subr.bf16.mxu0 0
        %4116 = vmatpush1.bf16.msra.mxu0 0
        %4117 = vmatprep.subr.bf16.mxu0 0
        %4118 = vmatpush1.bf16.msra.mxu0 0
        %4119 = vmatprep.subr.bf16.mxu0 0
        %4120 = vmatpush1.bf16.msra.mxu0 0
        %4121 = vmatprep.subr.bf16.mxu0 0
        %4122 = vmatpush1.bf16.msra.mxu0 0
        %4123 = vmatprep.subr.bf16.mxu0 0
        %4124 = vmatpush1.bf16.msra.mxu0 0
        %4125 = vmatprep.subr.bf16.mxu0 0
        %4126 = vmatpush1.bf16.msra.mxu0 %v2825
        %4127 = vmatprep.subr.bf16.mxu0 0
        %4128 = vmatpush2.bf16.msra.mxu0 0
        %4129 = vmatprep.subr.bf16.mxu0 0
        %4130 = vmatpush2.bf16.msra.mxu0 0
        %4131 = vmatprep.subr.bf16.mxu0 0
        %4132 = vmatpush2.bf16.msra.mxu0 0
        %4133 = vmatprep.subr.bf16.mxu0 0
        %4134 = vmatpush2.bf16.msra.mxu0 0
        %4135 = vmatprep.subr.bf16.mxu0 0
        %4136 = vmatpush2.bf16.msra.mxu0 0
        %4137 = vmatprep.subr.bf16.mxu0 0
        %4138 = vmatpush2.bf16.msra.mxu0 0
        %4139 = vmatprep.subr.bf16.mxu0 0
        %4140 = vmatpush2.bf16.msra.mxu0 0
        %4141 = vmatprep.subr.bf16.mxu0 0
        %4142 = vmatpush2.bf16.msra.mxu0 0
        %4143 = vmatprep.mubr.bf16.mxu0 0
        %4144 = vmatmul.mubr.bf16.gmra.mxu0 %v2828
        %v4145 = vpop.f32.mrf.mxu0
        %v4146 = vadd.f32 %v4106, %v4145
        %v4147 = vpop.f32.mrf.mxu0
        %v4148 = vpop.f32.mrf.mxu0
        %v4149 = vpop.f32.mrf.mxu0
        %4150 = vdwg.mxu0
        %v4151 = vpack.c.bf16 %v4146, %v4146
        %v4152 = vld [vmem:[%s22] sm:$0xf]
        %v4153 = vld [vmem:[%s22 + $0x4] sm:$0xf]
        %v4154 = vld [vmem:[%s22 + $0x8] sm:$0xf]
        %v4155 = vld [vmem:[%s22 + $0xc] sm:$0xf]
        %v4156 = vld [vmem:[%s22 + $0x10] sm:$0xf]
        %v4157 = vld [vmem:[%s22 + $0x14] sm:$0xf]
        %v4158 = vld [vmem:[%s22 + $0x18] sm:$0xf]
        %v4159 = vld [vmem:[%s22 + $0x1c] sm:$0xf]
        %v4160 = vld [vmem:[%s23] sm:$0x1]
        %v4162 = vlaneseq
        %v4163 = vshrl.u32 %v4162, 7
        %v4164 = vsub.s32 0, %v4163
        %v4165 = vrot.slane %v4160, %v4164
        %v4175 = vunpack.c.l.b16 %v4152
        %v4176 = vunpack.c.l.b16 %v4153
        %v4177 = vunpack.c.l.b16 %v4154
        %v4178 = vunpack.c.l.b16 %v4155
        %v4179 = vunpack.c.l.b16 %v4156
        %v4180 = vunpack.c.l.b16 %v4157
        %v4181 = vunpack.c.l.b16 %v4158
        %v4182 = vunpack.c.l.b16 %v4159
        %v4183 = vpack.c.b16 %v4176, %v4175
        %v4184 = vpack.c.b16 %v4178, %v4177
        %v4185 = vpack.c.b16 %v4180, %v4179
        %v4186 = vpack.c.b16 %v4182, %v4181
        %v4192 = vsel %vm753, %v4151, 0
        %4194 = vmatprep.subr.bf16.mxu0 0
        %4195 = vmatpush1.bf16.msra.mxu0 0
        %4196 = vmatprep.subr.bf16.mxu0 0
        %4197 = vmatpush1.bf16.msra.mxu0 0
        %4198 = vmatprep.subr.bf16.mxu0 0
        %4199 = vmatpush1.bf16.msra.mxu0 0
        %4200 = vmatprep.subr.bf16.mxu0 0
        %4201 = vmatpush1.bf16.msra.mxu0 0
        %4202 = vmatprep.subr.bf16.mxu0 0
        %4203 = vmatpush1.bf16.msra.mxu0 %v4186
        %4204 = vmatprep.subr.bf16.mxu0 0
        %4205 = vmatpush1.bf16.msra.mxu0 %v4185
        %4206 = vmatprep.subr.bf16.mxu0 0
        %4207 = vmatpush1.bf16.msra.mxu0 %v4184
        %4208 = vmatprep.subr.bf16.mxu0 0
        %4209 = vmatpush1.bf16.msra.mxu0 %v4183
        %4210 = vmatprep.subr.bf16.mxu0 0
        %4211 = vmatpush2.bf16.msra.mxu0 0
        %4212 = vmatprep.subr.bf16.mxu0 0
        %4213 = vmatpush2.bf16.msra.mxu0 0
        %4214 = vmatprep.subr.bf16.mxu0 0
        %4215 = vmatpush2.bf16.msra.mxu0 0
        %4216 = vmatprep.subr.bf16.mxu0 0
        %4217 = vmatpush2.bf16.msra.mxu0 0
        %4218 = vmatprep.subr.bf16.mxu0 0
        %4219 = vmatpush2.bf16.msra.mxu0 0
        %4220 = vmatprep.subr.bf16.mxu0 0
        %4221 = vmatpush2.bf16.msra.mxu0 0
        %4222 = vmatprep.subr.bf16.mxu0 0
        %4223 = vmatpush2.bf16.msra.mxu0 0
        %4224 = vmatprep.subr.bf16.mxu0 0
        %4225 = vmatpush2.bf16.msra.mxu0 0
        %4226 = vmatprep.mubr.bf16.mxu0 0
        %4227 = vmatmul.mubr.bf16.gmra.mxu0 %v4192
        %v4228 = vpop.f32.mrf.mxu0
        %v4229 = vadd.f32 %v4165, %v4228
        %v4230 = vpop.f32.mrf.mxu0
        %v4231 = vpop.f32.mrf.mxu0
        %v4232 = vpop.f32.mrf.mxu0
        %4233 = vdwg.mxu0
        %4234 = vst [vmem:[%s730] sm:$0xf] %v4229
        %s4235 = sand.u32 %s555, 1
        %s4236 = scalar_lea.sflag [#allocation3], %s4235
        %s4237 = sand.u32 %s555, 1
        %s4238 = smul.addr %s4237, 4
        %s4239 = scalar_lea.vmem [#allocation2], %s4238
        // Predicated region
        $region117: #{style_pyramid_forward.3} parent=115 // pred_check
          %p4240 = pneg %p565
        $region118: #{style_pyramid_forward.3} parent=115 // pred_check_branch
          %4242 = sbr.rel (%p4240) target = $region120
        $region119: #{style_pyramid_forward.3} parent=115 // pred_region
          %s4244 = ssub.s32 64, 64
          %4245 = vsyncadd %s4236, %s4244
          %s4246 = smul.addr %s38, 64
          %s4247 = scalar_lea.hbm %s24, %s4246
          %s4249 = sshll.u32 %s4239, 4
          %s4250 = int_to_ptr.vmem [resolvable:$true] %s4249
          %4252 = dma.vmem_to_hbm [thread:$0]  %s4250, 64, %s4247, %s4236
        $region120: #{style_pyramid_forward.3} parent=115 // pred_fallthru
          _
      $region116: #{style_pyramid_forward.3} parent=5 // pred_fallthru
        _
      %p4253 = scmp.le.s32.totalorder 2, %s33
      // Predicated region
      $region121: #{style_pyramid_forward.3} parent=5 // pred_check
        %p4254 = pneg %p4253
      $region122: #{style_pyramid_forward.3} parent=5 // pred_check_branch
        %4256 = sbr.rel (%p4254) target = $region124
      $region123: #{style_pyramid_forward.3} parent=5 // pred_region
        %s4257 = ssub.s32 %s33, 2
        // Predicated region
        $region125: #{style_pyramid_forward.3} parent=123 // pred_check
          %p4258 = pneg %p571
        $region126: #{style_pyramid_forward.3} parent=123 // pred_check_branch
          %4260 = sbr.rel (%p4258) target = $region128
        $region127: #{style_pyramid_forward.3} parent=123 // pred_region
          %s4261 = sand.u32 %s556, 1
          %s4262 = scalar_lea.sflag [#allocation3], %s4261
          %s4263 = sand.u32 %s556, 1
          %s4264 = smul.addr %s4263, 4
          %s4265 = scalar_lea.vmem [#allocation2], %s4264
          %4266 = dma.done %s4262, 64
        $region128: #{style_pyramid_forward.3} parent=123 // pred_fallthru
          _
      $region124: #{style_pyramid_forward.3} parent=5 // pred_fallthru
        _
    $region6: #{style_pyramid_forward.3} parent=1 // loop_footer
      %s37 = sadd.s32 1, %s33
    $region7: #{style_pyramid_forward.3} parent=1 // loop_footer_branch
      %32 = sbr.rel target = $region3
    $region8: #{style_pyramid_forward.3} parent=1 // loop_exit
      _
    %4267 = vsyncpa [#allocation3], 1
    %s4268 = scalar_lea.sflag [#allocation3], 1
    %4269 = vsyncpa %s4268, 1

// kernel: style_pyramid_forward.2
$region0: #{style_pyramid_forward.2}
  #allocation0 [shape = 'u32[]', space=smem, size = 0x4, offset = 0x4, fixed_abs, tag = 'smem constant byte address 0x4 - core index']
  #allocation1 [shape = 'u32[144,128]{1,0:T(1,128)}', space=vmem, size = 0x12000, scoped, tag = 'internal scratch']
  %s0 = inlined_call_operand.vmem [shape: f32[2,64,48], index: 0, kind: input, shape index: {}]
  %s1 = inlined_call_operand.vmem [shape: bf16[48,64], index: 1, kind: input, shape index: {}]
  %s2 = inlined_call_operand.vmem [shape: f32[64,64], index: 2, kind: input, shape index: {}]
  %s3 = inlined_call_operand.vmem [shape: f32[2,1,64], index: 3, kind: input, shape index: {}]
  %s4 = inlined_call_operand.vmem [shape: f32[2,1,64], index: 4, kind: input, shape index: {}]
  %s5 = inlined_call_operand.vmem [shape: bf16[2,64,192], index: 5, kind: input, shape index: {}]
  %s6 = inlined_call_operand.vmem [shape: f32[2,1,192], index: 6, kind: input, shape index: {}]
  %s7 = inlined_call_operand.vmem [shape: bf16[2,64,64], index: 7, kind: input, shape index: {}]
  %s8 = inlined_call_operand.vmem [shape: f32[2,1,64], index: 8, kind: input, shape index: {}]
  %s9 = inlined_call_operand.vmem [shape: f32[2,1,64], index: 9, kind: input, shape index: {}]
  %s10 = inlined_call_operand.vmem [shape: f32[2,1,64], index: 10, kind: input, shape index: {}]
  %s11 = inlined_call_operand.vmem [shape: bf16[2,64,256], index: 11, kind: input, shape index: {}]
  %s12 = inlined_call_operand.vmem [shape: f32[2,1,256], index: 12, kind: input, shape index: {}]
  %s13 = inlined_call_operand.vmem [shape: bf16[2,256,64], index: 13, kind: input, shape index: {}]
  %s14 = inlined_call_operand.vmem [shape: f32[2,1,64], index: 14, kind: input, shape index: {}]
  %s15 = inlined_call_operand.vmem [shape: f32[1,64], index: 15, kind: input, shape index: {}]
  %s16 = inlined_call_operand.vmem [shape: f32[1,64], index: 16, kind: input, shape index: {}]
  %s17 = inlined_call_operand.vmem [shape: bf16[88,64], index: 17, kind: input, shape index: {}]
  %s18 = inlined_call_operand.vmem [shape: bf16[64,256], index: 18, kind: input, shape index: {}]
  %s19 = inlined_call_operand.vmem [shape: f32[1,256], index: 19, kind: input, shape index: {}]
  %s20 = inlined_call_operand.vmem [shape: f32[2,64,64], index: 20, kind: output, shape index: {0}]
  %s21 = inlined_call_operand.vmem [shape: f32[2,88,256], index: 21, kind: output, shape index: {1}]
  %22 = xla_tuple %s20, %s21
  %s23 = sld [smem:[#allocation0]]
  $region121: #{style_pyramid_forward.2} parent=0
    _
  %s25 = ssub.s32 1, %s23
  %s26 = scalar_select 0, %s25, %s23
  loop: start=0, step=1, limit=4
  $region2: #{style_pyramid_forward.2} parent=0 // loop_pre_header
    _
  $region3: #{style_pyramid_forward.2} parent=0 // loop_header
    %s28 = sphi 0, %s32
    %p29 = scmp.ge.s32.totalorder %s28, 4
    %s38 = sphi 0, %s40
    %s41 = sphi 0, %s38
    %s42 = sphi 0, %s41
    %s58 = sphi 0, %s42
    %s62 = sphi 0, %s62
    %s64 = sphi 0, %s62
    %s65 = sphi 0, %s64
    %s79 = sphi 0, %s65
    %s83 = sphi 0, %s83
    %s85 = sphi 0, %s83
    %s86 = sphi 0, %s85
    %s100 = sphi 0, %s86
    %s104 = sphi 0, %s104
    %s106 = sphi 0, %s104
    %s107 = sphi 0, %s106
    %s121 = sphi 0, %s107
    %s125 = sphi 0, %s125
    %s127 = sphi 0, %s125
    %s128 = sphi 0, %s127
    %s142 = sphi 0, %s128
    %s146 = sphi 0, %s146
    %s148 = sphi 0, %s146
    %s149 = sphi 0, %s148
    %s163 = sphi 0, %s149
    %s167 = sphi 0, %s167
    %s169 = sphi 0, %s167
    %s170 = sphi 0, %s169
    %s184 = sphi 0, %s170
    %s188 = sphi 0, %s188
    %s190 = sphi 0, %s188
    %s191 = sphi 0, %s190
    %s205 = sphi 0, %s191
    %s209 = sphi 0, %s209
    %s211 = sphi 0, %s209
    %s212 = sphi 0, %s211
    %s226 = sphi 0, %s212
    %s230 = sphi 0, %s230
    %s232 = sphi 0, %s230
    %s233 = sphi 0, %s232
    %s247 = sphi 0, %s233
    %s251 = sphi 0, %s251
    %s253 = sphi 0, %s251
    %s254 = sphi 0, %s253
    %s268 = sphi 0, %s254
    %s272 = sphi 0, %s272
    %s274 = sphi 0, %s272
    %s275 = sphi 0, %s274
    %s289 = sphi 0, %s275
    %s293 = sphi 0, %s293
    %s295 = sphi 0, %s293
    %s296 = sphi 0, %s295
    %s310 = sphi 0, %s296
    %s314 = sphi 0, %s314
    %s316 = sphi 0, %s314
    %s317 = sphi 0, %s316
    %s331 = sphi 0, %s317
    %s335 = sphi 0, %s335
    %s337 = sphi 0, %s335
    %s338 = sphi 0, %s337
    %s352 = sphi 0, %s338
    %s356 = sphi 0, %s356
    %s358 = sphi 0, %s356
    %s359 = sphi 0, %s358
    %s373 = sphi 0, %s359
    %s377 = sphi 0, %s377
    %s379 = sphi 0, %s377
    %s380 = sphi 0, %s379
    %s394 = sphi 0, %s380
    %s398 = sphi 0, %s398
    %s400 = sphi 0, %s398
    %s401 = sphi 0, %s400
    %s415 = sphi 0, %s401
    %s419 = sphi 0, %s419
    %s421 = sphi 0, %s419
    %s422 = sphi 0, %s421
    %s436 = sphi 0, %s422
    %s440 = sphi 0, %s440
    %s442 = sphi 0, %s440
    %s443 = sphi 0, %s442
    %s457 = sphi 0, %s443
    %s463 = sphi 0, %s465
    %s466 = sphi 0, %s463
    %s467 = sphi 0, %s466
    %s483 = sphi 0, %s467
    %s489 = sphi 0, %s491
    %s492 = sphi 0, %s489
    %s493 = sphi 0, %s492
    %s509 = sphi 0, %s493
  $region4: #{style_pyramid_forward.2} parent=0 // loop_header_branch
    %31 = sbr.rel (%p29) target = $region8
  $region5: #{style_pyramid_forward.2} parent=0 // loop_body
    %s33 = ssub.s32 %s28, 1
    %s34 = ssub.s32 %s28, 2
    %s35 = sadd.s32 %s28, 1
    %s36 = ssub.s32 %s28, %s35
    %p37 = scmp.eq.s32.totalorder %s36, 0
    %s39 = sadd.s32 %s38, 1
    %s40 = scalar_select %p37, %s38, %s39
    %p43 = pneg %p37
    %p44 = scmp.eq.s32.totalorder %s28, 1
    %p45 = por %p43, %p44
    %p46 = scmp.ne.s32.totalorder %s38, %s41
    %p47 = scmp.eq.s32.totalorder %s28, 0
    %p48 = por %p46, %p47
    %p49 = scmp.ne.s32.totalorder %s38, %s41
    %p50 = scmp.eq.s32.totalorder %s33, 1
    %p51 = por %p49, %p50
    %p52 = scmp.ne.s32.totalorder %s41, %s42
    %p53 = scmp.eq.s32.totalorder %s33, 0
    %p54 = por %p52, %p53
    %p55 = scmp.ne.s32.totalorder %s41, %s42
    %p56 = scmp.eq.s32.totalorder %s34, 1
    %p57 = por %p55, %p56
    %p59 = scmp.ne.s32.totalorder %s42, %s58
    %p60 = scmp.eq.s32.totalorder %s34, 0
    %p61 = por %p59, %p60
    %s63 = sadd.s32 %s62, 1
    %p66 = scmp.eq.s32.totalorder %s28, 1
    %p67 = scmp.ne.s32.totalorder %s62, %s64
    %p68 = scmp.eq.s32.totalorder %s28, 0
    %p69 = por %p67, %p68
    %p70 = scmp.ne.s32.totalorder %s62, %s64
    %p71 = scmp.eq.s32.totalorder %s33, 1
    %p72 = por %p70, %p71
    %p73 = scmp.ne.s32.totalorder %s64, %s65
    %p74 = scmp.eq.s32.totalorder %s33, 0
    %p75 = por %p73, %p74
    %p76 = scmp.ne.s32.totalorder %s64, %s65
    %p77 = scmp.eq.s32.totalorder %s34, 1
    %p78 = por %p76, %p77
    %p80 = scmp.ne.s32.totalorder %s65, %s79
    %p81 = scmp.eq.s32.totalorder %s34, 0
    %p82 = por %p80, %p81
    %s84 = sadd.s32 %s83, 1
    %p87 = scmp.eq.s32.totalorder %s28, 1
    %p88 = scmp.ne.s32.totalorder %s83, %s85
    %p89 = scmp.eq.s32.totalorder %s28, 0
    %p90 = por %p88, %p89
    %p91 = scmp.ne.s32.totalorder %s83, %s85
    %p92 = scmp.eq.s32.totalorder %s33, 1
    %p93 = por %p91, %p92
    %p94 = scmp.ne.s32.totalorder %s85, %s86
    %p95 = scmp.eq.s32.totalorder %s33, 0
    %p96 = por %p94, %p95
    %p97 = scmp.ne.s32.totalorder %s85, %s86
    %p98 = scmp.eq.s32.totalorder %s34, 1
    %p99 = por %p97, %p98
    %p101 = scmp.ne.s32.totalorder %s86, %s100
    %p102 = scmp.eq.s32.totalorder %s34, 0
    %p103 = por %p101, %p102
    %s105 = sadd.s32 %s104, 1
    %p108 = scmp.eq.s32.totalorder %s28, 1
    %p109 = scmp.ne.s32.totalorder %s104, %s106
    %p110 = scmp.eq.s32.totalorder %s28, 0
    %p111 = por %p109, %p110
    %p112 = scmp.ne.s32.totalorder %s104, %s106
    %p113 = scmp.eq.s32.totalorder %s33, 1
    %p114 = por %p112, %p113
    %p115 = scmp.ne.s32.totalorder %s106, %s107
    %p116 = scmp.eq.s32.totalorder %s33, 0
    %p117 = por %p115, %p116
    %p118 = scmp.ne.s32.totalorder %s106, %s107
    %p119 = scmp.eq.s32.totalorder %s34, 1
    %p120 = por %p118, %p119
    %p122 = scmp.ne.s32.totalorder %s107, %s121
    %p123 = scmp.eq.s32.totalorder %s34, 0
    %p124 = por %p122, %p123
    %s126 = sadd.s32 %s125, 1
    %p129 = scmp.eq.s32.totalorder %s28, 1
    %p130 = scmp.ne.s32.totalorder %s125, %s127
    %p131 = scmp.eq.s32.totalorder %s28, 0
    %p132 = por %p130, %p131
    %p133 = scmp.ne.s32.totalorder %s125, %s127
    %p134 = scmp.eq.s32.totalorder %s33, 1
    %p135 = por %p133, %p134
    %p136 = scmp.ne.s32.totalorder %s127, %s128
    %p137 = scmp.eq.s32.totalorder %s33, 0
    %p138 = por %p136, %p137
    %p139 = scmp.ne.s32.totalorder %s127, %s128
    %p140 = scmp.eq.s32.totalorder %s34, 1
    %p141 = por %p139, %p140
    %p143 = scmp.ne.s32.totalorder %s128, %s142
    %p144 = scmp.eq.s32.totalorder %s34, 0
    %p145 = por %p143, %p144
    %s147 = sadd.s32 %s146, 1
    %p150 = scmp.eq.s32.totalorder %s28, 1
    %p151 = scmp.ne.s32.totalorder %s146, %s148
    %p152 = scmp.eq.s32.totalorder %s28, 0
    %p153 = por %p151, %p152
    %p154 = scmp.ne.s32.totalorder %s146, %s148
    %p155 = scmp.eq.s32.totalorder %s33, 1
    %p156 = por %p154, %p155
    %p157 = scmp.ne.s32.totalorder %s148, %s149
    %p158 = scmp.eq.s32.totalorder %s33, 0
    %p159 = por %p157, %p158
    %p160 = scmp.ne.s32.totalorder %s148, %s149
    %p161 = scmp.eq.s32.totalorder %s34, 1
    %p162 = por %p160, %p161
    %p164 = scmp.ne.s32.totalorder %s149, %s163
    %p165 = scmp.eq.s32.totalorder %s34, 0
    %p166 = por %p164, %p165
    %s168 = sadd.s32 %s167, 1
    %p171 = scmp.eq.s32.totalorder %s28, 1
    %p172 = scmp.ne.s32.totalorder %s167, %s169
    %p173 = scmp.eq.s32.totalorder %s28, 0
    %p174 = por %p172, %p173
    %p175 = scmp.ne.s32.totalorder %s167, %s169
    %p176 = scmp.eq.s32.totalorder %s33, 1
    %p177 = por %p175, %p176
    %p178 = scmp.ne.s32.totalorder %s169, %s170
    %p179 = scmp.eq.s32.totalorder %s33, 0
    %p180 = por %p178, %p179
    %p181 = scmp.ne.s32.totalorder %s169, %s170
    %p182 = scmp.eq.s32.totalorder %s34, 1
    %p183 = por %p181, %p182
    %p185 = scmp.ne.s32.totalorder %s170, %s184
    %p186 = scmp.eq.s32.totalorder %s34, 0
    %p187 = por %p185, %p186
    %s189 = sadd.s32 %s188, 1
    %p192 = scmp.eq.s32.totalorder %s28, 1
    %p193 = scmp.ne.s32.totalorder %s188, %s190
    %p194 = scmp.eq.s32.totalorder %s28, 0
    %p195 = por %p193, %p194
    %p196 = scmp.ne.s32.totalorder %s188, %s190
    %p197 = scmp.eq.s32.totalorder %s33, 1
    %p198 = por %p196, %p197
    %p199 = scmp.ne.s32.totalorder %s190, %s191
    %p200 = scmp.eq.s32.totalorder %s33, 0
    %p201 = por %p199, %p200
    %p202 = scmp.ne.s32.totalorder %s190, %s191
    %p203 = scmp.eq.s32.totalorder %s34, 1
    %p204 = por %p202, %p203
    %p206 = scmp.ne.s32.totalorder %s191, %s205
    %p207 = scmp.eq.s32.totalorder %s34, 0
    %p208 = por %p206, %p207
    %s210 = sadd.s32 %s209, 1
    %p213 = scmp.eq.s32.totalorder %s28, 1
    %p214 = scmp.ne.s32.totalorder %s209, %s211
    %p215 = scmp.eq.s32.totalorder %s28, 0
    %p216 = por %p214, %p215
    %p217 = scmp.ne.s32.totalorder %s209, %s211
    %p218 = scmp.eq.s32.totalorder %s33, 1
    %p219 = por %p217, %p218
    %p220 = scmp.ne.s32.totalorder %s211, %s212
    %p221 = scmp.eq.s32.totalorder %s33, 0
    %p222 = por %p220, %p221
    %p223 = scmp.ne.s32.totalorder %s211, %s212
    %p224 = scmp.eq.s32.totalorder %s34, 1
    %p225 = por %p223, %p224
    %p227 = scmp.ne.s32.totalorder %s212, %s226
    %p228 = scmp.eq.s32.totalorder %s34, 0
    %p229 = por %p227, %p228
    %s231 = sadd.s32 %s230, 1
    %p234 = scmp.eq.s32.totalorder %s28, 1
    %p235 = scmp.ne.s32.totalorder %s230, %s232
    %p236 = scmp.eq.s32.totalorder %s28, 0
    %p237 = por %p235, %p236
    %p238 = scmp.ne.s32.totalorder %s230, %s232
    %p239 = scmp.eq.s32.totalorder %s33, 1
    %p240 = por %p238, %p239
    %p241 = scmp.ne.s32.totalorder %s232, %s233
    %p242 = scmp.eq.s32.totalorder %s33, 0
    %p243 = por %p241, %p242
    %p244 = scmp.ne.s32.totalorder %s232, %s233
    %p245 = scmp.eq.s32.totalorder %s34, 1
    %p246 = por %p244, %p245
    %p248 = scmp.ne.s32.totalorder %s233, %s247
    %p249 = scmp.eq.s32.totalorder %s34, 0
    %p250 = por %p248, %p249
    %s252 = sadd.s32 %s251, 1
    %p255 = scmp.eq.s32.totalorder %s28, 1
    %p256 = scmp.ne.s32.totalorder %s251, %s253
    %p257 = scmp.eq.s32.totalorder %s28, 0
    %p258 = por %p256, %p257
    %p259 = scmp.ne.s32.totalorder %s251, %s253
    %p260 = scmp.eq.s32.totalorder %s33, 1
    %p261 = por %p259, %p260
    %p262 = scmp.ne.s32.totalorder %s253, %s254
    %p263 = scmp.eq.s32.totalorder %s33, 0
    %p264 = por %p262, %p263
    %p265 = scmp.ne.s32.totalorder %s253, %s254
    %p266 = scmp.eq.s32.totalorder %s34, 1
    %p267 = por %p265, %p266
    %p269 = scmp.ne.s32.totalorder %s254, %s268
    %p270 = scmp.eq.s32.totalorder %s34, 0
    %p271 = por %p269, %p270
    %s273 = sadd.s32 %s272, 1
    %p276 = scmp.eq.s32.totalorder %s28, 1
    %p277 = scmp.ne.s32.totalorder %s272, %s274
    %p278 = scmp.eq.s32.totalorder %s28, 0
    %p279 = por %p277, %p278
    %p280 = scmp.ne.s32.totalorder %s272, %s274
    %p281 = scmp.eq.s32.totalorder %s33, 1
    %p282 = por %p280, %p281
    %p283 = scmp.ne.s32.totalorder %s274, %s275
    %p284 = scmp.eq.s32.totalorder %s33, 0
    %p285 = por %p283, %p284
    %p286 = scmp.ne.s32.totalorder %s274, %s275
    %p287 = scmp.eq.s32.totalorder %s34, 1
    %p288 = por %p286, %p287
    %p290 = scmp.ne.s32.totalorder %s275, %s289
    %p291 = scmp.eq.s32.totalorder %s34, 0
    %p292 = por %p290, %p291
    %s294 = sadd.s32 %s293, 1
    %p297 = scmp.eq.s32.totalorder %s28, 1
    %p298 = scmp.ne.s32.totalorder %s293, %s295
    %p299 = scmp.eq.s32.totalorder %s28, 0
    %p300 = por %p298, %p299
    %p301 = scmp.ne.s32.totalorder %s293, %s295
    %p302 = scmp.eq.s32.totalorder %s33, 1
    %p303 = por %p301, %p302
    %p304 = scmp.ne.s32.totalorder %s295, %s296
    %p305 = scmp.eq.s32.totalorder %s33, 0
    %p306 = por %p304, %p305
    %p307 = scmp.ne.s32.totalorder %s295, %s296
    %p308 = scmp.eq.s32.totalorder %s34, 1
    %p309 = por %p307, %p308
    %p311 = scmp.ne.s32.totalorder %s296, %s310
    %p312 = scmp.eq.s32.totalorder %s34, 0
    %p313 = por %p311, %p312
    %s315 = sadd.s32 %s314, 1
    %p318 = scmp.eq.s32.totalorder %s28, 1
    %p319 = scmp.ne.s32.totalorder %s314, %s316
    %p320 = scmp.eq.s32.totalorder %s28, 0
    %p321 = por %p319, %p320
    %p322 = scmp.ne.s32.totalorder %s314, %s316
    %p323 = scmp.eq.s32.totalorder %s33, 1
    %p324 = por %p322, %p323
    %p325 = scmp.ne.s32.totalorder %s316, %s317
    %p326 = scmp.eq.s32.totalorder %s33, 0
    %p327 = por %p325, %p326
    %p328 = scmp.ne.s32.totalorder %s316, %s317
    %p329 = scmp.eq.s32.totalorder %s34, 1
    %p330 = por %p328, %p329
    %p332 = scmp.ne.s32.totalorder %s317, %s331
    %p333 = scmp.eq.s32.totalorder %s34, 0
    %p334 = por %p332, %p333
    %s336 = sadd.s32 %s335, 1
    %p339 = scmp.eq.s32.totalorder %s28, 1
    %p340 = scmp.ne.s32.totalorder %s335, %s337
    %p341 = scmp.eq.s32.totalorder %s28, 0
    %p342 = por %p340, %p341
    %p343 = scmp.ne.s32.totalorder %s335, %s337
    %p344 = scmp.eq.s32.totalorder %s33, 1
    %p345 = por %p343, %p344
    %p346 = scmp.ne.s32.totalorder %s337, %s338
    %p347 = scmp.eq.s32.totalorder %s33, 0
    %p348 = por %p346, %p347
    %p349 = scmp.ne.s32.totalorder %s337, %s338
    %p350 = scmp.eq.s32.totalorder %s34, 1
    %p351 = por %p349, %p350
    %p353 = scmp.ne.s32.totalorder %s338, %s352
    %p354 = scmp.eq.s32.totalorder %s34, 0
    %p355 = por %p353, %p354
    %s357 = sadd.s32 %s356, 1
    %p360 = scmp.eq.s32.totalorder %s28, 1
    %p361 = scmp.ne.s32.totalorder %s356, %s358
    %p362 = scmp.eq.s32.totalorder %s28, 0
    %p363 = por %p361, %p362
    %p364 = scmp.ne.s32.totalorder %s356, %s358
    %p365 = scmp.eq.s32.totalorder %s33, 1
    %p366 = por %p364, %p365
    %p367 = scmp.ne.s32.totalorder %s358, %s359
    %p368 = scmp.eq.s32.totalorder %s33, 0
    %p369 = por %p367, %p368
    %p370 = scmp.ne.s32.totalorder %s358, %s359
    %p371 = scmp.eq.s32.totalorder %s34, 1
    %p372 = por %p370, %p371
    %p374 = scmp.ne.s32.totalorder %s359, %s373
    %p375 = scmp.eq.s32.totalorder %s34, 0
    %p376 = por %p374, %p375
    %s378 = sadd.s32 %s377, 1
    %p381 = scmp.eq.s32.totalorder %s28, 1
    %p382 = scmp.ne.s32.totalorder %s377, %s379
    %p383 = scmp.eq.s32.totalorder %s28, 0
    %p384 = por %p382, %p383
    %p385 = scmp.ne.s32.totalorder %s377, %s379
    %p386 = scmp.eq.s32.totalorder %s33, 1
    %p387 = por %p385, %p386
    %p388 = scmp.ne.s32.totalorder %s379, %s380
    %p389 = scmp.eq.s32.totalorder %s33, 0
    %p390 = por %p388, %p389
    %p391 = scmp.ne.s32.totalorder %s379, %s380
    %p392 = scmp.eq.s32.totalorder %s34, 1
    %p393 = por %p391, %p392
    %p395 = scmp.ne.s32.totalorder %s380, %s394
    %p396 = scmp.eq.s32.totalorder %s34, 0
    %p397 = por %p395, %p396
    %s399 = sadd.s32 %s398, 1
    %p402 = scmp.eq.s32.totalorder %s28, 1
    %p403 = scmp.ne.s32.totalorder %s398, %s400
    %p404 = scmp.eq.s32.totalorder %s28, 0
    %p405 = por %p403, %p404
    %p406 = scmp.ne.s32.totalorder %s398, %s400
    %p407 = scmp.eq.s32.totalorder %s33, 1
    %p408 = por %p406, %p407
    %p409 = scmp.ne.s32.totalorder %s400, %s401
    %p410 = scmp.eq.s32.totalorder %s33, 0
    %p411 = por %p409, %p410
    %p412 = scmp.ne.s32.totalorder %s400, %s401
    %p413 = scmp.eq.s32.totalorder %s34, 1
    %p414 = por %p412, %p413
    %p416 = scmp.ne.s32.totalorder %s401, %s415
    %p417 = scmp.eq.s32.totalorder %s34, 0
    %p418 = por %p416, %p417
    %s420 = sadd.s32 %s419, 1
    %p423 = scmp.eq.s32.totalorder %s28, 1
    %p424 = scmp.ne.s32.totalorder %s419, %s421
    %p425 = scmp.eq.s32.totalorder %s28, 0
    %p426 = por %p424, %p425
    %p427 = scmp.ne.s32.totalorder %s419, %s421
    %p428 = scmp.eq.s32.totalorder %s33, 1
    %p429 = por %p427, %p428
    %p430 = scmp.ne.s32.totalorder %s421, %s422
    %p431 = scmp.eq.s32.totalorder %s33, 0
    %p432 = por %p430, %p431
    %p433 = scmp.ne.s32.totalorder %s421, %s422
    %p434 = scmp.eq.s32.totalorder %s34, 1
    %p435 = por %p433, %p434
    %p437 = scmp.ne.s32.totalorder %s422, %s436
    %p438 = scmp.eq.s32.totalorder %s34, 0
    %p439 = por %p437, %p438
    %s441 = sadd.s32 %s440, 1
    %p444 = scmp.eq.s32.totalorder %s28, 1
    %p445 = scmp.ne.s32.totalorder %s440, %s442
    %p446 = scmp.eq.s32.totalorder %s28, 0
    %p447 = por %p445, %p446
    %p448 = scmp.ne.s32.totalorder %s440, %s442
    %p449 = scmp.eq.s32.totalorder %s33, 1
    %p450 = por %p448, %p449
    %p451 = scmp.ne.s32.totalorder %s442, %s443
    %p452 = scmp.eq.s32.totalorder %s33, 0
    %p453 = por %p451, %p452
    %p454 = scmp.ne.s32.totalorder %s442, %s443
    %p455 = scmp.eq.s32.totalorder %s34, 1
    %p456 = por %p454, %p455
    %p458 = scmp.ne.s32.totalorder %s443, %s457
    %p459 = scmp.eq.s32.totalorder %s34, 0
    %p460 = por %p458, %p459
    %s461 = ssub.s32 %s28, %s35
    %p462 = scmp.eq.s32.totalorder %s461, 0
    %s464 = sadd.s32 %s463, 1
    %s465 = scalar_select %p462, %s463, %s464
    %p468 = pneg %p462
    %p469 = scmp.eq.s32.totalorder %s28, 1
    %p470 = por %p468, %p469
    %p471 = scmp.ne.s32.totalorder %s463, %s466
    %p472 = scmp.eq.s32.totalorder %s28, 0
    %p473 = por %p471, %p472
    %p474 = scmp.ne.s32.totalorder %s463, %s466
    %p475 = scmp.eq.s32.totalorder %s33, 1
    %p476 = por %p474, %p475
    %p477 = scmp.ne.s32.totalorder %s466, %s467
    %p478 = scmp.eq.s32.totalorder %s33, 0
    %p479 = por %p477, %p478
    %p480 = scmp.ne.s32.totalorder %s466, %s467
    %p481 = scmp.eq.s32.totalorder %s34, 1
    %p482 = por %p480, %p481
    %p484 = scmp.ne.s32.totalorder %s467, %s483
    %p485 = scmp.eq.s32.totalorder %s34, 0
    %p486 = por %p484, %p485
    %s487 = ssub.s32 %s28, %s35
    %p488 = scmp.eq.s32.totalorder %s487, 0
    %s490 = sadd.s32 %s489, 1
    %s491 = scalar_select %p488, %s489, %s490
    %p494 = pneg %p488
    %p495 = scmp.eq.s32.totalorder %s28, 1
    %p496 = por %p494, %p495
    %p497 = scmp.ne.s32.totalorder %s489, %s492
    %p498 = scmp.eq.s32.totalorder %s28, 0
    %p499 = por %p497, %p498
    %p500 = scmp.ne.s32.totalorder %s489, %s492
    %p501 = scmp.eq.s32.totalorder %s33, 1
    %p502 = por %p500, %p501
    %p503 = scmp.ne.s32.totalorder %s492, %s493
    %p504 = scmp.eq.s32.totalorder %s33, 0
    %p505 = por %p503, %p504
    %p506 = scmp.ne.s32.totalorder %s492, %s493
    %p507 = scmp.eq.s32.totalorder %s34, 1
    %p508 = por %p506, %p507
    %p510 = scmp.ne.s32.totalorder %s493, %s509
    %p511 = scmp.eq.s32.totalorder %s34, 0
    %p512 = por %p510, %p511
    %p513 = scmp.le.s32.totalorder 1, %s28
    %p514 = scmp.lt.s32.totalorder %s28, 3
    %p515 = pnand %p513, %p514
    %p516 = pneg %p515
    // Predicated region
    $region9: #{style_pyramid_forward.2} parent=5 // pred_check
      _
    $region10: #{style_pyramid_forward.2} parent=5 // pred_check_branch
      %518 = sbr.rel (%p515) target = $region12
    $region11: #{style_pyramid_forward.2} parent=5 // pred_region
      %s519 = ssub.s32 %s28, 1
      // Predicated region
      $region13: #{style_pyramid_forward.2} parent=11 // pred_check
        %p520 = pneg %p75
      $region14: #{style_pyramid_forward.2} parent=11 // pred_check_branch
        %522 = sbr.rel (%p520) target = $region16
      $region15: #{style_pyramid_forward.2} parent=11 // pred_region
        _
      $region16: #{style_pyramid_forward.2} parent=11 // pred_fallthru
        _
      // Predicated region
      $region17: #{style_pyramid_forward.2} parent=11 // pred_check
        %p523 = pneg %p96
      $region18: #{style_pyramid_forward.2} parent=11 // pred_check_branch
        %525 = sbr.rel (%p523) target = $region20
      $region19: #{style_pyramid_forward.2} parent=11 // pred_region
        _
      $region20: #{style_pyramid_forward.2} parent=11 // pred_fallthru
        _
      // Predicated region
      $region21: #{style_pyramid_forward.2} parent=11 // pred_check
        %p526 = pneg %p117
      $region22: #{style_pyramid_forward.2} parent=11 // pred_check_branch
        %528 = sbr.rel (%p526) target = $region24
      $region23: #{style_pyramid_forward.2} parent=11 // pred_region
        _
      $region24: #{style_pyramid_forward.2} parent=11 // pred_fallthru
        _
      // Predicated region
      $region25: #{style_pyramid_forward.2} parent=11 // pred_check
        %p529 = pneg %p138
      $region26: #{style_pyramid_forward.2} parent=11 // pred_check_branch
        %531 = sbr.rel (%p529) target = $region28
      $region27: #{style_pyramid_forward.2} parent=11 // pred_region
        _
      $region28: #{style_pyramid_forward.2} parent=11 // pred_fallthru
        _
      // Predicated region
      $region29: #{style_pyramid_forward.2} parent=11 // pred_check
        %p532 = pneg %p159
      $region30: #{style_pyramid_forward.2} parent=11 // pred_check_branch
        %534 = sbr.rel (%p532) target = $region32
      $region31: #{style_pyramid_forward.2} parent=11 // pred_region
        _
      $region32: #{style_pyramid_forward.2} parent=11 // pred_fallthru
        _
      // Predicated region
      $region33: #{style_pyramid_forward.2} parent=11 // pred_check
        %p535 = pneg %p180
      $region34: #{style_pyramid_forward.2} parent=11 // pred_check_branch
        %537 = sbr.rel (%p535) target = $region36
      $region35: #{style_pyramid_forward.2} parent=11 // pred_region
        _
      $region36: #{style_pyramid_forward.2} parent=11 // pred_fallthru
        _
      // Predicated region
      $region37: #{style_pyramid_forward.2} parent=11 // pred_check
        %p538 = pneg %p201
      $region38: #{style_pyramid_forward.2} parent=11 // pred_check_branch
        %540 = sbr.rel (%p538) target = $region40
      $region39: #{style_pyramid_forward.2} parent=11 // pred_region
        _
      $region40: #{style_pyramid_forward.2} parent=11 // pred_fallthru
        _
      // Predicated region
      $region41: #{style_pyramid_forward.2} parent=11 // pred_check
        %p541 = pneg %p222
      $region42: #{style_pyramid_forward.2} parent=11 // pred_check_branch
        %543 = sbr.rel (%p541) target = $region44
      $region43: #{style_pyramid_forward.2} parent=11 // pred_region
        _
      $region44: #{style_pyramid_forward.2} parent=11 // pred_fallthru
        _
      // Predicated region
      $region45: #{style_pyramid_forward.2} parent=11 // pred_check
        %p544 = pneg %p243
      $region46: #{style_pyramid_forward.2} parent=11 // pred_check_branch
        %546 = sbr.rel (%p544) target = $region48
      $region47: #{style_pyramid_forward.2} parent=11 // pred_region
        _
      $region48: #{style_pyramid_forward.2} parent=11 // pred_fallthru
        _
      // Predicated region
      $region49: #{style_pyramid_forward.2} parent=11 // pred_check
        %p547 = pneg %p264
      $region50: #{style_pyramid_forward.2} parent=11 // pred_check_branch
        %549 = sbr.rel (%p547) target = $region52
      $region51: #{style_pyramid_forward.2} parent=11 // pred_region
        _
      $region52: #{style_pyramid_forward.2} parent=11 // pred_fallthru
        _
      // Predicated region
      $region53: #{style_pyramid_forward.2} parent=11 // pred_check
        %p550 = pneg %p285
      $region54: #{style_pyramid_forward.2} parent=11 // pred_check_branch
        %552 = sbr.rel (%p550) target = $region56
      $region55: #{style_pyramid_forward.2} parent=11 // pred_region
        _
      $region56: #{style_pyramid_forward.2} parent=11 // pred_fallthru
        _
      // Predicated region
      $region57: #{style_pyramid_forward.2} parent=11 // pred_check
        %p553 = pneg %p306
      $region58: #{style_pyramid_forward.2} parent=11 // pred_check_branch
        %555 = sbr.rel (%p553) target = $region60
      $region59: #{style_pyramid_forward.2} parent=11 // pred_region
        _
      $region60: #{style_pyramid_forward.2} parent=11 // pred_fallthru
        _
      // Predicated region
      $region61: #{style_pyramid_forward.2} parent=11 // pred_check
        %p556 = pneg %p327
      $region62: #{style_pyramid_forward.2} parent=11 // pred_check_branch
        %558 = sbr.rel (%p556) target = $region64
      $region63: #{style_pyramid_forward.2} parent=11 // pred_region
        _
      $region64: #{style_pyramid_forward.2} parent=11 // pred_fallthru
        _
      // Predicated region
      $region65: #{style_pyramid_forward.2} parent=11 // pred_check
        %p559 = pneg %p348
      $region66: #{style_pyramid_forward.2} parent=11 // pred_check_branch
        %561 = sbr.rel (%p559) target = $region68
      $region67: #{style_pyramid_forward.2} parent=11 // pred_region
        _
      $region68: #{style_pyramid_forward.2} parent=11 // pred_fallthru
        _
      // Predicated region
      $region69: #{style_pyramid_forward.2} parent=11 // pred_check
        %p562 = pneg %p369
      $region70: #{style_pyramid_forward.2} parent=11 // pred_check_branch
        %564 = sbr.rel (%p562) target = $region72
      $region71: #{style_pyramid_forward.2} parent=11 // pred_region
        _
      $region72: #{style_pyramid_forward.2} parent=11 // pred_fallthru
        _
      // Predicated region
      $region73: #{style_pyramid_forward.2} parent=11 // pred_check
        %p565 = pneg %p390
      $region74: #{style_pyramid_forward.2} parent=11 // pred_check_branch
        %567 = sbr.rel (%p565) target = $region76
      $region75: #{style_pyramid_forward.2} parent=11 // pred_region
        _
      $region76: #{style_pyramid_forward.2} parent=11 // pred_fallthru
        _
      // Predicated region
      $region77: #{style_pyramid_forward.2} parent=11 // pred_check
        %p568 = pneg %p411
      $region78: #{style_pyramid_forward.2} parent=11 // pred_check_branch
        %570 = sbr.rel (%p568) target = $region80
      $region79: #{style_pyramid_forward.2} parent=11 // pred_region
        _
      $region80: #{style_pyramid_forward.2} parent=11 // pred_fallthru
        _
      // Predicated region
      $region81: #{style_pyramid_forward.2} parent=11 // pred_check
        %p571 = pneg %p432
      $region82: #{style_pyramid_forward.2} parent=11 // pred_check_branch
        %573 = sbr.rel (%p571) target = $region84
      $region83: #{style_pyramid_forward.2} parent=11 // pred_region
        _
      $region84: #{style_pyramid_forward.2} parent=11 // pred_fallthru
        _
      // Predicated region
      $region85: #{style_pyramid_forward.2} parent=11 // pred_check
        %p574 = pneg %p453
      $region86: #{style_pyramid_forward.2} parent=11 // pred_check_branch
        %576 = sbr.rel (%p574) target = $region88
      $region87: #{style_pyramid_forward.2} parent=11 // pred_region
        _
      $region88: #{style_pyramid_forward.2} parent=11 // pred_fallthru
        _
    $region12: #{style_pyramid_forward.2} parent=5 // pred_fallthru
      _
    %p577 = scmp.lt.s32.totalorder %s28, 2
    // Predicated region
    $region89: #{style_pyramid_forward.2} parent=5 // pred_check
      %p578 = pneg %p577
    $region90: #{style_pyramid_forward.2} parent=5 // pred_check_branch
      %580 = sbr.rel (%p578) target = $region92
    $region91: #{style_pyramid_forward.2} parent=5 // pred_region
      // Predicated region
      $region93: #{style_pyramid_forward.2} parent=91 // pred_check
        %p581 = pneg %p48
      $region94: #{style_pyramid_forward.2} parent=91 // pred_check_branch
        %583 = sbr.rel (%p581) target = $region96
      $region95: #{style_pyramid_forward.2} parent=91 // pred_region
        %p584 = scmp.lt.s32.totalorder %s28, 1
        %s585 = scalar_select %p584, %s28, 1
        %s586 = smul.addr %s585, 8
        %s587 = smul.addr %s586, 8
        %s588 = scalar_lea.vmem %s0, %s587
      $region96: #{style_pyramid_forward.2} parent=91 // pred_fallthru
        _
    $region92: #{style_pyramid_forward.2} parent=5 // pred_fallthru
      _
    %p589 = scmp.le.s32.totalorder 1, %s28
    %p590 = scmp.lt.s32.totalorder %s28, 3
    %p591 = pnand %p589, %p590
    %p592 = pneg %p591
    // Predicated region
    $region97: #{style_pyramid_forward.2} parent=5 // pred_check
      _
    $region98: #{style_pyramid_forward.2} parent=5 // pred_check_branch
      %594 = sbr.rel (%p591) target = $region100
    $region99: #{style_pyramid_forward.2} parent=5 // pred_region
      %s595 = ssub.s32 %s28, 1
      %p596 = scmp.lt.s32.totalorder %s33, 1
      %s597 = scalar_select %p596, %s33, 1
      %s598 = smul.addr %s597, 8
      %s599 = smul.addr %s598, 8
      %s600 = scalar_lea.vmem %s0, %s599
      %p601 = pneg %p54
      %p602 = pneg %p51
      %p603 = pneg %p75
      %p604 = pneg %p72
      %p605 = pneg %p96
      %p606 = pneg %p93
      %p607 = pneg %p117
      %p608 = pneg %p114
      %p609 = pneg %p138
      %p610 = pneg %p135
      %p611 = pneg %p159
      %p612 = pneg %p156
      %p613 = pneg %p180
      %p614 = pneg %p177
      %p615 = pneg %p201
      %p616 = pneg %p198
      %p617 = pneg %p222
      %p618 = pneg %p219
      %p619 = pneg %p243
      %p620 = pneg %p240
      %p621 = pneg %p264
      %p622 = pneg %p261
      %p623 = pneg %p285
      %p624 = pneg %p282
      %p625 = pneg %p306
      %p626 = pneg %p303
      %p627 = pneg %p327
      %p628 = pneg %p324
      %p629 = pneg %p348
      %p630 = pneg %p345
      %p631 = pneg %p369
      %p632 = pneg %p366
      %p633 = pneg %p390
      %p634 = pneg %p387
      %p635 = pneg %p411
      %p636 = pneg %p408
      %p637 = pneg %p432
      %p638 = pneg %p429
      %p639 = pneg %p453
      %p640 = pneg %p450
      %p641 = pneg %p479
      %p642 = pneg %p476
      %p643 = scmp.lt.s32.totalorder %s33, 1
      %s644 = scalar_select %p643, %s33, 1
      %s645 = smul.addr %s644, 8
      %s646 = smul.addr %s645, 8
      %s647 = scalar_lea.vmem %s20, %s646
      %p648 = pneg %p505
      %p649 = pneg %p502
      %p650 = scmp.lt.s32.totalorder %s33, 1
      %s651 = scalar_select %p650, %s33, 1
      %s652 = smul.addr %s651, 22
      %s653 = smul.addr %s652, 8
      %s654 = scalar_lea.vmem %s21, %s653
      %p655 = scmp.lt.s32.totalorder %s33, 1
      %s656 = scalar_select %p655, %s33, 1
      %s657 = smul.addr %s656, 8
      %s658 = smul.addr %s657, 8
      %s659 = scalar_lea.vmem %s0, %s658
      %p660 = scmp.lt.s32.totalorder %s33, 1
      %s661 = scalar_select %p660, %s33, 1
      %s662 = smul.addr %s661, 8
      %s663 = smul.addr %s662, 8
      %s664 = scalar_lea.vmem %s20, %s663
      %p665 = scmp.lt.s32.totalorder %s33, 1
      %s666 = scalar_select %p665, %s33, 1
      %s667 = smul.addr %s666, 22
      %s668 = smul.addr %s667, 8
      %s669 = scalar_lea.vmem %s21, %s668
      %v671 = vld [vmem:[%s659] sm:$0xff]
      %v672 = vld [vmem:[%s659 + $0x8] sm:$0xff]
      %v673 = vld [vmem:[%s659 + $0x10] sm:$0xff]
      %v674 = vld [vmem:[%s659 + $0x18] sm:$0xff]
      %v675 = vld [vmem:[%s659 + $0x20] sm:$0xff]
      %v676 = vld [vmem:[%s659 + $0x28] sm:$0xff]
      %v677 = vld [vmem:[%s659 + $0x30] sm:$0xff]
      %v678 = vld [vmem:[%s659 + $0x38] sm:$0xff]
      %v679 = vpack.c.bf16 %v672, %v671
      %v680 = vpack.c.bf16 %v674, %v673
      %v681 = vpack.c.bf16 %v676, %v675
      %v682 = vpack.c.bf16 %v678, %v677
      %v683 = vld [vmem:[%s1] sm:$0xf]
      %v684 = vld [vmem:[%s1 + $0x4] sm:$0xf]
      %v685 = vld [vmem:[%s1 + $0x8] sm:$0xf]
      %v686 = vld [vmem:[%s1 + $0xc] sm:$0xf]
      %v687 = vld [vmem:[%s1 + $0x10] sm:$0xf]
      %v688 = vld [vmem:[%s1 + $0x14] sm:$0xf]
      %v689 = vld [vmem:[%s2] sm:$0xff]
      %v690 = vld [vmem:[%s2 + $0x8] sm:$0xff]
      %v691 = vld [vmem:[%s2 + $0x10] sm:$0xff]
      %v692 = vld [vmem:[%s2 + $0x18] sm:$0xff]
      %v693 = vld [vmem:[%s2 + $0x20] sm:$0xff]
      %v694 = vld [vmem:[%s2 + $0x28] sm:$0xff]
      %v695 = vld [vmem:[%s2 + $0x30] sm:$0xff]
      %v696 = vld [vmem:[%s2 + $0x38] sm:$0xff]
      %v703 = vunpack.c.l.b16 %v683
      %v704 = vunpack.c.l.b16 %v684
      %v705 = vunpack.c.l.b16 %v685
      %v706 = vunpack.c.l.b16 %v686
      %v707 = vunpack.c.l.b16 %v687
      %v708 = vunpack.c.l.b16 %v688
      %v709 = vpack.c.b16 %v704, %v703
      %v710 = vpack.c.b16 %v706, %v705
      %v711 = vpack.c.b16 %v708, %v707
      %vm715 = vcmask 392192
      %v717 = vsel %vm715, %v679, 0
      %v720 = vsel %vm715, %v680, 0
      %v723 = vsel %vm715, %v681, 0
      %v726 = vsel %vm715, %v682, 0
      %728 = vmatprep.subr.bf16.mxu0 0
      %729 = vmatpush1.bf16.msra.mxu0 0
      %730 = vmatprep.subr.bf16.mxu0 0
      %731 = vmatpush1.bf16.msra.mxu0 0
      %732 = vmatprep.subr.bf16.mxu0 0
      %733 = vmatpush1.bf16.msra.mxu0 0
      %734 = vmatprep.subr.bf16.mxu0 0
      %735 = vmatpush1.bf16.msra.mxu0 0
      %736 = vmatprep.subr.bf16.mxu0 0
      %737 = vmatpush1.bf16.msra.mxu0 0
      %738 = vmatprep.subr.bf16.mxu0 0
      %739 = vmatpush1.bf16.msra.mxu0 %v711
      %740 = vmatprep.subr.bf16.mxu0 0
      %741 = vmatpush1.bf16.msra.mxu0 %v710
      %742 = vmatprep.subr.bf16.mxu0 0
      %743 = vmatpush1.bf16.msra.mxu0 %v709
      %744 = vmatprep.subr.bf16.mxu0 0
      %745 = vmatpush2.bf16.msra.mxu0 0
      %746 = vmatprep.subr.bf16.mxu0 0
      %747 = vmatpush2.bf16.msra.mxu0 0
      %748 = vmatprep.subr.bf16.mxu0 0
      %749 = vmatpush2.bf16.msra.mxu0 0
      %750 = vmatprep.subr.bf16.mxu0 0
      %751 = vmatpush2.bf16.msra.mxu0 0
      %752 = vmatprep.subr.bf16.mxu0 0
      %753 = vmatpush2.bf16.msra.mxu0 0
      %754 = vmatprep.subr.bf16.mxu0 0
      %755 = vmatpush2.bf16.msra.mxu0 0
      %756 = vmatprep.subr.bf16.mxu0 0
      %757 = vmatpush2.bf16.msra.mxu0 0
      %758 = vmatprep.subr.bf16.mxu0 0
      %759 = vmatpush2.bf16.msra.mxu0 0
      %760 = vmatprep.mubr.bf16.mxu0 0
      %761 = vmatmul.mubr.bf16.gmra.mxu0 %v717
      %v762 = vpop.f32.mrf.mxu0
      %v763 = vadd.f32 %v689, %v762
      %v764 = vpop.f32.mrf.mxu0
      %v765 = vpop.f32.mrf.mxu0
      %v766 = vadd.f32 %v690, %v765
      %v767 = vpop.f32.mrf.mxu0
      %768 = vmatprep.mubr.bf16.mxu0 0
      %769 = vmatmul.mubr.bf16.gmra.mxu0 %v720
      %v770 = vpop.f32.mrf.mxu0
      %v771 = vadd.f32 %v691, %v770
      %v772 = vpop.f32.mrf.mxu0
      %v773 = vpop.f32.mrf.mxu0
      %v774 = vadd.f32 %v692, %v773
      %v775 = vpop.f32.mrf.mxu0
      %776 = vmatprep.mubr.bf16.mxu0 0
      %777 = vmatmul.mubr.bf16.gmra.mxu0 %v723
      %v778 = vpop.f32.mrf.mxu0
      %v779 = vadd.f32 %v693, %v778
      %v780 = vpop.f32.mrf.mxu0
      %v781 = vpop.f32.mrf.mxu0
      %v782 = vadd.f32 %v694, %v781
      %v783 = vpop.f32.mrf.mxu0
      %784 = vmatprep.mubr.bf16.mxu0 0
      %785 = vmatmul.mubr.bf16.gmra.mxu0 %v726
      %v786 = vpop.f32.mrf.mxu0
      %v787 = vadd.f32 %v695, %v786
      %v788 = vpop.f32.mrf.mxu0
      %v789 = vpop.f32.mrf.mxu0
      %v790 = vadd.f32 %v696, %v789
      %v791 = vpop.f32.mrf.mxu0
      %792 = vdwg.mxu0
      %v793 = vld [vmem:[%s3] sm:$0x1]
      %v794 = vld [vmem:[%s4] sm:$0x1]
      %vm795 = vcmask 523264
      %v796 = vsel %vm795, %v763, 0.0
      %797 = vadd.xlane.f32.xlu0 %v796
      %v798 = vpop.xlane.xlu0 %797
      %v799 = vsel %vm795, %v766, 0.0
      %800 = vadd.xlane.f32.xlu0 %v799
      %v801 = vpop.xlane.xlu0 %800
      %v802 = vsel %vm795, %v771, 0.0
      %803 = vadd.xlane.f32.xlu0 %v802
      %v804 = vpop.xlane.xlu0 %803
      %v805 = vsel %vm795, %v774, 0.0
      %806 = vadd.xlane.f32.xlu0 %v805
      %v807 = vpop.xlane.xlu0 %806
      %v808 = vsel %vm795, %v779, 0.0
      %809 = vadd.xlane.f32.xlu0 %v808
      %v810 = vpop.xlane.xlu0 %809
      %v811 = vsel %vm795, %v782, 0.0
      %812 = vadd.xlane.f32.xlu0 %v811
      %v813 = vpop.xlane.xlu0 %812
      %v814 = vsel %vm795, %v787, 0.0
      %815 = vadd.xlane.f32.xlu0 %v814
      %v816 = vpop.xlane.xlu0 %815
      %v817 = vsel %vm795, %v790, 0.0
      %818 = vadd.xlane.f32.xlu0 %v817
      %v819 = vpop.xlane.xlu0 %818
      %v820 = vrcp.pop 64.0
      %v821 = vmul.f32 %v798, %v820
      %v822 = vmul.f32 %v801, %v820
      %v823 = vmul.f32 %v804, %v820
      %v824 = vmul.f32 %v807, %v820
      %v825 = vmul.f32 %v810, %v820
      %v826 = vmul.f32 %v813, %v820
      %v827 = vmul.f32 %v816, %v820
      %v828 = vmul.f32 %v819, %v820
      %v829 = vsub.f32 %v763, %v821
      %v830 = vsub.f32 %v766, %v822
      %v831 = vsub.f32 %v771, %v823
      %v832 = vsub.f32 %v774, %v824
      %v833 = vsub.f32 %v779, %v825
      %v834 = vsub.f32 %v782, %v826
      %v835 = vsub.f32 %v787, %v827
      %v836 = vsub.f32 %v790, %v828
      %v837 = vmul.f32 %v829, %v829
      %v838 = vmul.f32 %v830, %v830
      %v839 = vmul.f32 %v831, %v831
      %v840 = vmul.f32 %v832, %v832
      %v841 = vmul.f32 %v833, %v833
      %v842 = vmul.f32 %v834, %v834
      %v843 = vmul.f32 %v835, %v835
      %v844 = vmul.f32 %v836, %v836
      %v845 = vsel %vm795, %v837, 0.0
      %846 = vadd.xlane.f32.xlu0 %v845
      %v847 = vpop.xlane.xlu0 %846
      %v848 = vsel %vm795, %v838, 0.0
      %849 = vadd.xlane.f32.xlu0 %v848
      %v850 = vpop.xlane.xlu0 %849
      %v851 = vsel %vm795, %v839, 0.0
      %852 = vadd.xlane.f32.xlu0 %v851
      %v853 = vpop.xlane.xlu0 %852
      %v854 = vsel %vm795, %v840, 0.0
      %855 = vadd.xlane.f32.xlu0 %v854
      %v856 = vpop.xlane.xlu0 %855
      %v857 = vsel %vm795, %v841, 0.0
      %858 = vadd.xlane.f32.xlu0 %v857
      %v859 = vpop.xlane.xlu0 %858
      %v860 = vsel %vm795, %v842, 0.0
      %861 = vadd.xlane.f32.xlu0 %v860
      %v862 = vpop.xlane.xlu0 %861
      %v863 = vsel %vm795, %v843, 0.0
      %864 = vadd.xlane.f32.xlu0 %v863
      %v865 = vpop.xlane.xlu0 %864
      %v866 = vsel %vm795, %v844, 0.0
      %867 = vadd.xlane.f32.xlu0 %v866
      %v868 = vpop.xlane.xlu0 %867
      %v869 = vmul.f32 %v847, %v820
      %v870 = vmul.f32 %v850, %v820
      %v871 = vmul.f32 %v853, %v820
      %v872 = vmul.f32 %v856, %v820
      %v873 = vmul.f32 %v859, %v820
      %v874 = vmul.f32 %v862, %v820
      %v875 = vmul.f32 %v865, %v820
      %v876 = vmul.f32 %v868, %v820
      %v877 = vadd.f32 %v869, 1e-06
      %v878 = vadd.f32 %v870, 1e-06
      %v879 = vadd.f32 %v871, 1e-06
      %v880 = vadd.f32 %v872, 1e-06
      %v881 = vadd.f32 %v873, 1e-06
      %v882 = vadd.f32 %v874, 1e-06
      %v883 = vadd.f32 %v875, 1e-06
      %v884 = vadd.f32 %v876, 1e-06
      %v885 = vrsqrt.pop %v877
      %v886 = vrsqrt.pop %v878
      %v887 = vrsqrt.pop %v879
      %v888 = vrsqrt.pop %v880
      %v889 = vrsqrt.pop %v881
      %v890 = vrsqrt.pop %v882
      %v891 = vrsqrt.pop %v883
      %v892 = vrsqrt.pop %v884
      %v893 = vmul.f32 %v829, %v885
      %v894 = vmul.f32 %v830, %v886
      %v895 = vmul.f32 %v831, %v887
      %v896 = vmul.f32 %v832, %v888
      %v897 = vmul.f32 %v833, %v889
      %v898 = vmul.f32 %v834, %v890
      %v899 = vmul.f32 %v835, %v891
      %v900 = vmul.f32 %v836, %v892
      %v902 = vlaneseq
      %v903 = vshrl.u32 %v902, 7
      %v904 = vsub.s32 0, %v903
      %v905 = vrot.slane %v793, %v904
      %v907 = vmul.f32 %v893, %v905
      %v908 = vmul.f32 %v894, %v905
      %v909 = vmul.f32 %v895, %v905
      %v910 = vmul.f32 %v896, %v905
      %v911 = vmul.f32 %v897, %v905
      %v912 = vmul.f32 %v898, %v905
      %v913 = vmul.f32 %v899, %v905
      %v914 = vmul.f32 %v900, %v905
      %v916 = vlaneseq
      %v917 = vshrl.u32 %v916, 7
      %v918 = vsub.s32 0, %v917
      %v919 = vrot.slane %v794, %v918
      %v921 = vadd.f32 %v907, %v919
      %v922 = vadd.f32 %v908, %v919
      %v923 = vadd.f32 %v909, %v919
      %v924 = vadd.f32 %v910, %v919
      %v925 = vadd.f32 %v911, %v919
      %v926 = vadd.f32 %v912, %v919
      %v927 = vadd.f32 %v913, %v919
      %v928 = vadd.f32 %v914, %v919
      %v929 = vpack.c.bf16 %v922, %v921
      %v930 = vpack.c.bf16 %v924, %v923
      %v931 = vpack.c.bf16 %v926, %v925
      %v932 = vpack.c.bf16 %v928, %v927
      %v933 = vld [vmem:[%s5] sm:$0xff]
      %v934 = vld [vmem:[%s5 + $0x8] sm:$0xff]
      %v935 = vld [vmem:[%s5 + $0x10] sm:$0xff]
      %v936 = vld [vmem:[%s5 + $0x18] sm:$0xff]
      %v937 = vld [vmem:[%s5 + $0x20] sm:$0xff]
      %v938 = vld [vmem:[%s5 + $0x28] sm:$0xff]
      %v939 = vld [vmem:[%s5 + $0x30] sm:$0xff]
      %v940 = vld [vmem:[%s5 + $0x38] sm:$0xff]
      %v941 = vld [vmem:[%s6] sm:$0x3]
      %v943 = vlaneseq
      %v944 = vshrl.u32 %v943, 7
      %v945 = vsub.s32 0, %v944
      %v946 = vrot.slane %v941, %v945
      %v947 = vlaneseq
      %v948 = vshrl.u32 %v947, 7
      %v949 = vsub.s32 1, %v948
      %v950 = vrot.slane %v941, %v949
      %v961 = vunpack.c.l.b16 %v933
      %v962 = vunpack.c.h.b16 %v933
      %v963 = vunpack.c.l.b16 %v934
      %v964 = vunpack.c.h.b16 %v934
      %v965 = vunpack.c.l.b16 %v935
      %v966 = vunpack.c.h.b16 %v935
      %v967 = vunpack.c.l.b16 %v936
      %v968 = vunpack.c.h.b16 %v936
      %v969 = vunpack.c.l.b16 %v937
      %v970 = vunpack.c.h.b16 %v937
      %v971 = vunpack.c.l.b16 %v938
      %v972 = vunpack.c.h.b16 %v938
      %v973 = vunpack.c.l.b16 %v939
      %v974 = vunpack.c.h.b16 %v939
      %v975 = vunpack.c.l.b16 %v940
      %v976 = vunpack.c.h.b16 %v940
      %v977 = vpack.c.b16 %v963, %v961
      %v978 = vpack.c.b16 %v964, %v962
      %v979 = vpack.c.b16 %v967, %v965
      %v980 = vpack.c.b16 %v968, %v966
      %v981 = vpack.c.b16 %v971, %v969
      %v982 = vpack.c.b16 %v972, %v970
      %v983 = vpack.c.b16 %v975, %v973
      %v984 = vpack.c.b16 %v976, %v974
      %v994 = vsel %vm795, %v929, 0
      %v997 = vsel %vm795, %v930, 0
      %v1000 = vsel %vm795, %v931, 0
      %v1003 = vsel %vm795, %v932, 0
      %1005 = vmatprep.subr.bf16.mxu0 0
      %1006 = vmatpush1.bf16.msra.mxu0 0
      %1007 = vmatprep.subr.bf16.mxu0 0
      %1008 = vmatpush1.bf16.msra.mxu0 0
      %1009 = vmatprep.subr.bf16.mxu0 0
      %1010 = vmatpush1.bf16.msra.mxu0 0
      %1011 = vmatprep.subr.bf16.mxu0 0
      %1012 = vmatpush1.bf16.msra.mxu0 0
      %1013 = vmatprep.subr.bf16.mxu0 %v984
      %1014 = vmatpush1.bf16.msra.mxu0 %v983
      %1015 = vmatprep.subr.bf16.mxu0 %v982
      %1016 = vmatpush1.bf16.msra.mxu0 %v981
      %1017 = vmatprep.subr.bf16.mxu0 %v980
      %1018 = vmatpush1.bf16.msra.mxu0 %v979
      %1019 = vmatprep.subr.bf16.mxu0 %v978
      %1020 = vmatpush1.bf16.msra.mxu0 %v977
      %1021 = vmatprep.subr.bf16.mxu0 0
      %1022 = vmatpush2.bf16.msra.mxu0 0
      %1023 = vmatprep.subr.bf16.mxu0 0
      %1024 = vmatpush2.bf16.msra.mxu0 0
      %1025 = vmatprep.subr.bf16.mxu0 0
      %1026 = vmatpush2.bf16.msra.mxu0 0
      %1027 = vmatprep.subr.bf16.mxu0 0
      %1028 = vmatpush2.bf16.msra.mxu0 0
      %1029 = vmatprep.subr.bf16.mxu0 0
      %1030 = vmatpush2.bf16.msra.mxu0 0
      %1031 = vmatprep.subr.bf16.mxu0 0
      %1032 = vmatpush2.bf16.msra.mxu0 0
      %1033 = vmatprep.subr.bf16.mxu0 0
      %1034 = vmatpush2.bf16.msra.mxu0 0
      %1035 = vmatprep.subr.bf16.mxu0 0
      %1036 = vmatpush2.bf16.msra.mxu0 0
      %1037 = vmatprep.mubr.bf16.mxu0 0
      %1038 = vmatmul.mubr.bf16.gmra.mxu0 %v994
      %v1039 = vpop.f32.mrf.mxu0
      %v1040 = vadd.f32 %v946, %v1039
      %v1041 = vpop.f32.mrf.mxu0
      %v1042 = vadd.f32 %v950, %v1041
      %v1043 = vpop.f32.mrf.mxu0
      %v1044 = vadd.f32 %v946, %v1043
      %v1045 = vpop.f32.mrf.mxu0
      %v1046 = vadd.f32 %v950, %v1045
      %1047 = vmatprep.mubr.bf16.mxu0 0
      %1048 = vmatmul.mubr.bf16.gmra.mxu0 %v997
      %v1049 = vpop.f32.mrf.mxu0
      %v1050 = vadd.f32 %v946, %v1049
      %v1051 = vpop.f32.mrf.mxu0
      %v1052 = vadd.f32 %v950, %v1051
      %v1053 = vpop.f32.mrf.mxu0
      %v1054 = vadd.f32 %v946, %v1053
      %v1055 = vpop.f32.mrf.mxu0
      %v1056 = vadd.f32 %v950, %v1055
      %1057 = vmatprep.mubr.bf16.mxu0 0
      %1058 = vmatmul.mubr.bf16.gmra.mxu0 %v1000
      %v1059 = vpop.f32.mrf.mxu0
      %v1060 = vadd.f32 %v946, %v1059
      %v1061 = vpop.f32.mrf.mxu0
      %v1062 = vadd.f32 %v950, %v1061
      %v1063 = vpop.f32.mrf.mxu0
      %v1064 = vadd.f32 %v946, %v1063
      %v1065 = vpop.f32.mrf.mxu0
      %v1066 = vadd.f32 %v950, %v1065
      %1067 = vmatprep.mubr.bf16.mxu0 0
      %1068 = vmatmul.mubr.bf16.gmra.mxu0 %v1003
      %v1069 = vpop.f32.mrf.mxu0
      %v1070 = vadd.f32 %v946, %v1069
      %v1071 = vpop.f32.mrf.mxu0
      %v1072 = vadd.f32 %v950, %v1071
      %v1073 = vpop.f32.mrf.mxu0
      %v1074 = vadd.f32 %v946, %v1073
      %v1075 = vpop.f32.mrf.mxu0
      %v1076 = vadd.f32 %v950, %v1075
      %1077 = vdwg.mxu0
      %v1078 = vpack.c.bf16 %v1044, %v1040
      %v1079 = vpack.c.bf16 %v1054, %v1050
      %v1080 = vpack.c.bf16 %v1064, %v1060
      %v1081 = vpack.c.bf16 %v1074, %v1070
      %1086 = vrot.lane.b32.xlu0 %v1078, 64
      %v1087 = vpop.permute.xlu0 %1086
      %1088 = vrot.lane.b32.xlu0 %v1079, 64
      %v1089 = vpop.permute.xlu0 %1088
      %1090 = vrot.lane.b32.xlu0 %v1080, 64
      %v1091 = vpop.permute.xlu0 %1090
      %1092 = vrot.lane.b32.xlu0 %v1081, 64
      %v1093 = vpop.permute.xlu0 %1092
      %vm1094 = vcmask 130048
      %v1096 = vsel %vm1094, %v1078, 0
      %v1099 = vsel %vm1094, %v1079, 0
      %v1102 = vsel %vm1094, %v1080, 0
      %v1105 = vsel %vm1094, %v1081, 0
      %v1108 = vsel %vm1094, %v1087, 0
      %v1111 = vsel %vm1094, %v1089, 0
      %v1114 = vsel %vm1094, %v1091, 0
      %v1117 = vsel %vm1094, %v1093, 0
      %1119 = vmatprep.subr.bf16.mxu0 0
      %1120 = vmatpush1.bf16.xpose.msra.mxu0 0
      %1121 = vmatprep.subr.bf16.mxu0 0
      %1122 = vmatpush1.bf16.xpose.msra.mxu0 0
      %1123 = vmatprep.subr.bf16.mxu0 0
      %1124 = vmatpush1.bf16.xpose.msra.mxu0 0
      %1125 = vmatprep.subr.bf16.mxu0 0
      %1126 = vmatpush1.bf16.xpose.msra.mxu0 0
      %1127 = vmatprep.subr.bf16.mxu0 0
      %1128 = vmatpush1.bf16.xpose.msra.mxu0 %v1117
      %1129 = vmatprep.subr.bf16.mxu0 0
      %1130 = vmatpush1.bf16.xpose.msra.mxu0 %v1114
      %1131 = vmatprep.subr.bf16.mxu0 0
      %1132 = vmatpush1.bf16.xpose.msra.mxu0 %v1111
      %1133 = vmatprep.subr.bf16.mxu0 0
      %1134 = vmatpush1.bf16.xpose.msra.mxu0 %v1108
      %1135 = vmatprep.subr.bf16.mxu0 0
      %1136 = vmatpush2.bf16.xpose.msra.mxu0 0
      %1137 = vmatprep.subr.bf16.mxu0 0
      %1138 = vmatpush2.bf16.xpose.msra.mxu0 0
      %1139 = vmatprep.subr.bf16.mxu0 0
      %1140 = vmatpush2.bf16.xpose.msra.mxu0 0
      %1141 = vmatprep.subr.bf16.mxu0 0
      %1142 = vmatpush2.bf16.xpose.msra.mxu0 0
      %1143 = vmatprep.subr.bf16.mxu0 0
      %1144 = vmatpush2.bf16.xpose.msra.mxu0 0
      %1145 = vmatprep.subr.bf16.mxu0 0
      %1146 = vmatpush2.bf16.xpose.msra.mxu0 0
      %1147 = vmatprep.subr.bf16.mxu0 0
      %1148 = vmatpush2.bf16.xpose.msra.mxu0 0
      %1149 = vmatprep.subr.bf16.mxu0 0
      %1150 = vmatpush2.bf16.xpose.msra.mxu0 0
      %1151 = vmatprep.mubr.bf16.mxu0 0
      %1152 = vmatmul.mubr.bf16.gmra.mxu0 %v1096
      %v1153 = vpop.f32.mrf.mxu0
      %v1154 = vadd.f32 0.0, %v1153
      %v1155 = vpop.f32.mrf.mxu0
      %v1156 = vpop.f32.mrf.mxu0
      %v1157 = vadd.f32 0.0, %v1156
      %v1158 = vpop.f32.mrf.mxu0
      %1159 = vmatprep.mubr.bf16.mxu0 0
      %1160 = vmatmul.mubr.bf16.gmra.mxu0 %v1099
      %v1161 = vpop.f32.mrf.mxu0
      %v1162 = vadd.f32 0.0, %v1161
      %v1163 = vpop.f32.mrf.mxu0
      %v1164 = vpop.f32.mrf.mxu0
      %v1165 = vadd.f32 0.0, %v1164
      %v1166 = vpop.f32.mrf.mxu0
      %1167 = vmatprep.mubr.bf16.mxu0 0
      %1168 = vmatmul.mubr.bf16.gmra.mxu0 %v1102
      %v1169 = vpop.f32.mrf.mxu0
      %v1170 = vadd.f32 0.0, %v1169
      %v1171 = vpop.f32.mrf.mxu0
      %v1172 = vpop.f32.mrf.mxu0
      %v1173 = vadd.f32 0.0, %v1172
      %v1174 = vpop.f32.mrf.mxu0
      %1175 = vmatprep.mubr.bf16.mxu0 0
      %1176 = vmatmul.mubr.bf16.gmra.mxu0 %v1105
      %v1177 = vpop.f32.mrf.mxu0
      %v1178 = vadd.f32 0.0, %v1177
      %v1179 = vpop.f32.mrf.mxu0
      %v1180 = vpop.f32.mrf.mxu0
      %v1181 = vadd.f32 0.0, %v1180
      %v1182 = vpop.f32.mrf.mxu0
      %1183 = vdwg.mxu0
      %v1184 = vsel %vm795, %v1154, -inf
      %1185 = vmax.xlane.f32.xlu0 %v1184
      %v1186 = vpop.xlane.xlu0 %1185
      %v1187 = vsel %vm795, %v1157, -inf
      %1188 = vmax.xlane.f32.xlu0 %v1187
      %v1189 = vpop.xlane.xlu0 %1188
      %v1190 = vsel %vm795, %v1162, -inf
      %1191 = vmax.xlane.f32.xlu0 %v1190
      %v1192 = vpop.xlane.xlu0 %1191
      %v1193 = vsel %vm795, %v1165, -inf
      %1194 = vmax.xlane.f32.xlu0 %v1193
      %v1195 = vpop.xlane.xlu0 %1194
      %v1196 = vsel %vm795, %v1170, -inf
      %1197 = vmax.xlane.f32.xlu0 %v1196
      %v1198 = vpop.xlane.xlu0 %1197
      %v1199 = vsel %vm795, %v1173, -inf
      %1200 = vmax.xlane.f32.xlu0 %v1199
      %v1201 = vpop.xlane.xlu0 %1200
      %v1202 = vsel %vm795, %v1178, -inf
      %1203 = vmax.xlane.f32.xlu0 %v1202
      %v1204 = vpop.xlane.xlu0 %1203
      %v1205 = vsel %vm795, %v1181, -inf
      %1206 = vmax.xlane.f32.xlu0 %v1205
      %v1207 = vpop.xlane.xlu0 %1206
      %v1208 = vsub.f32 %v1154, %v1186
      %v1209 = vsub.f32 %v1157, %v1189
      %v1210 = vsub.f32 %v1162, %v1192
      %v1211 = vsub.f32 %v1165, %v1195
      %v1212 = vsub.f32 %v1170, %v1198
      %v1213 = vsub.f32 %v1173, %v1201
      %v1214 = vsub.f32 %v1178, %v1204
      %v1215 = vsub.f32 %v1181, %v1207
      %v1216 = vmul.f32 %v1208, 1.442695
      %v1217 = vpow.pop %v1216
      %v1218 = vmul.f32 %v1209, 1.442695
      %v1219 = vpow.pop %v1218
      %v1220 = vmul.f32 %v1210, 1.442695
      %v1221 = vpow.pop %v1220
      %v1222 = vmul.f32 %v1211, 1.442695
      %v1223 = vpow.pop %v1222
      %v1224 = vmul.f32 %v1212, 1.442695
      %v1225 = vpow.pop %v1224
      %v1226 = vmul.f32 %v1213, 1.442695
      %v1227 = vpow.pop %v1226
      %v1228 = vmul.f32 %v1214, 1.442695
      %v1229 = vpow.pop %v1228
      %v1230 = vmul.f32 %v1215, 1.442695
      %v1231 = vpow.pop %v1230
      %v1232 = vsel %vm795, %v1217, 0.0
      %1233 = vadd.xlane.f32.xlu0 %v1232
      %v1234 = vpop.xlane.xlu0 %1233
      %v1235 = vsel %vm795, %v1219, 0.0
      %1236 = vadd.xlane.f32.xlu0 %v1235
      %v1237 = vpop.xlane.xlu0 %1236
      %v1238 = vsel %vm795, %v1221, 0.0
      %1239 = vadd.xlane.f32.xlu0 %v1238
      %v1240 = vpop.xlane.xlu0 %1239
      %v1241 = vsel %vm795, %v1223, 0.0
      %1242 = vadd.xlane.f32.xlu0 %v1241
      %v1243 = vpop.xlane.xlu0 %1242
      %v1244 = vsel %vm795, %v1225, 0.0
      %1245 = vadd.xlane.f32.xlu0 %v1244
      %v1246 = vpop.xlane.xlu0 %1245
      %v1247 = vsel %vm795, %v1227, 0.0
      %1248 = vadd.xlane.f32.xlu0 %v1247
      %v1249 = vpop.xlane.xlu0 %1248
      %v1250 = vsel %vm795, %v1229, 0.0
      %1251 = vadd.xlane.f32.xlu0 %v1250
      %v1252 = vpop.xlane.xlu0 %1251
      %v1253 = vsel %vm795, %v1231, 0.0
      %1254 = vadd.xlane.f32.xlu0 %v1253
      %v1255 = vpop.xlane.xlu0 %1254
      %v1256 = vrcp.pop %v1234
      %v1257 = vrcp.pop %v1237
      %v1258 = vrcp.pop %v1240
      %v1259 = vrcp.pop %v1243
      %v1260 = vrcp.pop %v1246
      %v1261 = vrcp.pop %v1249
      %v1262 = vrcp.pop %v1252
      %v1263 = vrcp.pop %v1255
      %v1264 = vmul.f32 %v1217, %v1256
      %v1265 = vmul.f32 %v1219, %v1257
      %v1266 = vmul.f32 %v1221, %v1258
      %v1267 = vmul.f32 %v1223, %v1259
      %v1268 = vmul.f32 %v1225, %v1260
      %v1269 = vmul.f32 %v1227, %v1261
      %v1270 = vmul.f32 %v1229, %v1262
      %v1271 = vmul.f32 %v1231, %v1263
      %v1272 = vpack.c.bf16 %v1265, %v1264
      %v1273 = vpack.c.bf16 %v1267, %v1266
      %v1274 = vpack.c.bf16 %v1269, %v1268
      %v1275 = vpack.c.bf16 %v1271, %v1270
      %v1276 = vpack.c.bf16 %v1046, %v1042
      %v1277 = vpack.c.bf16 %v1056, %v1052
      %v1278 = vpack.c.bf16 %v1066, %v1062
      %v1279 = vpack.c.bf16 %v1076, %v1072
      %v1281 = vsel %vm795, %v1272, 0
      %v1284 = vsel %vm795, %v1273, 0
      %v1287 = vsel %vm795, %v1274, 0
      %v1290 = vsel %vm795, %v1275, 0
      %1292 = vmatprep.subr.bf16.mxu0 0
      %1293 = vmatpush1.bf16.msra.mxu0 0
      %1294 = vmatprep.subr.bf16.mxu0 0
      %1295 = vmatpush1.bf16.msra.mxu0 0
      %1296 = vmatprep.subr.bf16.mxu0 0
      %1297 = vmatpush1.bf16.msra.mxu0 0
      %1298 = vmatprep.subr.bf16.mxu0 0
      %1299 = vmatpush1.bf16.msra.mxu0 0
      %1300 = vmatprep.subr.bf16.mxu0 0
      %1301 = vmatpush1.bf16.msra.mxu0 %v1279
      %1302 = vmatprep.subr.bf16.mxu0 0
      %1303 = vmatpush1.bf16.msra.mxu0 %v1278
      %1304 = vmatprep.subr.bf16.mxu0 0
      %1305 = vmatpush1.bf16.msra.mxu0 %v1277
      %1306 = vmatprep.subr.bf16.mxu0 0
      %1307 = vmatpush1.bf16.msra.mxu0 %v1276
      %1308 = vmatprep.subr.bf16.mxu0 0
      %1309 = vmatpush2.bf16.msra.mxu0 0
      %1310 = vmatprep.subr.bf16.mxu0 0
      %1311 = vmatpush2.bf16.msra.mxu0 0
      %1312 = vmatprep.subr.bf16.mxu0 0
      %1313 = vmatpush2.bf16.msra.mxu0 0
      %1314 = vmatprep.subr.bf16.mxu0 0
      %1315 = vmatpush2.bf16.msra.mxu0 0
      %1316 = vmatprep.subr.bf16.mxu0 0
      %1317 = vmatpush2.bf16.msra.mxu0 0
      %1318 = vmatprep.subr.bf16.mxu0 0
      %1319 = vmatpush2.bf16.msra.mxu0 0
      %1320 = vmatprep.subr.bf16.mxu0 0
      %1321 = vmatpush2.bf16.msra.mxu0 0
      %1322 = vmatprep.subr.bf16.mxu0 0
      %1323 = vmatpush2.bf16.msra.mxu0 0
      %1324 = vmatprep.mubr.bf16.mxu0 0
      %1325 = vmatmul.mubr.bf16.gmra.mxu0 %v1281
      %v1326 = vpop.f32.mrf.mxu0
      %v1327 = vadd.f32 0.0, %v1326
      %v1328 = vpop.f32.mrf.mxu0
      %v1329 = vpop.f32.mrf.mxu0
      %v1330 = vadd.f32 0.0, %v1329
      %v1331 = vpop.f32.mrf.mxu0
      %1332 = vmatprep.mubr.bf16.mxu0 0
      %1333 = vmatmul.mubr.bf16.gmra.mxu0 %v1284
      %v1334 = vpop.f32.mrf.mxu0
      %v1335 = vadd.f32 0.0, %v1334
      %v1336 = vpop.f32.mrf.mxu0
      %v1337 = vpop.f32.mrf.mxu0
      %v1338 = vadd.f32 0.0, %v1337
      %v1339 = vpop.f32.mrf.mxu0
      %1340 = vmatprep.mubr.bf16.mxu0 0
      %1341 = vmatmul.mubr.bf16.gmra.mxu0 %v1287
      %v1342 = vpop.f32.mrf.mxu0
      %v1343 = vadd.f32 0.0, %v1342
      %v1344 = vpop.f32.mrf.mxu0
      %v1345 = vpop.f32.mrf.mxu0
      %v1346 = vadd.f32 0.0, %v1345
      %v1347 = vpop.f32.mrf.mxu0
      %1348 = vmatprep.mubr.bf16.mxu0 0
      %1349 = vmatmul.mubr.bf16.gmra.mxu0 %v1290
      %v1350 = vpop.f32.mrf.mxu0
      %v1351 = vadd.f32 0.0, %v1350
      %v1352 = vpop.f32.mrf.mxu0
      %v1353 = vpop.f32.mrf.mxu0
      %v1354 = vadd.f32 0.0, %v1353
      %v1355 = vpop.f32.mrf.mxu0
      %1356 = vdwg.mxu0
      %1357 = vrot.lane.b32.xlu0 %v1078, 112
      %v1358 = vpop.permute.xlu0 %1357
      %1359 = vrot.lane.b32.xlu0 %v1079, 112
      %v1360 = vpop.permute.xlu0 %1359
      %1361 = vrot.lane.b32.xlu0 %v1080, 112
      %v1362 = vpop.permute.xlu0 %1361
      %1363 = vrot.lane.b32.xlu0 %v1081, 112
      %v1364 = vpop.permute.xlu0 %1363
      %1365 = vrot.lane.b32.xlu0 %v1078, 48
      %v1366 = vpop.permute.xlu0 %1365
      %1367 = vrot.lane.b32.xlu0 %v1079, 48
      %v1368 = vpop.permute.xlu0 %1367
      %1369 = vrot.lane.b32.xlu0 %v1080, 48
      %v1370 = vpop.permute.xlu0 %1369
      %1371 = vrot.lane.b32.xlu0 %v1081, 48
      %v1372 = vpop.permute.xlu0 %1371
      %v1374 = vsel %vm1094, %v1358, 0
      %v1377 = vsel %vm1094, %v1360, 0
      %v1380 = vsel %vm1094, %v1362, 0
      %v1383 = vsel %vm1094, %v1364, 0
      %v1386 = vsel %vm1094, %v1366, 0
      %v1389 = vsel %vm1094, %v1368, 0
      %v1392 = vsel %vm1094, %v1370, 0
      %v1395 = vsel %vm1094, %v1372, 0
      %1397 = vmatprep.subr.bf16.mxu0 0
      %1398 = vmatpush1.bf16.xpose.msra.mxu0 0
      %1399 = vmatprep.subr.bf16.mxu0 0
      %1400 = vmatpush1.bf16.xpose.msra.mxu0 0
      %1401 = vmatprep.subr.bf16.mxu0 0
      %1402 = vmatpush1.bf16.xpose.msra.mxu0 0
      %1403 = vmatprep.subr.bf16.mxu0 0
      %1404 = vmatpush1.bf16.xpose.msra.mxu0 0
      %1405 = vmatprep.subr.bf16.mxu0 0
      %1406 = vmatpush1.bf16.xpose.msra.mxu0 %v1395
      %1407 = vmatprep.subr.bf16.mxu0 0
      %1408 = vmatpush1.bf16.xpose.msra.mxu0 %v1392
      %1409 = vmatprep.subr.bf16.mxu0 0
      %1410 = vmatpush1.bf16.xpose.msra.mxu0 %v1389
      %1411 = vmatprep.subr.bf16.mxu0 0
      %1412 = vmatpush1.bf16.xpose.msra.mxu0 %v1386
      %1413 = vmatprep.subr.bf16.mxu0 0
      %1414 = vmatpush2.bf16.xpose.msra.mxu0 0
      %1415 = vmatprep.subr.bf16.mxu0 0
      %1416 = vmatpush2.bf16.xpose.msra.mxu0 0
      %1417 = vmatprep.subr.bf16.mxu0 0
      %1418 = vmatpush2.bf16.xpose.msra.mxu0 0
      %1419 = vmatprep.subr.bf16.mxu0 0
      %1420 = vmatpush2.bf16.xpose.msra.mxu0 0
      %1421 = vmatprep.subr.bf16.mxu0 0
      %1422 = vmatpush2.bf16.xpose.msra.mxu0 0
      %1423 = vmatprep.subr.bf16.mxu0 0
      %1424 = vmatpush2.bf16.xpose.msra.mxu0 0
      %1425 = vmatprep.subr.bf16.mxu0 0
      %1426 = vmatpush2.bf16.xpose.msra.mxu0 0
      %1427 = vmatprep.subr.bf16.mxu0 0
      %1428 = vmatpush2.bf16.xpose.msra.mxu0 0
      %1429 = vmatprep.mubr.bf16.mxu0 0
      %1430 = vmatmul.mubr.bf16.gmra.mxu0 %v1374
      %v1431 = vpop.f32.mrf.mxu0
      %v1432 = vadd.f32 0.0, %v1431
      %v1433 = vpop.f32.mrf.mxu0
      %v1434 = vpop.f32.mrf.mxu0
      %v1435 = vadd.f32 0.0, %v1434
      %v1436 = vpop.f32.mrf.mxu0
      %1437 = vmatprep.mubr.bf16.mxu0 0
      %1438 = vmatmul.mubr.bf16.gmra.mxu0 %v1377
      %v1439 = vpop.f32.mrf.mxu0
      %v1440 = vadd.f32 0.0, %v1439
      %v1441 = vpop.f32.mrf.mxu0
      %v1442 = vpop.f32.mrf.mxu0
      %v1443 = vadd.f32 0.0, %v1442
      %v1444 = vpop.f32.mrf.mxu0
      %1445 = vmatprep.mubr.bf16.mxu0 0
      %1446 = vmatmul.mubr.bf16.gmra.mxu0 %v1380
      %v1447 = vpop.f32.mrf.mxu0
      %v1448 = vadd.f32 0.0, %v1447
      %v1449 = vpop.f32.mrf.mxu0
      %v1450 = vpop.f32.mrf.mxu0
      %v1451 = vadd.f32 0.0, %v1450
      %v1452 = vpop.f32.mrf.mxu0
      %1453 = vmatprep.mubr.bf16.mxu0 0
      %1454 = vmatmul.mubr.bf16.gmra.mxu0 %v1383
      %v1455 = vpop.f32.mrf.mxu0
      %v1456 = vadd.f32 0.0, %v1455
      %v1457 = vpop.f32.mrf.mxu0
      %v1458 = vpop.f32.mrf.mxu0
      %v1459 = vadd.f32 0.0, %v1458
      %v1460 = vpop.f32.mrf.mxu0
      %1461 = vdwg.mxu0
      %v1462 = vsel %vm795, %v1432, -inf
      %1463 = vmax.xlane.f32.xlu0 %v1462
      %v1464 = vpop.xlane.xlu0 %1463
      %v1465 = vsel %vm795, %v1435, -inf
      %1466 = vmax.xlane.f32.xlu0 %v1465
      %v1467 = vpop.xlane.xlu0 %1466
      %v1468 = vsel %vm795, %v1440, -inf
      %1469 = vmax.xlane.f32.xlu0 %v1468
      %v1470 = vpop.xlane.xlu0 %1469
      %v1471 = vsel %vm795, %v1443, -inf
      %1472 = vmax.xlane.f32.xlu0 %v1471
      %v1473 = vpop.xlane.xlu0 %1472
      %v1474 = vsel %vm795, %v1448, -inf
      %1475 = vmax.xlane.f32.xlu0 %v1474
      %v1476 = vpop.xlane.xlu0 %1475
      %v1477 = vsel %vm795, %v1451, -inf
      %1478 = vmax.xlane.f32.xlu0 %v1477
      %v1479 = vpop.xlane.xlu0 %1478
      %v1480 = vsel %vm795, %v1456, -inf
      %1481 = vmax.xlane.f32.xlu0 %v1480
      %v1482 = vpop.xlane.xlu0 %1481
      %v1483 = vsel %vm795, %v1459, -inf
      %1484 = vmax.xlane.f32.xlu0 %v1483
      %v1485 = vpop.xlane.xlu0 %1484
      %v1486 = vsub.f32 %v1432, %v1464
      %v1487 = vsub.f32 %v1435, %v1467
      %v1488 = vsub.f32 %v1440, %v1470
      %v1489 = vsub.f32 %v1443, %v1473
      %v1490 = vsub.f32 %v1448, %v1476
      %v1491 = vsub.f32 %v1451, %v1479
      %v1492 = vsub.f32 %v1456, %v1482
      %v1493 = vsub.f32 %v1459, %v1485
      %v1494 = vmul.f32 %v1486, 1.442695
      %v1495 = vpow.pop %v1494
      %v1496 = vmul.f32 %v1487, 1.442695
      %v1497 = vpow.pop %v1496
      %v1498 = vmul.f32 %v1488, 1.442695
      %v1499 = vpow.pop %v1498
      %v1500 = vmul.f32 %v1489, 1.442695
      %v1501 = vpow.pop %v1500
      %v1502 = vmul.f32 %v1490, 1.442695
      %v1503 = vpow.pop %v1502
      %v1504 = vmul.f32 %v1491, 1.442695
      %v1505 = vpow.pop %v1504
      %v1506 = vmul.f32 %v1492, 1.442695
      %v1507 = vpow.pop %v1506
      %v1508 = vmul.f32 %v1493, 1.442695
      %v1509 = vpow.pop %v1508
      %v1510 = vsel %vm795, %v1495, 0.0
      %1511 = vadd.xlane.f32.xlu0 %v1510
      %v1512 = vpop.xlane.xlu0 %1511
      %v1513 = vsel %vm795, %v1497, 0.0
      %1514 = vadd.xlane.f32.xlu0 %v1513
      %v1515 = vpop.xlane.xlu0 %1514
      %v1516 = vsel %vm795, %v1499, 0.0
      %1517 = vadd.xlane.f32.xlu0 %v1516
      %v1518 = vpop.xlane.xlu0 %1517
      %v1519 = vsel %vm795, %v1501, 0.0
      %1520 = vadd.xlane.f32.xlu0 %v1519
      %v1521 = vpop.xlane.xlu0 %1520
      %v1522 = vsel %vm795, %v1503, 0.0
      %1523 = vadd.xlane.f32.xlu0 %v1522
      %v1524 = vpop.xlane.xlu0 %1523
      %v1525 = vsel %vm795, %v1505, 0.0
      %1526 = vadd.xlane.f32.xlu0 %v1525
      %v1527 = vpop.xlane.xlu0 %1526
      %v1528 = vsel %vm795, %v1507, 0.0
      %1529 = vadd.xlane.f32.xlu0 %v1528
      %v1530 = vpop.xlane.xlu0 %1529
      %v1531 = vsel %vm795, %v1509, 0.0
      %1532 = vadd.xlane.f32.xlu0 %v1531
      %v1533 = vpop.xlane.xlu0 %1532
      %v1534 = vrcp.pop %v1512
      %v1535 = vrcp.pop %v1515
      %v1536 = vrcp.pop %v1518
      %v1537 = vrcp.pop %v1521
      %v1538 = vrcp.pop %v1524
      %v1539 = vrcp.pop %v1527
      %v1540 = vrcp.pop %v1530
      %v1541 = vrcp.pop %v1533
      %v1542 = vmul.f32 %v1495, %v1534
      %v1543 = vmul.f32 %v1497, %v1535
      %v1544 = vmul.f32 %v1499, %v1536
      %v1545 = vmul.f32 %v1501, %v1537
      %v1546 = vmul.f32 %v1503, %v1538
      %v1547 = vmul.f32 %v1505, %v1539
      %v1548 = vmul.f32 %v1507, %v1540
      %v1549 = vmul.f32 %v1509, %v1541
      %v1550 = vpack.c.bf16 %v1543, %v1542
      %v1551 = vpack.c.bf16 %v1545, %v1544
      %v1552 = vpack.c.bf16 %v1547, %v1546
      %v1553 = vpack.c.bf16 %v1549, %v1548
      %1558 = vrot.lane.b32.xlu0 %v1276, 112
      %v1559 = vpop.permute.xlu0 %1558
      %1560 = vrot.lane.b32.xlu0 %v1277, 112
      %v1561 = vpop.permute.xlu0 %1560
      %1562 = vrot.lane.b32.xlu0 %v1278, 112
      %v1563 = vpop.permute.xlu0 %1562
      %1564 = vrot.lane.b32.xlu0 %v1279, 112
      %v1565 = vpop.permute.xlu0 %1564
      %v1571 = vsel %vm795, %v1550, 0
      %v1574 = vsel %vm795, %v1551, 0
      %v1577 = vsel %vm795, %v1552, 0
      %v1580 = vsel %vm795, %v1553, 0
      %1582 = vmatprep.subr.bf16.mxu0 0
      %1583 = vmatpush1.bf16.msra.mxu0 0
      %1584 = vmatprep.subr.bf16.mxu0 0
      %1585 = vmatpush1.bf16.msra.mxu0 0
      %1586 = vmatprep.subr.bf16.mxu0 0
      %1587 = vmatpush1.bf16.msra.mxu0 0
      %1588 = vmatprep.subr.bf16.mxu0 0
      %1589 = vmatpush1.bf16.msra.mxu0 0
      %1590 = vmatprep.subr.bf16.mxu0 0
      %1591 = vmatpush1.bf16.msra.mxu0 %v1565
      %1592 = vmatprep.subr.bf16.mxu0 0
      %1593 = vmatpush1.bf16.msra.mxu0 %v1563
      %1594 = vmatprep.subr.bf16.mxu0 0
      %1595 = vmatpush1.bf16.msra.mxu0 %v1561
      %1596 = vmatprep.subr.bf16.mxu0 0
      %1597 = vmatpush1.bf16.msra.mxu0 %v1559
      %1598 = vmatprep.subr.bf16.mxu0 0
      %1599 = vmatpush2.bf16.msra.mxu0 0
      %1600 = vmatprep.subr.bf16.mxu0 0
      %1601 = vmatpush2.bf16.msra.mxu0 0
      %1602 = vmatprep.subr.bf16.mxu0 0
      %1603 = vmatpush2.bf16.msra.mxu0 0
      %1604 = vmatprep.subr.bf16.mxu0 0
      %1605 = vmatpush2.bf16.msra.mxu0 0
      %1606 = vmatprep.subr.bf16.mxu0 0
      %1607 = vmatpush2.bf16.msra.mxu0 0
      %1608 = vmatprep.subr.bf16.mxu0 0
      %1609 = vmatpush2.bf16.msra.mxu0 0
      %1610 = vmatprep.subr.bf16.mxu0 0
      %1611 = vmatpush2.bf16.msra.mxu0 0
      %1612 = vmatprep.subr.bf16.mxu0 0
      %1613 = vmatpush2.bf16.msra.mxu0 0
      %1614 = vmatprep.mubr.bf16.mxu0 0
      %1615 = vmatmul.mubr.bf16.gmra.mxu0 %v1571
      %v1616 = vpop.f32.mrf.mxu0
      %v1617 = vadd.f32 0.0, %v1616
      %v1618 = vpop.f32.mrf.mxu0
      %v1619 = vpop.f32.mrf.mxu0
      %v1620 = vadd.f32 0.0, %v1619
      %v1621 = vpop.f32.mrf.mxu0
      %1622 = vmatprep.mubr.bf16.mxu0 0
      %1623 = vmatmul.mubr.bf16.gmra.mxu0 %v1574
      %v1624 = vpop.f32.mrf.mxu0
      %v1625 = vadd.f32 0.0, %v1624
      %v1626 = vpop.f32.mrf.mxu0
      %v1627 = vpop.f32.mrf.mxu0
      %v1628 = vadd.f32 0.0, %v1627
      %v1629 = vpop.f32.mrf.mxu0
      %1630 = vmatprep.mubr.bf16.mxu0 0
      %1631 = vmatmul.mubr.bf16.gmra.mxu0 %v1577
      %v1632 = vpop.f32.mrf.mxu0
      %v1633 = vadd.f32 0.0, %v1632
      %v1634 = vpop.f32.mrf.mxu0
      %v1635 = vpop.f32.mrf.mxu0
      %v1636 = vadd.f32 0.0, %v1635
      %v1637 = vpop.f32.mrf.mxu0
      %1638 = vmatprep.mubr.bf16.mxu0 0
      %1639 = vmatmul.mubr.bf16.gmra.mxu0 %v1580
      %v1640 = vpop.f32.mrf.mxu0
      %v1641 = vadd.f32 0.0, %v1640
      %v1642 = vpop.f32.mrf.mxu0
      %v1643 = vpop.f32.mrf.mxu0
      %v1644 = vadd.f32 0.0, %v1643
      %v1645 = vpop.f32.mrf.mxu0
      %1646 = vdwg.mxu0
      %1647 = vrot.lane.b32.xlu0 %v1078, 96
      %v1648 = vpop.permute.xlu0 %1647
      %1649 = vrot.lane.b32.xlu0 %v1079, 96
      %v1650 = vpop.permute.xlu0 %1649
      %1651 = vrot.lane.b32.xlu0 %v1080, 96
      %v1652 = vpop.permute.xlu0 %1651
      %1653 = vrot.lane.b32.xlu0 %v1081, 96
      %v1654 = vpop.permute.xlu0 %1653
      %1655 = vrot.lane.b32.xlu0 %v1078, 32
      %v1656 = vpop.permute.xlu0 %1655
      %1657 = vrot.lane.b32.xlu0 %v1079, 32
      %v1658 = vpop.permute.xlu0 %1657
      %1659 = vrot.lane.b32.xlu0 %v1080, 32
      %v1660 = vpop.permute.xlu0 %1659
      %1661 = vrot.lane.b32.xlu0 %v1081, 32
      %v1662 = vpop.permute.xlu0 %1661
      %v1664 = vsel %vm1094, %v1648, 0
      %v1667 = vsel %vm1094, %v1650, 0
      %v1670 = vsel %vm1094, %v1652, 0
      %v1673 = vsel %vm1094, %v1654, 0
      %v1676 = vsel %vm1094, %v1656, 0
      %v1679 = vsel %vm1094, %v1658, 0
      %v1682 = vsel %vm1094, %v1660, 0
      %v1685 = vsel %vm1094, %v1662, 0
      %1687 = vmatprep.subr.bf16.mxu0 0
      %1688 = vmatpush1.bf16.xpose.msra.mxu0 0
      %1689 = vmatprep.subr.bf16.mxu0 0
      %1690 = vmatpush1.bf16.xpose.msra.mxu0 0
      %1691 = vmatprep.subr.bf16.mxu0 0
      %1692 = vmatpush1.bf16.xpose.msra.mxu0 0
      %1693 = vmatprep.subr.bf16.mxu0 0
      %1694 = vmatpush1.bf16.xpose.msra.mxu0 0
      %1695 = vmatprep.subr.bf16.mxu0 0
      %1696 = vmatpush1.bf16.xpose.msra.mxu0 %v1685
      %1697 = vmatprep.subr.bf16.mxu0 0
      %1698 = vmatpush1.bf16.xpose.msra.mxu0 %v1682
      %1699 = vmatprep.subr.bf16.mxu0 0
      %1700 = vmatpush1.bf16.xpose.msra.mxu0 %v1679
      %1701 = vmatprep.subr.bf16.mxu0 0
      %1702 = vmatpush1.bf16.xpose.msra.mxu0 %v1676
      %1703 = vmatprep.subr.bf16.mxu0 0
      %1704 = vmatpush2.bf16.xpose.msra.mxu0 0
      %1705 = vmatprep.subr.bf16.mxu0 0
      %1706 = vmatpush2.bf16.xpose.msra.mxu0 0
      %1707 = vmatprep.subr.bf16.mxu0 0
      %1708 = vmatpush2.bf16.xpose.msra.mxu0 0
      %1709 = vmatprep.subr.bf16.mxu0 0
      %1710 = vmatpush2.bf16.xpose.msra.mxu0 0
      %1711 = vmatprep.subr.bf16.mxu0 0
      %1712 = vmatpush2.bf16.xpose.msra.mxu0 0
      %1713 = vmatprep.subr.bf16.mxu0 0
      %1714 = vmatpush2.bf16.xpose.msra.mxu0 0
      %1715 = vmatprep.subr.bf16.mxu0 0
      %1716 = vmatpush2.bf16.xpose.msra.mxu0 0
      %1717 = vmatprep.subr.bf16.mxu0 0
      %1718 = vmatpush2.bf16.xpose.msra.mxu0 0
      %1719 = vmatprep.mubr.bf16.mxu0 0
      %1720 = vmatmul.mubr.bf16.gmra.mxu0 %v1664
      %v1721 = vpop.f32.mrf.mxu0
      %v1722 = vadd.f32 0.0, %v1721
      %v1723 = vpop.f32.mrf.mxu0
      %v1724 = vpop.f32.mrf.mxu0
      %v1725 = vadd.f32 0.0, %v1724
      %v1726 = vpop.f32.mrf.mxu0
      %1727 = vmatprep.mubr.bf16.mxu0 0
      %1728 = vmatmul.mubr.bf16.gmra.mxu0 %v1667
      %v1729 = vpop.f32.mrf.mxu0
      %v1730 = vadd.f32 0.0, %v1729
      %v1731 = vpop.f32.mrf.mxu0
      %v1732 = vpop.f32.mrf.mxu0
      %v1733 = vadd.f32 0.0, %v1732
      %v1734 = vpop.f32.mrf.mxu0
      %1735 = vmatprep.mubr.bf16.mxu0 0
      %1736 = vmatmul.mubr.bf16.gmra.mxu0 %v1670
      %v1737 = vpop.f32.mrf.mxu0
      %v1738 = vadd.f32 0.0, %v1737
      %v1739 = vpop.f32.mrf.mxu0
      %v1740 = vpop.f32.mrf.mxu0
      %v1741 = vadd.f32 0.0, %v1740
      %v1742 = vpop.f32.mrf.mxu0
      %1743 = vmatprep.mubr.bf16.mxu0 0
      %1744 = vmatmul.mubr.bf16.gmra.mxu0 %v1673
      %v1745 = vpop.f32.mrf.mxu0
      %v1746 = vadd.f32 0.0, %v1745
      %v1747 = vpop.f32.mrf.mxu0
      %v1748 = vpop.f32.mrf.mxu0
      %v1749 = vadd.f32 0.0, %v1748
      %v1750 = vpop.f32.mrf.mxu0
      %1751 = vdwg.mxu0
      %v1752 = vsel %vm795, %v1722, -inf
      %1753 = vmax.xlane.f32.xlu0 %v1752
      %v1754 = vpop.xlane.xlu0 %1753
      %v1755 = vsel %vm795, %v1725, -inf
      %1756 = vmax.xlane.f32.xlu0 %v1755
      %v1757 = vpop.xlane.xlu0 %1756
      %v1758 = vsel %vm795, %v1730, -inf
      %1759 = vmax.xlane.f32.xlu0 %v1758
      %v1760 = vpop.xlane.xlu0 %1759
      %v1761 = vsel %vm795, %v1733, -inf
      %1762 = vmax.xlane.f32.xlu0 %v1761
      %v1763 = vpop.xlane.xlu0 %1762
      %v1764 = vsel %vm795, %v1738, -inf
      %1765 = vmax.xlane.f32.xlu0 %v1764
      %v1766 = vpop.xlane.xlu0 %1765
      %v1767 = vsel %vm795, %v1741, -inf
      %1768 = vmax.xlane.f32.xlu0 %v1767
      %v1769 = vpop.xlane.xlu0 %1768
      %v1770 = vsel %vm795, %v1746, -inf
      %1771 = vmax.xlane.f32.xlu0 %v1770
      %v1772 = vpop.xlane.xlu0 %1771
      %v1773 = vsel %vm795, %v1749, -inf
      %1774 = vmax.xlane.f32.xlu0 %v1773
      %v1775 = vpop.xlane.xlu0 %1774
      %v1776 = vsub.f32 %v1722, %v1754
      %v1777 = vsub.f32 %v1725, %v1757
      %v1778 = vsub.f32 %v1730, %v1760
      %v1779 = vsub.f32 %v1733, %v1763
      %v1780 = vsub.f32 %v1738, %v1766
      %v1781 = vsub.f32 %v1741, %v1769
      %v1782 = vsub.f32 %v1746, %v1772
      %v1783 = vsub.f32 %v1749, %v1775
      %v1784 = vmul.f32 %v1776, 1.442695
      %v1785 = vpow.pop %v1784
      %v1786 = vmul.f32 %v1777, 1.442695
      %v1787 = vpow.pop %v1786
      %v1788 = vmul.f32 %v1778, 1.442695
      %v1789 = vpow.pop %v1788
      %v1790 = vmul.f32 %v1779, 1.442695
      %v1791 = vpow.pop %v1790
      %v1792 = vmul.f32 %v1780, 1.442695
      %v1793 = vpow.pop %v1792
      %v1794 = vmul.f32 %v1781, 1.442695
      %v1795 = vpow.pop %v1794
      %v1796 = vmul.f32 %v1782, 1.442695
      %v1797 = vpow.pop %v1796
      %v1798 = vmul.f32 %v1783, 1.442695
      %v1799 = vpow.pop %v1798
      %v1800 = vsel %vm795, %v1785, 0.0
      %1801 = vadd.xlane.f32.xlu0 %v1800
      %v1802 = vpop.xlane.xlu0 %1801
      %v1803 = vsel %vm795, %v1787, 0.0
      %1804 = vadd.xlane.f32.xlu0 %v1803
      %v1805 = vpop.xlane.xlu0 %1804
      %v1806 = vsel %vm795, %v1789, 0.0
      %1807 = vadd.xlane.f32.xlu0 %v1806
      %v1808 = vpop.xlane.xlu0 %1807
      %v1809 = vsel %vm795, %v1791, 0.0
      %1810 = vadd.xlane.f32.xlu0 %v1809
      %v1811 = vpop.xlane.xlu0 %1810
      %v1812 = vsel %vm795, %v1793, 0.0
      %1813 = vadd.xlane.f32.xlu0 %v1812
      %v1814 = vpop.xlane.xlu0 %1813
      %v1815 = vsel %vm795, %v1795, 0.0
      %1816 = vadd.xlane.f32.xlu0 %v1815
      %v1817 = vpop.xlane.xlu0 %1816
      %v1818 = vsel %vm795, %v1797, 0.0
      %1819 = vadd.xlane.f32.xlu0 %v1818
      %v1820 = vpop.xlane.xlu0 %1819
      %v1821 = vsel %vm795, %v1799, 0.0
      %1822 = vadd.xlane.f32.xlu0 %v1821
      %v1823 = vpop.xlane.xlu0 %1822
      %v1824 = vrcp.pop %v1802
      %v1825 = vrcp.pop %v1805
      %v1826 = vrcp.pop %v1808
      %v1827 = vrcp.pop %v1811
      %v1828 = vrcp.pop %v1814
      %v1829 = vrcp.pop %v1817
      %v1830 = vrcp.pop %v1820
      %v1831 = vrcp.pop %v1823
      %v1832 = vmul.f32 %v1785, %v1824
      %v1833 = vmul.f32 %v1787, %v1825
      %v1834 = vmul.f32 %v1789, %v1826
      %v1835 = vmul.f32 %v1791, %v1827
      %v1836 = vmul.f32 %v1793, %v1828
      %v1837 = vmul.f32 %v1795, %v1829
      %v1838 = vmul.f32 %v1797, %v1830
      %v1839 = vmul.f32 %v1799, %v1831
      %v1840 = vpack.c.bf16 %v1833, %v1832
      %v1841 = vpack.c.bf16 %v1835, %v1834
      %v1842 = vpack.c.bf16 %v1837, %v1836
      %v1843 = vpack.c.bf16 %v1839, %v1838
      %1844 = vrot.lane.b32.xlu0 %v1276, 96
      %v1845 = vpop.permute.xlu0 %1844
      %1846 = vrot.lane.b32.xlu0 %v1277, 96
      %v1847 = vpop.permute.xlu0 %1846
      %1848 = vrot.lane.b32.xlu0 %v1278, 96
      %v1849 = vpop.permute.xlu0 %1848
      %1850 = vrot.lane.b32.xlu0 %v1279, 96
      %v1851 = vpop.permute.xlu0 %1850
      %v1857 = vsel %vm795, %v1840, 0
      %v1860 = vsel %vm795, %v1841, 0
      %v1863 = vsel %vm795, %v1842, 0
      %v1866 = vsel %vm795, %v1843, 0
      %1868 = vmatprep.subr.bf16.mxu0 0
      %1869 = vmatpush1.bf16.msra.mxu0 0
      %1870 = vmatprep.subr.bf16.mxu0 0
      %1871 = vmatpush1.bf16.msra.mxu0 0
      %1872 = vmatprep.subr.bf16.mxu0 0
      %1873 = vmatpush1.bf16.msra.mxu0 0
      %1874 = vmatprep.subr.bf16.mxu0 0
      %1875 = vmatpush1.bf16.msra.mxu0 0
      %1876 = vmatprep.subr.bf16.mxu0 0
      %1877 = vmatpush1.bf16.msra.mxu0 %v1851
      %1878 = vmatprep.subr.bf16.mxu0 0
      %1879 = vmatpush1.bf16.msra.mxu0 %v1849
      %1880 = vmatprep.subr.bf16.mxu0 0
      %1881 = vmatpush1.bf16.msra.mxu0 %v1847
      %1882 = vmatprep.subr.bf16.mxu0 0
      %1883 = vmatpush1.bf16.msra.mxu0 %v1845
      %1884 = vmatprep.subr.bf16.mxu0 0
      %1885 = vmatpush2.bf16.msra.mxu0 0
      %1886 = vmatprep.subr.bf16.mxu0 0
      %1887 = vmatpush2.bf16.msra.mxu0 0
      %1888 = vmatprep.subr.bf16.mxu0 0
      %1889 = vmatpush2.bf16.msra.mxu0 0
      %1890 = vmatprep.subr.bf16.mxu0 0
      %1891 = vmatpush2.bf16.msra.mxu0 0
      %1892 = vmatprep.subr.bf16.mxu0 0
      %1893 = vmatpush2.bf16.msra.mxu0 0
      %1894 = vmatprep.subr.bf16.mxu0 0
      %1895 = vmatpush2.bf16.msra.mxu0 0
      %1896 = vmatprep.subr.bf16.mxu0 0
      %1897 = vmatpush2.bf16.msra.mxu0 0
      %1898 = vmatprep.subr.bf16.mxu0 0
      %1899 = vmatpush2.bf16.msra.mxu0 0
      %1900 = vmatprep.mubr.bf16.mxu0 0
      %1901 = vmatmul.mubr.bf16.gmra.mxu0 %v1857
      %v1902 = vpop.f32.mrf.mxu0
      %v1903 = vadd.f32 0.0, %v1902
      %v1904 = vpop.f32.mrf.mxu0
      %v1905 = vpop.f32.mrf.mxu0
      %v1906 = vadd.f32 0.0, %v1905
      %v1907 = vpop.f32.mrf.mxu0
      %1908 = vmatprep.mubr.bf16.mxu0 0
      %1909 = vmatmul.mubr.bf16.gmra.mxu0 %v1860
      %v1910 = vpop.f32.mrf.mxu0
      %v1911 = vadd.f32 0.0, %v1910
      %v1912 = vpop.f32.mrf.mxu0
      %v1913 = vpop.f32.mrf.mxu0
      %v1914 = vadd.f32 0.0, %v1913
      %v1915 = vpop.f32.mrf.mxu0
      %1916 = vmatprep.mubr.bf16.mxu0 0
      %1917 = vmatmul.mubr.bf16.gmra.mxu0 %v1863
      %v1918 = vpop.f32.mrf.mxu0
      %v1919 = vadd.f32 0.0, %v1918
      %v1920 = vpop.f32.mrf.mxu0
      %v1921 = vpop.f32.mrf.mxu0
      %v1922 = vadd.f32 0.0, %v1921
      %v1923 = vpop.f32.mrf.mxu0
      %1924 = vmatprep.mubr.bf16.mxu0 0
      %1925 = vmatmul.mubr.bf16.gmra.mxu0 %v1866
      %v1926 = vpop.f32.mrf.mxu0
      %v1927 = vadd.f32 0.0, %v1926
      %v1928 = vpop.f32.mrf.mxu0
      %v1929 = vpop.f32.mrf.mxu0
      %v1930 = vadd.f32 0.0, %v1929
      %v1931 = vpop.f32.mrf.mxu0
      %1932 = vdwg.mxu0
      %1933 = vrot.lane.b32.xlu0 %v1078, 80
      %v1934 = vpop.permute.xlu0 %1933
      %1935 = vrot.lane.b32.xlu0 %v1079, 80
      %v1936 = vpop.permute.xlu0 %1935
      %1937 = vrot.lane.b32.xlu0 %v1080, 80
      %v1938 = vpop.permute.xlu0 %1937
      %1939 = vrot.lane.b32.xlu0 %v1081, 80
      %v1940 = vpop.permute.xlu0 %1939
      %1941 = vrot.lane.b32.xlu0 %v1078, 16
      %v1942 = vpop.permute.xlu0 %1941
      %1943 = vrot.lane.b32.xlu0 %v1079, 16
      %v1944 = vpop.permute.xlu0 %1943
      %1945 = vrot.lane.b32.xlu0 %v1080, 16
      %v1946 = vpop.permute.xlu0 %1945
      %1947 = vrot.lane.b32.xlu0 %v1081, 16
      %v1948 = vpop.permute.xlu0 %1947
      %v1950 = vsel %vm1094, %v1934, 0
      %v1953 = vsel %vm1094, %v1936, 0
      %v1956 = vsel %vm1094, %v1938, 0
      %v1959 = vsel %vm1094, %v1940, 0
      %v1962 = vsel %vm1094, %v1942, 0
      %v1965 = vsel %vm1094, %v1944, 0
      %v1968 = vsel %vm1094, %v1946, 0
      %v1971 = vsel %vm1094, %v1948, 0
      %1973 = vmatprep.subr.bf16.mxu0 0
      %1974 = vmatpush1.bf16.xpose.msra.mxu0 0
      %1975 = vmatprep.subr.bf16.mxu0 0
      %1976 = vmatpush1.bf16.xpose.msra.mxu0 0
      %1977 = vmatprep.subr.bf16.mxu0 0
      %1978 = vmatpush1.bf16.xpose.msra.mxu0 0
      %1979 = vmatprep.subr.bf16.mxu0 0
      %1980 = vmatpush1.bf16.xpose.msra.mxu0 0
      %1981 = vmatprep.subr.bf16.mxu0 0
      %1982 = vmatpush1.bf16.xpose.msra.mxu0 %v1971
      %1983 = vmatprep.subr.bf16.mxu0 0
      %1984 = vmatpush1.bf16.xpose.msra.mxu0 %v1968
      %1985 = vmatprep.subr.bf16.mxu0 0
      %1986 = vmatpush1.bf16.xpose.msra.mxu0 %v1965
      %1987 = vmatprep.subr.bf16.mxu0 0
      %1988 = vmatpush1.bf16.xpose.msra.mxu0 %v1962
      %1989 = vmatprep.subr.bf16.mxu0 0
      %1990 = vmatpush2.bf16.xpose.msra.mxu0 0
      %1991 = vmatprep.subr.bf16.mxu0 0
      %1992 = vmatpush2.bf16.xpose.msra.mxu0 0
      %1993 = vmatprep.subr.bf16.mxu0 0
      %1994 = vmatpush2.bf16.xpose.msra.mxu0 0
      %1995 = vmatprep.subr.bf16.mxu0 0
      %1996 = vmatpush2.bf16.xpose.msra.mxu0 0
      %1997 = vmatprep.subr.bf16.mxu0 0
      %1998 = vmatpush2.bf16.xpose.msra.mxu0 0
      %1999 = vmatprep.subr.bf16.mxu0 0
      %2000 = vmatpush2.bf16.xpose.msra.mxu0 0
      %2001 = vmatprep.subr.bf16.mxu0 0
      %2002 = vmatpush2.bf16.xpose.msra.mxu0 0
      %2003 = vmatprep.subr.bf16.mxu0 0
      %2004 = vmatpush2.bf16.xpose.msra.mxu0 0
      %2005 = vmatprep.mubr.bf16.mxu0 0
      %2006 = vmatmul.mubr.bf16.gmra.mxu0 %v1950
      %v2007 = vpop.f32.mrf.mxu0
      %v2008 = vadd.f32 0.0, %v2007
      %v2009 = vpop.f32.mrf.mxu0
      %v2010 = vpop.f32.mrf.mxu0
      %v2011 = vadd.f32 0.0, %v2010
      %v2012 = vpop.f32.mrf.mxu0
      %2013 = vmatprep.mubr.bf16.mxu0 0
      %2014 = vmatmul.mubr.bf16.gmra.mxu0 %v1953
      %v2015 = vpop.f32.mrf.mxu0
      %v2016 = vadd.f32 0.0, %v2015
      %v2017 = vpop.f32.mrf.mxu0
      %v2018 = vpop.f32.mrf.mxu0
      %v2019 = vadd.f32 0.0, %v2018
      %v2020 = vpop.f32.mrf.mxu0
      %2021 = vmatprep.mubr.bf16.mxu0 0
      %2022 = vmatmul.mubr.bf16.gmra.mxu0 %v1956
      %v2023 = vpop.f32.mrf.mxu0
      %v2024 = vadd.f32 0.0, %v2023
      %v2025 = vpop.f32.mrf.mxu0
      %v2026 = vpop.f32.mrf.mxu0
      %v2027 = vadd.f32 0.0, %v2026
      %v2028 = vpop.f32.mrf.mxu0
      %2029 = vmatprep.mubr.bf16.mxu0 0
      %2030 = vmatmul.mubr.bf16.gmra.mxu0 %v1959
      %v2031 = vpop.f32.mrf.mxu0
      %v2032 = vadd.f32 0.0, %v2031
      %v2033 = vpop.f32.mrf.mxu0
      %v2034 = vpop.f32.mrf.mxu0
      %v2035 = vadd.f32 0.0, %v2034
      %v2036 = vpop.f32.mrf.mxu0
      %2037 = vdwg.mxu0
      %v2038 = vsel %vm795, %v2008, -inf
      %2039 = vmax.xlane.f32.xlu0 %v2038
      %v2040 = vpop.xlane.xlu0 %2039
      %v2041 = vsel %vm795, %v2011, -inf
      %2042 = vmax.xlane.f32.xlu0 %v2041
      %v2043 = vpop.xlane.xlu0 %2042
      %v2044 = vsel %vm795, %v2016, -inf
      %2045 = vmax.xlane.f32.xlu0 %v2044
      %v2046 = vpop.xlane.xlu0 %2045
      %v2047 = vsel %vm795, %v2019, -inf
      %2048 = vmax.xlane.f32.xlu0 %v2047
      %v2049 = vpop.xlane.xlu0 %2048
      %v2050 = vsel %vm795, %v2024, -inf
      %2051 = vmax.xlane.f32.xlu0 %v2050
      %v2052 = vpop.xlane.xlu0 %2051
      %v2053 = vsel %vm795, %v2027, -inf
      %2054 = vmax.xlane.f32.xlu0 %v2053
      %v2055 = vpop.xlane.xlu0 %2054
      %v2056 = vsel %vm795, %v2032, -inf
      %2057 = vmax.xlane.f32.xlu0 %v2056
      %v2058 = vpop.xlane.xlu0 %2057
      %v2059 = vsel %vm795, %v2035, -inf
      %2060 = vmax.xlane.f32.xlu0 %v2059
      %v2061 = vpop.xlane.xlu0 %2060
      %v2062 = vsub.f32 %v2008, %v2040
      %v2063 = vsub.f32 %v2011, %v2043
      %v2064 = vsub.f32 %v2016, %v2046
      %v2065 = vsub.f32 %v2019, %v2049
      %v2066 = vsub.f32 %v2024, %v2052
      %v2067 = vsub.f32 %v2027, %v2055
      %v2068 = vsub.f32 %v2032, %v2058
      %v2069 = vsub.f32 %v2035, %v2061
      %v2070 = vmul.f32 %v2062, 1.442695
      %v2071 = vpow.pop %v2070
      %v2072 = vmul.f32 %v2063, 1.442695
      %v2073 = vpow.pop %v2072
      %v2074 = vmul.f32 %v2064, 1.442695
      %v2075 = vpow.pop %v2074
      %v2076 = vmul.f32 %v2065, 1.442695
      %v2077 = vpow.pop %v2076
      %v2078 = vmul.f32 %v2066, 1.442695
      %v2079 = vpow.pop %v2078
      %v2080 = vmul.f32 %v2067, 1.442695
      %v2081 = vpow.pop %v2080
      %v2082 = vmul.f32 %v2068, 1.442695
      %v2083 = vpow.pop %v2082
      %v2084 = vmul.f32 %v2069, 1.442695
      %v2085 = vpow.pop %v2084
      %v2086 = vsel %vm795, %v2071, 0.0
      %2087 = vadd.xlane.f32.xlu0 %v2086
      %v2088 = vpop.xlane.xlu0 %2087
      %v2089 = vsel %vm795, %v2073, 0.0
      %2090 = vadd.xlane.f32.xlu0 %v2089
      %v2091 = vpop.xlane.xlu0 %2090
      %v2092 = vsel %vm795, %v2075, 0.0
      %2093 = vadd.xlane.f32.xlu0 %v2092
      %v2094 = vpop.xlane.xlu0 %2093
      %v2095 = vsel %vm795, %v2077, 0.0
      %2096 = vadd.xlane.f32.xlu0 %v2095
      %v2097 = vpop.xlane.xlu0 %2096
      %v2098 = vsel %vm795, %v2079, 0.0
      %2099 = vadd.xlane.f32.xlu0 %v2098
      %v2100 = vpop.xlane.xlu0 %2099
      %v2101 = vsel %vm795, %v2081, 0.0
      %2102 = vadd.xlane.f32.xlu0 %v2101
      %v2103 = vpop.xlane.xlu0 %2102
      %v2104 = vsel %vm795, %v2083, 0.0
      %2105 = vadd.xlane.f32.xlu0 %v2104
      %v2106 = vpop.xlane.xlu0 %2105
      %v2107 = vsel %vm795, %v2085, 0.0
      %2108 = vadd.xlane.f32.xlu0 %v2107
      %v2109 = vpop.xlane.xlu0 %2108
      %v2110 = vrcp.pop %v2088
      %v2111 = vrcp.pop %v2091
      %v2112 = vrcp.pop %v2094
      %v2113 = vrcp.pop %v2097
      %v2114 = vrcp.pop %v2100
      %v2115 = vrcp.pop %v2103
      %v2116 = vrcp.pop %v2106
      %v2117 = vrcp.pop %v2109
      %v2118 = vmul.f32 %v2071, %v2110
      %v2119 = vmul.f32 %v2073, %v2111
      %v2120 = vmul.f32 %v2075, %v2112
      %v2121 = vmul.f32 %v2077, %v2113
      %v2122 = vmul.f32 %v2079, %v2114
      %v2123 = vmul.f32 %v2081, %v2115
      %v2124 = vmul.f32 %v2083, %v2116
      %v2125 = vmul.f32 %v2085, %v2117
      %v2126 = vpack.c.bf16 %v2119, %v2118
      %v2127 = vpack.c.bf16 %v2121, %v2120
      %v2128 = vpack.c.bf16 %v2123, %v2122
      %v2129 = vpack.c.bf16 %v2125, %v2124
      %2130 = vrot.lane.b32.xlu0 %v1276, 80
      %v2131 = vpop.permute.xlu0 %2130
      %2132 = vrot.lane.b32.xlu0 %v1277, 80
      %v2133 = vpop.permute.xlu0 %2132
      %2134 = vrot.lane.b32.xlu0 %v1278, 80
      %v2135 = vpop.permute.xlu0 %2134
      %2136 = vrot.lane.b32.xlu0 %v1279, 80
      %v2137 = vpop.permute.xlu0 %2136
      %v2143 = vsel %vm795, %v2126, 0
      %v2146 = vsel %vm795, %v2127, 0
      %v2149 = vsel %vm795, %v2128, 0
      %v2152 = vsel %vm795, %v2129, 0
      %2154 = vmatprep.subr.bf16.mxu0 0
      %2155 = vmatpush1.bf16.msra.mxu0 0
      %2156 = vmatprep.subr.bf16.mxu0 0
      %2157 = vmatpush1.bf16.msra.mxu0 0
      %2158 = vmatprep.subr.bf16.mxu0 0
      %2159 = vmatpush1.bf16.msra.mxu0 0
      %2160 = vmatprep.subr.bf16.mxu0 0
      %2161 = vmatpush1.bf16.msra.mxu0 0
      %2162 = vmatprep.subr.bf16.mxu0 0
      %2163 = vmatpush1.bf16.msra.mxu0 %v2137
      %2164 = vmatprep.subr.bf16.mxu0 0
      %2165 = vmatpush1.bf16.msra.mxu0 %v2135
      %2166 = vmatprep.subr.bf16.mxu0 0
      %2167 = vmatpush1.bf16.msra.mxu0 %v2133
      %2168 = vmatprep.subr.bf16.mxu0 0
      %2169 = vmatpush1.bf16.msra.mxu0 %v2131
      %2170 = vmatprep.subr.bf16.mxu0 0
      %2171 = vmatpush2.bf16.msra.mxu0 0
      %2172 = vmatprep.subr.bf16.mxu0 0
      %2173 = vmatpush2.bf16.msra.mxu0 0
      %2174 = vmatprep.subr.bf16.mxu0 0
      %2175 = vmatpush2.bf16.msra.mxu0 0
      %2176 = vmatprep.subr.bf16.mxu0 0
      %2177 = vmatpush2.bf16.msra.mxu0 0
      %2178 = vmatprep.subr.bf16.mxu0 0
      %2179 = vmatpush2.bf16.msra.mxu0 0
      %2180 = vmatprep.subr.bf16.mxu0 0
      %2181 = vmatpush2.bf16.msra.mxu0 0
      %2182 = vmatprep.subr.bf16.mxu0 0
      %2183 = vmatpush2.bf16.msra.mxu0 0
      %2184 = vmatprep.subr.bf16.mxu0 0
      %2185 = vmatpush2.bf16.msra.mxu0 0
      %2186 = vmatprep.mubr.bf16.mxu0 0
      %2187 = vmatmul.mubr.bf16.gmra.mxu0 %v2143
      %v2188 = vpop.f32.mrf.mxu0
      %v2189 = vadd.f32 0.0, %v2188
      %v2190 = vpop.f32.mrf.mxu0
      %v2191 = vpop.f32.mrf.mxu0
      %v2192 = vadd.f32 0.0, %v2191
      %v2193 = vpop.f32.mrf.mxu0
      %2194 = vmatprep.mubr.bf16.mxu0 0
      %2195 = vmatmul.mubr.bf16.gmra.mxu0 %v2146
      %v2196 = vpop.f32.mrf.mxu0
      %v2197 = vadd.f32 0.0, %v2196
      %v2198 = vpop.f32.mrf.mxu0
      %v2199 = vpop.f32.mrf.mxu0
      %v2200 = vadd.f32 0.0, %v2199
      %v2201 = vpop.f32.mrf.mxu0
      %2202 = vmatprep.mubr.bf16.mxu0 0
      %2203 = vmatmul.mubr.bf16.gmra.mxu0 %v2149
      %v2204 = vpop.f32.mrf.mxu0
      %v2205 = vadd.f32 0.0, %v2204
      %v2206 = vpop.f32.mrf.mxu0
      %v2207 = vpop.f32.mrf.mxu0
      %v2208 = vadd.f32 0.0, %v2207
      %v2209 = vpop.f32.mrf.mxu0
      %2210 = vmatprep.mubr.bf16.mxu0 0
      %2211 = vmatmul.mubr.bf16.gmra.mxu0 %v2152
      %v2212 = vpop.f32.mrf.mxu0
      %v2213 = vadd.f32 0.0, %v2212
      %v2214 = vpop.f32.mrf.mxu0
      %v2215 = vpop.f32.mrf.mxu0
      %v2216 = vadd.f32 0.0, %v2215
      %v2217 = vpop.f32.mrf.mxu0
      %2218 = vdwg.mxu0
      %2227 = vrot.lane.b32.xlu0 %v1617, 16
      %v2228 = vpop.permute.xlu0 %2227
      %2229 = vrot.lane.b32.xlu0 %v1620, 16
      %v2230 = vpop.permute.xlu0 %2229
      %2231 = vrot.lane.b32.xlu0 %v1625, 16
      %v2232 = vpop.permute.xlu0 %2231
      %2233 = vrot.lane.b32.xlu0 %v1628, 16
      %v2234 = vpop.permute.xlu0 %2233
      %2235 = vrot.lane.b32.xlu0 %v1633, 16
      %v2236 = vpop.permute.xlu0 %2235
      %2237 = vrot.lane.b32.xlu0 %v1636, 16
      %v2238 = vpop.permute.xlu0 %2237
      %2239 = vrot.lane.b32.xlu0 %v1641, 16
      %v2240 = vpop.permute.xlu0 %2239
      %2241 = vrot.lane.b32.xlu0 %v1644, 16
      %v2242 = vpop.permute.xlu0 %2241
      %2259 = vrot.lane.b32.xlu0 %v1903, 32
      %v2260 = vpop.permute.xlu0 %2259
      %2261 = vrot.lane.b32.xlu0 %v1906, 32
      %v2262 = vpop.permute.xlu0 %2261
      %2263 = vrot.lane.b32.xlu0 %v1911, 32
      %v2264 = vpop.permute.xlu0 %2263
      %2265 = vrot.lane.b32.xlu0 %v1914, 32
      %v2266 = vpop.permute.xlu0 %2265
      %2267 = vrot.lane.b32.xlu0 %v1919, 32
      %v2268 = vpop.permute.xlu0 %2267
      %2269 = vrot.lane.b32.xlu0 %v1922, 32
      %v2270 = vpop.permute.xlu0 %2269
      %2271 = vrot.lane.b32.xlu0 %v1927, 32
      %v2272 = vpop.permute.xlu0 %2271
      %2273 = vrot.lane.b32.xlu0 %v1930, 32
      %v2274 = vpop.permute.xlu0 %2273
      %2291 = vrot.lane.b32.xlu0 %v2189, 48
      %v2292 = vpop.permute.xlu0 %2291
      %2293 = vrot.lane.b32.xlu0 %v2192, 48
      %v2294 = vpop.permute.xlu0 %2293
      %2295 = vrot.lane.b32.xlu0 %v2197, 48
      %v2296 = vpop.permute.xlu0 %2295
      %2297 = vrot.lane.b32.xlu0 %v2200, 48
      %v2298 = vpop.permute.xlu0 %2297
      %2299 = vrot.lane.b32.xlu0 %v2205, 48
      %v2300 = vpop.permute.xlu0 %2299
      %2301 = vrot.lane.b32.xlu0 %v2208, 48
      %v2302 = vpop.permute.xlu0 %2301
      %2303 = vrot.lane.b32.xlu0 %v2213, 48
      %v2304 = vpop.permute.xlu0 %2303
      %2305 = vrot.lane.b32.xlu0 %v2216, 48
      %v2306 = vpop.permute.xlu0 %2305
      %v2315 = vsel %vm1094, %v1327, %v2228
      %v2316 = vsel %vm1094, %v1330, %v2230
      %v2317 = vsel %vm1094, %v1335, %v2232
      %v2318 = vsel %vm1094, %v1338, %v2234
      %v2319 = vsel %vm1094, %v1343, %v2236
      %v2320 = vsel %vm1094, %v1346, %v2238
      %v2321 = vsel %vm1094, %v1351, %v2240
      %v2322 = vsel %vm1094, %v1354, %v2242
      %vm2323 = vcmask 261120
      %v2324 = vsel %vm2323, %v2315, %v2260
      %v2325 = vsel %vm2323, %v2316, %v2262
      %v2326 = vsel %vm2323, %v2317, %v2264
      %v2327 = vsel %vm2323, %v2318, %v2266
      %v2328 = vsel %vm2323, %v2319, %v2268
      %v2329 = vsel %vm2323, %v2320, %v2270
      %v2330 = vsel %vm2323, %v2321, %v2272
      %v2331 = vsel %vm2323, %v2322, %v2274
      %v2332 = vsel %vm715, %v2324, %v2292
      %v2333 = vsel %vm715, %v2325, %v2294
      %v2334 = vsel %vm715, %v2326, %v2296
      %v2335 = vsel %vm715, %v2327, %v2298
      %v2336 = vsel %vm715, %v2328, %v2300
      %v2337 = vsel %vm715, %v2329, %v2302
      %v2338 = vsel %vm715, %v2330, %v2304
      %v2339 = vsel %vm715, %v2331, %v2306
      %v2340 = vpack.c.bf16 %v2333, %v2332
      %v2341 = vpack.c.bf16 %v2335, %v2334
      %v2342 = vpack.c.bf16 %v2337, %v2336
      %v2343 = vpack.c.bf16 %v2339, %v2338
      %v2344 = vld [vmem:[%s7] sm:$0xf]
      %v2345 = vld [vmem:[%s7 + $0x4] sm:$0xf]
      %v2346 = vld [vmem:[%s7 + $0x8] sm:$0xf]
      %v2347 = vld [vmem:[%s7 + $0xc] sm:$0xf]
      %v2348 = vld [vmem:[%s7 + $0x10] sm:$0xf]
      %v2349 = vld [vmem:[%s7 + $0x14] sm:$0xf]
      %v2350 = vld [vmem:[%s7 + $0x18] sm:$0xf]
      %v2351 = vld [vmem:[%s7 + $0x1c] sm:$0xf]
      %v2352 = vld [vmem:[%s8] sm:$0x1]
      %v2354 = vlaneseq
      %v2355 = vshrl.u32 %v2354, 7
      %v2356 = vsub.s32 0, %v2355
      %v2357 = vrot.slane %v2352, %v2356
      %v2367 = vunpack.c.l.b16 %v2344
      %v2368 = vunpack.c.l.b16 %v2345
      %v2369 = vunpack.c.l.b16 %v2346
      %v2370 = vunpack.c.l.b16 %v2347
      %v2371 = vunpack.c.l.b16 %v2348
      %v2372 = vunpack.c.l.b16 %v2349
      %v2373 = vunpack.c.l.b16 %v2350
      %v2374 = vunpack.c.l.b16 %v2351
      %v2375 = vpack.c.b16 %v2368, %v2367
      %v2376 = vpack.c.b16 %v2370, %v2369
      %v2377 = vpack.c.b16 %v2372, %v2371
      %v2378 = vpack.c.b16 %v2374, %v2373
      %v2384 = vsel %vm795, %v2340, 0
      %v2387 = vsel %vm795, %v2341, 0
      %v2390 = vsel %vm795, %v2342, 0
      %v2393 = vsel %vm795, %v2343, 0
      %2395 = vmatprep.subr.bf16.mxu0 0
      %2396 = vmatpush1.bf16.msra.mxu0 0
      %2397 = vmatprep.subr.bf16.mxu0 0
      %2398 = vmatpush1.bf16.msra.mxu0 0
      %2399 = vmatprep.subr.bf16.mxu0 0
      %2400 = vmatpush1.bf16.msra.mxu0 0
      %2401 = vmatprep.subr.bf16.mxu0 0
      %2402 = vmatpush1.bf16.msra.mxu0 0
      %2403 = vmatprep.subr.bf16.mxu0 0
      %2404 = vmatpush1.bf16.msra.mxu0 %v2378
      %2405 = vmatprep.subr.bf16.mxu0 0
      %2406 = vmatpush1.bf16.msra.mxu0 %v2377
      %2407 = vmatprep.subr.bf16.mxu0 0
      %2408 = vmatpush1.bf16.msra.mxu0 %v2376
      %2409 = vmatprep.subr.bf16.mxu0 0
      %2410 = vmatpush1.bf16.msra.mxu0 %v2375
      %2411 = vmatprep.subr.bf16.mxu0 0
      %2412 = vmatpush2.bf16.msra.mxu0 0
      %2413 = vmatprep.subr.bf16.mxu0 0
      %2414 = vmatpush2.bf16.msra.mxu0 0
      %2415 = vmatprep.subr.bf16.mxu0 0
      %2416 = vmatpush2.bf16.msra.mxu0 0
      %2417 = vmatprep.subr.bf16.mxu0 0
      %2418 = vmatpush2.bf16.msra.mxu0 0
      %2419 = vmatprep.subr.bf16.mxu0 0
      %2420 = vmatpush2.bf16.msra.mxu0 0
      %2421 = vmatprep.subr.bf16.mxu0 0
      %2422 = vmatpush2.bf16.msra.mxu0 0
      %2423 = vmatprep.subr.bf16.mxu0 0
      %2424 = vmatpush2.bf16.msra.mxu0 0
      %2425 = vmatprep.subr.bf16.mxu0 0
      %2426 = vmatpush2.bf16.msra.mxu0 0
      %2427 = vmatprep.mubr.bf16.mxu0 0
      %2428 = vmatmul.mubr.bf16.gmra.mxu0 %v2384
      %v2429 = vpop.f32.mrf.mxu0
      %v2430 = vadd.f32 %v2357, %v2429
      %v2431 = vpop.f32.mrf.mxu0
      %v2432 = vpop.f32.mrf.mxu0
      %v2433 = vadd.f32 %v2357, %v2432
      %v2434 = vpop.f32.mrf.mxu0
      %2435 = vmatprep.mubr.bf16.mxu0 0
      %2436 = vmatmul.mubr.bf16.gmra.mxu0 %v2387
      %v2437 = vpop.f32.mrf.mxu0
      %v2438 = vadd.f32 %v2357, %v2437
      %v2439 = vpop.f32.mrf.mxu0
      %v2440 = vpop.f32.mrf.mxu0
      %v2441 = vadd.f32 %v2357, %v2440
      %v2442 = vpop.f32.mrf.mxu0
      %2443 = vmatprep.mubr.bf16.mxu0 0
      %2444 = vmatmul.mubr.bf16.gmra.mxu0 %v2390
      %v2445 = vpop.f32.mrf.mxu0
      %v2446 = vadd.f32 %v2357, %v2445
      %v2447 = vpop.f32.mrf.mxu0
      %v2448 = vpop.f32.mrf.mxu0
      %v2449 = vadd.f32 %v2357, %v2448
      %v2450 = vpop.f32.mrf.mxu0
      %2451 = vmatprep.mubr.bf16.mxu0 0
      %2452 = vmatmul.mubr.bf16.gmra.mxu0 %v2393
      %v2453 = vpop.f32.mrf.mxu0
      %v2454 = vadd.f32 %v2357, %v2453
      %v2455 = vpop.f32.mrf.mxu0
      %v2456 = vpop.f32.mrf.mxu0
      %v2457 = vadd.f32 %v2357, %v2456
      %v2458 = vpop.f32.mrf.mxu0
      %2459 = vdwg.mxu0
      %v2460 = vadd.f32 %v763, %v2430
      %v2461 = vadd.f32 %v766, %v2433
      %v2462 = vadd.f32 %v771, %v2438
      %v2463 = vadd.f32 %v774, %v2441
      %v2464 = vadd.f32 %v779, %v2446
      %v2465 = vadd.f32 %v782, %v2449
      %v2466 = vadd.f32 %v787, %v2454
      %v2467 = vadd.f32 %v790, %v2457
      %v2468 = vld [vmem:[%s9] sm:$0x1]
      %v2469 = vld [vmem:[%s10] sm:$0x1]
      %v2470 = vsel %vm795, %v2460, 0.0
      %2471 = vadd.xlane.f32.xlu0 %v2470
      %v2472 = vpop.xlane.xlu0 %2471
      %v2473 = vsel %vm795, %v2461, 0.0
      %2474 = vadd.xlane.f32.xlu0 %v2473
      %v2475 = vpop.xlane.xlu0 %2474
      %v2476 = vsel %vm795, %v2462, 0.0
      %2477 = vadd.xlane.f32.xlu0 %v2476
      %v2478 = vpop.xlane.xlu0 %2477
      %v2479 = vsel %vm795, %v2463, 0.0
      %2480 = vadd.xlane.f32.xlu0 %v2479
      %v2481 = vpop.xlane.xlu0 %2480
      %v2482 = vsel %vm795, %v2464, 0.0
      %2483 = vadd.xlane.f32.xlu0 %v2482
      %v2484 = vpop.xlane.xlu0 %2483
      %v2485 = vsel %vm795, %v2465, 0.0
      %2486 = vadd.xlane.f32.xlu0 %v2485
      %v2487 = vpop.xlane.xlu0 %2486
      %v2488 = vsel %vm795, %v2466, 0.0
      %2489 = vadd.xlane.f32.xlu0 %v2488
      %v2490 = vpop.xlane.xlu0 %2489
      %v2491 = vsel %vm795, %v2467, 0.0
      %2492 = vadd.xlane.f32.xlu0 %v2491
      %v2493 = vpop.xlane.xlu0 %2492
      %v2494 = vmul.f32 %v2472, %v820
      %v2495 = vmul.f32 %v2475, %v820
      %v2496 = vmul.f32 %v2478, %v820
      %v2497 = vmul.f32 %v2481, %v820
      %v2498 = vmul.f32 %v2484, %v820
      %v2499 = vmul.f32 %v2487, %v820
      %v2500 = vmul.f32 %v2490, %v820
      %v2501 = vmul.f32 %v2493, %v820
      %v2502 = vsub.f32 %v2460, %v2494
      %v2503 = vsub.f32 %v2461, %v2495
      %v2504 = vsub.f32 %v2462, %v2496
      %v2505 = vsub.f32 %v2463, %v2497
      %v2506 = vsub.f32 %v2464, %v2498
      %v2507 = vsub.f32 %v2465, %v2499
      %v2508 = vsub.f32 %v2466, %v2500
      %v2509 = vsub.f32 %v2467, %v2501
      %v2510 = vmul.f32 %v2502, %v2502
      %v2511 = vmul.f32 %v2503, %v2503
      %v2512 = vmul.f32 %v2504, %v2504
      %v2513 = vmul.f32 %v2505, %v2505
      %v2514 = vmul.f32 %v2506, %v2506
      %v2515 = vmul.f32 %v2507, %v2507
      %v2516 = vmul.f32 %v2508, %v2508
      %v2517 = vmul.f32 %v2509, %v2509
      %v2518 = vsel %vm795, %v2510, 0.0
      %2519 = vadd.xlane.f32.xlu0 %v2518
      %v2520 = vpop.xlane.xlu0 %2519
      %v2521 = vsel %vm795, %v2511, 0.0
      %2522 = vadd.xlane.f32.xlu0 %v2521
      %v2523 = vpop.xlane.xlu0 %2522
      %v2524 = vsel %vm795, %v2512, 0.0
      %2525 = vadd.xlane.f32.xlu0 %v2524
      %v2526 = vpop.xlane.xlu0 %2525
      %v2527 = vsel %vm795, %v2513, 0.0
      %2528 = vadd.xlane.f32.xlu0 %v2527
      %v2529 = vpop.xlane.xlu0 %2528
      %v2530 = vsel %vm795, %v2514, 0.0
      %2531 = vadd.xlane.f32.xlu0 %v2530
      %v2532 = vpop.xlane.xlu0 %2531
      %v2533 = vsel %vm795, %v2515, 0.0
      %2534 = vadd.xlane.f32.xlu0 %v2533
      %v2535 = vpop.xlane.xlu0 %2534
      %v2536 = vsel %vm795, %v2516, 0.0
      %2537 = vadd.xlane.f32.xlu0 %v2536
      %v2538 = vpop.xlane.xlu0 %2537
      %v2539 = vsel %vm795, %v2517, 0.0
      %2540 = vadd.xlane.f32.xlu0 %v2539
      %v2541 = vpop.xlane.xlu0 %2540
      %v2542 = vmul.f32 %v2520, %v820
      %v2543 = vmul.f32 %v2523, %v820
      %v2544 = vmul.f32 %v2526, %v820
      %v2545 = vmul.f32 %v2529, %v820
      %v2546 = vmul.f32 %v2532, %v820
      %v2547 = vmul.f32 %v2535, %v820
      %v2548 = vmul.f32 %v2538, %v820
      %v2549 = vmul.f32 %v2541, %v820
      %v2550 = vadd.f32 %v2542, 1e-06
      %v2551 = vadd.f32 %v2543, 1e-06
      %v2552 = vadd.f32 %v2544, 1e-06
      %v2553 = vadd.f32 %v2545, 1e-06
      %v2554 = vadd.f32 %v2546, 1e-06
      %v2555 = vadd.f32 %v2547, 1e-06
      %v2556 = vadd.f32 %v2548, 1e-06
      %v2557 = vadd.f32 %v2549, 1e-06
      %v2558 = vrsqrt.pop %v2550
      %v2559 = vrsqrt.pop %v2551
      %v2560 = vrsqrt.pop %v2552
      %v2561 = vrsqrt.pop %v2553
      %v2562 = vrsqrt.pop %v2554
      %v2563 = vrsqrt.pop %v2555
      %v2564 = vrsqrt.pop %v2556
      %v2565 = vrsqrt.pop %v2557
      %v2566 = vmul.f32 %v2502, %v2558
      %v2567 = vmul.f32 %v2503, %v2559
      %v2568 = vmul.f32 %v2504, %v2560
      %v2569 = vmul.f32 %v2505, %v2561
      %v2570 = vmul.f32 %v2506, %v2562
      %v2571 = vmul.f32 %v2507, %v2563
      %v2572 = vmul.f32 %v2508, %v2564
      %v2573 = vmul.f32 %v2509, %v2565
      %v2575 = vlaneseq
      %v2576 = vshrl.u32 %v2575, 7
      %v2577 = vsub.s32 0, %v2576
      %v2578 = vrot.slane %v2468, %v2577
      %v2580 = vmul.f32 %v2566, %v2578
      %v2581 = vmul.f32 %v2567, %v2578
      %v2582 = vmul.f32 %v2568, %v2578
      %v2583 = vmul.f32 %v2569, %v2578
      %v2584 = vmul.f32 %v2570, %v2578
      %v2585 = vmul.f32 %v2571, %v2578
      %v2586 = vmul.f32 %v2572, %v2578
      %v2587 = vmul.f32 %v2573, %v2578
      %v2589 = vlaneseq
      %v2590 = vshrl.u32 %v2589, 7
      %v2591 = vsub.s32 0, %v2590
      %v2592 = vrot.slane %v2469, %v2591
      %v2594 = vadd.f32 %v2580, %v2592
      %v2595 = vadd.f32 %v2581, %v2592
      %v2596 = vadd.f32 %v2582, %v2592
      %v2597 = vadd.f32 %v2583, %v2592
      %v2598 = vadd.f32 %v2584, %v2592
      %v2599 = vadd.f32 %v2585, %v2592
      %v2600 = vadd.f32 %v2586, %v2592
      %v2601 = vadd.f32 %v2587, %v2592
      %v2602 = vpack.c.bf16 %v2595, %v2594
      %v2603 = vpack.c.bf16 %v2597, %v2596
      %v2604 = vpack.c.bf16 %v2599, %v2598
      %v2605 = vpack.c.bf16 %v2601, %v2600
      %v2606 = vld [vmem:[%s11] sm:$0xff]
      %v2607 = vld [vmem:[%s11 + $0x8] sm:$0xff]
      %v2608 = vld [vmem:[%s11 + $0x10] sm:$0xff]
      %v2609 = vld [vmem:[%s11 + $0x18] sm:$0xff]
      %v2610 = vld [vmem:[%s11 + $0x20] sm:$0xff]
      %v2611 = vld [vmem:[%s11 + $0x28] sm:$0xff]
      %v2612 = vld [vmem:[%s11 + $0x30] sm:$0xff]
      %v2613 = vld [vmem:[%s11 + $0x38] sm:$0xff]
      %v2614 = vld [vmem:[%s12] sm:$0x3]
      %v2616 = vlaneseq
      %v2617 = vshrl.u32 %v2616, 7
      %v2618 = vsub.s32 0, %v2617
      %v2619 = vrot.slane %v2614, %v2618
      %v2620 = vlaneseq
      %v2621 = vshrl.u32 %v2620, 7
      %v2622 = vsub.s32 1, %v2621
      %v2623 = vrot.slane %v2614, %v2622
      %v2634 = vunpack.c.l.b16 %v2606
      %v2635 = vunpack.c.h.b16 %v2606
      %v2636 = vunpack.c.l.b16 %v2607
      %v2637 = vunpack.c.h.b16 %v2607
      %v2638 = vunpack.c.l.b16 %v2608
      %v2639 = vunpack.c.h.b16 %v2608
      %v2640 = vunpack.c.l.b16 %v2609
      %v2641 = vunpack.c.h.b16 %v2609
      %v2642 = vunpack.c.l.b16 %v2610
      %v2643 = vunpack.c.h.b16 %v2610
      %v2644 = vunpack.c.l.b16 %v2611
      %v2645 = vunpack.c.h.b16 %v2611
      %v2646 = vunpack.c.l.b16 %v2612
      %v2647 = vunpack.c.h.b16 %v2612
      %v2648 = vunpack.c.l.b16 %v2613
      %v2649 = vunpack.c.h.b16 %v2613
      %v2650 = vpack.c.b16 %v2636, %v2634
      %v2651 = vpack.c.b16 %v2637, %v2635
      %v2652 = vpack.c.b16 %v2640, %v2638
      %v2653 = vpack.c.b16 %v2641, %v2639
      %v2654 = vpack.c.b16 %v2644, %v2642
      %v2655 = vpack.c.b16 %v2645, %v2643
      %v2656 = vpack.c.b16 %v2648, %v2646
      %v2657 = vpack.c.b16 %v2649, %v2647
      %v2667 = vsel %vm795, %v2602, 0
      %v2670 = vsel %vm795, %v2603, 0
      %v2673 = vsel %vm795, %v2604, 0
      %v2676 = vsel %vm795, %v2605, 0
      %2678 = vmatprep.subr.bf16.mxu0 0
      %2679 = vmatpush1.bf16.msra.mxu0 0
      %2680 = vmatprep.subr.bf16.mxu0 0
      %2681 = vmatpush1.bf16.msra.mxu0 0
      %2682 = vmatprep.subr.bf16.mxu0 0
      %2683 = vmatpush1.bf16.msra.mxu0 0
      %2684 = vmatprep.subr.bf16.mxu0 0
      %2685 = vmatpush1.bf16.msra.mxu0 0
      %2686 = vmatprep.subr.bf16.mxu0 %v2657
      %2687 = vmatpush1.bf16.msra.mxu0 %v2656
      %2688 = vmatprep.subr.bf16.mxu0 %v2655
      %2689 = vmatpush1.bf16.msra.mxu0 %v2654
      %2690 = vmatprep.subr.bf16.mxu0 %v2653
      %2691 = vmatpush1.bf16.msra.mxu0 %v2652
      %2692 = vmatprep.subr.bf16.mxu0 %v2651
      %2693 = vmatpush1.bf16.msra.mxu0 %v2650
      %2694 = vmatprep.subr.bf16.mxu0 0
      %2695 = vmatpush2.bf16.msra.mxu0 0
      %2696 = vmatprep.subr.bf16.mxu0 0
      %2697 = vmatpush2.bf16.msra.mxu0 0
      %2698 = vmatprep.subr.bf16.mxu0 0
      %2699 = vmatpush2.bf16.msra.mxu0 0
      %2700 = vmatprep.subr.bf16.mxu0 0
      %2701 = vmatpush2.bf16.msra.mxu0 0
      %2702 = vmatprep.subr.bf16.mxu0 0
      %2703 = vmatpush2.bf16.msra.mxu0 0
      %2704 = vmatprep.subr.bf16.mxu0 0
      %2705 = vmatpush2.bf16.msra.mxu0 0
      %2706 = vmatprep.subr.bf16.mxu0 0
      %2707 = vmatpush2.bf16.msra.mxu0 0
      %2708 = vmatprep.subr.bf16.mxu0 0
      %2709 = vmatpush2.bf16.msra.mxu0 0
      %2710 = vmatprep.mubr.bf16.mxu0 0
      %2711 = vmatmul.mubr.bf16.gmra.mxu0 %v2667
      %v2712 = vpop.f32.mrf.mxu0
      %v2713 = vadd.f32 %v2619, %v2712
      %v2714 = vpop.f32.mrf.mxu0
      %v2715 = vadd.f32 %v2623, %v2714
      %v2716 = vpop.f32.mrf.mxu0
      %v2717 = vadd.f32 %v2619, %v2716
      %v2718 = vpop.f32.mrf.mxu0
      %v2719 = vadd.f32 %v2623, %v2718
      %2720 = vmatprep.mubr.bf16.mxu0 0
      %2721 = vmatmul.mubr.bf16.gmra.mxu0 %v2670
      %v2722 = vpop.f32.mrf.mxu0
      %v2723 = vadd.f32 %v2619, %v2722
      %v2724 = vpop.f32.mrf.mxu0
      %v2725 = vadd.f32 %v2623, %v2724
      %v2726 = vpop.f32.mrf.mxu0
      %v2727 = vadd.f32 %v2619, %v2726
      %v2728 = vpop.f32.mrf.mxu0
      %v2729 = vadd.f32 %v2623, %v2728
      %2730 = vmatprep.mubr.bf16.mxu0 0
      %2731 = vmatmul.mubr.bf16.gmra.mxu0 %v2673
      %v2732 = vpop.f32.mrf.mxu0
      %v2733 = vadd.f32 %v2619, %v2732
      %v2734 = vpop.f32.mrf.mxu0
      %v2735 = vadd.f32 %v2623, %v2734
      %v2736 = vpop.f32.mrf.mxu0
      %v2737 = vadd.f32 %v2619, %v2736
      %v2738 = vpop.f32.mrf.mxu0
      %v2739 = vadd.f32 %v2623, %v2738
      %2740 = vmatprep.mubr.bf16.mxu0 0
      %2741 = vmatmul.mubr.bf16.gmra.mxu0 %v2676
      %v2742 = vpop.f32.mrf.mxu0
      %v2743 = vadd.f32 %v2619, %v2742
      %v2744 = vpop.f32.mrf.mxu0
      %v2745 = vadd.f32 %v2623, %v2744
      %v2746 = vpop.f32.mrf.mxu0
      %v2747 = vadd.f32 %v2619, %v2746
      %v2748 = vpop.f32.mrf.mxu0
      %v2749 = vadd.f32 %v2623, %v2748
      %2750 = vdwg.mxu0
      %v2751 = vmul.f32 %v2713, 0.5
      %v2752 = vmul.f32 %v2715, 0.5
      %v2753 = vmul.f32 %v2717, 0.5
      %v2754 = vmul.f32 %v2719, 0.5
      %v2755 = vmul.f32 %v2723, 0.5
      %v2756 = vmul.f32 %v2725, 0.5
      %v2757 = vmul.f32 %v2727, 0.5
      %v2758 = vmul.f32 %v2729, 0.5
      %v2759 = vmul.f32 %v2733, 0.5
      %v2760 = vmul.f32 %v2735, 0.5
      %v2761 = vmul.f32 %v2737, 0.5
      %v2762 = vmul.f32 %v2739, 0.5
      %v2763 = vmul.f32 %v2743, 0.5
      %v2764 = vmul.f32 %v2745, 0.5
      %v2765 = vmul.f32 %v2747, 0.5
      %v2766 = vmul.f32 %v2749, 0.5
      %v2767 = vmul.f32 %v2713, 0.70710677
      %v2768 = vmul.f32 %v2715, 0.70710677
      %v2769 = vmul.f32 %v2717, 0.70710677
      %v2770 = vmul.f32 %v2719, 0.70710677
      %v2771 = vmul.f32 %v2723, 0.70710677
      %v2772 = vmul.f32 %v2725, 0.70710677
      %v2773 = vmul.f32 %v2727, 0.70710677
      %v2774 = vmul.f32 %v2729, 0.70710677
      %v2775 = vmul.f32 %v2733, 0.70710677
      %v2776 = vmul.f32 %v2735, 0.70710677
      %v2777 = vmul.f32 %v2737, 0.70710677
      %v2778 = vmul.f32 %v2739, 0.70710677
      %v2779 = vmul.f32 %v2743, 0.70710677
      %v2780 = vmul.f32 %v2745, 0.70710677
      %v2781 = vmul.f32 %v2747, 0.70710677
      %v2782 = vmul.f32 %v2749, 0.70710677
      %v2783 = verf.f32.pop %v2767
      %v2784 = verf.f32.pop %v2768
      %v2785 = verf.f32.pop %v2769
      %v2786 = verf.f32.pop %v2770
      %v2787 = verf.f32.pop %v2771
      %v2788 = verf.f32.pop %v2772
      %v2789 = verf.f32.pop %v2773
      %v2790 = verf.f32.pop %v2774
      %v2791 = verf.f32.pop %v2775
      %v2792 = verf.f32.pop %v2776
      %v2793 = verf.f32.pop %v2777
      %v2794 = verf.f32.pop %v2778
      %v2795 = verf.f32.pop %v2779
      %v2796 = verf.f32.pop %v2780
      %v2797 = verf.f32.pop %v2781
      %v2798 = verf.f32.pop %v2782
      %v2799 = vadd.f32 %v2783, 1.0
      %v2800 = vadd.f32 %v2784, 1.0
      %v2801 = vadd.f32 %v2785, 1.0
      %v2802 = vadd.f32 %v2786, 1.0
      %v2803 = vadd.f32 %v2787, 1.0
      %v2804 = vadd.f32 %v2788, 1.0
      %v2805 = vadd.f32 %v2789, 1.0
      %v2806 = vadd.f32 %v2790, 1.0
      %v2807 = vadd.f32 %v2791, 1.0
      %v2808 = vadd.f32 %v2792, 1.0
      %v2809 = vadd.f32 %v2793, 1.0
      %v2810 = vadd.f32 %v2794, 1.0
      %v2811 = vadd.f32 %v2795, 1.0
      %v2812 = vadd.f32 %v2796, 1.0
      %v2813 = vadd.f32 %v2797, 1.0
      %v2814 = vadd.f32 %v2798, 1.0
      %v2815 = vmul.f32 %v2751, %v2799
      %v2816 = vmul.f32 %v2752, %v2800
      %v2817 = vmul.f32 %v2753, %v2801
      %v2818 = vmul.f32 %v2754, %v2802
      %v2819 = vmul.f32 %v2755, %v2803
      %v2820 = vmul.f32 %v2756, %v2804
      %v2821 = vmul.f32 %v2757, %v2805
      %v2822 = vmul.f32 %v2758, %v2806
      %v2823 = vmul.f32 %v2759, %v2807
      %v2824 = vmul.f32 %v2760, %v2808
      %v2825 = vmul.f32 %v2761, %v2809
      %v2826 = vmul.f32 %v2762, %v2810
      %v2827 = vmul.f32 %v2763, %v2811
      %v2828 = vmul.f32 %v2764, %v2812
      %v2829 = vmul.f32 %v2765, %v2813
      %v2830 = vmul.f32 %v2766, %v2814
      %v2831 = vpack.c.bf16 %v2817, %v2815
      %v2832 = vpack.c.bf16 %v2818, %v2816
      %v2833 = vpack.c.bf16 %v2821, %v2819
      %v2834 = vpack.c.bf16 %v2822, %v2820
      %v2835 = vpack.c.bf16 %v2825, %v2823
      %v2836 = vpack.c.bf16 %v2826, %v2824
      %v2837 = vpack.c.bf16 %v2829, %v2827
      %v2838 = vpack.c.bf16 %v2830, %v2828
      %v2839 = vld [vmem:[%s13] sm:$0xf]
      %v2840 = vld [vmem:[%s13 + $0x4] sm:$0xf]
      %v2841 = vld [vmem:[%s13 + $0x8] sm:$0xf]
      %v2842 = vld [vmem:[%s13 + $0xc] sm:$0xf]
      %v2843 = vld [vmem:[%s13 + $0x10] sm:$0xf]
      %v2844 = vld [vmem:[%s13 + $0x14] sm:$0xf]
      %v2845 = vld [vmem:[%s13 + $0x18] sm:$0xf]
      %v2846 = vld [vmem:[%s13 + $0x1c] sm:$0xf]
      %v2847 = vld [vmem:[%s13 + $0x20] sm:$0xf]
      %v2848 = vld [vmem:[%s13 + $0x24] sm:$0xf]
      %v2849 = vld [vmem:[%s13 + $0x28] sm:$0xf]
      %v2850 = vld [vmem:[%s13 + $0x2c] sm:$0xf]
      %v2851 = vld [vmem:[%s13 + $0x30] sm:$0xf]
      %v2852 = vld [vmem:[%s13 + $0x34] sm:$0xf]
      %v2853 = vld [vmem:[%s13 + $0x38] sm:$0xf]
      %v2854 = vld [vmem:[%s13 + $0x3c] sm:$0xf]
      %v2855 = vld [vmem:[%s13 + $0x40] sm:$0xf]
      %v2856 = vld [vmem:[%s13 + $0x44] sm:$0xf]
      %v2857 = vld [vmem:[%s13 + $0x48] sm:$0xf]
      %v2858 = vld [vmem:[%s13 + $0x4c] sm:$0xf]
      %v2859 = vld [vmem:[%s13 + $0x50] sm:$0xf]
      %v2860 = vld [vmem:[%s13 + $0x54] sm:$0xf]
      %v2861 = vld [vmem:[%s13 + $0x58] sm:$0xf]
      %v2862 = vld [vmem:[%s13 + $0x5c] sm:$0xf]
      %v2863 = vld [vmem:[%s13 + $0x60] sm:$0xf]
      %v2864 = vld [vmem:[%s13 + $0x64] sm:$0xf]
      %v2865 = vld [vmem:[%s13 + $0x68] sm:$0xf]
      %v2866 = vld [vmem:[%s13 + $0x6c] sm:$0xf]
      %v2867 = vld [vmem:[%s13 + $0x70] sm:$0xf]
      %v2868 = vld [vmem:[%s13 + $0x74] sm:$0xf]
      %v2869 = vld [vmem:[%s13 + $0x78] sm:$0xf]
      %v2870 = vld [vmem:[%s13 + $0x7c] sm:$0xf]
      %v2903 = vunpack.c.l.b16 %v2839
      %v2904 = vunpack.c.l.b16 %v2840
      %v2905 = vunpack.c.l.b16 %v2841
      %v2906 = vunpack.c.l.b16 %v2842
      %v2907 = vunpack.c.l.b16 %v2843
      %v2908 = vunpack.c.l.b16 %v2844
      %v2909 = vunpack.c.l.b16 %v2845
      %v2910 = vunpack.c.l.b16 %v2846
      %v2911 = vunpack.c.l.b16 %v2847
      %v2912 = vunpack.c.l.b16 %v2848
      %v2913 = vunpack.c.l.b16 %v2849
      %v2914 = vunpack.c.l.b16 %v2850
      %v2915 = vunpack.c.l.b16 %v2851
      %v2916 = vunpack.c.l.b16 %v2852
      %v2917 = vunpack.c.l.b16 %v2853
      %v2918 = vunpack.c.l.b16 %v2854
      %v2919 = vunpack.c.l.b16 %v2855
      %v2920 = vunpack.c.l.b16 %v2856
      %v2921 = vunpack.c.l.b16 %v2857
      %v2922 = vunpack.c.l.b16 %v2858
      %v2923 = vunpack.c.l.b16 %v2859
      %v2924 = vunpack.c.l.b16 %v2860
      %v2925 = vunpack.c.l.b16 %v2861
      %v2926 = vunpack.c.l.b16 %v2862
      %v2927 = vunpack.c.l.b16 %v2863
      %v2928 = vunpack.c.l.b16 %v2864
      %v2929 = vunpack.c.l.b16 %v2865
      %v2930 = vunpack.c.l.b16 %v2866
      %v2931 = vunpack.c.l.b16 %v2867
      %v2932 = vunpack.c.l.b16 %v2868
      %v2933 = vunpack.c.l.b16 %v2869
      %v2934 = vunpack.c.l.b16 %v2870
      %v2935 = vpack.c.b16 %v2904, %v2903
      %v2936 = vpack.c.b16 %v2906, %v2905
      %v2937 = vpack.c.b16 %v2908, %v2907
      %v2938 = vpack.c.b16 %v2910, %v2909
      %v2939 = vpack.c.b16 %v2912, %v2911
      %v2940 = vpack.c.b16 %v2914, %v2913
      %v2941 = vpack.c.b16 %v2916, %v2915
      %v2942 = vpack.c.b16 %v2918, %v2917
      %v2943 = vpack.c.b16 %v2920, %v2919
      %v2944 = vpack.c.b16 %v2922, %v2921
      %v2945 = vpack.c.b16 %v2924, %v2923
      %v2946 = vpack.c.b16 %v2926, %v2925
      %v2947 = vpack.c.b16 %v2928, %v2927
      %v2948 = vpack.c.b16 %v2930, %v2929
      %v2949 = vpack.c.b16 %v2932, %v2931
      %v2950 = vpack.c.b16 %v2934, %v2933
      %2967 = vmatprep.subr.bf16.mxu0 0
      %2968 = vmatpush1.bf16.msra.mxu0 %v2942
      %2969 = vmatprep.subr.bf16.mxu0 0
      %2970 = vmatpush1.bf16.msra.mxu0 %v2941
      %2971 = vmatprep.subr.bf16.mxu0 0
      %2972 = vmatpush1.bf16.msra.mxu0 %v2940
      %2973 = vmatprep.subr.bf16.mxu0 0
      %2974 = vmatpush1.bf16.msra.mxu0 %v2939
      %2975 = vmatprep.subr.bf16.mxu0 0
      %2976 = vmatpush1.bf16.msra.mxu0 %v2938
      %2977 = vmatprep.subr.bf16.mxu0 0
      %2978 = vmatpush1.bf16.msra.mxu0 %v2937
      %2979 = vmatprep.subr.bf16.mxu0 0
      %2980 = vmatpush1.bf16.msra.mxu0 %v2936
      %2981 = vmatprep.subr.bf16.mxu0 0
      %2982 = vmatpush1.bf16.msra.mxu0 %v2935
      %2983 = vmatprep.subr.bf16.mxu0 0
      %2984 = vmatpush2.bf16.msra.mxu0 %v2950
      %2985 = vmatprep.subr.bf16.mxu0 0
      %2986 = vmatpush2.bf16.msra.mxu0 %v2949
      %2987 = vmatprep.subr.bf16.mxu0 0
      %2988 = vmatpush2.bf16.msra.mxu0 %v2948
      %2989 = vmatprep.subr.bf16.mxu0 0
      %2990 = vmatpush2.bf16.msra.mxu0 %v2947
      %2991 = vmatprep.subr.bf16.mxu0 0
      %2992 = vmatpush2.bf16.msra.mxu0 %v2946
      %2993 = vmatprep.subr.bf16.mxu0 0
      %2994 = vmatpush2.bf16.msra.mxu0 %v2945
      %2995 = vmatprep.subr.bf16.mxu0 0
      %2996 = vmatpush2.bf16.msra.mxu0 %v2944
      %2997 = vmatprep.subr.bf16.mxu0 0
      %2998 = vmatpush2.bf16.msra.mxu0 %v2943
      %2999 = vmatprep.mubr.bf16.mxu0 %v2832
      %3000 = vmatmul.mubr.bf16.gmra.mxu0 %v2831
      %v3001 = vpop.f32.mrf.mxu0
      %v3002 = vadd.f32 0.0, %v3001
      %v3003 = vpop.f32.mrf.mxu0
      %v3004 = vpop.f32.mrf.mxu0
      %v3005 = vadd.f32 0.0, %v3004
      %v3006 = vpop.f32.mrf.mxu0
      %3007 = vmatprep.mubr.bf16.mxu0 %v2834
      %3008 = vmatmul.mubr.bf16.gmra.mxu0 %v2833
      %v3009 = vpop.f32.mrf.mxu0
      %v3010 = vadd.f32 0.0, %v3009
      %v3011 = vpop.f32.mrf.mxu0
      %v3012 = vpop.f32.mrf.mxu0
      %v3013 = vadd.f32 0.0, %v3012
      %v3014 = vpop.f32.mrf.mxu0
      %3015 = vmatprep.mubr.bf16.mxu0 %v2836
      %3016 = vmatmul.mubr.bf16.gmra.mxu0 %v2835
      %v3017 = vpop.f32.mrf.mxu0
      %v3018 = vadd.f32 0.0, %v3017
      %v3019 = vpop.f32.mrf.mxu0
      %v3020 = vpop.f32.mrf.mxu0
      %v3021 = vadd.f32 0.0, %v3020
      %v3022 = vpop.f32.mrf.mxu0
      %3023 = vmatprep.mubr.bf16.mxu0 %v2838
      %3024 = vmatmul.mubr.bf16.gmra.mxu0 %v2837
      %v3025 = vpop.f32.mrf.mxu0
      %v3026 = vadd.f32 0.0, %v3025
      %v3027 = vpop.f32.mrf.mxu0
      %v3028 = vpop.f32.mrf.mxu0
      %v3029 = vadd.f32 0.0, %v3028
      %v3030 = vpop.f32.mrf.mxu0
      %3031 = vdwg.mxu0
      %v3032 = vadd.f32 %v2460, %v3002
      %v3033 = vadd.f32 %v2461, %v3005
      %v3034 = vadd.f32 %v2462, %v3010
      %v3035 = vadd.f32 %v2463, %v3013
      %v3036 = vadd.f32 %v2464, %v3018
      %v3037 = vadd.f32 %v2465, %v3021
      %v3038 = vadd.f32 %v2466, %v3026
      %v3039 = vadd.f32 %v2467, %v3029
      %v3040 = vld [vmem:[%s14] sm:$0x1]
      %v3042 = vlaneseq
      %v3043 = vshrl.u32 %v3042, 7
      %v3044 = vsub.s32 0, %v3043
      %v3045 = vrot.slane %v3040, %v3044
      %v3047 = vadd.f32 %v3032, %v3045
      %v3048 = vadd.f32 %v3033, %v3045
      %v3049 = vadd.f32 %v3034, %v3045
      %v3050 = vadd.f32 %v3035, %v3045
      %v3051 = vadd.f32 %v3036, %v3045
      %v3052 = vadd.f32 %v3037, %v3045
      %v3053 = vadd.f32 %v3038, %v3045
      %v3054 = vadd.f32 %v3039, %v3045
      %s3055 = scalar_lea.vmem %s3, 1
      %v3056 = vld [vmem:[%s3055] sm:$0x1]
      %s3057 = scalar_lea.vmem %s4, 1
      %v3058 = vld [vmem:[%s3057] sm:$0x1]
      %v3059 = vsel %vm795, %v3047, 0.0
      %3060 = vadd.xlane.f32.xlu0 %v3059
      %v3061 = vpop.xlane.xlu0 %3060
      %v3062 = vsel %vm795, %v3048, 0.0
      %3063 = vadd.xlane.f32.xlu0 %v3062
      %v3064 = vpop.xlane.xlu0 %3063
      %v3065 = vsel %vm795, %v3049, 0.0
      %3066 = vadd.xlane.f32.xlu0 %v3065
      %v3067 = vpop.xlane.xlu0 %3066
      %v3068 = vsel %vm795, %v3050, 0.0
      %3069 = vadd.xlane.f32.xlu0 %v3068
      %v3070 = vpop.xlane.xlu0 %3069
      %v3071 = vsel %vm795, %v3051, 0.0
      %3072 = vadd.xlane.f32.xlu0 %v3071
      %v3073 = vpop.xlane.xlu0 %3072
      %v3074 = vsel %vm795, %v3052, 0.0
      %3075 = vadd.xlane.f32.xlu0 %v3074
      %v3076 = vpop.xlane.xlu0 %3075
      %v3077 = vsel %vm795, %v3053, 0.0
      %3078 = vadd.xlane.f32.xlu0 %v3077
      %v3079 = vpop.xlane.xlu0 %3078
      %v3080 = vsel %vm795, %v3054, 0.0
      %3081 = vadd.xlane.f32.xlu0 %v3080
      %v3082 = vpop.xlane.xlu0 %3081
      %v3083 = vmul.f32 %v3061, %v820
      %v3084 = vmul.f32 %v3064, %v820
      %v3085 = vmul.f32 %v3067, %v820
      %v3086 = vmul.f32 %v3070, %v820
      %v3087 = vmul.f32 %v3073, %v820
      %v3088 = vmul.f32 %v3076, %v820
      %v3089 = vmul.f32 %v3079, %v820
      %v3090 = vmul.f32 %v3082, %v820
      %v3091 = vsub.f32 %v3047, %v3083
      %v3092 = vsub.f32 %v3048, %v3084
      %v3093 = vsub.f32 %v3049, %v3085
      %v3094 = vsub.f32 %v3050, %v3086
      %v3095 = vsub.f32 %v3051, %v3087
      %v3096 = vsub.f32 %v3052, %v3088
      %v3097 = vsub.f32 %v3053, %v3089
      %v3098 = vsub.f32 %v3054, %v3090
      %v3099 = vmul.f32 %v3091, %v3091
      %v3100 = vmul.f32 %v3092, %v3092
      %v3101 = vmul.f32 %v3093, %v3093
      %v3102 = vmul.f32 %v3094, %v3094
      %v3103 = vmul.f32 %v3095, %v3095
      %v3104 = vmul.f32 %v3096, %v3096
      %v3105 = vmul.f32 %v3097, %v3097
      %v3106 = vmul.f32 %v3098, %v3098
      %v3107 = vsel %vm795, %v3099, 0.0
      %3108 = vadd.xlane.f32.xlu0 %v3107
      %v3109 = vpop.xlane.xlu0 %3108
      %v3110 = vsel %vm795, %v3100, 0.0
      %3111 = vadd.xlane.f32.xlu0 %v3110
      %v3112 = vpop.xlane.xlu0 %3111
      %v3113 = vsel %vm795, %v3101, 0.0
      %3114 = vadd.xlane.f32.xlu0 %v3113
      %v3115 = vpop.xlane.xlu0 %3114
      %v3116 = vsel %vm795, %v3102, 0.0
      %3117 = vadd.xlane.f32.xlu0 %v3116
      %v3118 = vpop.xlane.xlu0 %3117
      %v3119 = vsel %vm795, %v3103, 0.0
      %3120 = vadd.xlane.f32.xlu0 %v3119
      %v3121 = vpop.xlane.xlu0 %3120
      %v3122 = vsel %vm795, %v3104, 0.0
      %3123 = vadd.xlane.f32.xlu0 %v3122
      %v3124 = vpop.xlane.xlu0 %3123
      %v3125 = vsel %vm795, %v3105, 0.0
      %3126 = vadd.xlane.f32.xlu0 %v3125
      %v3127 = vpop.xlane.xlu0 %3126
      %v3128 = vsel %vm795, %v3106, 0.0
      %3129 = vadd.xlane.f32.xlu0 %v3128
      %v3130 = vpop.xlane.xlu0 %3129
      %v3131 = vmul.f32 %v3109, %v820
      %v3132 = vmul.f32 %v3112, %v820
      %v3133 = vmul.f32 %v3115, %v820
      %v3134 = vmul.f32 %v3118, %v820
      %v3135 = vmul.f32 %v3121, %v820
      %v3136 = vmul.f32 %v3124, %v820
      %v3137 = vmul.f32 %v3127, %v820
      %v3138 = vmul.f32 %v3130, %v820
      %v3139 = vadd.f32 %v3131, 1e-06
      %v3140 = vadd.f32 %v3132, 1e-06
      %v3141 = vadd.f32 %v3133, 1e-06
      %v3142 = vadd.f32 %v3134, 1e-06
      %v3143 = vadd.f32 %v3135, 1e-06
      %v3144 = vadd.f32 %v3136, 1e-06
      %v3145 = vadd.f32 %v3137, 1e-06
      %v3146 = vadd.f32 %v3138, 1e-06
      %v3147 = vrsqrt.pop %v3139
      %v3148 = vrsqrt.pop %v3140
      %v3149 = vrsqrt.pop %v3141
      %v3150 = vrsqrt.pop %v3142
      %v3151 = vrsqrt.pop %v3143
      %v3152 = vrsqrt.pop %v3144
      %v3153 = vrsqrt.pop %v3145
      %v3154 = vrsqrt.pop %v3146
      %v3155 = vmul.f32 %v3091, %v3147
      %v3156 = vmul.f32 %v3092, %v3148
      %v3157 = vmul.f32 %v3093, %v3149
      %v3158 = vmul.f32 %v3094, %v3150
      %v3159 = vmul.f32 %v3095, %v3151
      %v3160 = vmul.f32 %v3096, %v3152
      %v3161 = vmul.f32 %v3097, %v3153
      %v3162 = vmul.f32 %v3098, %v3154
      %v3164 = vlaneseq
      %v3165 = vshrl.u32 %v3164, 7
      %v3166 = vsub.s32 0, %v3165
      %v3167 = vrot.slane %v3056, %v3166
      %v3169 = vmul.f32 %v3155, %v3167
      %v3170 = vmul.f32 %v3156, %v3167
      %v3171 = vmul.f32 %v3157, %v3167
      %v3172 = vmul.f32 %v3158, %v3167
      %v3173 = vmul.f32 %v3159, %v3167
      %v3174 = vmul.f32 %v3160, %v3167
      %v3175 = vmul.f32 %v3161, %v3167
      %v3176 = vmul.f32 %v3162, %v3167
      %v3178 = vlaneseq
      %v3179 = vshrl.u32 %v3178, 7
      %v3180 = vsub.s32 0, %v3179
      %v3181 = vrot.slane %v3058, %v3180
      %v3183 = vadd.f32 %v3169, %v3181
      %v3184 = vadd.f32 %v3170, %v3181
      %v3185 = vadd.f32 %v3171, %v3181
      %v3186 = vadd.f32 %v3172, %v3181
      %v3187 = vadd.f32 %v3173, %v3181
      %v3188 = vadd.f32 %v3174, %v3181
      %v3189 = vadd.f32 %v3175, %v3181
      %v3190 = vadd.f32 %v3176, %v3181
      %v3191 = vpack.c.bf16 %v3184, %v3183
      %v3192 = vpack.c.bf16 %v3186, %v3185
      %v3193 = vpack.c.bf16 %v3188, %v3187
      %v3194 = vpack.c.bf16 %v3190, %v3189
      %s3195 = scalar_lea.vmem %s5, 64
      %v3196 = vld [vmem:[%s3195] sm:$0xff]
      %v3197 = vld [vmem:[%s3195 + $0x8] sm:$0xff]
      %v3198 = vld [vmem:[%s3195 + $0x10] sm:$0xff]
      %v3199 = vld [vmem:[%s3195 + $0x18] sm:$0xff]
      %v3200 = vld [vmem:[%s3195 + $0x20] sm:$0xff]
      %v3201 = vld [vmem:[%s3195 + $0x28] sm:$0xff]
      %v3202 = vld [vmem:[%s3195 + $0x30] sm:$0xff]
      %v3203 = vld [vmem:[%s3195 + $0x38] sm:$0xff]
      %s3204 = scalar_lea.vmem %s6, 2
      %v3205 = vld [vmem:[%s3204] sm:$0x3]
      %v3207 = vlaneseq
      %v3208 = vshrl.u32 %v3207, 7
      %v3209 = vsub.s32 0, %v3208
      %v3210 = vrot.slane %v3205, %v3209
      %v3211 = vlaneseq
      %v3212 = vshrl.u32 %v3211, 7
      %v3213 = vsub.s32 1, %v3212
      %v3214 = vrot.slane %v3205, %v3213
      %v3225 = vunpack.c.l.b16 %v3196
      %v3226 = vunpack.c.h.b16 %v3196
      %v3227 = vunpack.c.l.b16 %v3197
      %v3228 = vunpack.c.h.b16 %v3197
      %v3229 = vunpack.c.l.b16 %v3198
      %v3230 = vunpack.c.h.b16 %v3198
      %v3231 = vunpack.c.l.b16 %v3199
      %v3232 = vunpack.c.h.b16 %v3199
      %v3233 = vunpack.c.l.b16 %v3200
      %v3234 = vunpack.c.h.b16 %v3200
      %v3235 = vunpack.c.l.b16 %v3201
      %v3236 = vunpack.c.h.b16 %v3201
      %v3237 = vunpack.c.l.b16 %v3202
      %v3238 = vunpack.c.h.b16 %v3202
      %v3239 = vunpack.c.l.b16 %v3203
      %v3240 = vunpack.c.h.b16 %v3203
      %v3241 = vpack.c.b16 %v3227, %v3225
      %v3242 = vpack.c.b16 %v3228, %v3226
      %v3243 = vpack.c.b16 %v3231, %v3229
      %v3244 = vpack.c.b16 %v3232, %v3230
      %v3245 = vpack.c.b16 %v3235, %v3233
      %v3246 = vpack.c.b16 %v3236, %v3234
      %v3247 = vpack.c.b16 %v3239, %v3237
      %v3248 = vpack.c.b16 %v3240, %v3238
      %v3258 = vsel %vm795, %v3191, 0
      %v3261 = vsel %vm795, %v3192, 0
      %v3264 = vsel %vm795, %v3193, 0
      %v3267 = vsel %vm795, %v3194, 0
      %3269 = vmatprep.subr.bf16.mxu0 0
      %3270 = vmatpush1.bf16.msra.mxu0 0
      %3271 = vmatprep.subr.bf16.mxu0 0
      %3272 = vmatpush1.bf16.msra.mxu0 0
      %3273 = vmatprep.subr.bf16.mxu0 0
      %3274 = vmatpush1.bf16.msra.mxu0 0
      %3275 = vmatprep.subr.bf16.mxu0 0
      %3276 = vmatpush1.bf16.msra.mxu0 0
      %3277 = vmatprep.subr.bf16.mxu0 %v3248
      %3278 = vmatpush1.bf16.msra.mxu0 %v3247
      %3279 = vmatprep.subr.bf16.mxu0 %v3246
      %3280 = vmatpush1.bf16.msra.mxu0 %v3245
      %3281 = vmatprep.subr.bf16.mxu0 %v3244
      %3282 = vmatpush1.bf16.msra.mxu0 %v3243
      %3283 = vmatprep.subr.bf16.mxu0 %v3242
      %3284 = vmatpush1.bf16.msra.mxu0 %v3241
      %3285 = vmatprep.subr.bf16.mxu0 0
      %3286 = vmatpush2.bf16.msra.mxu0 0
      %3287 = vmatprep.subr.bf16.mxu0 0
      %3288 = vmatpush2.bf16.msra.mxu0 0
      %3289 = vmatprep.subr.bf16.mxu0 0
      %3290 = vmatpush2.bf16.msra.mxu0 0
      %3291 = vmatprep.subr.bf16.mxu0 0
      %3292 = vmatpush2.bf16.msra.mxu0 0
      %3293 = vmatprep.subr.bf16.mxu0 0
      %3294 = vmatpush2.bf16.msra.mxu0 0
      %3295 = vmatprep.subr.bf16.mxu0 0
      %3296 = vmatpush2.bf16.msra.mxu0 0
      %3297 = vmatprep.subr.bf16.mxu0 0
      %3298 = vmatpush2.bf16.msra.mxu0 0
      %3299 = vmatprep.subr.bf16.mxu0 0
      %3300 = vmatpush2.bf16.msra.mxu0 0
      %3301 = vmatprep.mubr.bf16.mxu0 0
      %3302 = vmatmul.mubr.bf16.gmra.mxu0 %v3258
      %v3303 = vpop.f32.mrf.mxu0
      %v3304 = vadd.f32 %v3210, %v3303
      %v3305 = vpop.f32.mrf.mxu0
      %v3306 = vadd.f32 %v3214, %v3305
      %v3307 = vpop.f32.mrf.mxu0
      %v3308 = vadd.f32 %v3210, %v3307
      %v3309 = vpop.f32.mrf.mxu0
      %v3310 = vadd.f32 %v3214, %v3309
      %3311 = vmatprep.mubr.bf16.mxu0 0
      %3312 = vmatmul.mubr.bf16.gmra.mxu0 %v3261
      %v3313 = vpop.f32.mrf.mxu0
      %v3314 = vadd.f32 %v3210, %v3313
      %v3315 = vpop.f32.mrf.mxu0
      %v3316 = vadd.f32 %v3214, %v3315
      %v3317 = vpop.f32.mrf.mxu0
      %v3318 = vadd.f32 %v3210, %v3317
      %v3319 = vpop.f32.mrf.mxu0
      %v3320 = vadd.f32 %v3214, %v3319
      %3321 = vmatprep.mubr.bf16.mxu0 0
      %3322 = vmatmul.mubr.bf16.gmra.mxu0 %v3264
      %v3323 = vpop.f32.mrf.mxu0
      %v3324 = vadd.f32 %v3210, %v3323
      %v3325 = vpop.f32.mrf.mxu0
      %v3326 = vadd.f32 %v3214, %v3325
      %v3327 = vpop.f32.mrf.mxu0
      %v3328 = vadd.f32 %v3210, %v3327
      %v3329 = vpop.f32.mrf.mxu0
      %v3330 = vadd.f32 %v3214, %v3329
      %3331 = vmatprep.mubr.bf16.mxu0 0
      %3332 = vmatmul.mubr.bf16.gmra.mxu0 %v3267
      %v3333 = vpop.f32.mrf.mxu0
      %v3334 = vadd.f32 %v3210, %v3333
      %v3335 = vpop.f32.mrf.mxu0
      %v3336 = vadd.f32 %v3214, %v3335
      %v3337 = vpop.f32.mrf.mxu0
      %v3338 = vadd.f32 %v3210, %v3337
      %v3339 = vpop.f32.mrf.mxu0
      %v3340 = vadd.f32 %v3214, %v3339
      %3341 = vdwg.mxu0
      %v3342 = vpack.c.bf16 %v3308, %v3304
      %v3343 = vpack.c.bf16 %v3318, %v3314
      %v3344 = vpack.c.bf16 %v3328, %v3324
      %v3345 = vpack.c.bf16 %v3338, %v3334
      %3350 = vrot.lane.b32.xlu0 %v3342, 64
      %v3351 = vpop.permute.xlu0 %3350
      %3352 = vrot.lane.b32.xlu0 %v3343, 64
      %v3353 = vpop.permute.xlu0 %3352
      %3354 = vrot.lane.b32.xlu0 %v3344, 64
      %v3355 = vpop.permute.xlu0 %3354
      %3356 = vrot.lane.b32.xlu0 %v3345, 64
      %v3357 = vpop.permute.xlu0 %3356
      %v3359 = vsel %vm1094, %v3342, 0
      %v3362 = vsel %vm1094, %v3343, 0
      %v3365 = vsel %vm1094, %v3344, 0
      %v3368 = vsel %vm1094, %v3345, 0
      %v3371 = vsel %vm1094, %v3351, 0
      %v3374 = vsel %vm1094, %v3353, 0
      %v3377 = vsel %vm1094, %v3355, 0
      %v3380 = vsel %vm1094, %v3357, 0
      %3382 = vmatprep.subr.bf16.mxu0 0
      %3383 = vmatpush1.bf16.xpose.msra.mxu0 0
      %3384 = vmatprep.subr.bf16.mxu0 0
      %3385 = vmatpush1.bf16.xpose.msra.mxu0 0
      %3386 = vmatprep.subr.bf16.mxu0 0
      %3387 = vmatpush1.bf16.xpose.msra.mxu0 0
      %3388 = vmatprep.subr.bf16.mxu0 0
      %3389 = vmatpush1.bf16.xpose.msra.mxu0 0
      %3390 = vmatprep.subr.bf16.mxu0 0
      %3391 = vmatpush1.bf16.xpose.msra.mxu0 %v3380
      %3392 = vmatprep.subr.bf16.mxu0 0
      %3393 = vmatpush1.bf16.xpose.msra.mxu0 %v3377
      %3394 = vmatprep.subr.bf16.mxu0 0
      %3395 = vmatpush1.bf16.xpose.msra.mxu0 %v3374
      %3396 = vmatprep.subr.bf16.mxu0 0
      %3397 = vmatpush1.bf16.xpose.msra.mxu0 %v3371
      %3398 = vmatprep.subr.bf16.mxu0 0
      %3399 = vmatpush2.bf16.xpose.msra.mxu0 0
      %3400 = vmatprep.subr.bf16.mxu0 0
      %3401 = vmatpush2.bf16.xpose.msra.mxu0 0
      %3402 = vmatprep.subr.bf16.mxu0 0
      %3403 = vmatpush2.bf16.xpose.msra.mxu0 0
      %3404 = vmatprep.subr.bf16.mxu0 0
      %3405 = vmatpush2.bf16.xpose.msra.mxu0 0
      %3406 = vmatprep.subr.bf16.mxu0 0
      %3407 = vmatpush2.bf16.xpose.msra.mxu0 0
      %3408 = vmatprep.subr.bf16.mxu0 0
      %3409 = vmatpush2.bf16.xpose.msra.mxu0 0
      %3410 = vmatprep.subr.bf16.mxu0 0
      %3411 = vmatpush2.bf16.xpose.msra.mxu0 0
      %3412 = vmatprep.subr.bf16.mxu0 0
      %3413 = vmatpush2.bf16.xpose.msra.mxu0 0
      %3414 = vmatprep.mubr.bf16.mxu0 0
      %3415 = vmatmul.mubr.bf16.gmra.mxu0 %v3359
      %v3416 = vpop.f32.mrf.mxu0
      %v3417 = vadd.f32 0.0, %v3416
      %v3418 = vpop.f32.mrf.mxu0
      %v3419 = vpop.f32.mrf.mxu0
      %v3420 = vadd.f32 0.0, %v3419
      %v3421 = vpop.f32.mrf.mxu0
      %3422 = vmatprep.mubr.bf16.mxu0 0
      %3423 = vmatmul.mubr.bf16.gmra.mxu0 %v3362
      %v3424 = vpop.f32.mrf.mxu0
      %v3425 = vadd.f32 0.0, %v3424
      %v3426 = vpop.f32.mrf.mxu0
      %v3427 = vpop.f32.mrf.mxu0
      %v3428 = vadd.f32 0.0, %v3427
      %v3429 = vpop.f32.mrf.mxu0
      %3430 = vmatprep.mubr.bf16.mxu0 0
      %3431 = vmatmul.mubr.bf16.gmra.mxu0 %v3365
      %v3432 = vpop.f32.mrf.mxu0
      %v3433 = vadd.f32 0.0, %v3432
      %v3434 = vpop.f32.mrf.mxu0
      %v3435 = vpop.f32.mrf.mxu0
      %v3436 = vadd.f32 0.0, %v3435
      %v3437 = vpop.f32.mrf.mxu0
      %3438 = vmatprep.mubr.bf16.mxu0 0
      %3439 = vmatmul.mubr.bf16.gmra.mxu0 %v3368
      %v3440 = vpop.f32.mrf.mxu0
      %v3441 = vadd.f32 0.0, %v3440
      %v3442 = vpop.f32.mrf.mxu0
      %v3443 = vpop.f32.mrf.mxu0
      %v3444 = vadd.f32 0.0, %v3443
      %v3445 = vpop.f32.mrf.mxu0
      %3446 = vdwg.mxu0
      %v3447 = vsel %vm795, %v3417, -inf
      %3448 = vmax.xlane.f32.xlu0 %v3447
      %v3449 = vpop.xlane.xlu0 %3448
      %v3450 = vsel %vm795, %v3420, -inf
      %3451 = vmax.xlane.f32.xlu0 %v3450
      %v3452 = vpop.xlane.xlu0 %3451
      %v3453 = vsel %vm795, %v3425, -inf
      %3454 = vmax.xlane.f32.xlu0 %v3453
      %v3455 = vpop.xlane.xlu0 %3454
      %v3456 = vsel %vm795, %v3428, -inf
      %3457 = vmax.xlane.f32.xlu0 %v3456
      %v3458 = vpop.xlane.xlu0 %3457
      %v3459 = vsel %vm795, %v3433, -inf
      %3460 = vmax.xlane.f32.xlu0 %v3459
      %v3461 = vpop.xlane.xlu0 %3460
      %v3462 = vsel %vm795, %v3436, -inf
      %3463 = vmax.xlane.f32.xlu0 %v3462
      %v3464 = vpop.xlane.xlu0 %3463
      %v3465 = vsel %vm795, %v3441, -inf
      %3466 = vmax.xlane.f32.xlu0 %v3465
      %v3467 = vpop.xlane.xlu0 %3466
      %v3468 = vsel %vm795, %v3444, -inf
      %3469 = vmax.xlane.f32.xlu0 %v3468
      %v3470 = vpop.xlane.xlu0 %3469
      %v3471 = vsub.f32 %v3417, %v3449
      %v3472 = vsub.f32 %v3420, %v3452
      %v3473 = vsub.f32 %v3425, %v3455
      %v3474 = vsub.f32 %v3428, %v3458
      %v3475 = vsub.f32 %v3433, %v3461
      %v3476 = vsub.f32 %v3436, %v3464
      %v3477 = vsub.f32 %v3441, %v3467
      %v3478 = vsub.f32 %v3444, %v3470
      %v3479 = vmul.f32 %v3471, 1.442695
      %v3480 = vpow.pop %v3479
      %v3481 = vmul.f32 %v3472, 1.442695
      %v3482 = vpow.pop %v3481
      %v3483 = vmul.f32 %v3473, 1.442695
      %v3484 = vpow.pop %v3483
      %v3485 = vmul.f32 %v3474, 1.442695
      %v3486 = vpow.pop %v3485
      %v3487 = vmul.f32 %v3475, 1.442695
      %v3488 = vpow.pop %v3487
      %v3489 = vmul.f32 %v3476, 1.442695
      %v3490 = vpow.pop %v3489
      %v3491 = vmul.f32 %v3477, 1.442695
      %v3492 = vpow.pop %v3491
      %v3493 = vmul.f32 %v3478, 1.442695
      %v3494 = vpow.pop %v3493
      %v3495 = vsel %vm795, %v3480, 0.0
      %3496 = vadd.xlane.f32.xlu0 %v3495
      %v3497 = vpop.xlane.xlu0 %3496
      %v3498 = vsel %vm795, %v3482, 0.0
      %3499 = vadd.xlane.f32.xlu0 %v3498
      %v3500 = vpop.xlane.xlu0 %3499
      %v3501 = vsel %vm795, %v3484, 0.0
      %3502 = vadd.xlane.f32.xlu0 %v3501
      %v3503 = vpop.xlane.xlu0 %3502
      %v3504 = vsel %vm795, %v3486, 0.0
      %3505 = vadd.xlane.f32.xlu0 %v3504
      %v3506 = vpop.xlane.xlu0 %3505
      %v3507 = vsel %vm795, %v3488, 0.0
      %3508 = vadd.xlane.f32.xlu0 %v3507
      %v3509 = vpop.xlane.xlu0 %3508
      %v3510 = vsel %vm795, %v3490, 0.0
      %3511 = vadd.xlane.f32.xlu0 %v3510
      %v3512 = vpop.xlane.xlu0 %3511
      %v3513 = vsel %vm795, %v3492, 0.0
      %3514 = vadd.xlane.f32.xlu0 %v3513
      %v3515 = vpop.xlane.xlu0 %3514
      %v3516 = vsel %vm795, %v3494, 0.0
      %3517 = vadd.xlane.f32.xlu0 %v3516
      %v3518 = vpop.xlane.xlu0 %3517
      %v3519 = vrcp.pop %v3497
      %v3520 = vrcp.pop %v3500
      %v3521 = vrcp.pop %v3503
      %v3522 = vrcp.pop %v3506
      %v3523 = vrcp.pop %v3509
      %v3524 = vrcp.pop %v3512
      %v3525 = vrcp.pop %v3515
      %v3526 = vrcp.pop %v3518
      %v3527 = vmul.f32 %v3480, %v3519
      %v3528 = vmul.f32 %v3482, %v3520
      %v3529 = vmul.f32 %v3484, %v3521
      %v3530 = vmul.f32 %v3486, %v3522
      %v3531 = vmul.f32 %v3488, %v3523
      %v3532 = vmul.f32 %v3490, %v3524
      %v3533 = vmul.f32 %v3492, %v3525
      %v3534 = vmul.f32 %v3494, %v3526
      %v3535 = vpack.c.bf16 %v3528, %v3527
      %v3536 = vpack.c.bf16 %v3530, %v3529
      %v3537 = vpack.c.bf16 %v3532, %v3531
      %v3538 = vpack.c.bf16 %v3534, %v3533
      %v3539 = vpack.c.bf16 %v3310, %v3306
      %v3540 = vpack.c.bf16 %v3320, %v3316
      %v3541 = vpack.c.bf16 %v3330, %v3326
      %v3542 = vpack.c.bf16 %v3340, %v3336
      %v3544 = vsel %vm795, %v3535, 0
      %v3547 = vsel %vm795, %v3536, 0
      %v3550 = vsel %vm795, %v3537, 0
      %v3553 = vsel %vm795, %v3538, 0
      %3555 = vmatprep.subr.bf16.mxu0 0
      %3556 = vmatpush1.bf16.msra.mxu0 0
      %3557 = vmatprep.subr.bf16.mxu0 0
      %3558 = vmatpush1.bf16.msra.mxu0 0
      %3559 = vmatprep.subr.bf16.mxu0 0
      %3560 = vmatpush1.bf16.msra.mxu0 0
      %3561 = vmatprep.subr.bf16.mxu0 0
      %3562 = vmatpush1.bf16.msra.mxu0 0
      %3563 = vmatprep.subr.bf16.mxu0 0
      %3564 = vmatpush1.bf16.msra.mxu0 %v3542
      %3565 = vmatprep.subr.bf16.mxu0 0
      %3566 = vmatpush1.bf16.msra.mxu0 %v3541
      %3567 = vmatprep.subr.bf16.mxu0 0
      %3568 = vmatpush1.bf16.msra.mxu0 %v3540
      %3569 = vmatprep.subr.bf16.mxu0 0
      %3570 = vmatpush1.bf16.msra.mxu0 %v3539
      %3571 = vmatprep.subr.bf16.mxu0 0
      %3572 = vmatpush2.bf16.msra.mxu0 0
      %3573 = vmatprep.subr.bf16.mxu0 0
      %3574 = vmatpush2.bf16.msra.mxu0 0
      %3575 = vmatprep.subr.bf16.mxu0 0
      %3576 = vmatpush2.bf16.msra.mxu0 0
      %3577 = vmatprep.subr.bf16.mxu0 0
      %3578 = vmatpush2.bf16.msra.mxu0 0
      %3579 = vmatprep.subr.bf16.mxu0 0
      %3580 = vmatpush2.bf16.msra.mxu0 0
      %3581 = vmatprep.subr.bf16.mxu0 0
      %3582 = vmatpush2.bf16.msra.mxu0 0
      %3583 = vmatprep.subr.bf16.mxu0 0
      %3584 = vmatpush2.bf16.msra.mxu0 0
      %3585 = vmatprep.subr.bf16.mxu0 0
      %3586 = vmatpush2.bf16.msra.mxu0 0
      %3587 = vmatprep.mubr.bf16.mxu0 0
      %3588 = vmatmul.mubr.bf16.gmra.mxu0 %v3544
      %v3589 = vpop.f32.mrf.mxu0
      %v3590 = vadd.f32 0.0, %v3589
      %v3591 = vpop.f32.mrf.mxu0
      %v3592 = vpop.f32.mrf.mxu0
      %v3593 = vadd.f32 0.0, %v3592
      %v3594 = vpop.f32.mrf.mxu0
      %3595 = vmatprep.mubr.bf16.mxu0 0
      %3596 = vmatmul.mubr.bf16.gmra.mxu0 %v3547
      %v3597 = vpop.f32.mrf.mxu0
      %v3598 = vadd.f32 0.0, %v3597
      %v3599 = vpop.f32.mrf.mxu0
      %v3600 = vpop.f32.mrf.mxu0
      %v3601 = vadd.f32 0.0, %v3600
      %v3602 = vpop.f32.mrf.mxu0
      %3603 = vmatprep.mubr.bf16.mxu0 0
      %3604 = vmatmul.mubr.bf16.gmra.mxu0 %v3550
      %v3605 = vpop.f32.mrf.mxu0
      %v3606 = vadd.f32 0.0, %v3605
      %v3607 = vpop.f32.mrf.mxu0
      %v3608 = vpop.f32.mrf.mxu0
      %v3609 = vadd.f32 0.0, %v3608
      %v3610 = vpop.f32.mrf.mxu0
      %3611 = vmatprep.mubr.bf16.mxu0 0
      %3612 = vmatmul.mubr.bf16.gmra.mxu0 %v3553
      %v3613 = vpop.f32.mrf.mxu0
      %v3614 = vadd.f32 0.0, %v3613
      %v3615 = vpop.f32.mrf.mxu0
      %v3616 = vpop.f32.mrf.mxu0
      %v3617 = vadd.f32 0.0, %v3616
      %v3618 = vpop.f32.mrf.mxu0
      %3619 = vdwg.mxu0
      %3620 = vrot.lane.b32.xlu0 %v3342, 112
      %v3621 = vpop.permute.xlu0 %3620
      %3622 = vrot.lane.b32.xlu0 %v3343, 112
      %v3623 = vpop.permute.xlu0 %3622
      %3624 = vrot.lane.b32.xlu0 %v3344, 112
      %v3625 = vpop.permute.xlu0 %3624
      %3626 = vrot.lane.b32.xlu0 %v3345, 112
      %v3627 = vpop.permute.xlu0 %3626
      %3628 = vrot.lane.b32.xlu0 %v3342, 48
      %v3629 = vpop.permute.xlu0 %3628
      %3630 = vrot.lane.b32.xlu0 %v3343, 48
      %v3631 = vpop.permute.xlu0 %3630
      %3632 = vrot.lane.b32.xlu0 %v3344, 48
      %v3633 = vpop.permute.xlu0 %3632
      %3634 = vrot.lane.b32.xlu0 %v3345, 48
      %v3635 = vpop.permute.xlu0 %3634
      %v3637 = vsel %vm1094, %v3621, 0
      %v3640 = vsel %vm1094, %v3623, 0
      %v3643 = vsel %vm1094, %v3625, 0
      %v3646 = vsel %vm1094, %v3627, 0
      %v3649 = vsel %vm1094, %v3629, 0
      %v3652 = vsel %vm1094, %v3631, 0
      %v3655 = vsel %vm1094, %v3633, 0
      %v3658 = vsel %vm1094, %v3635, 0
      %3660 = vmatprep.subr.bf16.mxu0 0
      %3661 = vmatpush1.bf16.xpose.msra.mxu0 0
      %3662 = vmatprep.subr.bf16.mxu0 0
      %3663 = vmatpush1.bf16.xpose.msra.mxu0 0
      %3664 = vmatprep.subr.bf16.mxu0 0
      %3665 = vmatpush1.bf16.xpose.msra.mxu0 0
      %3666 = vmatprep.subr.bf16.mxu0 0
      %3667 = vmatpush1.bf16.xpose.msra.mxu0 0
      %3668 = vmatprep.subr.bf16.mxu0 0
      %3669 = vmatpush1.bf16.xpose.msra.mxu0 %v3658
      %3670 = vmatprep.subr.bf16.mxu0 0
      %3671 = vmatpush1.bf16.xpose.msra.mxu0 %v3655
      %3672 = vmatprep.subr.bf16.mxu0 0
      %3673 = vmatpush1.bf16.xpose.msra.mxu0 %v3652
      %3674 = vmatprep.subr.bf16.mxu0 0
      %3675 = vmatpush1.bf16.xpose.msra.mxu0 %v3649
      %3676 = vmatprep.subr.bf16.mxu0 0
      %3677 = vmatpush2.bf16.xpose.msra.mxu0 0
      %3678 = vmatprep.subr.bf16.mxu0 0
      %3679 = vmatpush2.bf16.xpose.msra.mxu0 0
      %3680 = vmatprep.subr.bf16.mxu0 0
      %3681 = vmatpush2.bf16.xpose.msra.mxu0 0
      %3682 = vmatprep.subr.bf16.mxu0 0
      %3683 = vmatpush2.bf16.xpose.msra.mxu0 0
      %3684 = vmatprep.subr.bf16.mxu0 0
      %3685 = vmatpush2.bf16.xpose.msra.mxu0 0
      %3686 = vmatprep.subr.bf16.mxu0 0
      %3687 = vmatpush2.bf16.xpose.msra.mxu0 0
      %3688 = vmatprep.subr.bf16.mxu0 0
      %3689 = vmatpush2.bf16.xpose.msra.mxu0 0
      %3690 = vmatprep.subr.bf16.mxu0 0
      %3691 = vmatpush2.bf16.xpose.msra.mxu0 0
      %3692 = vmatprep.mubr.bf16.mxu0 0
      %3693 = vmatmul.mubr.bf16.gmra.mxu0 %v3637
      %v3694 = vpop.f32.mrf.mxu0
      %v3695 = vadd.f32 0.0, %v3694
      %v3696 = vpop.f32.mrf.mxu0
      %v3697 = vpop.f32.mrf.mxu0
      %v3698 = vadd.f32 0.0, %v3697
      %v3699 = vpop.f32.mrf.mxu0
      %3700 = vmatprep.mubr.bf16.mxu0 0
      %3701 = vmatmul.mubr.bf16.gmra.mxu0 %v3640
      %v3702 = vpop.f32.mrf.mxu0
      %v3703 = vadd.f32 0.0, %v3702
      %v3704 = vpop.f32.mrf.mxu0
      %v3705 = vpop.f32.mrf.mxu0
      %v3706 = vadd.f32 0.0, %v3705
      %v3707 = vpop.f32.mrf.mxu0
      %3708 = vmatprep.mubr.bf16.mxu0 0
      %3709 = vmatmul.mubr.bf16.gmra.mxu0 %v3643
      %v3710 = vpop.f32.mrf.mxu0
      %v3711 = vadd.f32 0.0, %v3710
      %v3712 = vpop.f32.mrf.mxu0
      %v3713 = vpop.f32.mrf.mxu0
      %v3714 = vadd.f32 0.0, %v3713
      %v3715 = vpop.f32.mrf.mxu0
      %3716 = vmatprep.mubr.bf16.mxu0 0
      %3717 = vmatmul.mubr.bf16.gmra.mxu0 %v3646
      %v3718 = vpop.f32.mrf.mxu0
      %v3719 = vadd.f32 0.0, %v3718
      %v3720 = vpop.f32.mrf.mxu0
      %v3721 = vpop.f32.mrf.mxu0
      %v3722 = vadd.f32 0.0, %v3721
      %v3723 = vpop.f32.mrf.mxu0
      %3724 = vdwg.mxu0
      %v3725 = vsel %vm795, %v3695, -inf
      %3726 = vmax.xlane.f32.xlu0 %v3725
      %v3727 = vpop.xlane.xlu0 %3726
      %v3728 = vsel %vm795, %v3698, -inf
      %3729 = vmax.xlane.f32.xlu0 %v3728
      %v3730 = vpop.xlane.xlu0 %3729
      %v3731 = vsel %vm795, %v3703, -inf
      %3732 = vmax.xlane.f32.xlu0 %v3731
      %v3733 = vpop.xlane.xlu0 %3732
      %v3734 = vsel %vm795, %v3706, -inf
      %3735 = vmax.xlane.f32.xlu0 %v3734
      %v3736 = vpop.xlane.xlu0 %3735
      %v3737 = vsel %vm795, %v3711, -inf
      %3738 = vmax.xlane.f32.xlu0 %v3737
      %v3739 = vpop.xlane.xlu0 %3738
      %v3740 = vsel %vm795, %v3714, -inf
      %3741 = vmax.xlane.f32.xlu0 %v3740
      %v3742 = vpop.xlane.xlu0 %3741
      %v3743 = vsel %vm795, %v3719, -inf
      %3744 = vmax.xlane.f32.xlu0 %v3743
      %v3745 = vpop.xlane.xlu0 %3744
      %v3746 = vsel %vm795, %v3722, -inf
      %3747 = vmax.xlane.f32.xlu0 %v3746
      %v3748 = vpop.xlane.xlu0 %3747
      %v3749 = vsub.f32 %v3695, %v3727
      %v3750 = vsub.f32 %v3698, %v3730
      %v3751 = vsub.f32 %v3703, %v3733
      %v3752 = vsub.f32 %v3706, %v3736
      %v3753 = vsub.f32 %v3711, %v3739
      %v3754 = vsub.f32 %v3714, %v3742
      %v3755 = vsub.f32 %v3719, %v3745
      %v3756 = vsub.f32 %v3722, %v3748
      %v3757 = vmul.f32 %v3749, 1.442695
      %v3758 = vpow.pop %v3757
      %v3759 = vmul.f32 %v3750, 1.442695
      %v3760 = vpow.pop %v3759
      %v3761 = vmul.f32 %v3751, 1.442695
      %v3762 = vpow.pop %v3761
      %v3763 = vmul.f32 %v3752, 1.442695
      %v3764 = vpow.pop %v3763
      %v3765 = vmul.f32 %v3753, 1.442695
      %v3766 = vpow.pop %v3765
      %v3767 = vmul.f32 %v3754, 1.442695
      %v3768 = vpow.pop %v3767
      %v3769 = vmul.f32 %v3755, 1.442695
      %v3770 = vpow.pop %v3769
      %v3771 = vmul.f32 %v3756, 1.442695
      %v3772 = vpow.pop %v3771
      %v3773 = vsel %vm795, %v3758, 0.0
      %3774 = vadd.xlane.f32.xlu0 %v3773
      %v3775 = vpop.xlane.xlu0 %3774
      %v3776 = vsel %vm795, %v3760, 0.0
      %3777 = vadd.xlane.f32.xlu0 %v3776
      %v3778 = vpop.xlane.xlu0 %3777
      %v3779 = vsel %vm795, %v3762, 0.0
      %3780 = vadd.xlane.f32.xlu0 %v3779
      %v3781 = vpop.xlane.xlu0 %3780
      %v3782 = vsel %vm795, %v3764, 0.0
      %3783 = vadd.xlane.f32.xlu0 %v3782
      %v3784 = vpop.xlane.xlu0 %3783
      %v3785 = vsel %vm795, %v3766, 0.0
      %3786 = vadd.xlane.f32.xlu0 %v3785
      %v3787 = vpop.xlane.xlu0 %3786
      %v3788 = vsel %vm795, %v3768, 0.0
      %3789 = vadd.xlane.f32.xlu0 %v3788
      %v3790 = vpop.xlane.xlu0 %3789
      %v3791 = vsel %vm795, %v3770, 0.0
      %3792 = vadd.xlane.f32.xlu0 %v3791
      %v3793 = vpop.xlane.xlu0 %3792
      %v3794 = vsel %vm795, %v3772, 0.0
      %3795 = vadd.xlane.f32.xlu0 %v3794
      %v3796 = vpop.xlane.xlu0 %3795
      %v3797 = vrcp.pop %v3775
      %v3798 = vrcp.pop %v3778
      %v3799 = vrcp.pop %v3781
      %v3800 = vrcp.pop %v3784
      %v3801 = vrcp.pop %v3787
      %v3802 = vrcp.pop %v3790
      %v3803 = vrcp.pop %v3793
      %v3804 = vrcp.pop %v3796
      %v3805 = vmul.f32 %v3758, %v3797
      %v3806 = vmul.f32 %v3760, %v3798
      %v3807 = vmul.f32 %v3762, %v3799
      %v3808 = vmul.f32 %v3764, %v3800
      %v3809 = vmul.f32 %v3766, %v3801
      %v3810 = vmul.f32 %v3768, %v3802
      %v3811 = vmul.f32 %v3770, %v3803
      %v3812 = vmul.f32 %v3772, %v3804
      %v3813 = vpack.c.bf16 %v3806, %v3805
      %v3814 = vpack.c.bf16 %v3808, %v3807
      %v3815 = vpack.c.bf16 %v3810, %v3809
      %v3816 = vpack.c.bf16 %v3812, %v3811
      %3821 = vrot.lane.b32.xlu0 %v3539, 112
      %v3822 = vpop.permute.xlu0 %3821
      %3823 = vrot.lane.b32.xlu0 %v3540, 112
      %v3824 = vpop.permute.xlu0 %3823
      %3825 = vrot.lane.b32.xlu0 %v3541, 112
      %v3826 = vpop.permute.xlu0 %3825
      %3827 = vrot.lane.b32.xlu0 %v3542, 112
      %v3828 = vpop.permute.xlu0 %3827
      %v3834 = vsel %vm795, %v3813, 0
      %v3837 = vsel %vm795, %v3814, 0
      %v3840 = vsel %vm795, %v3815, 0
      %v3843 = vsel %vm795, %v3816, 0
      %3845 = vmatprep.subr.bf16.mxu0 0
      %3846 = vmatpush1.bf16.msra.mxu0 0
      %3847 = vmatprep.subr.bf16.mxu0 0
      %3848 = vmatpush1.bf16.msra.mxu0 0
      %3849 = vmatprep.subr.bf16.mxu0 0
      %3850 = vmatpush1.bf16.msra.mxu0 0
      %3851 = vmatprep.subr.bf16.mxu0 0
      %3852 = vmatpush1.bf16.msra.mxu0 0
      %3853 = vmatprep.subr.bf16.mxu0 0
      %3854 = vmatpush1.bf16.msra.mxu0 %v3828
      %3855 = vmatprep.subr.bf16.mxu0 0
      %3856 = vmatpush1.bf16.msra.mxu0 %v3826
      %3857 = vmatprep.subr.bf16.mxu0 0
      %3858 = vmatpush1.bf16.msra.mxu0 %v3824
      %3859 = vmatprep.subr.bf16.mxu0 0
      %3860 = vmatpush1.bf16.msra.mxu0 %v3822
      %3861 = vmatprep.subr.bf16.mxu0 0
      %3862 = vmatpush2.bf16.msra.mxu0 0
      %3863 = vmatprep.subr.bf16.mxu0 0
      %3864 = vmatpush2.bf16.msra.mxu0 0
      %3865 = vmatprep.subr.bf16.mxu0 0
      %3866 = vmatpush2.bf16.msra.mxu0 0
      %3867 = vmatprep.subr.bf16.mxu0 0
      %3868 = vmatpush2.bf16.msra.mxu0 0
      %3869 = vmatprep.subr.bf16.mxu0 0
      %3870 = vmatpush2.bf16.msra.mxu0 0
      %3871 = vmatprep.subr.bf16.mxu0 0
      %3872 = vmatpush2.bf16.msra.mxu0 0
      %3873 = vmatprep.subr.bf16.mxu0 0
      %3874 = vmatpush2.bf16.msra.mxu0 0
      %3875 = vmatprep.subr.bf16.mxu0 0
      %3876 = vmatpush2.bf16.msra.mxu0 0
      %3877 = vmatprep.mubr.bf16.mxu0 0
      %3878 = vmatmul.mubr.bf16.gmra.mxu0 %v3834
      %v3879 = vpop.f32.mrf.mxu0
      %v3880 = vadd.f32 0.0, %v3879
      %v3881 = vpop.f32.mrf.mxu0
      %v3882 = vpop.f32.mrf.mxu0
      %v3883 = vadd.f32 0.0, %v3882
      %v3884 = vpop.f32.mrf.mxu0
      %3885 = vmatprep.mubr.bf16.mxu0 0
      %3886 = vmatmul.mubr.bf16.gmra.mxu0 %v3837
      %v3887 = vpop.f32.mrf.mxu0
      %v3888 = vadd.f32 0.0, %v3887
      %v3889 = vpop.f32.mrf.mxu0
      %v3890 = vpop.f32.mrf.mxu0
      %v3891 = vadd.f32 0.0, %v3890
      %v3892 = vpop.f32.mrf.mxu0
      %3893 = vmatprep.mubr.bf16.mxu0 0
      %3894 = vmatmul.mubr.bf16.gmra.mxu0 %v3840
      %v3895 = vpop.f32.mrf.mxu0
      %v3896 = vadd.f32 0.0, %v3895
      %v3897 = vpop.f32.mrf.mxu0
      %v3898 = vpop.f32.mrf.mxu0
      %v3899 = vadd.f32 0.0, %v3898
      %v3900 = vpop.f32.mrf.mxu0
      %3901 = vmatprep.mubr.bf16.mxu0 0
      %3902 = vmatmul.mubr.bf16.gmra.mxu0 %v3843
      %v3903 = vpop.f32.mrf.mxu0
      %v3904 = vadd.f32 0.0, %v3903
      %v3905 = vpop.f32.mrf.mxu0
      %v3906 = vpop.f32.mrf.mxu0
      %v3907 = vadd.f32 0.0, %v3906
      %v3908 = vpop.f32.mrf.mxu0
      %3909 = vdwg.mxu0
      %3910 = vrot.lane.b32.xlu0 %v3342, 96
      %v3911 = vpop.permute.xlu0 %3910
      %3912 = vrot.lane.b32.xlu0 %v3343, 96
      %v3913 = vpop.permute.xlu0 %3912
      %3914 = vrot.lane.b32.xlu0 %v3344, 96
      %v3915 = vpop.permute.xlu0 %3914
      %3916 = vrot.lane.b32.xlu0 %v3345, 96
      %v3917 = vpop.permute.xlu0 %3916
      %3918 = vrot.lane.b32.xlu0 %v3342, 32
      %v3919 = vpop.permute.xlu0 %3918
      %3920 = vrot.lane.b32.xlu0 %v3343, 32
      %v3921 = vpop.permute.xlu0 %3920
      %3922 = vrot.lane.b32.xlu0 %v3344, 32
      %v3923 = vpop.permute.xlu0 %3922
      %3924 = vrot.lane.b32.xlu0 %v3345, 32
      %v3925 = vpop.permute.xlu0 %3924
      %v3927 = vsel %vm1094, %v3911, 0
      %v3930 = vsel %vm1094, %v3913, 0
      %v3933 = vsel %vm1094, %v3915, 0
      %v3936 = vsel %vm1094, %v3917, 0
      %v3939 = vsel %vm1094, %v3919, 0
      %v3942 = vsel %vm1094, %v3921, 0
      %v3945 = vsel %vm1094, %v3923, 0
      %v3948 = vsel %vm1094, %v3925, 0
      %3950 = vmatprep.subr.bf16.mxu0 0
      %3951 = vmatpush1.bf16.xpose.msra.mxu0 0
      %3952 = vmatprep.subr.bf16.mxu0 0
      %3953 = vmatpush1.bf16.xpose.msra.mxu0 0
      %3954 = vmatprep.subr.bf16.mxu0 0
      %3955 = vmatpush1.bf16.xpose.msra.mxu0 0
      %3956 = vmatprep.subr.bf16.mxu0 0
      %3957 = vmatpush1.bf16.xpose.msra.mxu0 0
      %3958 = vmatprep.subr.bf16.mxu0 0
      %3959 = vmatpush1.bf16.xpose.msra.mxu0 %v3948
      %3960 = vmatprep.subr.bf16.mxu0 0
      %3961 = vmatpush1.bf16.xpose.msra.mxu0 %v3945
      %3962 = vmatprep.subr.bf16.mxu0 0
      %3963 = vmatpush1.bf16.xpose.msra.mxu0 %v3942
      %3964 = vmatprep.subr.bf16.mxu0 0
      %3965 = vmatpush1.bf16.xpose.msra.mxu0 %v3939
      %3966 = vmatprep.subr.bf16.mxu0 0
      %3967 = vmatpush2.bf16.xpose.msra.mxu0 0
      %3968 = vmatprep.subr.bf16.mxu0 0
      %3969 = vmatpush2.bf16.xpose.msra.mxu0 0
      %3970 = vmatprep.subr.bf16.mxu0 0
      %3971 = vmatpush2.bf16.xpose.msra.mxu0 0
      %3972 = vmatprep.subr.bf16.mxu0 0
      %3973 = vmatpush2.bf16.xpose.msra.mxu0 0
      %3974 = vmatprep.subr.bf16.mxu0 0
      %3975 = vmatpush2.bf16.xpose.msra.mxu0 0
      %3976 = vmatprep.subr.bf16.mxu0 0
      %3977 = vmatpush2.bf16.xpose.msra.mxu0 0
      %3978 = vmatprep.subr.bf16.mxu0 0
      %3979 = vmatpush2.bf16.xpose.msra.mxu0 0
      %3980 = vmatprep.subr.bf16.mxu0 0
      %3981 = vmatpush2.bf16.xpose.msra.mxu0 0
      %3982 = vmatprep.mubr.bf16.mxu0 0
      %3983 = vmatmul.mubr.bf16.gmra.mxu0 %v3927
      %v3984 = vpop.f32.mrf.mxu0
      %v3985 = vadd.f32 0.0, %v3984
      %v3986 = vpop.f32.mrf.mxu0
      %v3987 = vpop.f32.mrf.mxu0
      %v3988 = vadd.f32 0.0, %v3987
      %v3989 = vpop.f32.mrf.mxu0
      %3990 = vmatprep.mubr.bf16.mxu0 0
      %3991 = vmatmul.mubr.bf16.gmra.mxu0 %v3930
      %v3992 = vpop.f32.mrf.mxu0
      %v3993 = vadd.f32 0.0, %v3992
      %v3994 = vpop.f32.mrf.mxu0
      %v3995 = vpop.f32.mrf.mxu0
      %v3996 = vadd.f32 0.0, %v3995
      %v3997 = vpop.f32.mrf.mxu0
      %3998 = vmatprep.mubr.bf16.mxu0 0
      %3999 = vmatmul.mubr.bf16.gmra.mxu0 %v3933
      %v4000 = vpop.f32.mrf.mxu0
      %v4001 = vadd.f32 0.0, %v4000
      %v4002 = vpop.f32.mrf.mxu0
      %v4003 = vpop.f32.mrf.mxu0
      %v4004 = vadd.f32 0.0, %v4003
      %v4005 = vpop.f32.mrf.mxu0
      %4006 = vmatprep.mubr.bf16.mxu0 0
      %4007 = vmatmul.mubr.bf16.gmra.mxu0 %v3936
      %v4008 = vpop.f32.mrf.mxu0
      %v4009 = vadd.f32 0.0, %v4008
      %v4010 = vpop.f32.mrf.mxu0
      %v4011 = vpop.f32.mrf.mxu0
      %v4012 = vadd.f32 0.0, %v4011
      %v4013 = vpop.f32.mrf.mxu0
      %4014 = vdwg.mxu0
      %v4015 = vsel %vm795, %v3985, -inf
      %4016 = vmax.xlane.f32.xlu0 %v4015
      %v4017 = vpop.xlane.xlu0 %4016
      %v4018 = vsel %vm795, %v3988, -inf
      %4019 = vmax.xlane.f32.xlu0 %v4018
      %v4020 = vpop.xlane.xlu0 %4019
      %v4021 = vsel %vm795, %v3993, -inf
      %4022 = vmax.xlane.f32.xlu0 %v4021
      %v4023 = vpop.xlane.xlu0 %4022
      %v4024 = vsel %vm795, %v3996, -inf
      %4025 = vmax.xlane.f32.xlu0 %v4024
      %v4026 = vpop.xlane.xlu0 %4025
      %v4027 = vsel %vm795, %v4001, -inf
      %4028 = vmax.xlane.f32.xlu0 %v4027
      %v4029 = vpop.xlane.xlu0 %4028
      %v4030 = vsel %vm795, %v4004, -inf
      %4031 = vmax.xlane.f32.xlu0 %v4030
      %v4032 = vpop.xlane.xlu0 %4031
      %v4033 = vsel %vm795, %v4009, -inf
      %4034 = vmax.xlane.f32.xlu0 %v4033
      %v4035 = vpop.xlane.xlu0 %4034
      %v4036 = vsel %vm795, %v4012, -inf
      %4037 = vmax.xlane.f32.xlu0 %v4036
      %v4038 = vpop.xlane.xlu0 %4037
      %v4039 = vsub.f32 %v3985, %v4017
      %v4040 = vsub.f32 %v3988, %v4020
      %v4041 = vsub.f32 %v3993, %v4023
      %v4042 = vsub.f32 %v3996, %v4026
      %v4043 = vsub.f32 %v4001, %v4029
      %v4044 = vsub.f32 %v4004, %v4032
      %v4045 = vsub.f32 %v4009, %v4035
      %v4046 = vsub.f32 %v4012, %v4038
      %v4047 = vmul.f32 %v4039, 1.442695
      %v4048 = vpow.pop %v4047
      %v4049 = vmul.f32 %v4040, 1.442695
      %v4050 = vpow.pop %v4049
      %v4051 = vmul.f32 %v4041, 1.442695
      %v4052 = vpow.pop %v4051
      %v4053 = vmul.f32 %v4042, 1.442695
      %v4054 = vpow.pop %v4053
      %v4055 = vmul.f32 %v4043, 1.442695
      %v4056 = vpow.pop %v4055
      %v4057 = vmul.f32 %v4044, 1.442695
      %v4058 = vpow.pop %v4057
      %v4059 = vmul.f32 %v4045, 1.442695
      %v4060 = vpow.pop %v4059
      %v4061 = vmul.f32 %v4046, 1.442695
      %v4062 = vpow.pop %v4061
      %v4063 = vsel %vm795, %v4048, 0.0
      %4064 = vadd.xlane.f32.xlu0 %v4063
      %v4065 = vpop.xlane.xlu0 %4064
      %v4066 = vsel %vm795, %v4050, 0.0
      %4067 = vadd.xlane.f32.xlu0 %v4066
      %v4068 = vpop.xlane.xlu0 %4067
      %v4069 = vsel %vm795, %v4052, 0.0
      %4070 = vadd.xlane.f32.xlu0 %v4069
      %v4071 = vpop.xlane.xlu0 %4070
      %v4072 = vsel %vm795, %v4054, 0.0
      %4073 = vadd.xlane.f32.xlu0 %v4072
      %v4074 = vpop.xlane.xlu0 %4073
      %v4075 = vsel %vm795, %v4056, 0.0
      %4076 = vadd.xlane.f32.xlu0 %v4075
      %v4077 = vpop.xlane.xlu0 %4076
      %v4078 = vsel %vm795, %v4058, 0.0
      %4079 = vadd.xlane.f32.xlu0 %v4078
      %v4080 = vpop.xlane.xlu0 %4079
      %v4081 = vsel %vm795, %v4060, 0.0
      %4082 = vadd.xlane.f32.xlu0 %v4081
      %v4083 = vpop.xlane.xlu0 %4082
      %v4084 = vsel %vm795, %v4062, 0.0
      %4085 = vadd.xlane.f32.xlu0 %v4084
      %v4086 = vpop.xlane.xlu0 %4085
      %v4087 = vrcp.pop %v4065
      %v4088 = vrcp.pop %v4068
      %v4089 = vrcp.pop %v4071
      %v4090 = vrcp.pop %v4074
      %v4091 = vrcp.pop %v4077
      %v4092 = vrcp.pop %v4080
      %v4093 = vrcp.pop %v4083
      %v4094 = vrcp.pop %v4086
      %v4095 = vmul.f32 %v4048, %v4087
      %v4096 = vmul.f32 %v4050, %v4088
      %v4097 = vmul.f32 %v4052, %v4089
      %v4098 = vmul.f32 %v4054, %v4090
      %v4099 = vmul.f32 %v4056, %v4091
      %v4100 = vmul.f32 %v4058, %v4092
      %v4101 = vmul.f32 %v4060, %v4093
      %v4102 = vmul.f32 %v4062, %v4094
      %v4103 = vpack.c.bf16 %v4096, %v4095
      %v4104 = vpack.c.bf16 %v4098, %v4097
      %v4105 = vpack.c.bf16 %v4100, %v4099
      %v4106 = vpack.c.bf16 %v4102, %v4101
      %4107 = vrot.lane.b32.xlu0 %v3539, 96
      %v4108 = vpop.permute.xlu0 %4107
      %4109 = vrot.lane.b32.xlu0 %v3540, 96
      %v4110 = vpop.permute.xlu0 %4109
      %4111 = vrot.lane.b32.xlu0 %v3541, 96
      %v4112 = vpop.permute.xlu0 %4111
      %4113 = vrot.lane.b32.xlu0 %v3542, 96
      %v4114 = vpop.permute.xlu0 %4113
      %v4120 = vsel %vm795, %v4103, 0
      %v4123 = vsel %vm795, %v4104, 0
      %v4126 = vsel %vm795, %v4105, 0
      %v4129 = vsel %vm795, %v4106, 0
      %4131 = vmatprep.subr.bf16.mxu0 0
      %4132 = vmatpush1.bf16.msra.mxu0 0
      %4133 = vmatprep.subr.bf16.mxu0 0
      %4134 = vmatpush1.bf16.msra.mxu0 0
      %4135 = vmatprep.subr.bf16.mxu0 0
      %4136 = vmatpush1.bf16.msra.mxu0 0
      %4137 = vmatprep.subr.bf16.mxu0 0
      %4138 = vmatpush1.bf16.msra.mxu0 0
      %4139 = vmatprep.subr.bf16.mxu0 0
      %4140 = vmatpush1.bf16.msra.mxu0 %v4114
      %4141 = vmatprep.subr.bf16.mxu0 0
      %4142 = vmatpush1.bf16.msra.mxu0 %v4112
      %4143 = vmatprep.subr.bf16.mxu0 0
      %4144 = vmatpush1.bf16.msra.mxu0 %v4110
      %4145 = vmatprep.subr.bf16.mxu0 0
      %4146 = vmatpush1.bf16.msra.mxu0 %v4108
      %4147 = vmatprep.subr.bf16.mxu0 0
      %4148 = vmatpush2.bf16.msra.mxu0 0
      %4149 = vmatprep.subr.bf16.mxu0 0
      %4150 = vmatpush2.bf16.msra.mxu0 0
      %4151 = vmatprep.subr.bf16.mxu0 0
      %4152 = vmatpush2.bf16.msra.mxu0 0
      %4153 = vmatprep.subr.bf16.mxu0 0
      %4154 = vmatpush2.bf16.msra.mxu0 0
      %4155 = vmatprep.subr.bf16.mxu0 0
      %4156 = vmatpush2.bf16.msra.mxu0 0
      %4157 = vmatprep.subr.bf16.mxu0 0
      %4158 = vmatpush2.bf16.msra.mxu0 0
      %4159 = vmatprep.subr.bf16.mxu0 0
      %4160 = vmatpush2.bf16.msra.mxu0 0
      %4161 = vmatprep.subr.bf16.mxu0 0
      %4162 = vmatpush2.bf16.msra.mxu0 0
      %4163 = vmatprep.mubr.bf16.mxu0 0
      %4164 = vmatmul.mubr.bf16.gmra.mxu0 %v4120
      %v4165 = vpop.f32.mrf.mxu0
      %v4166 = vadd.f32 0.0, %v4165
      %v4167 = vpop.f32.mrf.mxu0
      %v4168 = vpop.f32.mrf.mxu0
      %v4169 = vadd.f32 0.0, %v4168
      %v4170 = vpop.f32.mrf.mxu0
      %4171 = vmatprep.mubr.bf16.mxu0 0
      %4172 = vmatmul.mubr.bf16.gmra.mxu0 %v4123
      %v4173 = vpop.f32.mrf.mxu0
      %v4174 = vadd.f32 0.0, %v4173
      %v4175 = vpop.f32.mrf.mxu0
      %v4176 = vpop.f32.mrf.mxu0
      %v4177 = vadd.f32 0.0, %v4176
      %v4178 = vpop.f32.mrf.mxu0
      %4179 = vmatprep.mubr.bf16.mxu0 0
      %4180 = vmatmul.mubr.bf16.gmra.mxu0 %v4126
      %v4181 = vpop.f32.mrf.mxu0
      %v4182 = vadd.f32 0.0, %v4181
      %v4183 = vpop.f32.mrf.mxu0
      %v4184 = vpop.f32.mrf.mxu0
      %v4185 = vadd.f32 0.0, %v4184
      %v4186 = vpop.f32.mrf.mxu0
      %4187 = vmatprep.mubr.bf16.mxu0 0
      %4188 = vmatmul.mubr.bf16.gmra.mxu0 %v4129
      %v4189 = vpop.f32.mrf.mxu0
      %v4190 = vadd.f32 0.0, %v4189
      %v4191 = vpop.f32.mrf.mxu0
      %v4192 = vpop.f32.mrf.mxu0
      %v4193 = vadd.f32 0.0, %v4192
      %v4194 = vpop.f32.mrf.mxu0
      %4195 = vdwg.mxu0
      %4196 = vrot.lane.b32.xlu0 %v3342, 80
      %v4197 = vpop.permute.xlu0 %4196
      %4198 = vrot.lane.b32.xlu0 %v3343, 80
      %v4199 = vpop.permute.xlu0 %4198
      %4200 = vrot.lane.b32.xlu0 %v3344, 80
      %v4201 = vpop.permute.xlu0 %4200
      %4202 = vrot.lane.b32.xlu0 %v3345, 80
      %v4203 = vpop.permute.xlu0 %4202
      %4204 = vrot.lane.b32.xlu0 %v3342, 16
      %v4205 = vpop.permute.xlu0 %4204
      %4206 = vrot.lane.b32.xlu0 %v3343, 16
      %v4207 = vpop.permute.xlu0 %4206
      %4208 = vrot.lane.b32.xlu0 %v3344, 16
      %v4209 = vpop.permute.xlu0 %4208
      %4210 = vrot.lane.b32.xlu0 %v3345, 16
      %v4211 = vpop.permute.xlu0 %4210
      %v4213 = vsel %vm1094, %v4197, 0
      %v4216 = vsel %vm1094, %v4199, 0
      %v4219 = vsel %vm1094, %v4201, 0
      %v4222 = vsel %vm1094, %v4203, 0
      %v4225 = vsel %vm1094, %v4205, 0
      %v4228 = vsel %vm1094, %v4207, 0
      %v4231 = vsel %vm1094, %v4209, 0
      %v4234 = vsel %vm1094, %v4211, 0
      %4236 = vmatprep.subr.bf16.mxu0 0
      %4237 = vmatpush1.bf16.xpose.msra.mxu0 0
      %4238 = vmatprep.subr.bf16.mxu0 0
      %4239 = vmatpush1.bf16.xpose.msra.mxu0 0
      %4240 = vmatprep.subr.bf16.mxu0 0
      %4241 = vmatpush1.bf16.xpose.msra.mxu0 0
      %4242 = vmatprep.subr.bf16.mxu0 0
      %4243 = vmatpush1.bf16.xpose.msra.mxu0 0
      %4244 = vmatprep.subr.bf16.mxu0 0
      %4245 = vmatpush1.bf16.xpose.msra.mxu0 %v4234
      %4246 = vmatprep.subr.bf16.mxu0 0
      %4247 = vmatpush1.bf16.xpose.msra.mxu0 %v4231
      %4248 = vmatprep.subr.bf16.mxu0 0
      %4249 = vmatpush1.bf16.xpose.msra.mxu0 %v4228
      %4250 = vmatprep.subr.bf16.mxu0 0
      %4251 = vmatpush1.bf16.xpose.msra.mxu0 %v4225
      %4252 = vmatprep.subr.bf16.mxu0 0
      %4253 = vmatpush2.bf16.xpose.msra.mxu0 0
      %4254 = vmatprep.subr.bf16.mxu0 0
      %4255 = vmatpush2.bf16.xpose.msra.mxu0 0
      %4256 = vmatprep.subr.bf16.mxu0 0
      %4257 = vmatpush2.bf16.xpose.msra.mxu0 0
      %4258 = vmatprep.subr.bf16.mxu0 0
      %4259 = vmatpush2.bf16.xpose.msra.mxu0 0
      %4260 = vmatprep.subr.bf16.mxu0 0
      %4261 = vmatpush2.bf16.xpose.msra.mxu0 0
      %4262 = vmatprep.subr.bf16.mxu0 0
      %4263 = vmatpush2.bf16.xpose.msra.mxu0 0
      %4264 = vmatprep.subr.bf16.mxu0 0
      %4265 = vmatpush2.bf16.xpose.msra.mxu0 0
      %4266 = vmatprep.subr.bf16.mxu0 0
      %4267 = vmatpush2.bf16.xpose.msra.mxu0 0
      %4268 = vmatprep.mubr.bf16.mxu0 0
      %4269 = vmatmul.mubr.bf16.gmra.mxu0 %v4213
      %v4270 = vpop.f32.mrf.mxu0
      %v4271 = vadd.f32 0.0, %v4270
      %v4272 = vpop.f32.mrf.mxu0
      %v4273 = vpop.f32.mrf.mxu0
      %v4274 = vadd.f32 0.0, %v4273
      %v4275 = vpop.f32.mrf.mxu0
      %4276 = vmatprep.mubr.bf16.mxu0 0
      %4277 = vmatmul.mubr.bf16.gmra.mxu0 %v4216
      %v4278 = vpop.f32.mrf.mxu0
      %v4279 = vadd.f32 0.0, %v4278
      %v4280 = vpop.f32.mrf.mxu0
      %v4281 = vpop.f32.mrf.mxu0
      %v4282 = vadd.f32 0.0, %v4281
      %v4283 = vpop.f32.mrf.mxu0
      %4284 = vmatprep.mubr.bf16.mxu0 0
      %4285 = vmatmul.mubr.bf16.gmra.mxu0 %v4219
      %v4286 = vpop.f32.mrf.mxu0
      %v4287 = vadd.f32 0.0, %v4286
      %v4288 = vpop.f32.mrf.mxu0
      %v4289 = vpop.f32.mrf.mxu0
      %v4290 = vadd.f32 0.0, %v4289
      %v4291 = vpop.f32.mrf.mxu0
      %4292 = vmatprep.mubr.bf16.mxu0 0
      %4293 = vmatmul.mubr.bf16.gmra.mxu0 %v4222
      %v4294 = vpop.f32.mrf.mxu0
      %v4295 = vadd.f32 0.0, %v4294
      %v4296 = vpop.f32.mrf.mxu0
      %v4297 = vpop.f32.mrf.mxu0
      %v4298 = vadd.f32 0.0, %v4297
      %v4299 = vpop.f32.mrf.mxu0
      %4300 = vdwg.mxu0
      %v4301 = vsel %vm795, %v4271, -inf
      %4302 = vmax.xlane.f32.xlu0 %v4301
      %v4303 = vpop.xlane.xlu0 %4302
      %v4304 = vsel %vm795, %v4274, -inf
      %4305 = vmax.xlane.f32.xlu0 %v4304
      %v4306 = vpop.xlane.xlu0 %4305
      %v4307 = vsel %vm795, %v4279, -inf
      %4308 = vmax.xlane.f32.xlu0 %v4307
      %v4309 = vpop.xlane.xlu0 %4308
      %v4310 = vsel %vm795, %v4282, -inf
      %4311 = vmax.xlane.f32.xlu0 %v4310
      %v4312 = vpop.xlane.xlu0 %4311
      %v4313 = vsel %vm795, %v4287, -inf
      %4314 = vmax.xlane.f32.xlu0 %v4313
      %v4315 = vpop.xlane.xlu0 %4314
      %v4316 = vsel %vm795, %v4290, -inf
      %4317 = vmax.xlane.f32.xlu0 %v4316
      %v4318 = vpop.xlane.xlu0 %4317
      %v4319 = vsel %vm795, %v4295, -inf
      %4320 = vmax.xlane.f32.xlu0 %v4319
      %v4321 = vpop.xlane.xlu0 %4320
      %v4322 = vsel %vm795, %v4298, -inf
      %4323 = vmax.xlane.f32.xlu0 %v4322
      %v4324 = vpop.xlane.xlu0 %4323
      %v4325 = vsub.f32 %v4271, %v4303
      %v4326 = vsub.f32 %v4274, %v4306
      %v4327 = vsub.f32 %v4279, %v4309
      %v4328 = vsub.f32 %v4282, %v4312
      %v4329 = vsub.f32 %v4287, %v4315
      %v4330 = vsub.f32 %v4290, %v4318
      %v4331 = vsub.f32 %v4295, %v4321
      %v4332 = vsub.f32 %v4298, %v4324
      %v4333 = vmul.f32 %v4325, 1.442695
      %v4334 = vpow.pop %v4333
      %v4335 = vmul.f32 %v4326, 1.442695
      %v4336 = vpow.pop %v4335
      %v4337 = vmul.f32 %v4327, 1.442695
      %v4338 = vpow.pop %v4337
      %v4339 = vmul.f32 %v4328, 1.442695
      %v4340 = vpow.pop %v4339
      %v4341 = vmul.f32 %v4329, 1.442695
      %v4342 = vpow.pop %v4341
      %v4343 = vmul.f32 %v4330, 1.442695
      %v4344 = vpow.pop %v4343
      %v4345 = vmul.f32 %v4331, 1.442695
      %v4346 = vpow.pop %v4345
      %v4347 = vmul.f32 %v4332, 1.442695
      %v4348 = vpow.pop %v4347
      %v4349 = vsel %vm795, %v4334, 0.0
      %4350 = vadd.xlane.f32.xlu0 %v4349
      %v4351 = vpop.xlane.xlu0 %4350
      %v4352 = vsel %vm795, %v4336, 0.0
      %4353 = vadd.xlane.f32.xlu0 %v4352
      %v4354 = vpop.xlane.xlu0 %4353
      %v4355 = vsel %vm795, %v4338, 0.0
      %4356 = vadd.xlane.f32.xlu0 %v4355
      %v4357 = vpop.xlane.xlu0 %4356
      %v4358 = vsel %vm795, %v4340, 0.0
      %4359 = vadd.xlane.f32.xlu0 %v4358
      %v4360 = vpop.xlane.xlu0 %4359
      %v4361 = vsel %vm795, %v4342, 0.0
      %4362 = vadd.xlane.f32.xlu0 %v4361
      %v4363 = vpop.xlane.xlu0 %4362
      %v4364 = vsel %vm795, %v4344, 0.0
      %4365 = vadd.xlane.f32.xlu0 %v4364
      %v4366 = vpop.xlane.xlu0 %4365
      %v4367 = vsel %vm795, %v4346, 0.0
      %4368 = vadd.xlane.f32.xlu0 %v4367
      %v4369 = vpop.xlane.xlu0 %4368
      %v4370 = vsel %vm795, %v4348, 0.0
      %4371 = vadd.xlane.f32.xlu0 %v4370
      %v4372 = vpop.xlane.xlu0 %4371
      %v4373 = vrcp.pop %v4351
      %v4374 = vrcp.pop %v4354
      %v4375 = vrcp.pop %v4357
      %v4376 = vrcp.pop %v4360
      %v4377 = vrcp.pop %v4363
      %v4378 = vrcp.pop %v4366
      %v4379 = vrcp.pop %v4369
      %v4380 = vrcp.pop %v4372
      %v4381 = vmul.f32 %v4334, %v4373
      %v4382 = vmul.f32 %v4336, %v4374
      %v4383 = vmul.f32 %v4338, %v4375
      %v4384 = vmul.f32 %v4340, %v4376
      %v4385 = vmul.f32 %v4342, %v4377
      %v4386 = vmul.f32 %v4344, %v4378
      %v4387 = vmul.f32 %v4346, %v4379
      %v4388 = vmul.f32 %v4348, %v4380
      %v4389 = vpack.c.bf16 %v4382, %v4381
      %v4390 = vpack.c.bf16 %v4384, %v4383
      %v4391 = vpack.c.bf16 %v4386, %v4385
      %v4392 = vpack.c.bf16 %v4388, %v4387
      %4393 = vrot.lane.b32.xlu0 %v3539, 80
      %v4394 = vpop.permute.xlu0 %4393
      %4395 = vrot.lane.b32.xlu0 %v3540, 80
      %v4396 = vpop.permute.xlu0 %4395
      %4397 = vrot.lane.b32.xlu0 %v3541, 80
      %v4398 = vpop.permute.xlu0 %4397
      %4399 = vrot.lane.b32.xlu0 %v3542, 80
      %v4400 = vpop.permute.xlu0 %4399
      %v4406 = vsel %vm795, %v4389, 0
      %v4409 = vsel %vm795, %v4390, 0
      %v4412 = vsel %vm795, %v4391, 0
      %v4415 = vsel %vm795, %v4392, 0
      %4417 = vmatprep.subr.bf16.mxu0 0
      %4418 = vmatpush1.bf16.msra.mxu0 0
      %4419 = vmatprep.subr.bf16.mxu0 0
      %4420 = vmatpush1.bf16.msra.mxu0 0
      %4421 = vmatprep.subr.bf16.mxu0 0
      %4422 = vmatpush1.bf16.msra.mxu0 0
      %4423 = vmatprep.subr.bf16.mxu0 0
      %4424 = vmatpush1.bf16.msra.mxu0 0
      %4425 = vmatprep.subr.bf16.mxu0 0
      %4426 = vmatpush1.bf16.msra.mxu0 %v4400
      %4427 = vmatprep.subr.bf16.mxu0 0
      %4428 = vmatpush1.bf16.msra.mxu0 %v4398
      %4429 = vmatprep.subr.bf16.mxu0 0
      %4430 = vmatpush1.bf16.msra.mxu0 %v4396
      %4431 = vmatprep.subr.bf16.mxu0 0
      %4432 = vmatpush1.bf16.msra.mxu0 %v4394
      %4433 = vmatprep.subr.bf16.mxu0 0
      %4434 = vmatpush2.bf16.msra.mxu0 0
      %4435 = vmatprep.subr.bf16.mxu0 0
      %4436 = vmatpush2.bf16.msra.mxu0 0
      %4437 = vmatprep.subr.bf16.mxu0 0
      %4438 = vmatpush2.bf16.msra.mxu0 0
      %4439 = vmatprep.subr.bf16.mxu0 0
      %4440 = vmatpush2.bf16.msra.mxu0 0
      %4441 = vmatprep.subr.bf16.mxu0 0
      %4442 = vmatpush2.bf16.msra.mxu0 0
      %4443 = vmatprep.subr.bf16.mxu0 0
      %4444 = vmatpush2.bf16.msra.mxu0 0
      %4445 = vmatprep.subr.bf16.mxu0 0
      %4446 = vmatpush2.bf16.msra.mxu0 0
      %4447 = vmatprep.subr.bf16.mxu0 0
      %4448 = vmatpush2.bf16.msra.mxu0 0
      %4449 = vmatprep.mubr.bf16.mxu0 0
      %4450 = vmatmul.mubr.bf16.gmra.mxu0 %v4406
      %v4451 = vpop.f32.mrf.mxu0
      %v4452 = vadd.f32 0.0, %v4451
      %v4453 = vpop.f32.mrf.mxu0
      %v4454 = vpop.f32.mrf.mxu0
      %v4455 = vadd.f32 0.0, %v4454
      %v4456 = vpop.f32.mrf.mxu0
      %4457 = vmatprep.mubr.bf16.mxu0 0
      %4458 = vmatmul.mubr.bf16.gmra.mxu0 %v4409
      %v4459 = vpop.f32.mrf.mxu0
      %v4460 = vadd.f32 0.0, %v4459
      %v4461 = vpop.f32.mrf.mxu0
      %v4462 = vpop.f32.mrf.mxu0
      %v4463 = vadd.f32 0.0, %v4462
      %v4464 = vpop.f32.mrf.mxu0
      %4465 = vmatprep.mubr.bf16.mxu0 0
      %4466 = vmatmul.mubr.bf16.gmra.mxu0 %v4412
      %v4467 = vpop.f32.mrf.mxu0
      %v4468 = vadd.f32 0.0, %v4467
      %v4469 = vpop.f32.mrf.mxu0
      %v4470 = vpop.f32.mrf.mxu0
      %v4471 = vadd.f32 0.0, %v4470
      %v4472 = vpop.f32.mrf.mxu0
      %4473 = vmatprep.mubr.bf16.mxu0 0
      %4474 = vmatmul.mubr.bf16.gmra.mxu0 %v4415
      %v4475 = vpop.f32.mrf.mxu0
      %v4476 = vadd.f32 0.0, %v4475
      %v4477 = vpop.f32.mrf.mxu0
      %v4478 = vpop.f32.mrf.mxu0
      %v4479 = vadd.f32 0.0, %v4478
      %v4480 = vpop.f32.mrf.mxu0
      %4481 = vdwg.mxu0
      %4490 = vrot.lane.b32.xlu0 %v3880, 16
      %v4491 = vpop.permute.xlu0 %4490
      %4492 = vrot.lane.b32.xlu0 %v3883, 16
      %v4493 = vpop.permute.xlu0 %4492
      %4494 = vrot.lane.b32.xlu0 %v3888, 16
      %v4495 = vpop.permute.xlu0 %4494
      %4496 = vrot.lane.b32.xlu0 %v3891, 16
      %v4497 = vpop.permute.xlu0 %4496
      %4498 = vrot.lane.b32.xlu0 %v3896, 16
      %v4499 = vpop.permute.xlu0 %4498
      %4500 = vrot.lane.b32.xlu0 %v3899, 16
      %v4501 = vpop.permute.xlu0 %4500
      %4502 = vrot.lane.b32.xlu0 %v3904, 16
      %v4503 = vpop.permute.xlu0 %4502
      %4504 = vrot.lane.b32.xlu0 %v3907, 16
      %v4505 = vpop.permute.xlu0 %4504
      %4522 = vrot.lane.b32.xlu0 %v4166, 32
      %v4523 = vpop.permute.xlu0 %4522
      %4524 = vrot.lane.b32.xlu0 %v4169, 32
      %v4525 = vpop.permute.xlu0 %4524
      %4526 = vrot.lane.b32.xlu0 %v4174, 32
      %v4527 = vpop.permute.xlu0 %4526
      %4528 = vrot.lane.b32.xlu0 %v4177, 32
      %v4529 = vpop.permute.xlu0 %4528
      %4530 = vrot.lane.b32.xlu0 %v4182, 32
      %v4531 = vpop.permute.xlu0 %4530
      %4532 = vrot.lane.b32.xlu0 %v4185, 32
      %v4533 = vpop.permute.xlu0 %4532
      %4534 = vrot.lane.b32.xlu0 %v4190, 32
      %v4535 = vpop.permute.xlu0 %4534
      %4536 = vrot.lane.b32.xlu0 %v4193, 32
      %v4537 = vpop.permute.xlu0 %4536
      %4554 = vrot.lane.b32.xlu0 %v4452, 48
      %v4555 = vpop.permute.xlu0 %4554
      %4556 = vrot.lane.b32.xlu0 %v4455, 48
      %v4557 = vpop.permute.xlu0 %4556
      %4558 = vrot.lane.b32.xlu0 %v4460, 48
      %v4559 = vpop.permute.xlu0 %4558
      %4560 = vrot.lane.b32.xlu0 %v4463, 48
      %v4561 = vpop.permute.xlu0 %4560
      %4562 = vrot.lane.b32.xlu0 %v4468, 48
      %v4563 = vpop.permute.xlu0 %4562
      %4564 = vrot.lane.b32.xlu0 %v4471, 48
      %v4565 = vpop.permute.xlu0 %4564
      %4566 = vrot.lane.b32.xlu0 %v4476, 48
      %v4567 = vpop.permute.xlu0 %4566
      %4568 = vrot.lane.b32.xlu0 %v4479, 48
      %v4569 = vpop.permute.xlu0 %4568
      %v4578 = vsel %vm1094, %v3590, %v4491
      %v4579 = vsel %vm1094, %v3593, %v4493
      %v4580 = vsel %vm1094, %v3598, %v4495
      %v4581 = vsel %vm1094, %v3601, %v4497
      %v4582 = vsel %vm1094, %v3606, %v4499
      %v4583 = vsel %vm1094, %v3609, %v4501
      %v4584 = vsel %vm1094, %v3614, %v4503
      %v4585 = vsel %vm1094, %v3617, %v4505
      %v4586 = vsel %vm2323, %v4578, %v4523
      %v4587 = vsel %vm2323, %v4579, %v4525
      %v4588 = vsel %vm2323, %v4580, %v4527
      %v4589 = vsel %vm2323, %v4581, %v4529
      %v4590 = vsel %vm2323, %v4582, %v4531
      %v4591 = vsel %vm2323, %v4583, %v4533
      %v4592 = vsel %vm2323, %v4584, %v4535
      %v4593 = vsel %vm2323, %v4585, %v4537
      %v4594 = vsel %vm715, %v4586, %v4555
      %v4595 = vsel %vm715, %v4587, %v4557
      %v4596 = vsel %vm715, %v4588, %v4559
      %v4597 = vsel %vm715, %v4589, %v4561
      %v4598 = vsel %vm715, %v4590, %v4563
      %v4599 = vsel %vm715, %v4591, %v4565
      %v4600 = vsel %vm715, %v4592, %v4567
      %v4601 = vsel %vm715, %v4593, %v4569
      %v4602 = vpack.c.bf16 %v4595, %v4594
      %v4603 = vpack.c.bf16 %v4597, %v4596
      %v4604 = vpack.c.bf16 %v4599, %v4598
      %v4605 = vpack.c.bf16 %v4601, %v4600
      %s4606 = scalar_lea.vmem %s7, 32
      %v4607 = vld [vmem:[%s4606] sm:$0xf]
      %v4608 = vld [vmem:[%s4606 + $0x4] sm:$0xf]
      %v4609 = vld [vmem:[%s4606 + $0x8] sm:$0xf]
      %v4610 = vld [vmem:[%s4606 + $0xc] sm:$0xf]
      %v4611 = vld [vmem:[%s4606 + $0x10] sm:$0xf]
      %v4612 = vld [vmem:[%s4606 + $0x14] sm:$0xf]
      %v4613 = vld [vmem:[%s4606 + $0x18] sm:$0xf]
      %v4614 = vld [vmem:[%s4606 + $0x1c] sm:$0xf]
      %s4615 = scalar_lea.vmem %s8, 1
      %v4616 = vld [vmem:[%s4615] sm:$0x1]
      %v4618 = vlaneseq
      %v4619 = vshrl.u32 %v4618, 7
      %v4620 = vsub.s32 0, %v4619
      %v4621 = vrot.slane %v4616, %v4620
      %v4631 = vunpack.c.l.b16 %v4607
      %v4632 = vunpack.c.l.b16 %v4608
      %v4633 = vunpack.c.l.b16 %v4609
      %v4634 = vunpack.c.l.b16 %v4610
      %v4635 = vunpack.c.l.b16 %v4611
      %v4636 = vunpack.c.l.b16 %v4612
      %v4637 = vunpack.c.l.b16 %v4613
      %v4638 = vunpack.c.l.b16 %v4614
      %v4639 = vpack.c.b16 %v4632, %v4631
      %v4640 = vpack.c.b16 %v4634, %v4633
      %v4641 = vpack.c.b16 %v4636, %v4635
      %v4642 = vpack.c.b16 %v4638, %v4637
      %v4648 = vsel %vm795, %v4602, 0
      %v4651 = vsel %vm795, %v4603, 0
      %v4654 = vsel %vm795, %v4604, 0
      %v4657 = vsel %vm795, %v4605, 0
      %4659 = vmatprep.subr.bf16.mxu0 0
      %4660 = vmatpush1.bf16.msra.mxu0 0
      %4661 = vmatprep.subr.bf16.mxu0 0
      %4662 = vmatpush1.bf16.msra.mxu0 0
      %4663 = vmatprep.subr.bf16.mxu0 0
      %4664 = vmatpush1.bf16.msra.mxu0 0
      %4665 = vmatprep.subr.bf16.mxu0 0
      %4666 = vmatpush1.bf16.msra.mxu0 0
      %4667 = vmatprep.subr.bf16.mxu0 0
      %4668 = vmatpush1.bf16.msra.mxu0 %v4642
      %4669 = vmatprep.subr.bf16.mxu0 0
      %4670 = vmatpush1.bf16.msra.mxu0 %v4641
      %4671 = vmatprep.subr.bf16.mxu0 0
      %4672 = vmatpush1.bf16.msra.mxu0 %v4640
      %4673 = vmatprep.subr.bf16.mxu0 0
      %4674 = vmatpush1.bf16.msra.mxu0 %v4639
      %4675 = vmatprep.subr.bf16.mxu0 0
      %4676 = vmatpush2.bf16.msra.mxu0 0
      %4677 = vmatprep.subr.bf16.mxu0 0
      %4678 = vmatpush2.bf16.msra.mxu0 0
      %4679 = vmatprep.subr.bf16.mxu0 0
      %4680 = vmatpush2.bf16.msra.mxu0 0
      %4681 = vmatprep.subr.bf16.mxu0 0
      %4682 = vmatpush2.bf16.msra.mxu0 0
      %4683 = vmatprep.subr.bf16.mxu0 0
      %4684 = vmatpush2.bf16.msra.mxu0 0
      %4685 = vmatprep.subr.bf16.mxu0 0
      %4686 = vmatpush2.bf16.msra.mxu0 0
      %4687 = vmatprep.subr.bf16.mxu0 0
      %4688 = vmatpush2.bf16.msra.mxu0 0
      %4689 = vmatprep.subr.bf16.mxu0 0
      %4690 = vmatpush2.bf16.msra.mxu0 0
      %4691 = vmatprep.mubr.bf16.mxu0 0
      %4692 = vmatmul.mubr.bf16.gmra.mxu0 %v4648
      %v4693 = vpop.f32.mrf.mxu0
      %v4694 = vadd.f32 %v4621, %v4693
      %v4695 = vpop.f32.mrf.mxu0
      %v4696 = vpop.f32.mrf.mxu0
      %v4697 = vadd.f32 %v4621, %v4696
      %v4698 = vpop.f32.mrf.mxu0
      %4699 = vmatprep.mubr.bf16.mxu0 0
      %4700 = vmatmul.mubr.bf16.gmra.mxu0 %v4651
      %v4701 = vpop.f32.mrf.mxu0
      %v4702 = vadd.f32 %v4621, %v4701
      %v4703 = vpop.f32.mrf.mxu0
      %v4704 = vpop.f32.mrf.mxu0
      %v4705 = vadd.f32 %v4621, %v4704
      %v4706 = vpop.f32.mrf.mxu0
      %4707 = vmatprep.mubr.bf16.mxu0 0
      %4708 = vmatmul.mubr.bf16.gmra.mxu0 %v4654
      %v4709 = vpop.f32.mrf.mxu0
      %v4710 = vadd.f32 %v4621, %v4709
      %v4711 = vpop.f32.mrf.mxu0
      %v4712 = vpop.f32.mrf.mxu0
      %v4713 = vadd.f32 %v4621, %v4712
      %v4714 = vpop.f32.mrf.mxu0
      %4715 = vmatprep.mubr.bf16.mxu0 0
      %4716 = vmatmul.mubr.bf16.gmra.mxu0 %v4657
      %v4717 = vpop.f32.mrf.mxu0
      %v4718 = vadd.f32 %v4621, %v4717
      %v4719 = vpop.f32.mrf.mxu0
      %v4720 = vpop.f32.mrf.mxu0
      %v4721 = vadd.f32 %v4621, %v4720
      %v4722 = vpop.f32.mrf.mxu0
      %4723 = vdwg.mxu0
      %v4724 = vadd.f32 %v3047, %v4694
      %v4725 = vadd.f32 %v3048, %v4697
      %v4726 = vadd.f32 %v3049, %v4702
      %v4727 = vadd.f32 %v3050, %v4705
      %v4728 = vadd.f32 %v3051, %v4710
      %v4729 = vadd.f32 %v3052, %v4713
      %v4730 = vadd.f32 %v3053, %v4718
      %v4731 = vadd.f32 %v3054, %v4721
      %s4732 = scalar_lea.vmem %s9, 1
      %v4733 = vld [vmem:[%s4732] sm:$0x1]
      %s4734 = scalar_lea.vmem %s10, 1
      %v4735 = vld [vmem:[%s4734] sm:$0x1]
      %v4736 = vsel %vm795, %v4724, 0.0
      %4737 = vadd.xlane.f32.xlu0 %v4736
      %v4738 = vpop.xlane.xlu0 %4737
      %v4739 = vsel %vm795, %v4725, 0.0
      %4740 = vadd.xlane.f32.xlu0 %v4739
      %v4741 = vpop.xlane.xlu0 %4740
      %v4742 = vsel %vm795, %v4726, 0.0
      %4743 = vadd.xlane.f32.xlu0 %v4742
      %v4744 = vpop.xlane.xlu0 %4743
      %v4745 = vsel %vm795, %v4727, 0.0
      %4746 = vadd.xlane.f32.xlu0 %v4745
      %v4747 = vpop.xlane.xlu0 %4746
      %v4748 = vsel %vm795, %v4728, 0.0
      %4749 = vadd.xlane.f32.xlu0 %v4748
      %v4750 = vpop.xlane.xlu0 %4749
      %v4751 = vsel %vm795, %v4729, 0.0
      %4752 = vadd.xlane.f32.xlu0 %v4751
      %v4753 = vpop.xlane.xlu0 %4752
      %v4754 = vsel %vm795, %v4730, 0.0
      %4755 = vadd.xlane.f32.xlu0 %v4754
      %v4756 = vpop.xlane.xlu0 %4755
      %v4757 = vsel %vm795, %v4731, 0.0
      %4758 = vadd.xlane.f32.xlu0 %v4757
      %v4759 = vpop.xlane.xlu0 %4758
      %v4760 = vmul.f32 %v4738, %v820
      %v4761 = vmul.f32 %v4741, %v820
      %v4762 = vmul.f32 %v4744, %v820
      %v4763 = vmul.f32 %v4747, %v820
      %v4764 = vmul.f32 %v4750, %v820
      %v4765 = vmul.f32 %v4753, %v820
      %v4766 = vmul.f32 %v4756, %v820
      %v4767 = vmul.f32 %v4759, %v820
      %v4768 = vsub.f32 %v4724, %v4760
      %v4769 = vsub.f32 %v4725, %v4761
      %v4770 = vsub.f32 %v4726, %v4762
      %v4771 = vsub.f32 %v4727, %v4763
      %v4772 = vsub.f32 %v4728, %v4764
      %v4773 = vsub.f32 %v4729, %v4765
      %v4774 = vsub.f32 %v4730, %v4766
      %v4775 = vsub.f32 %v4731, %v4767
      %v4776 = vmul.f32 %v4768, %v4768
      %v4777 = vmul.f32 %v4769, %v4769
      %v4778 = vmul.f32 %v4770, %v4770
      %v4779 = vmul.f32 %v4771, %v4771
      %v4780 = vmul.f32 %v4772, %v4772
      %v4781 = vmul.f32 %v4773, %v4773
      %v4782 = vmul.f32 %v4774, %v4774
      %v4783 = vmul.f32 %v4775, %v4775
      %v4784 = vsel %vm795, %v4776, 0.0
      %4785 = vadd.xlane.f32.xlu0 %v4784
      %v4786 = vpop.xlane.xlu0 %4785
      %v4787 = vsel %vm795, %v4777, 0.0
      %4788 = vadd.xlane.f32.xlu0 %v4787
      %v4789 = vpop.xlane.xlu0 %4788
      %v4790 = vsel %vm795, %v4778, 0.0
      %4791 = vadd.xlane.f32.xlu0 %v4790
      %v4792 = vpop.xlane.xlu0 %4791
      %v4793 = vsel %vm795, %v4779, 0.0
      %4794 = vadd.xlane.f32.xlu0 %v4793
      %v4795 = vpop.xlane.xlu0 %4794
      %v4796 = vsel %vm795, %v4780, 0.0
      %4797 = vadd.xlane.f32.xlu0 %v4796
      %v4798 = vpop.xlane.xlu0 %4797
      %v4799 = vsel %vm795, %v4781, 0.0
      %4800 = vadd.xlane.f32.xlu0 %v4799
      %v4801 = vpop.xlane.xlu0 %4800
      %v4802 = vsel %vm795, %v4782, 0.0
      %4803 = vadd.xlane.f32.xlu0 %v4802
      %v4804 = vpop.xlane.xlu0 %4803
      %v4805 = vsel %vm795, %v4783, 0.0
      %4806 = vadd.xlane.f32.xlu0 %v4805
      %v4807 = vpop.xlane.xlu0 %4806
      %v4808 = vmul.f32 %v4786, %v820
      %v4809 = vmul.f32 %v4789, %v820
      %v4810 = vmul.f32 %v4792, %v820
      %v4811 = vmul.f32 %v4795, %v820
      %v4812 = vmul.f32 %v4798, %v820
      %v4813 = vmul.f32 %v4801, %v820
      %v4814 = vmul.f32 %v4804, %v820
      %v4815 = vmul.f32 %v4807, %v820
      %v4816 = vadd.f32 %v4808, 1e-06
      %v4817 = vadd.f32 %v4809, 1e-06
      %v4818 = vadd.f32 %v4810, 1e-06
      %v4819 = vadd.f32 %v4811, 1e-06
      %v4820 = vadd.f32 %v4812, 1e-06
      %v4821 = vadd.f32 %v4813, 1e-06
      %v4822 = vadd.f32 %v4814, 1e-06
      %v4823 = vadd.f32 %v4815, 1e-06
      %v4824 = vrsqrt.pop %v4816
      %v4825 = vrsqrt.pop %v4817
      %v4826 = vrsqrt.pop %v4818
      %v4827 = vrsqrt.pop %v4819
      %v4828 = vrsqrt.pop %v4820
      %v4829 = vrsqrt.pop %v4821
      %v4830 = vrsqrt.pop %v4822
      %v4831 = vrsqrt.pop %v4823
      %v4832 = vmul.f32 %v4768, %v4824
      %v4833 = vmul.f32 %v4769, %v4825
      %v4834 = vmul.f32 %v4770, %v4826
      %v4835 = vmul.f32 %v4771, %v4827
      %v4836 = vmul.f32 %v4772, %v4828
      %v4837 = vmul.f32 %v4773, %v4829
      %v4838 = vmul.f32 %v4774, %v4830
      %v4839 = vmul.f32 %v4775, %v4831
      %v4841 = vlaneseq
      %v4842 = vshrl.u32 %v4841, 7
      %v4843 = vsub.s32 0, %v4842
      %v4844 = vrot.slane %v4733, %v4843
      %v4846 = vmul.f32 %v4832, %v4844
      %v4847 = vmul.f32 %v4833, %v4844
      %v4848 = vmul.f32 %v4834, %v4844
      %v4849 = vmul.f32 %v4835, %v4844
      %v4850 = vmul.f32 %v4836, %v4844
      %v4851 = vmul.f32 %v4837, %v4844
      %v4852 = vmul.f32 %v4838, %v4844
      %v4853 = vmul.f32 %v4839, %v4844
      %v4855 = vlaneseq
      %v4856 = vshrl.u32 %v4855, 7
      %v4857 = vsub.s32 0, %v4856
      %v4858 = vrot.slane %v4735, %v4857
      %v4860 = vadd.f32 %v4846, %v4858
      %v4861 = vadd.f32 %v4847, %v4858
      %v4862 = vadd.f32 %v4848, %v4858
      %v4863 = vadd.f32 %v4849, %v4858
      %v4864 = vadd.f32 %v4850, %v4858
      %v4865 = vadd.f32 %v4851, %v4858
      %v4866 = vadd.f32 %v4852, %v4858
      %v4867 = vadd.f32 %v4853, %v4858
      %v4868 = vpack.c.bf16 %v4861, %v4860
      %v4869 = vpack.c.bf16 %v4863, %v4862
      %v4870 = vpack.c.bf16 %v4865, %v4864
      %v4871 = vpack.c.bf16 %v4867, %v4866
      %s4872 = scalar_lea.vmem %s11, 64
      %v4873 = vld [vmem:[%s4872] sm:$0xff]
      %v4874 = vld [vmem:[%s4872 + $0x8] sm:$0xff]
      %v4875 = vld [vmem:[%s4872 + $0x10] sm:$0xff]
      %v4876 = vld [vmem:[%s4872 + $0x18] sm:$0xff]
      %v4877 = vld [vmem:[%s4872 + $0x20] sm:$0xff]
      %v4878 = vld [vmem:[%s4872 + $0x28] sm:$0xff]
      %v4879 = vld [vmem:[%s4872 + $0x30] sm:$0xff]
      %v4880 = vld [vmem:[%s4872 + $0x38] sm:$0xff]
      %s4881 = scalar_lea.vmem %s12, 2
      %v4882 = vld [vmem:[%s4881] sm:$0x3]
      %v4884 = vlaneseq
      %v4885 = vshrl.u32 %v4884, 7
      %v4886 = vsub.s32 0, %v4885
      %v4887 = vrot.slane %v4882, %v4886
      %v4888 = vlaneseq
      %v4889 = vshrl.u32 %v4888, 7
      %v4890 = vsub.s32 1, %v4889
      %v4891 = vrot.slane %v4882, %v4890
      %v4902 = vunpack.c.l.b16 %v4873
      %v4903 = vunpack.c.h.b16 %v4873
      %v4904 = vunpack.c.l.b16 %v4874
      %v4905 = vunpack.c.h.b16 %v4874
      %v4906 = vunpack.c.l.b16 %v4875
      %v4907 = vunpack.c.h.b16 %v4875
      %v4908 = vunpack.c.l.b16 %v4876
      %v4909 = vunpack.c.h.b16 %v4876
      %v4910 = vunpack.c.l.b16 %v4877
      %v4911 = vunpack.c.h.b16 %v4877
      %v4912 = vunpack.c.l.b16 %v4878
      %v4913 = vunpack.c.h.b16 %v4878
      %v4914 = vunpack.c.l.b16 %v4879
      %v4915 = vunpack.c.h.b16 %v4879
      %v4916 = vunpack.c.l.b16 %v4880
      %v4917 = vunpack.c.h.b16 %v4880
      %v4918 = vpack.c.b16 %v4904, %v4902
      %v4919 = vpack.c.b16 %v4905, %v4903
      %v4920 = vpack.c.b16 %v4908, %v4906
      %v4921 = vpack.c.b16 %v4909, %v4907
      %v4922 = vpack.c.b16 %v4912, %v4910
      %v4923 = vpack.c.b16 %v4913, %v4911
      %v4924 = vpack.c.b16 %v4916, %v4914
      %v4925 = vpack.c.b16 %v4917, %v4915
      %v4935 = vsel %vm795, %v4868, 0
      %v4938 = vsel %vm795, %v4869, 0
      %v4941 = vsel %vm795, %v4870, 0
      %v4944 = vsel %vm795, %v4871, 0
      %4946 = vmatprep.subr.bf16.mxu0 0
      %4947 = vmatpush1.bf16.msra.mxu0 0
      %4948 = vmatprep.subr.bf16.mxu0 0
      %4949 = vmatpush1.bf16.msra.mxu0 0
      %4950 = vmatprep.subr.bf16.mxu0 0
      %4951 = vmatpush1.bf16.msra.mxu0 0
      %4952 = vmatprep.subr.bf16.mxu0 0
      %4953 = vmatpush1.bf16.msra.mxu0 0
      %4954 = vmatprep.subr.bf16.mxu0 %v4925
      %4955 = vmatpush1.bf16.msra.mxu0 %v4924
      %4956 = vmatprep.subr.bf16.mxu0 %v4923
      %4957 = vmatpush1.bf16.msra.mxu0 %v4922
      %4958 = vmatprep.subr.bf16.mxu0 %v4921
      %4959 = vmatpush1.bf16.msra.mxu0 %v4920
      %4960 = vmatprep.subr.bf16.mxu0 %v4919
      %4961 = vmatpush1.bf16.msra.mxu0 %v4918
      %4962 = vmatprep.subr.bf16.mxu0 0
      %4963 = vmatpush2.bf16.msra.mxu0 0
      %4964 = vmatprep.subr.bf16.mxu0 0
      %4965 = vmatpush2.bf16.msra.mxu0 0
      %4966 = vmatprep.subr.bf16.mxu0 0
      %4967 = vmatpush2.bf16.msra.mxu0 0
      %4968 = vmatprep.subr.bf16.mxu0 0
      %4969 = vmatpush2.bf16.msra.mxu0 0
      %4970 = vmatprep.subr.bf16.mxu0 0
      %4971 = vmatpush2.bf16.msra.mxu0 0
      %4972 = vmatprep.subr.bf16.mxu0 0
      %4973 = vmatpush2.bf16.msra.mxu0 0
      %4974 = vmatprep.subr.bf16.mxu0 0
      %4975 = vmatpush2.bf16.msra.mxu0 0
      %4976 = vmatprep.subr.bf16.mxu0 0
      %4977 = vmatpush2.bf16.msra.mxu0 0
      %4978 = vmatprep.mubr.bf16.mxu0 0
      %4979 = vmatmul.mubr.bf16.gmra.mxu0 %v4935
      %v4980 = vpop.f32.mrf.mxu0
      %v4981 = vadd.f32 %v4887, %v4980
      %v4982 = vpop.f32.mrf.mxu0
      %v4983 = vadd.f32 %v4891, %v4982
      %v4984 = vpop.f32.mrf.mxu0
      %v4985 = vadd.f32 %v4887, %v4984
      %v4986 = vpop.f32.mrf.mxu0
      %v4987 = vadd.f32 %v4891, %v4986
      %4988 = vmatprep.mubr.bf16.mxu0 0
      %4989 = vmatmul.mubr.bf16.gmra.mxu0 %v4938
      %v4990 = vpop.f32.mrf.mxu0
      %v4991 = vadd.f32 %v4887, %v4990
      %v4992 = vpop.f32.mrf.mxu0
      %v4993 = vadd.f32 %v4891, %v4992
      %v4994 = vpop.f32.mrf.mxu0
      %v4995 = vadd.f32 %v4887, %v4994
      %v4996 = vpop.f32.mrf.mxu0
      %v4997 = vadd.f32 %v4891, %v4996
      %4998 = vmatprep.mubr.bf16.mxu0 0
      %4999 = vmatmul.mubr.bf16.gmra.mxu0 %v4941
      %v5000 = vpop.f32.mrf.mxu0
      %v5001 = vadd.f32 %v4887, %v5000
      %v5002 = vpop.f32.mrf.mxu0
      %v5003 = vadd.f32 %v4891, %v5002
      %v5004 = vpop.f32.mrf.mxu0
      %v5005 = vadd.f32 %v4887, %v5004
      %v5006 = vpop.f32.mrf.mxu0
      %v5007 = vadd.f32 %v4891, %v5006
      %5008 = vmatprep.mubr.bf16.mxu0 0
      %5009 = vmatmul.mubr.bf16.gmra.mxu0 %v4944
      %v5010 = vpop.f32.mrf.mxu0
      %v5011 = vadd.f32 %v4887, %v5010
      %v5012 = vpop.f32.mrf.mxu0
      %v5013 = vadd.f32 %v4891, %v5012
      %v5014 = vpop.f32.mrf.mxu0
      %v5015 = vadd.f32 %v4887, %v5014
      %v5016 = vpop.f32.mrf.mxu0
      %v5017 = vadd.f32 %v4891, %v5016
      %5018 = vdwg.mxu0
      %v5019 = vmul.f32 %v4981, 0.5
      %v5020 = vmul.f32 %v4983, 0.5
      %v5021 = vmul.f32 %v4985, 0.5
      %v5022 = vmul.f32 %v4987, 0.5
      %v5023 = vmul.f32 %v4991, 0.5
      %v5024 = vmul.f32 %v4993, 0.5
      %v5025 = vmul.f32 %v4995, 0.5
      %v5026 = vmul.f32 %v4997, 0.5
      %v5027 = vmul.f32 %v5001, 0.5
      %v5028 = vmul.f32 %v5003, 0.5
      %v5029 = vmul.f32 %v5005, 0.5
      %v5030 = vmul.f32 %v5007, 0.5
      %v5031 = vmul.f32 %v5011, 0.5
      %v5032 = vmul.f32 %v5013, 0.5
      %v5033 = vmul.f32 %v5015, 0.5
      %v5034 = vmul.f32 %v5017, 0.5
      %v5035 = vmul.f32 %v4981, 0.70710677
      %v5036 = vmul.f32 %v4983, 0.70710677
      %v5037 = vmul.f32 %v4985, 0.70710677
      %v5038 = vmul.f32 %v4987, 0.70710677
      %v5039 = vmul.f32 %v4991, 0.70710677
      %v5040 = vmul.f32 %v4993, 0.70710677
      %v5041 = vmul.f32 %v4995, 0.70710677
      %v5042 = vmul.f32 %v4997, 0.70710677
      %v5043 = vmul.f32 %v5001, 0.70710677
      %v5044 = vmul.f32 %v5003, 0.70710677
      %v5045 = vmul.f32 %v5005, 0.70710677
      %v5046 = vmul.f32 %v5007, 0.70710677
      %v5047 = vmul.f32 %v5011, 0.70710677
      %v5048 = vmul.f32 %v5013, 0.70710677
      %v5049 = vmul.f32 %v5015, 0.70710677
      %v5050 = vmul.f32 %v5017, 0.70710677
      %v5051 = verf.f32.pop %v5035
      %v5052 = verf.f32.pop %v5036
      %v5053 = verf.f32.pop %v5037
      %v5054 = verf.f32.pop %v5038
      %v5055 = verf.f32.pop %v5039
      %v5056 = verf.f32.pop %v5040
      %v5057 = verf.f32.pop %v5041
      %v5058 = verf.f32.pop %v5042
      %v5059 = verf.f32.pop %v5043
      %v5060 = verf.f32.pop %v5044
      %v5061 = verf.f32.pop %v5045
      %v5062 = verf.f32.pop %v5046
      %v5063 = verf.f32.pop %v5047
      %v5064 = verf.f32.pop %v5048
      %v5065 = verf.f32.pop %v5049
      %v5066 = verf.f32.pop %v5050
      %v5067 = vadd.f32 %v5051, 1.0
      %v5068 = vadd.f32 %v5052, 1.0
      %v5069 = vadd.f32 %v5053, 1.0
      %v5070 = vadd.f32 %v5054, 1.0
      %v5071 = vadd.f32 %v5055, 1.0
      %v5072 = vadd.f32 %v5056, 1.0
      %v5073 = vadd.f32 %v5057, 1.0
      %v5074 = vadd.f32 %v5058, 1.0
      %v5075 = vadd.f32 %v5059, 1.0
      %v5076 = vadd.f32 %v5060, 1.0
      %v5077 = vadd.f32 %v5061, 1.0
      %v5078 = vadd.f32 %v5062, 1.0
      %v5079 = vadd.f32 %v5063, 1.0
      %v5080 = vadd.f32 %v5064, 1.0
      %v5081 = vadd.f32 %v5065, 1.0
      %v5082 = vadd.f32 %v5066, 1.0
      %v5083 = vmul.f32 %v5019, %v5067
      %v5084 = vmul.f32 %v5020, %v5068
      %v5085 = vmul.f32 %v5021, %v5069
      %v5086 = vmul.f32 %v5022, %v5070
      %v5087 = vmul.f32 %v5023, %v5071
      %v5088 = vmul.f32 %v5024, %v5072
      %v5089 = vmul.f32 %v5025, %v5073
      %v5090 = vmul.f32 %v5026, %v5074
      %v5091 = vmul.f32 %v5027, %v5075
      %v5092 = vmul.f32 %v5028, %v5076
      %v5093 = vmul.f32 %v5029, %v5077
      %v5094 = vmul.f32 %v5030, %v5078
      %v5095 = vmul.f32 %v5031, %v5079
      %v5096 = vmul.f32 %v5032, %v5080
      %v5097 = vmul.f32 %v5033, %v5081
      %v5098 = vmul.f32 %v5034, %v5082
      %v5099 = vpack.c.bf16 %v5085, %v5083
      %v5100 = vpack.c.bf16 %v5086, %v5084
      %v5101 = vpack.c.bf16 %v5089, %v5087
      %v5102 = vpack.c.bf16 %v5090, %v5088
      %v5103 = vpack.c.bf16 %v5093, %v5091
      %v5104 = vpack.c.bf16 %v5094, %v5092
      %v5105 = vpack.c.bf16 %v5097, %v5095
      %v5106 = vpack.c.bf16 %v5098, %v5096
      %s5107 = scalar_lea.vmem %s13, 128
      %v5108 = vld [vmem:[%s5107] sm:$0xf]
      %v5109 = vld [vmem:[%s5107 + $0x4] sm:$0xf]
      %v5110 = vld [vmem:[%s5107 + $0x8] sm:$0xf]
      %v5111 = vld [vmem:[%s5107 + $0xc] sm:$0xf]
      %v5112 = vld [vmem:[%s5107 + $0x10] sm:$0xf]
      %v5113 = vld [vmem:[%s5107 + $0x14] sm:$0xf]
      %v5114 = vld [vmem:[%s5107 + $0x18] sm:$0xf]
      %v5115 = vld [vmem:[%s5107 + $0x1c] sm:$0xf]
      %v5116 = vld [vmem:[%s5107 + $0x20] sm:$0xf]
      %v5117 = vld [vmem:[%s5107 + $0x24] sm:$0xf]
      %v5118 = vld [vmem:[%s5107 + $0x28] sm:$0xf]
      %v5119 = vld [vmem:[%s5107 + $0x2c] sm:$0xf]
      %v5120 = vld [vmem:[%s5107 + $0x30] sm:$0xf]
      %v5121 = vld [vmem:[%s5107 + $0x34] sm:$0xf]
      %v5122 = vld [vmem:[%s5107 + $0x38] sm:$0xf]
      %v5123 = vld [vmem:[%s5107 + $0x3c] sm:$0xf]
      %v5124 = vld [vmem:[%s5107 + $0x40] sm:$0xf]
      %v5125 = vld [vmem:[%s5107 + $0x44] sm:$0xf]
      %v5126 = vld [vmem:[%s5107 + $0x48] sm:$0xf]
      %v5127 = vld [vmem:[%s5107 + $0x4c] sm:$0xf]
      %v5128 = vld [vmem:[%s5107 + $0x50] sm:$0xf]
      %v5129 = vld [vmem:[%s5107 + $0x54] sm:$0xf]
      %v5130 = vld [vmem:[%s5107 + $0x58] sm:$0xf]
      %v5131 = vld [vmem:[%s5107 + $0x5c] sm:$0xf]
      %v5132 = vld [vmem:[%s5107 + $0x60] sm:$0xf]
      %v5133 = vld [vmem:[%s5107 + $0x64] sm:$0xf]
      %v5134 = vld [vmem:[%s5107 + $0x68] sm:$0xf]
      %v5135 = vld [vmem:[%s5107 + $0x6c] sm:$0xf]
      %v5136 = vld [vmem:[%s5107 + $0x70] sm:$0xf]
      %v5137 = vld [vmem:[%s5107 + $0x74] sm:$0xf]
      %v5138 = vld [vmem:[%s5107 + $0x78] sm:$0xf]
      %v5139 = vld [vmem:[%s5107 + $0x7c] sm:$0xf]
      %v5172 = vunpack.c.l.b16 %v5108
      %v5173 = vunpack.c.l.b16 %v5109
      %v5174 = vunpack.c.l.b16 %v5110
      %v5175 = vunpack.c.l.b16 %v5111
      %v5176 = vunpack.c.l.b16 %v5112
      %v5177 = vunpack.c.l.b16 %v5113
      %v5178 = vunpack.c.l.b16 %v5114
      %v5179 = vunpack.c.l.b16 %v5115
      %v5180 = vunpack.c.l.b16 %v5116
      %v5181 = vunpack.c.l.b16 %v5117
      %v5182 = vunpack.c.l.b16 %v5118
      %v5183 = vunpack.c.l.b16 %v5119
      %v5184 = vunpack.c.l.b16 %v5120
      %v5185 = vunpack.c.l.b16 %v5121
      %v5186 = vunpack.c.l.b16 %v5122
      %v5187 = vunpack.c.l.b16 %v5123
      %v5188 = vunpack.c.l.b16 %v5124
      %v5189 = vunpack.c.l.b16 %v5125
      %v5190 = vunpack.c.l.b16 %v5126
      %v5191 = vunpack.c.l.b16 %v5127
      %v5192 = vunpack.c.l.b16 %v5128
      %v5193 = vunpack.c.l.b16 %v5129
      %v5194 = vunpack.c.l.b16 %v5130
      %v5195 = vunpack.c.l.b16 %v5131
      %v5196 = vunpack.c.l.b16 %v5132
      %v5197 = vunpack.c.l.b16 %v5133
      %v5198 = vunpack.c.l.b16 %v5134
      %v5199 = vunpack.c.l.b16 %v5135
      %v5200 = vunpack.c.l.b16 %v5136
      %v5201 = vunpack.c.l.b16 %v5137
      %v5202 = vunpack.c.l.b16 %v5138
      %v5203 = vunpack.c.l.b16 %v5139
      %v5204 = vpack.c.b16 %v5173, %v5172
      %v5205 = vpack.c.b16 %v5175, %v5174
      %v5206 = vpack.c.b16 %v5177, %v5176
      %v5207 = vpack.c.b16 %v5179, %v5178
      %v5208 = vpack.c.b16 %v5181, %v5180
      %v5209 = vpack.c.b16 %v5183, %v5182
      %v5210 = vpack.c.b16 %v5185, %v5184
      %v5211 = vpack.c.b16 %v5187, %v5186
      %v5212 = vpack.c.b16 %v5189, %v5188
      %v5213 = vpack.c.b16 %v5191, %v5190
      %v5214 = vpack.c.b16 %v5193, %v5192
      %v5215 = vpack.c.b16 %v5195, %v5194
      %v5216 = vpack.c.b16 %v5197, %v5196
      %v5217 = vpack.c.b16 %v5199, %v5198
      %v5218 = vpack.c.b16 %v5201, %v5200
      %v5219 = vpack.c.b16 %v5203, %v5202
      %5236 = vmatprep.subr.bf16.mxu0 0
      %5237 = vmatpush1.bf16.msra.mxu0 %v5211
      %5238 = vmatprep.subr.bf16.mxu0 0
      %5239 = vmatpush1.bf16.msra.mxu0 %v5210
      %5240 = vmatprep.subr.bf16.mxu0 0
      %5241 = vmatpush1.bf16.msra.mxu0 %v5209
      %5242 = vmatprep.subr.bf16.mxu0 0
      %5243 = vmatpush1.bf16.msra.mxu0 %v5208
      %5244 = vmatprep.subr.bf16.mxu0 0
      %5245 = vmatpush1.bf16.msra.mxu0 %v5207
      %5246 = vmatprep.subr.bf16.mxu0 0
      %5247 = vmatpush1.bf16.msra.mxu0 %v5206
      %5248 = vmatprep.subr.bf16.mxu0 0
      %5249 = vmatpush1.bf16.msra.mxu0 %v5205
      %5250 = vmatprep.subr.bf16.mxu0 0
      %5251 = vmatpush1.bf16.msra.mxu0 %v5204
      %5252 = vmatprep.subr.bf16.mxu0 0
      %5253 = vmatpush2.bf16.msra.mxu0 %v5219
      %5254 = vmatprep.subr.bf16.mxu0 0
      %5255 = vmatpush2.bf16.msra.mxu0 %v5218
      %5256 = vmatprep.subr.bf16.mxu0 0
      %5257 = vmatpush2.bf16.msra.mxu0 %v5217
      %5258 = vmatprep.subr.bf16.mxu0 0
      %5259 = vmatpush2.bf16.msra.mxu0 %v5216
      %5260 = vmatprep.subr.bf16.mxu0 0
      %5261 = vmatpush2.bf16.msra.mxu0 %v5215
      %5262 = vmatprep.subr.bf16.mxu0 0
      %5263 = vmatpush2.bf16.msra.mxu0 %v5214
      %5264 = vmatprep.subr.bf16.mxu0 0
      %5265 = vmatpush2.bf16.msra.mxu0 %v5213
      %5266 = vmatprep.subr.bf16.mxu0 0
      %5267 = vmatpush2.bf16.msra.mxu0 %v5212
      %5268 = vmatprep.mubr.bf16.mxu0 %v5100
      %5269 = vmatmul.mubr.bf16.gmra.mxu0 %v5099
      %v5270 = vpop.f32.mrf.mxu0
      %v5271 = vadd.f32 0.0, %v5270
      %v5272 = vpop.f32.mrf.mxu0
      %v5273 = vpop.f32.mrf.mxu0
      %v5274 = vadd.f32 0.0, %v5273
      %v5275 = vpop.f32.mrf.mxu0
      %5276 = vmatprep.mubr.bf16.mxu0 %v5102
      %5277 = vmatmul.mubr.bf16.gmra.mxu0 %v5101
      %v5278 = vpop.f32.mrf.mxu0
      %v5279 = vadd.f32 0.0, %v5278
      %v5280 = vpop.f32.mrf.mxu0
      %v5281 = vpop.f32.mrf.mxu0
      %v5282 = vadd.f32 0.0, %v5281
      %v5283 = vpop.f32.mrf.mxu0
      %5284 = vmatprep.mubr.bf16.mxu0 %v5104
      %5285 = vmatmul.mubr.bf16.gmra.mxu0 %v5103
      %v5286 = vpop.f32.mrf.mxu0
      %v5287 = vadd.f32 0.0, %v5286
      %v5288 = vpop.f32.mrf.mxu0
      %v5289 = vpop.f32.mrf.mxu0
      %v5290 = vadd.f32 0.0, %v5289
      %v5291 = vpop.f32.mrf.mxu0
      %5292 = vmatprep.mubr.bf16.mxu0 %v5106
      %5293 = vmatmul.mubr.bf16.gmra.mxu0 %v5105
      %v5294 = vpop.f32.mrf.mxu0
      %v5295 = vadd.f32 0.0, %v5294
      %v5296 = vpop.f32.mrf.mxu0
      %v5297 = vpop.f32.mrf.mxu0
      %v5298 = vadd.f32 0.0, %v5297
      %v5299 = vpop.f32.mrf.mxu0
      %5300 = vdwg.mxu0
      %v5301 = vadd.f32 %v4724, %v5271
      %v5302 = vadd.f32 %v4725, %v5274
      %v5303 = vadd.f32 %v4726, %v5279
      %v5304 = vadd.f32 %v4727, %v5282
      %v5305 = vadd.f32 %v4728, %v5287
      %v5306 = vadd.f32 %v4729, %v5290
      %v5307 = vadd.f32 %v4730, %v5295
      %v5308 = vadd.f32 %v4731, %v5298
      %s5309 = scalar_lea.vmem %s14, 1
      %v5310 = vld [vmem:[%s5309] sm:$0x1]
      %v5312 = vlaneseq
      %v5313 = vshrl.u32 %v5312, 7
      %v5314 = vsub.s32 0, %v5313
      %v5315 = vrot.slane %v5310, %v5314
      %v5317 = vadd.f32 %v5301, %v5315
      %v5318 = vadd.f32 %v5302, %v5315
      %v5319 = vadd.f32 %v5303, %v5315
      %v5320 = vadd.f32 %v5304, %v5315
      %v5321 = vadd.f32 %v5305, %v5315
      %v5322 = vadd.f32 %v5306, %v5315
      %v5323 = vadd.f32 %v5307, %v5315
      %v5324 = vadd.f32 %v5308, %v5315
      %v5325 = vld [vmem:[%s15] sm:$0x1]
      %v5326 = vld [vmem:[%s16] sm:$0x1]
      %v5327 = vsel %vm795, %v5317, 0.0
      %5328 = vadd.xlane.f32.xlu0 %v5327
      %v5329 = vpop.xlane.xlu0 %5328
      %v5330 = vsel %vm795, %v5318, 0.0
      %5331 = vadd.xlane.f32.xlu0 %v5330
      %v5332 = vpop.xlane.xlu0 %5331
      %v5333 = vsel %vm795, %v5319, 0.0
      %5334 = vadd.xlane.f32.xlu0 %v5333
      %v5335 = vpop.xlane.xlu0 %5334
      %v5336 = vsel %vm795, %v5320, 0.0
      %5337 = vadd.xlane.f32.xlu0 %v5336
      %v5338 = vpop.xlane.xlu0 %5337
      %v5339 = vsel %vm795, %v5321, 0.0
      %5340 = vadd.xlane.f32.xlu0 %v5339
      %v5341 = vpop.xlane.xlu0 %5340
      %v5342 = vsel %vm795, %v5322, 0.0
      %5343 = vadd.xlane.f32.xlu0 %v5342
      %v5344 = vpop.xlane.xlu0 %5343
      %v5345 = vsel %vm795, %v5323, 0.0
      %5346 = vadd.xlane.f32.xlu0 %v5345
      %v5347 = vpop.xlane.xlu0 %5346
      %v5348 = vsel %vm795, %v5324, 0.0
      %5349 = vadd.xlane.f32.xlu0 %v5348
      %v5350 = vpop.xlane.xlu0 %5349
      %v5351 = vmul.f32 %v5329, %v820
      %v5352 = vmul.f32 %v5332, %v820
      %v5353 = vmul.f32 %v5335, %v820
      %v5354 = vmul.f32 %v5338, %v820
      %v5355 = vmul.f32 %v5341, %v820
      %v5356 = vmul.f32 %v5344, %v820
      %v5357 = vmul.f32 %v5347, %v820
      %v5358 = vmul.f32 %v5350, %v820
      %v5359 = vsub.f32 %v5317, %v5351
      %v5360 = vsub.f32 %v5318, %v5352
      %v5361 = vsub.f32 %v5319, %v5353
      %v5362 = vsub.f32 %v5320, %v5354
      %v5363 = vsub.f32 %v5321, %v5355
      %v5364 = vsub.f32 %v5322, %v5356
      %v5365 = vsub.f32 %v5323, %v5357
      %v5366 = vsub.f32 %v5324, %v5358
      %v5367 = vmul.f32 %v5359, %v5359
      %v5368 = vmul.f32 %v5360, %v5360
      %v5369 = vmul.f32 %v5361, %v5361
      %v5370 = vmul.f32 %v5362, %v5362
      %v5371 = vmul.f32 %v5363, %v5363
      %v5372 = vmul.f32 %v5364, %v5364
      %v5373 = vmul.f32 %v5365, %v5365
      %v5374 = vmul.f32 %v5366, %v5366
      %v5375 = vsel %vm795, %v5367, 0.0
      %5376 = vadd.xlane.f32.xlu0 %v5375
      %v5377 = vpop.xlane.xlu0 %5376
      %v5378 = vsel %vm795, %v5368, 0.0
      %5379 = vadd.xlane.f32.xlu0 %v5378
      %v5380 = vpop.xlane.xlu0 %5379
      %v5381 = vsel %vm795, %v5369, 0.0
      %5382 = vadd.xlane.f32.xlu0 %v5381
      %v5383 = vpop.xlane.xlu0 %5382
      %v5384 = vsel %vm795, %v5370, 0.0
      %5385 = vadd.xlane.f32.xlu0 %v5384
      %v5386 = vpop.xlane.xlu0 %5385
      %v5387 = vsel %vm795, %v5371, 0.0
      %5388 = vadd.xlane.f32.xlu0 %v5387
      %v5389 = vpop.xlane.xlu0 %5388
      %v5390 = vsel %vm795, %v5372, 0.0
      %5391 = vadd.xlane.f32.xlu0 %v5390
      %v5392 = vpop.xlane.xlu0 %5391
      %v5393 = vsel %vm795, %v5373, 0.0
      %5394 = vadd.xlane.f32.xlu0 %v5393
      %v5395 = vpop.xlane.xlu0 %5394
      %v5396 = vsel %vm795, %v5374, 0.0
      %5397 = vadd.xlane.f32.xlu0 %v5396
      %v5398 = vpop.xlane.xlu0 %5397
      %v5399 = vmul.f32 %v5377, %v820
      %v5400 = vmul.f32 %v5380, %v820
      %v5401 = vmul.f32 %v5383, %v820
      %v5402 = vmul.f32 %v5386, %v820
      %v5403 = vmul.f32 %v5389, %v820
      %v5404 = vmul.f32 %v5392, %v820
      %v5405 = vmul.f32 %v5395, %v820
      %v5406 = vmul.f32 %v5398, %v820
      %v5407 = vadd.f32 %v5399, 1e-06
      %v5408 = vadd.f32 %v5400, 1e-06
      %v5409 = vadd.f32 %v5401, 1e-06
      %v5410 = vadd.f32 %v5402, 1e-06
      %v5411 = vadd.f32 %v5403, 1e-06
      %v5412 = vadd.f32 %v5404, 1e-06
      %v5413 = vadd.f32 %v5405, 1e-06
      %v5414 = vadd.f32 %v5406, 1e-06
      %v5415 = vrsqrt.pop %v5407
      %v5416 = vrsqrt.pop %v5408
      %v5417 = vrsqrt.pop %v5409
      %v5418 = vrsqrt.pop %v5410
      %v5419 = vrsqrt.pop %v5411
      %v5420 = vrsqrt.pop %v5412
      %v5421 = vrsqrt.pop %v5413
      %v5422 = vrsqrt.pop %v5414
      %v5423 = vmul.f32 %v5359, %v5415
      %v5424 = vmul.f32 %v5360, %v5416
      %v5425 = vmul.f32 %v5361, %v5417
      %v5426 = vmul.f32 %v5362, %v5418
      %v5427 = vmul.f32 %v5363, %v5419
      %v5428 = vmul.f32 %v5364, %v5420
      %v5429 = vmul.f32 %v5365, %v5421
      %v5430 = vmul.f32 %v5366, %v5422
      %v5432 = vlaneseq
      %v5433 = vshrl.u32 %v5432, 7
      %v5434 = vsub.s32 0, %v5433
      %v5435 = vrot.slane %v5325, %v5434
      %v5437 = vmul.f32 %v5423, %v5435
      %v5438 = vmul.f32 %v5424, %v5435
      %v5439 = vmul.f32 %v5425, %v5435
      %v5440 = vmul.f32 %v5426, %v5435
      %v5441 = vmul.f32 %v5427, %v5435
      %v5442 = vmul.f32 %v5428, %v5435
      %v5443 = vmul.f32 %v5429, %v5435
      %v5444 = vmul.f32 %v5430, %v5435
      %v5446 = vlaneseq
      %v5447 = vshrl.u32 %v5446, 7
      %v5448 = vsub.s32 0, %v5447
      %v5449 = vrot.slane %v5326, %v5448
      %v5451 = vadd.f32 %v5437, %v5449
      %v5452 = vadd.f32 %v5438, %v5449
      %v5453 = vadd.f32 %v5439, %v5449
      %v5454 = vadd.f32 %v5440, %v5449
      %v5455 = vadd.f32 %v5441, %v5449
      %v5456 = vadd.f32 %v5442, %v5449
      %v5457 = vadd.f32 %v5443, %v5449
      %v5458 = vadd.f32 %v5444, %v5449
      %5459 = vst.msk [vmem:[%s664] sm:$0xff] %vm795, %v5451
      %5460 = vst.msk [vmem:[%s664 + $0x8] sm:$0xff] %vm795, %v5452
      %5461 = vst.msk [vmem:[%s664 + $0x10] sm:$0xff] %vm795, %v5453
      %5462 = vst.msk [vmem:[%s664 + $0x18] sm:$0xff] %vm795, %v5454
      %5463 = vst.msk [vmem:[%s664 + $0x20] sm:$0xff] %vm795, %v5455
      %5464 = vst.msk [vmem:[%s664 + $0x28] sm:$0xff] %vm795, %v5456
      %5465 = vst.msk [vmem:[%s664 + $0x30] sm:$0xff] %vm795, %v5457
      %5466 = vst.msk [vmem:[%s664 + $0x38] sm:$0xff] %vm795, %v5458
      %v5467 = vld [vmem:[%s17] sm:$0xf]
      %v5468 = vld [vmem:[%s17 + $0x4] sm:$0xf]
      %v5469 = vld [vmem:[%s17 + $0x8] sm:$0xf]
      %v5470 = vld [vmem:[%s17 + $0xc] sm:$0xf]
      %v5471 = vld [vmem:[%s17 + $0x10] sm:$0xf]
      %v5472 = vld [vmem:[%s17 + $0x14] sm:$0xf]
      %v5473 = vld [vmem:[%s17 + $0x18] sm:$0xf]
      %v5474 = vld [vmem:[%s17 + $0x1c] sm:$0xf]
      %v5475 = vld [vmem:[%s17 + $0x20] sm:$0xf]
      %v5476 = vld [vmem:[%s17 + $0x24] sm:$0xf]
      %v5477 = vld [vmem:[%s17 + $0x28] sm:$0xf]
      %v5478 = vpack.c.bf16 %v5452, %v5451
      %v5479 = vpack.c.bf16 %v5454, %v5453
      %v5480 = vpack.c.bf16 %v5456, %v5455
      %v5481 = vpack.c.bf16 %v5458, %v5457
      %v5493 = vunpack.c.l.b16 %v5467
      %v5494 = vunpack.c.l.b16 %v5468
      %v5495 = vunpack.c.l.b16 %v5469
      %v5496 = vunpack.c.l.b16 %v5470
      %v5497 = vunpack.c.l.b16 %v5471
      %v5498 = vunpack.c.l.b16 %v5472
      %v5499 = vunpack.c.l.b16 %v5473
      %v5500 = vunpack.c.l.b16 %v5474
      %v5501 = vunpack.c.l.b16 %v5475
      %v5502 = vunpack.c.l.b16 %v5476
      %v5503 = vunpack.c.l.b16 %v5477
      %v5504 = vpack.c.b16 %v5494, %v5493
      %v5505 = vpack.c.b16 %v5496, %v5495
      %v5506 = vpack.c.b16 %v5498, %v5497
      %v5507 = vpack.c.b16 %v5500, %v5499
      %v5508 = vpack.c.b16 %v5502, %v5501
      %v5509 = vpack.c.b16 %v5503, %v5503
      %v5511 = vsel %vm795, %v5504, 0
      %v5514 = vsel %vm795, %v5505, 0
      %v5517 = vsel %vm795, %v5506, 0
      %v5520 = vsel %vm795, %v5507, 0
      %v5523 = vsel %vm795, %v5508, 0
      %v5526 = vsel %vm795, %v5509, 0
      %5528 = vmatprep.subr.bf16.mxu0 0
      %5529 = vmatpush1.bf16.msra.mxu0 0
      %5530 = vmatprep.subr.bf16.mxu0 0
      %5531 = vmatpush1.bf16.msra.mxu0 0
      %5532 = vmatprep.subr.bf16.mxu0 0
      %5533 = vmatpush1.bf16.msra.mxu0 0
      %5534 = vmatprep.subr.bf16.mxu0 0
      %5535 = vmatpush1.bf16.msra.mxu0 0
      %5536 = vmatprep.subr.bf16.mxu0 0
      %5537 = vmatpush1.bf16.msra.mxu0 %v5481
      %5538 = vmatprep.subr.bf16.mxu0 0
      %5539 = vmatpush1.bf16.msra.mxu0 %v5480
      %5540 = vmatprep.subr.bf16.mxu0 0
      %5541 = vmatpush1.bf16.msra.mxu0 %v5479
      %5542 = vmatprep.subr.bf16.mxu0 0
      %5543 = vmatpush1.bf16.msra.mxu0 %v5478
      %5544 = vmatprep.subr.bf16.mxu0 0
      %5545 = vmatpush2.bf16.msra.mxu0 0
      %5546 = vmatprep.subr.bf16.mxu0 0
      %5547 = vmatpush2.bf16.msra.mxu0 0
      %5548 = vmatprep.subr.bf16.mxu0 0
      %5549 = vmatpush2.bf16.msra.mxu0 0
      %5550 = vmatprep.subr.bf16.mxu0 0
      %5551 = vmatpush2.bf16.msra.mxu0 0
      %5552 = vmatprep.subr.bf16.mxu0 0
      %5553 = vmatpush2.bf16.msra.mxu0 0
      %5554 = vmatprep.subr.bf16.mxu0 0
      %5555 = vmatpush2.bf16.msra.mxu0 0
      %5556 = vmatprep.subr.bf16.mxu0 0
      %5557 = vmatpush2.bf16.msra.mxu0 0
      %5558 = vmatprep.subr.bf16.mxu0 0
      %5559 = vmatpush2.bf16.msra.mxu0 0
      %5560 = vmatprep.mubr.bf16.mxu0 0
      %5561 = vmatmul.mubr.bf16.gmra.mxu0 %v5511
      %v5562 = vpop.f32.mrf.mxu0
      %v5563 = vadd.f32 0.0, %v5562
      %v5564 = vpop.f32.mrf.mxu0
      %v5565 = vpop.f32.mrf.mxu0
      %v5566 = vadd.f32 0.0, %v5565
      %v5567 = vpop.f32.mrf.mxu0
      %5568 = vmatprep.mubr.bf16.mxu0 0
      %5569 = vmatmul.mubr.bf16.gmra.mxu0 %v5514
      %v5570 = vpop.f32.mrf.mxu0
      %v5571 = vadd.f32 0.0, %v5570
      %v5572 = vpop.f32.mrf.mxu0
      %v5573 = vpop.f32.mrf.mxu0
      %v5574 = vadd.f32 0.0, %v5573
      %v5575 = vpop.f32.mrf.mxu0
      %5576 = vmatprep.mubr.bf16.mxu0 0
      %5577 = vmatmul.mubr.bf16.gmra.mxu0 %v5517
      %v5578 = vpop.f32.mrf.mxu0
      %v5579 = vadd.f32 0.0, %v5578
      %v5580 = vpop.f32.mrf.mxu0
      %v5581 = vpop.f32.mrf.mxu0
      %v5582 = vadd.f32 0.0, %v5581
      %v5583 = vpop.f32.mrf.mxu0
      %5584 = vmatprep.mubr.bf16.mxu0 0
      %5585 = vmatmul.mubr.bf16.gmra.mxu0 %v5520
      %v5586 = vpop.f32.mrf.mxu0
      %v5587 = vadd.f32 0.0, %v5586
      %v5588 = vpop.f32.mrf.mxu0
      %v5589 = vpop.f32.mrf.mxu0
      %v5590 = vadd.f32 0.0, %v5589
      %v5591 = vpop.f32.mrf.mxu0
      %5592 = vmatprep.mubr.bf16.mxu0 0
      %5593 = vmatmul.mubr.bf16.gmra.mxu0 %v5523
      %v5594 = vpop.f32.mrf.mxu0
      %v5595 = vadd.f32 0.0, %v5594
      %v5596 = vpop.f32.mrf.mxu0
      %v5597 = vpop.f32.mrf.mxu0
      %v5598 = vadd.f32 0.0, %v5597
      %v5599 = vpop.f32.mrf.mxu0
      %5600 = vmatprep.mubr.bf16.mxu0 0
      %5601 = vmatmul.mubr.bf16.gmra.mxu0 %v5526
      %v5602 = vpop.f32.mrf.mxu0
      %v5603 = vadd.f32 0.0, %v5602
      %v5604 = vpop.f32.mrf.mxu0
      %v5605 = vpop.f32.mrf.mxu0
      %v5606 = vpop.f32.mrf.mxu0
      %5607 = vdwg.mxu0
      %v5608 = vpack.c.bf16 %v5566, %v5563
      %v5609 = vpack.c.bf16 %v5574, %v5571
      %v5610 = vpack.c.bf16 %v5582, %v5579
      %v5611 = vpack.c.bf16 %v5590, %v5587
      %v5612 = vpack.c.bf16 %v5598, %v5595
      %v5613 = vpack.c.bf16 %v5603, %v5603
      %v5614 = vld [vmem:[%s18] sm:$0xff]
      %v5615 = vld [vmem:[%s18 + $0x8] sm:$0xff]
      %v5616 = vld [vmem:[%s18 + $0x10] sm:$0xff]
      %v5617 = vld [vmem:[%s18 + $0x18] sm:$0xff]
      %v5618 = vld [vmem:[%s18 + $0x20] sm:$0xff]
      %v5619 = vld [vmem:[%s18 + $0x28] sm:$0xff]
      %v5620 = vld [vmem:[%s18 + $0x30] sm:$0xff]
      %v5621 = vld [vmem:[%s18 + $0x38] sm:$0xff]
      %v5622 = vld [vmem:[%s19] sm:$0x3]
      %v5624 = vlaneseq
      %v5625 = vshrl.u32 %v5624, 7
      %v5626 = vsub.s32 0, %v5625
      %v5627 = vrot.slane %v5622, %v5626
      %v5628 = vlaneseq
      %v5629 = vshrl.u32 %v5628, 7
      %v5630 = vsub.s32 1, %v5629
      %v5631 = vrot.slane %v5622, %v5630
      %v5642 = vunpack.c.l.b16 %v5614
      %v5643 = vunpack.c.h.b16 %v5614
      %v5644 = vunpack.c.l.b16 %v5615
      %v5645 = vunpack.c.h.b16 %v5615
      %v5646 = vunpack.c.l.b16 %v5616
      %v5647 = vunpack.c.h.b16 %v5616
      %v5648 = vunpack.c.l.b16 %v5617
      %v5649 = vunpack.c.h.b16 %v5617
      %v5650 = vunpack.c.l.b16 %v5618
      %v5651 = vunpack.c.h.b16 %v5618
      %v5652 = vunpack.c.l.b16 %v5619
      %v5653 = vunpack.c.h.b16 %v5619
      %v5654 = vunpack.c.l.b16 %v5620
      %v5655 = vunpack.c.h.b16 %v5620
      %v5656 = vunpack.c.l.b16 %v5621
      %v5657 = vunpack.c.h.b16 %v5621
      %v5658 = vpack.c.b16 %v5644, %v5642
      %v5659 = vpack.c.b16 %v5645, %v5643
      %v5660 = vpack.c.b16 %v5648, %v5646
      %v5661 = vpack.c.b16 %v5649, %v5647
      %v5662 = vpack.c.b16 %v5652, %v5650
      %v5663 = vpack.c.b16 %v5653, %v5651
      %v5664 = vpack.c.b16 %v5656, %v5654
      %v5665 = vpack.c.b16 %v5657, %v5655
      %v5675 = vsel %vm795, %v5608, 0
      %v5678 = vsel %vm795, %v5609, 0
      %v5681 = vsel %vm795, %v5610, 0
      %v5684 = vsel %vm795, %v5611, 0
      %v5687 = vsel %vm795, %v5612, 0
      %v5690 = vsel %vm795, %v5613, 0
      %5692 = vmatprep.subr.bf16.mxu0 0
      %5693 = vmatpush1.bf16.msra.mxu0 0
      %5694 = vmatprep.subr.bf16.mxu0 0
      %5695 = vmatpush1.bf16.msra.mxu0 0
      %5696 = vmatprep.subr.bf16.mxu0 0
      %5697 = vmatpush1.bf16.msra.mxu0 0
      %5698 = vmatprep.subr.bf16.mxu0 0
      %5699 = vmatpush1.bf16.msra.mxu0 0
      %5700 = vmatprep.subr.bf16.mxu0 %v5665
      %5701 = vmatpush1.bf16.msra.mxu0 %v5664
      %5702 = vmatprep.subr.bf16.mxu0 %v5663
      %5703 = vmatpush1.bf16.msra.mxu0 %v5662
      %5704 = vmatprep.subr.bf16.mxu0 %v5661
      %5705 = vmatpush1.bf16.msra.mxu0 %v5660
      %5706 = vmatprep.subr.bf16.mxu0 %v5659
      %5707 = vmatpush1.bf16.msra.mxu0 %v5658
      %5708 = vmatprep.subr.bf16.mxu0 0
      %5709 = vmatpush2.bf16.msra.mxu0 0
      %5710 = vmatprep.subr.bf16.mxu0 0
      %5711 = vmatpush2.bf16.msra.mxu0 0
      %5712 = vmatprep.subr.bf16.mxu0 0
      %5713 = vmatpush2.bf16.msra.mxu0 0
      %5714 = vmatprep.subr.bf16.mxu0 0
      %5715 = vmatpush2.bf16.msra.mxu0 0
      %5716 = vmatprep.subr.bf16.mxu0 0
      %5717 = vmatpush2.bf16.msra.mxu0 0
      %5718 = vmatprep.subr.bf16.mxu0 0
      %5719 = vmatpush2.bf16.msra.mxu0 0
      %5720 = vmatprep.subr.bf16.mxu0 0
      %5721 = vmatpush2.bf16.msra.mxu0 0
      %5722 = vmatprep.subr.bf16.mxu0 0
      %5723 = vmatpush2.bf16.msra.mxu0 0
      %5724 = vmatprep.mubr.bf16.mxu0 0
      %5725 = vmatmul.mubr.bf16.gmra.mxu0 %v5675
      %v5726 = vpop.f32.mrf.mxu0
      %v5727 = vadd.f32 %v5627, %v5726
      %v5728 = vpop.f32.mrf.mxu0
      %v5729 = vadd.f32 %v5631, %v5728
      %v5730 = vpop.f32.mrf.mxu0
      %v5731 = vadd.f32 %v5627, %v5730
      %v5732 = vpop.f32.mrf.mxu0
      %v5733 = vadd.f32 %v5631, %v5732
      %5734 = vmatprep.mubr.bf16.mxu0 0
      %5735 = vmatmul.mubr.bf16.gmra.mxu0 %v5678
      %v5736 = vpop.f32.mrf.mxu0
      %v5737 = vadd.f32 %v5627, %v5736
      %v5738 = vpop.f32.mrf.mxu0
      %v5739 = vadd.f32 %v5631, %v5738
      %v5740 = vpop.f32.mrf.mxu0
      %v5741 = vadd.f32 %v5627, %v5740
      %v5742 = vpop.f32.mrf.mxu0
      %v5743 = vadd.f32 %v5631, %v5742
      %5744 = vmatprep.mubr.bf16.mxu0 0
      %5745 = vmatmul.mubr.bf16.gmra.mxu0 %v5681
      %v5746 = vpop.f32.mrf.mxu0
      %v5747 = vadd.f32 %v5627, %v5746
      %v5748 = vpop.f32.mrf.mxu0
      %v5749 = vadd.f32 %v5631, %v5748
      %v5750 = vpop.f32.mrf.mxu0
      %v5751 = vadd.f32 %v5627, %v5750
      %v5752 = vpop.f32.mrf.mxu0
      %v5753 = vadd.f32 %v5631, %v5752
      %5754 = vmatprep.mubr.bf16.mxu0 0
      %5755 = vmatmul.mubr.bf16.gmra.mxu0 %v5684
      %v5756 = vpop.f32.mrf.mxu0
      %v5757 = vadd.f32 %v5627, %v5756
      %v5758 = vpop.f32.mrf.mxu0
      %v5759 = vadd.f32 %v5631, %v5758
      %v5760 = vpop.f32.mrf.mxu0
      %v5761 = vadd.f32 %v5627, %v5760
      %v5762 = vpop.f32.mrf.mxu0
      %v5763 = vadd.f32 %v5631, %v5762
      %5764 = vmatprep.mubr.bf16.mxu0 0
      %5765 = vmatmul.mubr.bf16.gmra.mxu0 %v5687
      %v5766 = vpop.f32.mrf.mxu0
      %v5767 = vadd.f32 %v5627, %v5766
      %v5768 = vpop.f32.mrf.mxu0
      %v5769 = vadd.f32 %v5631, %v5768
      %v5770 = vpop.f32.mrf.mxu0
      %v5771 = vadd.f32 %v5627, %v5770
      %v5772 = vpop.f32.mrf.mxu0
      %v5773 = vadd.f32 %v5631, %v5772
      %5774 = vmatprep.mubr.bf16.mxu0 0
      %5775 = vmatmul.mubr.bf16.gmra.mxu0 %v5690
      %v5776 = vpop.f32.mrf.mxu0
      %v5777 = vadd.f32 %v5627, %v5776
      %v5778 = vpop.f32.mrf.mxu0
      %v5779 = vadd.f32 %v5631, %v5778
      %v5780 = vpop.f32.mrf.mxu0
      %v5781 = vpop.f32.mrf.mxu0
      %5782 = vdwg.mxu0
      %5783 = vst [vmem:[%s669] sm:$0xff] %v5727
      %5784 = vst [vmem:[%s669 + $0x8] sm:$0xff] %v5729
      %5785 = vst [vmem:[%s669 + $0x10] sm:$0xff] %v5731
      %5786 = vst [vmem:[%s669 + $0x18] sm:$0xff] %v5733
      %5787 = vst [vmem:[%s669 + $0x20] sm:$0xff] %v5737
      %5788 = vst [vmem:[%s669 + $0x28] sm:$0xff] %v5739
      %5789 = vst [vmem:[%s669 + $0x30] sm:$0xff] %v5741
      %5790 = vst [vmem:[%s669 + $0x38] sm:$0xff] %v5743
      %5791 = vst [vmem:[%s669 + $0x40] sm:$0xff] %v5747
      %5792 = vst [vmem:[%s669 + $0x48] sm:$0xff] %v5749
      %5793 = vst [vmem:[%s669 + $0x50] sm:$0xff] %v5751
      %5794 = vst [vmem:[%s669 + $0x58] sm:$0xff] %v5753
      %5795 = vst [vmem:[%s669 + $0x60] sm:$0xff] %v5757
      %5796 = vst [vmem:[%s669 + $0x68] sm:$0xff] %v5759
      %5797 = vst [vmem:[%s669 + $0x70] sm:$0xff] %v5761
      %5798 = vst [vmem:[%s669 + $0x78] sm:$0xff] %v5763
      %5799 = vst [vmem:[%s669 + $0x80] sm:$0xff] %v5767
      %5800 = vst [vmem:[%s669 + $0x88] sm:$0xff] %v5769
      %5801 = vst [vmem:[%s669 + $0x90] sm:$0xff] %v5771
      %5802 = vst [vmem:[%s669 + $0x98] sm:$0xff] %v5773
      %5803 = vst [vmem:[%s669 + $0xa0] sm:$0xff] %v5777
      %5804 = vst [vmem:[%s669 + $0xa8] sm:$0xff] %v5779
      %p5805 = scmp.lt.s32.totalorder %s33, 1
      %s5806 = scalar_select %p5805, %s33, 1
      %s5807 = smul.addr %s5806, 8
      %s5808 = smul.addr %s5807, 8
      %s5809 = scalar_lea.vmem %s20, %s5808
      %p5810 = scmp.lt.s32.totalorder %s33, 1
      %s5811 = scalar_select %p5810, %s33, 1
      %s5812 = smul.addr %s5811, 22
      %s5813 = smul.addr %s5812, 8
      %s5814 = scalar_lea.vmem %s21, %s5813
      // Predicated region
      $region101: #{style_pyramid_forward.2} parent=99 // pred_check
        %p5815 = pneg %p476
      $region102: #{style_pyramid_forward.2} parent=99 // pred_check_branch
        %5817 = sbr.rel (%p5815) target = $region104
      $region103: #{style_pyramid_forward.2} parent=99 // pred_region
        _
      $region104: #{style_pyramid_forward.2} parent=99 // pred_fallthru
        _
      // Predicated region
      $region105: #{style_pyramid_forward.2} parent=99 // pred_check
        %p5818 = pneg %p502
      $region106: #{style_pyramid_forward.2} parent=99 // pred_check_branch
        %5820 = sbr.rel (%p5818) target = $region108
      $region107: #{style_pyramid_forward.2} parent=99 // pred_region
        _
      $region108: #{style_pyramid_forward.2} parent=99 // pred_fallthru
        _
    $region100: #{style_pyramid_forward.2} parent=5 // pred_fallthru
      _
    %p5821 = scmp.le.s32.totalorder 2, %s28
    // Predicated region
    $region109: #{style_pyramid_forward.2} parent=5 // pred_check
      %p5822 = pneg %p5821
    $region110: #{style_pyramid_forward.2} parent=5 // pred_check_branch
      %5824 = sbr.rel (%p5822) target = $region112
    $region111: #{style_pyramid_forward.2} parent=5 // pred_region
      %s5825 = ssub.s32 %s28, 2
      // Predicated region
      $region113: #{style_pyramid_forward.2} parent=111 // pred_check
        %p5826 = pneg %p482
      $region114: #{style_pyramid_forward.2} parent=111 // pred_check_branch
        %5828 = sbr.rel (%p5826) target = $region116
      $region115: #{style_pyramid_forward.2} parent=111 // pred_region
        %p5829 = scmp.lt.s32.totalorder %s34, 1
        %s5830 = scalar_select %p5829, %s34, 1
        %s5831 = smul.addr %s5830, 8
        %s5832 = smul.addr %s5831, 8
        %s5833 = scalar_lea.vmem %s20, %s5832
      $region116: #{style_pyramid_forward.2} parent=111 // pred_fallthru
        _
      // Predicated region
      $region117: #{style_pyramid_forward.2} parent=111 // pred_check
        %p5834 = pneg %p508
      $region118: #{style_pyramid_forward.2} parent=111 // pred_check_branch
        %5836 = sbr.rel (%p5834) target = $region120
      $region119: #{style_pyramid_forward.2} parent=111 // pred_region
        %p5837 = scmp.lt.s32.totalorder %s34, 1
        %s5838 = scalar_select %p5837, %s34, 1
        %s5839 = smul.addr %s5838, 22
        %s5840 = smul.addr %s5839, 8
        %s5841 = scalar_lea.vmem %s21, %s5840
      $region120: #{style_pyramid_forward.2} parent=111 // pred_fallthru
        _
    $region112: #{style_pyramid_forward.2} parent=5 // pred_fallthru
      _
  $region6: #{style_pyramid_forward.2} parent=0 // loop_footer
    %s32 = sadd.s32 1, %s28
  $region7: #{style_pyramid_forward.2} parent=0 // loop_footer_branch
    %27 = sbr.rel target = $region3
  $region8: #{style_pyramid_forward.2} parent=0 // loop_exit
    _

</llo_original>
